<compile_context>
chip_gen: v7x
topology: tpu7x:2x2x1
jax: 0.10.0
libtpu: 0.0.40
codegen_flags: <defaults>
</compile_context>

<pallas_src>
import functools

import jax
import jax.numpy as jnp
import numpy as np
from jax.experimental import pallas as pl
from jax.experimental.pallas import tpu as pltpu


# ---------------------------------------------------------------------------
# Fused Pallas kernel: embedding-sequence in -> logits out
# ---------------------------------------------------------------------------
def _rnn_kernel(x_ref, wih_ref, whh_ref, b_ref, gamma_ref, beta_ref,
                fcw_ref, fcb_ref, out_ref, seq_buf, gx_buf, *,
                norm, residual, t_chunk, unroll):
    """Ref shapes (per batch-block program):
      x_ref     : (T, bB, E)  f32       time-major embeddings (also the residual)
      wih_ref   : (L, E, 4H)  bf16      input->gates weights (transposed PyTorch W_ih)
      whh_ref   : (L, H, 4H)  bf16      hidden->gates weights (transposed PyTorch W_hh)
      b_ref     : (L, 1, 4H)  f32       combined bias b_ih + b_hh
      gamma_ref : (L, 1, H)   f32       LayerNorm weight
      beta_ref  : (L, 1, H)   f32       LayerNorm bias
      fcw_ref   : (H, O)      bf16      final Linear weight (transposed)
      fcb_ref   : (1, O)      f32       final Linear bias
      out_ref   : (bB, O)     f32       logits
      seq_buf   : (T, bB, H)  bf16/f32  scratch: current layer's output sequence
      gx_buf    : (T, bB, 4H) f32       scratch: hoisted input projection (gates_x)
    PyTorch gate order: i, f, g, o.
    """
    T, bB, E = x_ref.shape
    L, H, _ = whh_ref.shape
    seq_dtype = seq_buf.dtype

    for layer in range(L):
        # ---- hoisted input projection, streamed in ~128-row chunks ------------------
        bias_l = b_ref[layer]                                     # (1, 4H) f32
        src = x_ref if layer == 0 else seq_buf
        for t0 in range(0, T, t_chunk):
            tc = min(t_chunk, T - t0)
            inp = src[pl.ds(t0, tc)].reshape(tc * bB, -1).astype(jnp.bfloat16)
            gx = jnp.dot(inp, wih_ref[layer],
                         preferred_element_type=jnp.float32)      # (tc*bB, 4H) f32
            gx_buf[pl.ds(t0, tc)] = gx.reshape(tc, bB, 4 * H) + bias_l

        # ---- loop-invariant broadcasts hoisted out of the recurrence ----------------
        if norm:
            gamma_l = jnp.broadcast_to(gamma_ref[layer], (bB, H))
            beta_l = jnp.broadcast_to(beta_ref[layer], (bB, H))

        def step(t, carry, layer=layer):
            h, c = carry                                          # f32 state
            # W_hh streamed from VMEM per step (not hoisted into a 32-vreg live value):
            # avoids spilling gates/h/c; vld slots are otherwise idle in this loop.
            gates = gx_buf[t] + jnp.dot(h.astype(jnp.bfloat16), whh_ref[layer],
                                        preferred_element_type=jnp.float32)
            i = jax.nn.sigmoid(gates[:, 0:H])
            f = jax.nn.sigmoid(gates[:, H:2 * H])
            g = jnp.tanh(gates[:, 2 * H:3 * H])
            o = jax.nn.sigmoid(gates[:, 3 * H:4 * H])
            c_new = f * c + i * g
            h_new = o * jnp.tanh(c_new)

            y = h_new
            if norm:
                # One-pass LayerNorm: both XLU reductions issue back-to-back.
                mu = jnp.mean(y, axis=-1, keepdims=True)
                ms = jnp.mean(y * y, axis=-1, keepdims=True)
                var = ms - mu * mu
                y = (y - mu) * jax.lax.rsqrt(var + 1e-5)
                y = y * gamma_l + beta_l
            # TODO(synk): nn.Dropout(0.5) is identity here (eval semantics); training-mode
            # dropout would use pltpu.prng_seed / pltpu.prng_random_bits masking.
            y = jnp.maximum(y, 0.0)                               # ReLU
            if residual:
                y = y + x_ref[t]                                  # + embedding residual
            seq_buf[t] = y.astype(seq_dtype)                      # bf16 store when aligned
            return h_new, c_new

        h0 = jnp.zeros((bB, H), jnp.float32)
        c0 = jnp.zeros((bB, H), jnp.float32)
        jax.lax.fori_loop(0, T, step, (h0, c0), unroll=unroll)

    # ---- fused final Linear on the last time step only (no (T,B,H) HBM writeback) ----
    h_last = seq_buf[T - 1].astype(jnp.bfloat16)                  # (bB, H)
    out_ref[...] = (
        jnp.dot(h_last, fcw_ref[...], preferred_element_type=jnp.float32)
        + fcb_ref[...]
    )


# ---------------------------------------------------------------------------
# Wrapper helpers
# ---------------------------------------------------------------------------
def _replicated(shape):
    n = len(shape)
    # TODO(synk): at production H, single-buffer these constant-index weight specs
    # (pipeline_mode=pl.Buffered(1)) to save VMEM on v7x; negligible at H=128.
    return pl.BlockSpec(shape, lambda b, n=n: (0,) * n)


def _pick_batch_block(B, max_rows=256):
    """Batch rows per grid step.

    Targets: (a) many LHS rows (up to 256) to fill the MXU, (b) multiples of 16 so the
    bf16 sequence scratch stays tile-aligned, (c) >= 2 grid steps when B allows so
    v7x's second TensorCore gets work.
    """
    if B <= 16:
        return B
    divs = []
    for quantum in (16, 8):
        divs = [d for d in range(quantum, min(B, max_rows) + 1, quantum) if B % d == 0]
        if divs:
            break
    if not divs:
        return B
    bB = max(divs)
    if bB == B:                          # keep >= 2 grid blocks for the 2nd TC if possible
        smaller = [d for d in divs if d <= B // 2]
        if smaller:
            bB = max(smaller)
    return bB


def _vmem_limit_bytes():
    # ~48 MiB on v7x (64 MiB physical), ~96 MiB on v5e/v6e (128 MiB physical).
    cap = None
    try:
        cap = getattr(pltpu.get_tpu_info(), "vmem_capacity_bytes", None)
    except Exception:
        cap = None
    if not cap:
        cap = 64 * 1024 * 1024           # conservative fallback
    return int(min(cap * 3 // 4, 100 * 1024 * 1024))


# ---------------------------------------------------------------------------
# Wrapper
# ---------------------------------------------------------------------------
def rnn_forward_pallas(tokens, params, *, norm, residual):
    # tokens: (B, T) int32
    emb = jnp.take(params["embedding"], tokens, axis=0)           # (B, T, E) — glue gather
    x = jnp.transpose(emb, (1, 0, 2)).astype(jnp.float32)         # time-major (T, B, E)
    T, B, E = x.shape
    L, H, _ = params["whh_all"].shape
    O = params["fc_w_t"].shape[1]
    if residual:
        assert E == H, "residual path requires embedding_dim == hidden_dim"

    bB = _pick_batch_block(B)
    assert B % bB == 0

    # bf16 sequence scratch only when the batch block matches the bf16 sublane packing
    # (16) so per-step stores and the chunk reshape stay tile-aligned; else f32 fallback.
    seq_dtype = jnp.bfloat16 if bB % 16 == 0 else jnp.float32
    # Stream the input projection in ~128-row chunks (one full MXU push group).
    t_chunk = max(1, min(T, max(1, 128 // bB)))
    unroll = True if T <= 16 else 8

    wih = params["wih_all"].astype(jnp.bfloat16)                  # (L, E, 4H)
    whh = params["whh_all"].astype(jnp.bfloat16)                  # (L, H, 4H)
    fcw = params["fc_w_t"].astype(jnp.bfloat16)                   # (H, O)

    kernel = functools.partial(_rnn_kernel, norm=norm, residual=residual,
                               t_chunk=t_chunk, unroll=unroll)

    return pl.pallas_call(
        kernel,
        out_shape=jax.ShapeDtypeStruct((B, O), jnp.float32),
        grid_spec=pltpu.PrefetchScalarGridSpec(
            num_scalar_prefetch=0,
            grid=(B // bB,),
            in_specs=[
                pl.BlockSpec((T, bB, E), lambda b: (0, b, 0)),    # x / residual
                _replicated((L, E, 4 * H)),                       # W_ih (bf16)
                _replicated((L, H, 4 * H)),                       # W_hh (bf16)
                _replicated((L, 1, 4 * H)),                       # bias
                _replicated((L, 1, H)),                           # LayerNorm gamma
                _replicated((L, 1, H)),                           # LayerNorm beta
                _replicated((H, O)),                              # fc weight (bf16)
                _replicated((1, O)),                              # fc bias
            ],
            out_specs=pl.BlockSpec((bB, O), lambda b: (b, 0)),
            scratch_shapes=[
                pltpu.VMEM((T, bB, H), seq_dtype),                # layer output sequence
                pltpu.VMEM((T, bB, 4 * H), jnp.float32),          # hoisted gates_x
            ],
        ),
        compiler_params=pltpu.CompilerParams(
            dimension_semantics=("parallel",),                    # batch blocks -> 2 TCs on v7x
            vmem_limit_bytes=_vmem_limit_bytes(),
        ),
    )(x, wih, whh, params["b_all"], params["gamma_all"], params["beta_all"],
      fcw, params["fc_b"])


# ---------------------------------------------------------------------------
# Pure-JAX reference (mirrors the PyTorch forward, eval-mode dropout).
# matmul_dtype=bf16 matches the kernel's mixed-precision MXU path;
# matmul_dtype=f32 is the exact PyTorch-semantics sanity check.
# ---------------------------------------------------------------------------
def rnn_forward_ref(tokens, params, *, norm, residual, matmul_dtype=jnp.bfloat16):
    emb = jnp.take(params["embedding"], tokens, axis=0)           # (B, T, E)
    B = emb.shape[0]
    L, H, _ = params["whh_all"].shape
    res = emb
    out = emb
    for l in range(L):
        wih = params["wih_all"][l].astype(matmul_dtype)
        whh = params["whh_all"][l].astype(matmul_dtype)
        bias = params["b_all"][l][0]
        gx = jnp.dot(out.astype(matmul_dtype), wih,
                     preferred_element_type=jnp.float32) + bias   # (B, T, 4H)

        def step(carry, gx_t, whh=whh):
            h, c = carry
            gates = gx_t + jnp.dot(h.astype(matmul_dtype), whh,
                                   preferred_element_type=jnp.float32)
            i = jax.nn.sigmoid(gates[:, 0:H])
            f = jax.nn.sigmoid(gates[:, H:2 * H])
            g = jnp.tanh(gates[:, 2 * H:3 * H])
            o = jax.nn.sigmoid(gates[:, 3 * H:4 * H])
            c = f * c + i * g
            h = o * jnp.tanh(c)
            return (h, c), h

        _, hs = jax.lax.scan(
            step,
            (jnp.zeros((B, H), jnp.float32), jnp.zeros((B, H), jnp.float32)),
            jnp.transpose(gx, (1, 0, 2)),
        )
        y = jnp.transpose(hs, (1, 0, 2))
        if norm:
            mu = y.mean(-1, keepdims=True)
            var = jnp.square(y - mu).mean(-1, keepdims=True)
            y = (y - mu) * jax.lax.rsqrt(var + 1e-5)
            y = y * params["gamma_all"][l][0] + params["beta_all"][l][0]
        y = jnp.maximum(y, 0.0)
        if residual:
            y = y + res
        out = y
    h_last = out[:, -1, :]
    return jnp.dot(h_last.astype(matmul_dtype), params["fc_w_t"].astype(matmul_dtype),
                   preferred_element_type=jnp.float32) + params["fc_b"][0]


# ---------------------------------------------------------------------------
# Deterministic parameter init (stacked per-layer weights)
# ---------------------------------------------------------------------------
def init_params(key, vocab_size, n_layers, embedding_dim, hidden_dim, output_dim):
    E, H, O = embedding_dim, hidden_dim, output_dim
    keys = jax.random.split(key, 1 + 4 * n_layers + 2)
    k_it = iter(keys)
    scale = 1.0 / np.sqrt(H)
    embedding = jax.random.normal(next(k_it), (vocab_size, E), jnp.float32) * 0.1
    wih_all, whh_all, b_all, gamma_all, beta_all = [], [], [], [], []
    for _ in range(n_layers):
        wih = jax.random.uniform(next(k_it), (4 * H, E), jnp.float32, -scale, scale)
        whh = jax.random.uniform(next(k_it), (4 * H, H), jnp.float32, -scale, scale)
        b_ih = jax.random.uniform(next(k_it), (4 * H,), jnp.float32, -scale, scale)
        b_hh = jax.random.uniform(next(k_it), (4 * H,), jnp.float32, -scale, scale)
        wih_all.append(wih.T)                          # (E, 4H)
        whh_all.append(whh.T)                          # (H, 4H)
        b_all.append((b_ih + b_hh)[None, :])           # (1, 4H)
        gamma_all.append(jnp.ones((1, H), jnp.float32))
        beta_all.append(jnp.zeros((1, H), jnp.float32))
    fc_w = jax.random.uniform(next(k_it), (O, H), jnp.float32, -scale, scale)
    fc_b = jax.random.uniform(next(k_it), (O,), jnp.float32, -scale, scale)
    return {
        "embedding": embedding,
        "wih_all": jnp.stack(wih_all),                 # (L, E, 4H)
        "whh_all": jnp.stack(whh_all),                 # (L, H, 4H)
        "b_all": jnp.stack(b_all),                     # (L, 1, 4H)
        "gamma_all": jnp.stack(gamma_all),             # (L, 1, H)
        "beta_all": jnp.stack(beta_all),               # (L, 1, H)
        "fc_w_t": fc_w.T,                              # (H, O)
        "fc_b": fc_b[None, :],                         # (1, O)
    }


# ---------------------------------------------------------------------------
# Main
# ---------------------------------------------------------------------------
if __name__ == "__main__":
    VOCAB = 50
    N_LAYERS = 2
    EMB = 128        # lane-aligned (multiple of 128); residual requires EMB == HID
    HID = 128
    OUT = 5
    B, T = 32, 8     # bB=16 (bf16-tile aligned), grid=(2,) -> both v7x TCs get work
    NORM = True
    DROPOUT = False  # eval-mode identity either way
    RESIDUAL = True

    key = jax.random.PRNGKey(0)
    k_params, k_tok = jax.random.split(key)
    params = init_params(k_params, VOCAB, N_LAYERS, EMB, HID, OUT)
    tokens = jax.random.randint(k_tok, (B, T), 0, VOCAB, dtype=jnp.int32)

    fwd = jax.jit(functools.partial(rnn_forward_pallas, norm=NORM, residual=RESIDUAL))
    out = fwd(tokens, params)
    jax.block_until_ready(out)

    # Precision-matched reference (bf16 MXU operands, f32 accumulation): tight tolerance.
    ref_bf16 = rnn_forward_ref(tokens, params, norm=NORM, residual=RESIDUAL,
                               matmul_dtype=jnp.bfloat16)
    np.testing.assert_allclose(np.asarray(out), np.asarray(ref_bf16), rtol=2e-3, atol=2e-3)

    # Full-f32 PyTorch-semantics reference: loose tolerance (bf16 matmul rounding only).
    ref_f32 = rnn_forward_ref(tokens, params, norm=NORM, residual=RESIDUAL,
                              matmul_dtype=jnp.float32)
    np.testing.assert_allclose(np.asarray(out), np.asarray(ref_f32), rtol=5e-2, atol=5e-2)

    assert out.shape == (B, OUT)
    print("KERNEL_OK")
</pallas_src>

<mosaic_0001>
module attributes {stable_mosaic.version = 11 : i64} {
  func.func @_rnn_kernel(%arg0: i32, %arg1: memref<8x16x128xf32, #tpu.memory_space<vmem>>, %arg2: memref<2x128x512xbf16, #tpu.memory_space<vmem>>, %arg3: memref<2x128x512xbf16, #tpu.memory_space<vmem>>, %arg4: memref<2x1x512xf32, #tpu.memory_space<vmem>>, %arg5: memref<2x1x128xf32, #tpu.memory_space<vmem>>, %arg6: memref<2x1x128xf32, #tpu.memory_space<vmem>>, %arg7: memref<128x5xbf16, #tpu.memory_space<vmem>>, %arg8: memref<1x5xf32, #tpu.memory_space<vmem>>, %arg9: memref<16x5xf32, #tpu.memory_space<vmem>>, %arg10: memref<8x16x128xbf16, #tpu.memory_space<vmem>>, %arg11: memref<8x16x512xf32, #tpu.memory_space<vmem>>) attributes {dimension_semantics = [#tpu.dimension_semantics<parallel>], iteration_bounds = array<i64: 2>, scalar_prefetch = 0 : i64, scratch_operands = 2 : i64, tpu.core_type = #tpu.core_type<tc>, window_params = [{transform_indices = @transform_0, window_bounds = array<i64: 8, 16, 128>}, {pipeline_mode = #tpu.pipeline_mode<synchronous>, transform_indices = @transform_1, window_bounds = array<i64: 2, 128, 512>}, {pipeline_mode = #tpu.pipeline_mode<synchronous>, transform_indices = @transform_2, window_bounds = array<i64: 2, 128, 512>}, {pipeline_mode = #tpu.pipeline_mode<synchronous>, transform_indices = @transform_3, window_bounds = array<i64: 2, 1, 512>}, {pipeline_mode = #tpu.pipeline_mode<synchronous>, transform_indices = @transform_4, window_bounds = array<i64: 2, 1, 128>}, {pipeline_mode = #tpu.pipeline_mode<synchronous>, transform_indices = @transform_5, window_bounds = array<i64: 2, 1, 128>}, {pipeline_mode = #tpu.pipeline_mode<synchronous>, transform_indices = @transform_6, window_bounds = array<i64: 128, 5>}, {pipeline_mode = #tpu.pipeline_mode<synchronous>, transform_indices = @transform_7, window_bounds = array<i64: 1, 5>}, {transform_indices = @transform_8, window_bounds = array<i64: 16, 5>}]} {
    %c0 = arith.constant 0 : index
    %c0_0 = arith.constant 0 : index
    %c0_1 = arith.constant 0 : index
    %0 = vector.load %arg4[%c0, %c0_0, %c0_1] : memref<2x1x512xf32, #tpu.memory_space<vmem>>, vector<1x1x512xf32>
    %1 = vector.shape_cast %0 : vector<1x1x512xf32> to vector<1x512xf32>
    %c0_2 = arith.constant 0 : index
    %c0_3 = arith.constant 0 : index
    %c0_4 = arith.constant 0 : index
    %2 = vector.load %arg1[%c0_2, %c0_3, %c0_4] : memref<8x16x128xf32, #tpu.memory_space<vmem>>, vector<8x16x128xf32>
    %3 = vector.shape_cast %2 : vector<8x16x128xf32> to vector<128x128xf32>
    %4 = arith.truncf %3 : vector<128x128xf32> to vector<128x128xbf16>
    %c0_5 = arith.constant 0 : index
    %c0_6 = arith.constant 0 : index
    %c0_7 = arith.constant 0 : index
    %5 = vector.load %arg2[%c0_5, %c0_6, %c0_7] : memref<2x128x512xbf16, #tpu.memory_space<vmem>>, vector<1x128x512xbf16>
    %6 = vector.shape_cast %5 : vector<1x128x512xbf16> to vector<128x512xbf16>
    %cst = arith.constant dense<0.000000e+00> : vector<128x512xf32>
    %7 = tpu.matmul %4, %6, %cst {dimension_numbers = #tpu.dot_dimension_numbers<[1], [0], [0], [1], [0, 0, 1, 1], [], []>} : vector<128x128xbf16>, vector<128x512xbf16>, vector<128x512xf32> -> vector<128x512xf32>
    %8 = vector.shape_cast %7 : vector<128x512xf32> to vector<8x16x512xf32>
    %9 = vector.shape_cast %1 : vector<1x512xf32> to vector<1x1x512xf32>
    %10 = vector.broadcast %9 : vector<1x1x512xf32> to vector<8x16x512xf32>
    %11 = arith.addf %8, %10 : vector<8x16x512xf32>
    %c0_8 = arith.constant 0 : index
    %c0_9 = arith.constant 0 : index
    %c0_10 = arith.constant 0 : index
    %12 = vector.load %arg11[%c0_8, %c0_9, %c0_10] : memref<8x16x512xf32, #tpu.memory_space<vmem>>, vector<8x16x512xf32>
    tpu.vector_store %arg11[%c0_8, %c0_9, %c0_10], %11 {strides = array<i32>} : memref<8x16x512xf32, #tpu.memory_space<vmem>>, vector<8x16x512xf32>,
    %c0_11 = arith.constant 0 : index
    %c0_12 = arith.constant 0 : index
    %c0_13 = arith.constant 0 : index
    %13 = vector.load %arg5[%c0_11, %c0_12, %c0_13] : memref<2x1x128xf32, #tpu.memory_space<vmem>>, vector<1x1x128xf32>
    %14 = vector.shape_cast %13 : vector<1x1x128xf32> to vector<1x128xf32>
    %15 = vector.shape_cast %14 : vector<1x128xf32> to vector<1x128xf32>
    %16 = vector.broadcast %15 : vector<1x128xf32> to vector<16x128xf32>
    %c0_14 = arith.constant 0 : index
    %c0_15 = arith.constant 0 : index
    %c0_16 = arith.constant 0 : index
    %17 = vector.load %arg6[%c0_14, %c0_15, %c0_16] : memref<2x1x128xf32, #tpu.memory_space<vmem>>, vector<1x1x128xf32>
    %18 = vector.shape_cast %17 : vector<1x1x128xf32> to vector<1x128xf32>
    %19 = vector.shape_cast %18 : vector<1x128xf32> to vector<1x128xf32>
    %20 = vector.broadcast %19 : vector<1x128xf32> to vector<16x128xf32>
    %cst_17 = arith.constant 0.000000e+00 : f32
    %21 = vector.broadcast %cst_17 : f32 to vector<16x128xf32>
    %cst_18 = arith.constant 0.000000e+00 : f32
    %22 = vector.broadcast %cst_18 : f32 to vector<16x128xf32>
    %c0_i32 = arith.constant 0 : i32
    %23 = arith.index_cast %c0_i32 : i32 to index
    %c0_19 = arith.constant 0 : index
    %c0_20 = arith.constant 0 : index
    %24 = vector.load %arg11[%23, %c0_19, %c0_20] : memref<8x16x512xf32, #tpu.memory_space<vmem>>, vector<1x16x512xf32>
    %25 = vector.shape_cast %24 : vector<1x16x512xf32> to vector<16x512xf32>
    %26 = arith.truncf %21 : vector<16x128xf32> to vector<16x128xbf16>
    %c0_21 = arith.constant 0 : index
    %c0_22 = arith.constant 0 : index
    %c0_23 = arith.constant 0 : index
    %27 = vector.load %arg3[%c0_21, %c0_22, %c0_23] : memref<2x128x512xbf16, #tpu.memory_space<vmem>>, vector<1x128x512xbf16>
    %28 = vector.shape_cast %27 : vector<1x128x512xbf16> to vector<128x512xbf16>
    %cst_24 = arith.constant dense<0.000000e+00> : vector<16x512xf32>
    %29 = tpu.matmul %26, %28, %cst_24 {dimension_numbers = #tpu.dot_dimension_numbers<[1], [0], [0], [1], [0, 0, 1, 1], [], []>} : vector<16x128xbf16>, vector<128x512xbf16>, vector<16x512xf32> -> vector<16x512xf32>
    %30 = arith.addf %25, %29 : vector<16x512xf32>
    %31 = vector.extract_strided_slice %30 {offsets = [0, 0], sizes = [16, 128], strides = [1, 1]} : vector<16x512xf32> to vector<16x128xf32>
    %32 = arith.negf %31 : vector<16x128xf32>
    %33 = math.exp %32 : vector<16x128xf32>
    %cst_25 = arith.constant 1.000000e+00 : f32
    %34 = vector.broadcast %cst_25 : f32 to vector<16x128xf32>
    %35 = arith.addf %34, %33 : vector<16x128xf32>
    %36 = arith.divf %34, %35 : vector<16x128xf32>
    %37 = vector.extract_strided_slice %30 {offsets = [0, 128], sizes = [16, 128], strides = [1, 1]} : vector<16x512xf32> to vector<16x128xf32>
    %38 = arith.negf %37 : vector<16x128xf32>
    %39 = math.exp %38 : vector<16x128xf32>
    %cst_26 = arith.constant 1.000000e+00 : f32
    %40 = vector.broadcast %cst_26 : f32 to vector<16x128xf32>
    %41 = arith.addf %40, %39 : vector<16x128xf32>
    %42 = arith.divf %40, %41 : vector<16x128xf32>
    %43 = vector.extract_strided_slice %30 {offsets = [0, 256], sizes = [16, 128], strides = [1, 1]} : vector<16x512xf32> to vector<16x128xf32>
    %44 = math.tanh %43 : vector<16x128xf32>
    %45 = vector.extract_strided_slice %30 {offsets = [0, 384], sizes = [16, 128], strides = [1, 1]} : vector<16x512xf32> to vector<16x128xf32>
    %46 = arith.negf %45 : vector<16x128xf32>
    %47 = math.exp %46 : vector<16x128xf32>
    %cst_27 = arith.constant 1.000000e+00 : f32
    %48 = vector.broadcast %cst_27 : f32 to vector<16x128xf32>
    %49 = arith.addf %48, %47 : vector<16x128xf32>
    %50 = arith.divf %48, %49 : vector<16x128xf32>
    %51 = arith.mulf %42, %22 : vector<16x128xf32>
    %52 = arith.mulf %36, %44 : vector<16x128xf32>
    %53 = arith.addf %51, %52 : vector<16x128xf32>
    %54 = math.tanh %53 : vector<16x128xf32>
    %55 = arith.mulf %50, %54 : vector<16x128xf32>
    %cst_28 = arith.constant dense<0.000000e+00> : vector<16xf32>
    %56 = vector.multi_reduction <add>, %55, %cst_28 [1] : vector<16x128xf32> to vector<16xf32>
    %57 = vector.shape_cast %56 : vector<16xf32> to vector<16x1xf32>
    %cst_29 = arith.constant 1.280000e+02 : f32
    %58 = vector.broadcast %cst_29 : f32 to vector<16x1xf32>
    %59 = arith.divf %57, %58 : vector<16x1xf32>
    %60 = arith.mulf %55, %55 : vector<16x128xf32>
    %cst_30 = arith.constant dense<0.000000e+00> : vector<16xf32>
    %61 = vector.multi_reduction <add>, %60, %cst_30 [1] : vector<16x128xf32> to vector<16xf32>
    %62 = vector.shape_cast %61 : vector<16xf32> to vector<16x1xf32>
    %cst_31 = arith.constant 1.280000e+02 : f32
    %63 = vector.broadcast %cst_31 : f32 to vector<16x1xf32>
    %64 = arith.divf %62, %63 : vector<16x1xf32>
    %65 = arith.mulf %59, %59 : vector<16x1xf32>
    %66 = arith.subf %64, %65 : vector<16x1xf32>
    %67 = vector.broadcast %59 : vector<16x1xf32> to vector<16x128xf32>
    %68 = arith.subf %55, %67 : vector<16x128xf32>
    %cst_32 = arith.constant 9.99999974E-6 : f32
    %69 = vector.broadcast %cst_32 : f32 to vector<16x1xf32>
    %70 = arith.addf %66, %69 : vector<16x1xf32>
    %71 = math.rsqrt %70 : vector<16x1xf32>
    %72 = vector.broadcast %71 : vector<16x1xf32> to vector<16x128xf32>
    %73 = arith.mulf %68, %72 : vector<16x128xf32>
    %74 = arith.mulf %73, %16 : vector<16x128xf32>
    %75 = arith.addf %74, %20 : vector<16x128xf32>
    %cst_33 = arith.constant 0.000000e+00 : f32
    %76 = vector.broadcast %cst_33 : f32 to vector<16x128xf32>
    %77 = arith.maximumf %75, %76 : vector<16x128xf32>
    %78 = arith.index_cast %c0_i32 : i32 to index
    %c0_34 = arith.constant 0 : index
    %c0_35 = arith.constant 0 : index
    %79 = vector.load %arg1[%78, %c0_34, %c0_35] : memref<8x16x128xf32, #tpu.memory_space<vmem>>, vector<1x16x128xf32>
    %80 = vector.shape_cast %79 : vector<1x16x128xf32> to vector<16x128xf32>
    %81 = arith.addf %77, %80 : vector<16x128xf32>
    %82 = arith.truncf %81 : vector<16x128xf32> to vector<16x128xbf16>
    %83 = arith.index_cast %c0_i32 : i32 to index
    %c0_36 = arith.constant 0 : index
    %c0_37 = arith.constant 0 : index
    %84 = vector.load %arg10[%83, %c0_36, %c0_37] : memref<8x16x128xbf16, #tpu.memory_space<vmem>>, vector<1x16x128xbf16>
    %85 = vector.shape_cast %84 : vector<1x16x128xbf16> to vector<16x128xbf16>
    %86 = vector.shape_cast %82 : vector<16x128xbf16> to vector<1x16x128xbf16>
    tpu.vector_store %arg10[%83, %c0_36, %c0_37], %86 {strides = array<i32>} : memref<8x16x128xbf16, #tpu.memory_space<vmem>>, vector<1x16x128xbf16>,
    %c1_i32 = arith.constant 1 : i32
    %87 = arith.index_cast %c1_i32 : i32 to index
    %c0_38 = arith.constant 0 : index
    %c0_39 = arith.constant 0 : index
    %88 = vector.load %arg11[%87, %c0_38, %c0_39] : memref<8x16x512xf32, #tpu.memory_space<vmem>>, vector<1x16x512xf32>
    %89 = vector.shape_cast %88 : vector<1x16x512xf32> to vector<16x512xf32>
    %90 = arith.truncf %55 : vector<16x128xf32> to vector<16x128xbf16>
    %c0_40 = arith.constant 0 : index
    %c0_41 = arith.constant 0 : index
    %c0_42 = arith.constant 0 : index
    %91 = vector.load %arg3[%c0_40, %c0_41, %c0_42] : memref<2x128x512xbf16, #tpu.memory_space<vmem>>, vector<1x128x512xbf16>
    %92 = vector.shape_cast %91 : vector<1x128x512xbf16> to vector<128x512xbf16>
    %cst_43 = arith.constant dense<0.000000e+00> : vector<16x512xf32>
    %93 = tpu.matmul %90, %92, %cst_43 {dimension_numbers = #tpu.dot_dimension_numbers<[1], [0], [0], [1], [0, 0, 1, 1], [], []>} : vector<16x128xbf16>, vector<128x512xbf16>, vector<16x512xf32> -> vector<16x512xf32>
    %94 = arith.addf %89, %93 : vector<16x512xf32>
    %95 = vector.extract_strided_slice %94 {offsets = [0, 0], sizes = [16, 128], strides = [1, 1]} : vector<16x512xf32> to vector<16x128xf32>
    %96 = arith.negf %95 : vector<16x128xf32>
    %97 = math.exp %96 : vector<16x128xf32>
    %cst_44 = arith.constant 1.000000e+00 : f32
    %98 = vector.broadcast %cst_44 : f32 to vector<16x128xf32>
    %99 = arith.addf %98, %97 : vector<16x128xf32>
    %100 = arith.divf %98, %99 : vector<16x128xf32>
    %101 = vector.extract_strided_slice %94 {offsets = [0, 128], sizes = [16, 128], strides = [1, 1]} : vector<16x512xf32> to vector<16x128xf32>
    %102 = arith.negf %101 : vector<16x128xf32>
    %103 = math.exp %102 : vector<16x128xf32>
    %cst_45 = arith.constant 1.000000e+00 : f32
    %104 = vector.broadcast %cst_45 : f32 to vector<16x128xf32>
    %105 = arith.addf %104, %103 : vector<16x128xf32>
    %106 = arith.divf %104, %105 : vector<16x128xf32>
    %107 = vector.extract_strided_slice %94 {offsets = [0, 256], sizes = [16, 128], strides = [1, 1]} : vector<16x512xf32> to vector<16x128xf32>
    %108 = math.tanh %107 : vector<16x128xf32>
    %109 = vector.extract_strided_slice %94 {offsets = [0, 384], sizes = [16, 128], strides = [1, 1]} : vector<16x512xf32> to vector<16x128xf32>
    %110 = arith.negf %109 : vector<16x128xf32>
    %111 = math.exp %110 : vector<16x128xf32>
    %cst_46 = arith.constant 1.000000e+00 : f32
    %112 = vector.broadcast %cst_46 : f32 to vector<16x128xf32>
    %113 = arith.addf %112, %111 : vector<16x128xf32>
    %114 = arith.divf %112, %113 : vector<16x128xf32>
    %115 = arith.mulf %106, %53 : vector<16x128xf32>
    %116 = arith.mulf %100, %108 : vector<16x128xf32>
    %117 = arith.addf %115, %116 : vector<16x128xf32>
    %118 = math.tanh %117 : vector<16x128xf32>
    %119 = arith.mulf %114, %118 : vector<16x128xf32>
    %cst_47 = arith.constant dense<0.000000e+00> : vector<16xf32>
    %120 = vector.multi_reduction <add>, %119, %cst_47 [1] : vector<16x128xf32> to vector<16xf32>
    %121 = vector.shape_cast %120 : vector<16xf32> to vector<16x1xf32>
    %cst_48 = arith.constant 1.280000e+02 : f32
    %122 = vector.broadcast %cst_48 : f32 to vector<16x1xf32>
    %123 = arith.divf %121, %122 : vector<16x1xf32>
    %124 = arith.mulf %119, %119 : vector<16x128xf32>
    %cst_49 = arith.constant dense<0.000000e+00> : vector<16xf32>
    %125 = vector.multi_reduction <add>, %124, %cst_49 [1] : vector<16x128xf32> to vector<16xf32>
    %126 = vector.shape_cast %125 : vector<16xf32> to vector<16x1xf32>
    %cst_50 = arith.constant 1.280000e+02 : f32
    %127 = vector.broadcast %cst_50 : f32 to vector<16x1xf32>
    %128 = arith.divf %126, %127 : vector<16x1xf32>
    %129 = arith.mulf %123, %123 : vector<16x1xf32>
    %130 = arith.subf %128, %129 : vector<16x1xf32>
    %131 = vector.broadcast %123 : vector<16x1xf32> to vector<16x128xf32>
    %132 = arith.subf %119, %131 : vector<16x128xf32>
    %cst_51 = arith.constant 9.99999974E-6 : f32
    %133 = vector.broadcast %cst_51 : f32 to vector<16x1xf32>
    %134 = arith.addf %130, %133 : vector<16x1xf32>
    %135 = math.rsqrt %134 : vector<16x1xf32>
    %136 = vector.broadcast %135 : vector<16x1xf32> to vector<16x128xf32>
    %137 = arith.mulf %132, %136 : vector<16x128xf32>
    %138 = arith.mulf %137, %16 : vector<16x128xf32>
    %139 = arith.addf %138, %20 : vector<16x128xf32>
    %cst_52 = arith.constant 0.000000e+00 : f32
    %140 = vector.broadcast %cst_52 : f32 to vector<16x128xf32>
    %141 = arith.maximumf %139, %140 : vector<16x128xf32>
    %142 = arith.index_cast %c1_i32 : i32 to index
    %c0_53 = arith.constant 0 : index
    %c0_54 = arith.constant 0 : index
    %143 = vector.load %arg1[%142, %c0_53, %c0_54] : memref<8x16x128xf32, #tpu.memory_space<vmem>>, vector<1x16x128xf32>
    %144 = vector.shape_cast %143 : vector<1x16x128xf32> to vector<16x128xf32>
    %145 = arith.addf %141, %144 : vector<16x128xf32>
    %146 = arith.truncf %145 : vector<16x128xf32> to vector<16x128xbf16>
    %147 = arith.index_cast %c1_i32 : i32 to index
    %c0_55 = arith.constant 0 : index
    %c0_56 = arith.constant 0 : index
    %148 = vector.load %arg10[%147, %c0_55, %c0_56] : memref<8x16x128xbf16, #tpu.memory_space<vmem>>, vector<1x16x128xbf16>
    %149 = vector.shape_cast %148 : vector<1x16x128xbf16> to vector<16x128xbf16>
    %150 = vector.shape_cast %146 : vector<16x128xbf16> to vector<1x16x128xbf16>
    tpu.vector_store %arg10[%147, %c0_55, %c0_56], %150 {strides = array<i32>} : memref<8x16x128xbf16, #tpu.memory_space<vmem>>, vector<1x16x128xbf16>,
    %c2_i32 = arith.constant 2 : i32
    %151 = arith.index_cast %c2_i32 : i32 to index
    %c0_57 = arith.constant 0 : index
    %c0_58 = arith.constant 0 : index
    %152 = vector.load %arg11[%151, %c0_57, %c0_58] : memref<8x16x512xf32, #tpu.memory_space<vmem>>, vector<1x16x512xf32>
    %153 = vector.shape_cast %152 : vector<1x16x512xf32> to vector<16x512xf32>
    %154 = arith.truncf %119 : vector<16x128xf32> to vector<16x128xbf16>
    %c0_59 = arith.constant 0 : index
    %c0_60 = arith.constant 0 : index
    %c0_61 = arith.constant 0 : index
    %155 = vector.load %arg3[%c0_59, %c0_60, %c0_61] : memref<2x128x512xbf16, #tpu.memory_space<vmem>>, vector<1x128x512xbf16>
    %156 = vector.shape_cast %155 : vector<1x128x512xbf16> to vector<128x512xbf16>
    %cst_62 = arith.constant dense<0.000000e+00> : vector<16x512xf32>
    %157 = tpu.matmul %154, %156, %cst_62 {dimension_numbers = #tpu.dot_dimension_numbers<[1], [0], [0], [1], [0, 0, 1, 1], [], []>} : vector<16x128xbf16>, vector<128x512xbf16>, vector<16x512xf32> -> vector<16x512xf32>
    %158 = arith.addf %153, %157 : vector<16x512xf32>
    %159 = vector.extract_strided_slice %158 {offsets = [0, 0], sizes = [16, 128], strides = [1, 1]} : vector<16x512xf32> to vector<16x128xf32>
    %160 = arith.negf %159 : vector<16x128xf32>
    %161 = math.exp %160 : vector<16x128xf32>
    %cst_63 = arith.constant 1.000000e+00 : f32
    %162 = vector.broadcast %cst_63 : f32 to vector<16x128xf32>
    %163 = arith.addf %162, %161 : vector<16x128xf32>
    %164 = arith.divf %162, %163 : vector<16x128xf32>
    %165 = vector.extract_strided_slice %158 {offsets = [0, 128], sizes = [16, 128], strides = [1, 1]} : vector<16x512xf32> to vector<16x128xf32>
    %166 = arith.negf %165 : vector<16x128xf32>
    %167 = math.exp %166 : vector<16x128xf32>
    %cst_64 = arith.constant 1.000000e+00 : f32
    %168 = vector.broadcast %cst_64 : f32 to vector<16x128xf32>
    %169 = arith.addf %168, %167 : vector<16x128xf32>
    %170 = arith.divf %168, %169 : vector<16x128xf32>
    %171 = vector.extract_strided_slice %158 {offsets = [0, 256], sizes = [16, 128], strides = [1, 1]} : vector<16x512xf32> to vector<16x128xf32>
    %172 = math.tanh %171 : vector<16x128xf32>
    %173 = vector.extract_strided_slice %158 {offsets = [0, 384], sizes = [16, 128], strides = [1, 1]} : vector<16x512xf32> to vector<16x128xf32>
    %174 = arith.negf %173 : vector<16x128xf32>
    %175 = math.exp %174 : vector<16x128xf32>
    %cst_65 = arith.constant 1.000000e+00 : f32
    %176 = vector.broadcast %cst_65 : f32 to vector<16x128xf32>
    %177 = arith.addf %176, %175 : vector<16x128xf32>
    %178 = arith.divf %176, %177 : vector<16x128xf32>
    %179 = arith.mulf %170, %117 : vector<16x128xf32>
    %180 = arith.mulf %164, %172 : vector<16x128xf32>
    %181 = arith.addf %179, %180 : vector<16x128xf32>
    %182 = math.tanh %181 : vector<16x128xf32>
    %183 = arith.mulf %178, %182 : vector<16x128xf32>
    %cst_66 = arith.constant dense<0.000000e+00> : vector<16xf32>
    %184 = vector.multi_reduction <add>, %183, %cst_66 [1] : vector<16x128xf32> to vector<16xf32>
    %185 = vector.shape_cast %184 : vector<16xf32> to vector<16x1xf32>
    %cst_67 = arith.constant 1.280000e+02 : f32
    %186 = vector.broadcast %cst_67 : f32 to vector<16x1xf32>
    %187 = arith.divf %185, %186 : vector<16x1xf32>
    %188 = arith.mulf %183, %183 : vector<16x128xf32>
    %cst_68 = arith.constant dense<0.000000e+00> : vector<16xf32>
    %189 = vector.multi_reduction <add>, %188, %cst_68 [1] : vector<16x128xf32> to vector<16xf32>
    %190 = vector.shape_cast %189 : vector<16xf32> to vector<16x1xf32>
    %cst_69 = arith.constant 1.280000e+02 : f32
    %191 = vector.broadcast %cst_69 : f32 to vector<16x1xf32>
    %192 = arith.divf %190, %191 : vector<16x1xf32>
    %193 = arith.mulf %187, %187 : vector<16x1xf32>
    %194 = arith.subf %192, %193 : vector<16x1xf32>
    %195 = vector.broadcast %187 : vector<16x1xf32> to vector<16x128xf32>
    %196 = arith.subf %183, %195 : vector<16x128xf32>
    %cst_70 = arith.constant 9.99999974E-6 : f32
    %197 = vector.broadcast %cst_70 : f32 to vector<16x1xf32>
    %198 = arith.addf %194, %197 : vector<16x1xf32>
    %199 = math.rsqrt %198 : vector<16x1xf32>
    %200 = vector.broadcast %199 : vector<16x1xf32> to vector<16x128xf32>
    %201 = arith.mulf %196, %200 : vector<16x128xf32>
    %202 = arith.mulf %201, %16 : vector<16x128xf32>
    %203 = arith.addf %202, %20 : vector<16x128xf32>
    %cst_71 = arith.constant 0.000000e+00 : f32
    %204 = vector.broadcast %cst_71 : f32 to vector<16x128xf32>
    %205 = arith.maximumf %203, %204 : vector<16x128xf32>
    %206 = arith.index_cast %c2_i32 : i32 to index
    %c0_72 = arith.constant 0 : index
    %c0_73 = arith.constant 0 : index
    %207 = vector.load %arg1[%206, %c0_72, %c0_73] : memref<8x16x128xf32, #tpu.memory_space<vmem>>, vector<1x16x128xf32>
    %208 = vector.shape_cast %207 : vector<1x16x128xf32> to vector<16x128xf32>
    %209 = arith.addf %205, %208 : vector<16x128xf32>
    %210 = arith.truncf %209 : vector<16x128xf32> to vector<16x128xbf16>
    %211 = arith.index_cast %c2_i32 : i32 to index
    %c0_74 = arith.constant 0 : index
    %c0_75 = arith.constant 0 : index
    %212 = vector.load %arg10[%211, %c0_74, %c0_75] : memref<8x16x128xbf16, #tpu.memory_space<vmem>>, vector<1x16x128xbf16>
    %213 = vector.shape_cast %212 : vector<1x16x128xbf16> to vector<16x128xbf16>
    %214 = vector.shape_cast %210 : vector<16x128xbf16> to vector<1x16x128xbf16>
    tpu.vector_store %arg10[%211, %c0_74, %c0_75], %214 {strides = array<i32>} : memref<8x16x128xbf16, #tpu.memory_space<vmem>>, vector<1x16x128xbf16>,
    %c3_i32 = arith.constant 3 : i32
    %215 = arith.index_cast %c3_i32 : i32 to index
    %c0_76 = arith.constant 0 : index
    %c0_77 = arith.constant 0 : index
    %216 = vector.load %arg11[%215, %c0_76, %c0_77] : memref<8x16x512xf32, #tpu.memory_space<vmem>>, vector<1x16x512xf32>
    %217 = vector.shape_cast %216 : vector<1x16x512xf32> to vector<16x512xf32>
    %218 = arith.truncf %183 : vector<16x128xf32> to vector<16x128xbf16>
    %c0_78 = arith.constant 0 : index
    %c0_79 = arith.constant 0 : index
    %c0_80 = arith.constant 0 : index
    %219 = vector.load %arg3[%c0_78, %c0_79, %c0_80] : memref<2x128x512xbf16, #tpu.memory_space<vmem>>, vector<1x128x512xbf16>
    %220 = vector.shape_cast %219 : vector<1x128x512xbf16> to vector<128x512xbf16>
    %cst_81 = arith.constant dense<0.000000e+00> : vector<16x512xf32>
    %221 = tpu.matmul %218, %220, %cst_81 {dimension_numbers = #tpu.dot_dimension_numbers<[1], [0], [0], [1], [0, 0, 1, 1], [], []>} : vector<16x128xbf16>, vector<128x512xbf16>, vector<16x512xf32> -> vector<16x512xf32>
    %222 = arith.addf %217, %221 : vector<16x512xf32>
    %223 = vector.extract_strided_slice %222 {offsets = [0, 0], sizes = [16, 128], strides = [1, 1]} : vector<16x512xf32> to vector<16x128xf32>
    %224 = arith.negf %223 : vector<16x128xf32>
    %225 = math.exp %224 : vector<16x128xf32>
    %cst_82 = arith.constant 1.000000e+00 : f32
    %226 = vector.broadcast %cst_82 : f32 to vector<16x128xf32>
    %227 = arith.addf %226, %225 : vector<16x128xf32>
    %228 = arith.divf %226, %227 : vector<16x128xf32>
    %229 = vector.extract_strided_slice %222 {offsets = [0, 128], sizes = [16, 128], strides = [1, 1]} : vector<16x512xf32> to vector<16x128xf32>
    %230 = arith.negf %229 : vector<16x128xf32>
    %231 = math.exp %230 : vector<16x128xf32>
    %cst_83 = arith.constant 1.000000e+00 : f32
    %232 = vector.broadcast %cst_83 : f32 to vector<16x128xf32>
    %233 = arith.addf %232, %231 : vector<16x128xf32>
    %234 = arith.divf %232, %233 : vector<16x128xf32>
    %235 = vector.extract_strided_slice %222 {offsets = [0, 256], sizes = [16, 128], strides = [1, 1]} : vector<16x512xf32> to vector<16x128xf32>
    %236 = math.tanh %235 : vector<16x128xf32>
    %237 = vector.extract_strided_slice %222 {offsets = [0, 384], sizes = [16, 128], strides = [1, 1]} : vector<16x512xf32> to vector<16x128xf32>
    %238 = arith.negf %237 : vector<16x128xf32>
    %239 = math.exp %238 : vector<16x128xf32>
    %cst_84 = arith.constant 1.000000e+00 : f32
    %240 = vector.broadcast %cst_84 : f32 to vector<16x128xf32>
    %241 = arith.addf %240, %239 : vector<16x128xf32>
    %242 = arith.divf %240, %241 : vector<16x128xf32>
    %243 = arith.mulf %234, %181 : vector<16x128xf32>
    %244 = arith.mulf %228, %236 : vector<16x128xf32>
    %245 = arith.addf %243, %244 : vector<16x128xf32>
    %246 = math.tanh %245 : vector<16x128xf32>
    %247 = arith.mulf %242, %246 : vector<16x128xf32>
    %cst_85 = arith.constant dense<0.000000e+00> : vector<16xf32>
    %248 = vector.multi_reduction <add>, %247, %cst_85 [1] : vector<16x128xf32> to vector<16xf32>
    %249 = vector.shape_cast %248 : vector<16xf32> to vector<16x1xf32>
    %cst_86 = arith.constant 1.280000e+02 : f32
    %250 = vector.broadcast %cst_86 : f32 to vector<16x1xf32>
    %251 = arith.divf %249, %250 : vector<16x1xf32>
    %252 = arith.mulf %247, %247 : vector<16x128xf32>
    %cst_87 = arith.constant dense<0.000000e+00> : vector<16xf32>
    %253 = vector.multi_reduction <add>, %252, %cst_87 [1] : vector<16x128xf32> to vector<16xf32>
    %254 = vector.shape_cast %253 : vector<16xf32> to vector<16x1xf32>
    %cst_88 = arith.constant 1.280000e+02 : f32
    %255 = vector.broadcast %cst_88 : f32 to vector<16x1xf32>
    %256 = arith.divf %254, %255 : vector<16x1xf32>
    %257 = arith.mulf %251, %251 : vector<16x1xf32>
    %258 = arith.subf %256, %257 : vector<16x1xf32>
    %259 = vector.broadcast %251 : vector<16x1xf32> to vector<16x128xf32>
    %260 = arith.subf %247, %259 : vector<16x128xf32>
    %cst_89 = arith.constant 9.99999974E-6 : f32
    %261 = vector.broadcast %cst_89 : f32 to vector<16x1xf32>
    %262 = arith.addf %258, %261 : vector<16x1xf32>
    %263 = math.rsqrt %262 : vector<16x1xf32>
    %264 = vector.broadcast %263 : vector<16x1xf32> to vector<16x128xf32>
    %265 = arith.mulf %260, %264 : vector<16x128xf32>
    %266 = arith.mulf %265, %16 : vector<16x128xf32>
    %267 = arith.addf %266, %20 : vector<16x128xf32>
    %cst_90 = arith.constant 0.000000e+00 : f32
    %268 = vector.broadcast %cst_90 : f32 to vector<16x128xf32>
    %269 = arith.maximumf %267, %268 : vector<16x128xf32>
    %270 = arith.index_cast %c3_i32 : i32 to index
    %c0_91 = arith.constant 0 : index
    %c0_92 = arith.constant 0 : index
    %271 = vector.load %arg1[%270, %c0_91, %c0_92] : memref<8x16x128xf32, #tpu.memory_space<vmem>>, vector<1x16x128xf32>
    %272 = vector.shape_cast %271 : vector<1x16x128xf32> to vector<16x128xf32>
    %273 = arith.addf %269, %272 : vector<16x128xf32>
    %274 = arith.truncf %273 : vector<16x128xf32> to vector<16x128xbf16>
    %275 = arith.index_cast %c3_i32 : i32 to index
    %c0_93 = arith.constant 0 : index
    %c0_94 = arith.constant 0 : index
    %276 = vector.load %arg10[%275, %c0_93, %c0_94] : memref<8x16x128xbf16, #tpu.memory_space<vmem>>, vector<1x16x128xbf16>
    %277 = vector.shape_cast %276 : vector<1x16x128xbf16> to vector<16x128xbf16>
    %278 = vector.shape_cast %274 : vector<16x128xbf16> to vector<1x16x128xbf16>
    tpu.vector_store %arg10[%275, %c0_93, %c0_94], %278 {strides = array<i32>} : memref<8x16x128xbf16, #tpu.memory_space<vmem>>, vector<1x16x128xbf16>,
    %c4_i32 = arith.constant 4 : i32
    %279 = arith.index_cast %c4_i32 : i32 to index
    %c0_95 = arith.constant 0 : index
    %c0_96 = arith.constant 0 : index
    %280 = vector.load %arg11[%279, %c0_95, %c0_96] : memref<8x16x512xf32, #tpu.memory_space<vmem>>, vector<1x16x512xf32>
    %281 = vector.shape_cast %280 : vector<1x16x512xf32> to vector<16x512xf32>
    %282 = arith.truncf %247 : vector<16x128xf32> to vector<16x128xbf16>
    %c0_97 = arith.constant 0 : index
    %c0_98 = arith.constant 0 : index
    %c0_99 = arith.constant 0 : index
    %283 = vector.load %arg3[%c0_97, %c0_98, %c0_99] : memref<2x128x512xbf16, #tpu.memory_space<vmem>>, vector<1x128x512xbf16>
    %284 = vector.shape_cast %283 : vector<1x128x512xbf16> to vector<128x512xbf16>
    %cst_100 = arith.constant dense<0.000000e+00> : vector<16x512xf32>
    %285 = tpu.matmul %282, %284, %cst_100 {dimension_numbers = #tpu.dot_dimension_numbers<[1], [0], [0], [1], [0, 0, 1, 1], [], []>} : vector<16x128xbf16>, vector<128x512xbf16>, vector<16x512xf32> -> vector<16x512xf32>
    %286 = arith.addf %281, %285 : vector<16x512xf32>
    %287 = vector.extract_strided_slice %286 {offsets = [0, 0], sizes = [16, 128], strides = [1, 1]} : vector<16x512xf32> to vector<16x128xf32>
    %288 = arith.negf %287 : vector<16x128xf32>
    %289 = math.exp %288 : vector<16x128xf32>
    %cst_101 = arith.constant 1.000000e+00 : f32
    %290 = vector.broadcast %cst_101 : f32 to vector<16x128xf32>
    %291 = arith.addf %290, %289 : vector<16x128xf32>
    %292 = arith.divf %290, %291 : vector<16x128xf32>
    %293 = vector.extract_strided_slice %286 {offsets = [0, 128], sizes = [16, 128], strides = [1, 1]} : vector<16x512xf32> to vector<16x128xf32>
    %294 = arith.negf %293 : vector<16x128xf32>
    %295 = math.exp %294 : vector<16x128xf32>
    %cst_102 = arith.constant 1.000000e+00 : f32
    %296 = vector.broadcast %cst_102 : f32 to vector<16x128xf32>
    %297 = arith.addf %296, %295 : vector<16x128xf32>
    %298 = arith.divf %296, %297 : vector<16x128xf32>
    %299 = vector.extract_strided_slice %286 {offsets = [0, 256], sizes = [16, 128], strides = [1, 1]} : vector<16x512xf32> to vector<16x128xf32>
    %300 = math.tanh %299 : vector<16x128xf32>
    %301 = vector.extract_strided_slice %286 {offsets = [0, 384], sizes = [16, 128], strides = [1, 1]} : vector<16x512xf32> to vector<16x128xf32>
    %302 = arith.negf %301 : vector<16x128xf32>
    %303 = math.exp %302 : vector<16x128xf32>
    %cst_103 = arith.constant 1.000000e+00 : f32
    %304 = vector.broadcast %cst_103 : f32 to vector<16x128xf32>
    %305 = arith.addf %304, %303 : vector<16x128xf32>
    %306 = arith.divf %304, %305 : vector<16x128xf32>
    %307 = arith.mulf %298, %245 : vector<16x128xf32>
    %308 = arith.mulf %292, %300 : vector<16x128xf32>
    %309 = arith.addf %307, %308 : vector<16x128xf32>
    %310 = math.tanh %309 : vector<16x128xf32>
    %311 = arith.mulf %306, %310 : vector<16x128xf32>
    %cst_104 = arith.constant dense<0.000000e+00> : vector<16xf32>
    %312 = vector.multi_reduction <add>, %311, %cst_104 [1] : vector<16x128xf32> to vector<16xf32>
    %313 = vector.shape_cast %312 : vector<16xf32> to vector<16x1xf32>
    %cst_105 = arith.constant 1.280000e+02 : f32
    %314 = vector.broadcast %cst_105 : f32 to vector<16x1xf32>
    %315 = arith.divf %313, %314 : vector<16x1xf32>
    %316 = arith.mulf %311, %311 : vector<16x128xf32>
    %cst_106 = arith.constant dense<0.000000e+00> : vector<16xf32>
    %317 = vector.multi_reduction <add>, %316, %cst_106 [1] : vector<16x128xf32> to vector<16xf32>
    %318 = vector.shape_cast %317 : vector<16xf32> to vector<16x1xf32>
    %cst_107 = arith.constant 1.280000e+02 : f32
    %319 = vector.broadcast %cst_107 : f32 to vector<16x1xf32>
    %320 = arith.divf %318, %319 : vector<16x1xf32>
    %321 = arith.mulf %315, %315 : vector<16x1xf32>
    %322 = arith.subf %320, %321 : vector<16x1xf32>
    %323 = vector.broadcast %315 : vector<16x1xf32> to vector<16x128xf32>
    %324 = arith.subf %311, %323 : vector<16x128xf32>
    %cst_108 = arith.constant 9.99999974E-6 : f32
    %325 = vector.broadcast %cst_108 : f32 to vector<16x1xf32>
    %326 = arith.addf %322, %325 : vector<16x1xf32>
    %327 = math.rsqrt %326 : vector<16x1xf32>
    %328 = vector.broadcast %327 : vector<16x1xf32> to vector<16x128xf32>
    %329 = arith.mulf %324, %328 : vector<16x128xf32>
    %330 = arith.mulf %329, %16 : vector<16x128xf32>
    %331 = arith.addf %330, %20 : vector<16x128xf32>
    %cst_109 = arith.constant 0.000000e+00 : f32
    %332 = vector.broadcast %cst_109 : f32 to vector<16x128xf32>
    %333 = arith.maximumf %331, %332 : vector<16x128xf32>
    %334 = arith.index_cast %c4_i32 : i32 to index
    %c0_110 = arith.constant 0 : index
    %c0_111 = arith.constant 0 : index
    %335 = vector.load %arg1[%334, %c0_110, %c0_111] : memref<8x16x128xf32, #tpu.memory_space<vmem>>, vector<1x16x128xf32>
    %336 = vector.shape_cast %335 : vector<1x16x128xf32> to vector<16x128xf32>
    %337 = arith.addf %333, %336 : vector<16x128xf32>
    %338 = arith.truncf %337 : vector<16x128xf32> to vector<16x128xbf16>
    %339 = arith.index_cast %c4_i32 : i32 to index
    %c0_112 = arith.constant 0 : index
    %c0_113 = arith.constant 0 : index
    %340 = vector.load %arg10[%339, %c0_112, %c0_113] : memref<8x16x128xbf16, #tpu.memory_space<vmem>>, vector<1x16x128xbf16>
    %341 = vector.shape_cast %340 : vector<1x16x128xbf16> to vector<16x128xbf16>
    %342 = vector.shape_cast %338 : vector<16x128xbf16> to vector<1x16x128xbf16>
    tpu.vector_store %arg10[%339, %c0_112, %c0_113], %342 {strides = array<i32>} : memref<8x16x128xbf16, #tpu.memory_space<vmem>>, vector<1x16x128xbf16>,
    %c5_i32 = arith.constant 5 : i32
    %343 = arith.index_cast %c5_i32 : i32 to index
    %c0_114 = arith.constant 0 : index
    %c0_115 = arith.constant 0 : index
    %344 = vector.load %arg11[%343, %c0_114, %c0_115] : memref<8x16x512xf32, #tpu.memory_space<vmem>>, vector<1x16x512xf32>
    %345 = vector.shape_cast %344 : vector<1x16x512xf32> to vector<16x512xf32>
    %346 = arith.truncf %311 : vector<16x128xf32> to vector<16x128xbf16>
    %c0_116 = arith.constant 0 : index
    %c0_117 = arith.constant 0 : index
    %c0_118 = arith.constant 0 : index
    %347 = vector.load %arg3[%c0_116, %c0_117, %c0_118] : memref<2x128x512xbf16, #tpu.memory_space<vmem>>, vector<1x128x512xbf16>
    %348 = vector.shape_cast %347 : vector<1x128x512xbf16> to vector<128x512xbf16>
    %cst_119 = arith.constant dense<0.000000e+00> : vector<16x512xf32>
    %349 = tpu.matmul %346, %348, %cst_119 {dimension_numbers = #tpu.dot_dimension_numbers<[1], [0], [0], [1], [0, 0, 1, 1], [], []>} : vector<16x128xbf16>, vector<128x512xbf16>, vector<16x512xf32> -> vector<16x512xf32>
    %350 = arith.addf %345, %349 : vector<16x512xf32>
    %351 = vector.extract_strided_slice %350 {offsets = [0, 0], sizes = [16, 128], strides = [1, 1]} : vector<16x512xf32> to vector<16x128xf32>
    %352 = arith.negf %351 : vector<16x128xf32>
    %353 = math.exp %352 : vector<16x128xf32>
    %cst_120 = arith.constant 1.000000e+00 : f32
    %354 = vector.broadcast %cst_120 : f32 to vector<16x128xf32>
    %355 = arith.addf %354, %353 : vector<16x128xf32>
    %356 = arith.divf %354, %355 : vector<16x128xf32>
    %357 = vector.extract_strided_slice %350 {offsets = [0, 128], sizes = [16, 128], strides = [1, 1]} : vector<16x512xf32> to vector<16x128xf32>
    %358 = arith.negf %357 : vector<16x128xf32>
    %359 = math.exp %358 : vector<16x128xf32>
    %cst_121 = arith.constant 1.000000e+00 : f32
    %360 = vector.broadcast %cst_121 : f32 to vector<16x128xf32>
    %361 = arith.addf %360, %359 : vector<16x128xf32>
    %362 = arith.divf %360, %361 : vector<16x128xf32>
    %363 = vector.extract_strided_slice %350 {offsets = [0, 256], sizes = [16, 128], strides = [1, 1]} : vector<16x512xf32> to vector<16x128xf32>
    %364 = math.tanh %363 : vector<16x128xf32>
    %365 = vector.extract_strided_slice %350 {offsets = [0, 384], sizes = [16, 128], strides = [1, 1]} : vector<16x512xf32> to vector<16x128xf32>
    %366 = arith.negf %365 : vector<16x128xf32>
    %367 = math.exp %366 : vector<16x128xf32>
    %cst_122 = arith.constant 1.000000e+00 : f32
    %368 = vector.broadcast %cst_122 : f32 to vector<16x128xf32>
    %369 = arith.addf %368, %367 : vector<16x128xf32>
    %370 = arith.divf %368, %369 : vector<16x128xf32>
    %371 = arith.mulf %362, %309 : vector<16x128xf32>
    %372 = arith.mulf %356, %364 : vector<16x128xf32>
    %373 = arith.addf %371, %372 : vector<16x128xf32>
    %374 = math.tanh %373 : vector<16x128xf32>
    %375 = arith.mulf %370, %374 : vector<16x128xf32>
    %cst_123 = arith.constant dense<0.000000e+00> : vector<16xf32>
    %376 = vector.multi_reduction <add>, %375, %cst_123 [1] : vector<16x128xf32> to vector<16xf32>
    %377 = vector.shape_cast %376 : vector<16xf32> to vector<16x1xf32>
    %cst_124 = arith.constant 1.280000e+02 : f32
    %378 = vector.broadcast %cst_124 : f32 to vector<16x1xf32>
    %379 = arith.divf %377, %378 : vector<16x1xf32>
    %380 = arith.mulf %375, %375 : vector<16x128xf32>
    %cst_125 = arith.constant dense<0.000000e+00> : vector<16xf32>
    %381 = vector.multi_reduction <add>, %380, %cst_125 [1] : vector<16x128xf32> to vector<16xf32>
    %382 = vector.shape_cast %381 : vector<16xf32> to vector<16x1xf32>
    %cst_126 = arith.constant 1.280000e+02 : f32
    %383 = vector.broadcast %cst_126 : f32 to vector<16x1xf32>
    %384 = arith.divf %382, %383 : vector<16x1xf32>
    %385 = arith.mulf %379, %379 : vector<16x1xf32>
    %386 = arith.subf %384, %385 : vector<16x1xf32>
    %387 = vector.broadcast %379 : vector<16x1xf32> to vector<16x128xf32>
    %388 = arith.subf %375, %387 : vector<16x128xf32>
    %cst_127 = arith.constant 9.99999974E-6 : f32
    %389 = vector.broadcast %cst_127 : f32 to vector<16x1xf32>
    %390 = arith.addf %386, %389 : vector<16x1xf32>
    %391 = math.rsqrt %390 : vector<16x1xf32>
    %392 = vector.broadcast %391 : vector<16x1xf32> to vector<16x128xf32>
    %393 = arith.mulf %388, %392 : vector<16x128xf32>
    %394 = arith.mulf %393, %16 : vector<16x128xf32>
    %395 = arith.addf %394, %20 : vector<16x128xf32>
    %cst_128 = arith.constant 0.000000e+00 : f32
    %396 = vector.broadcast %cst_128 : f32 to vector<16x128xf32>
    %397 = arith.maximumf %395, %396 : vector<16x128xf32>
    %398 = arith.index_cast %c5_i32 : i32 to index
    %c0_129 = arith.constant 0 : index
    %c0_130 = arith.constant 0 : index
    %399 = vector.load %arg1[%398, %c0_129, %c0_130] : memref<8x16x128xf32, #tpu.memory_space<vmem>>, vector<1x16x128xf32>
    %400 = vector.shape_cast %399 : vector<1x16x128xf32> to vector<16x128xf32>
    %401 = arith.addf %397, %400 : vector<16x128xf32>
    %402 = arith.truncf %401 : vector<16x128xf32> to vector<16x128xbf16>
    %403 = arith.index_cast %c5_i32 : i32 to index
    %c0_131 = arith.constant 0 : index
    %c0_132 = arith.constant 0 : index
    %404 = vector.load %arg10[%403, %c0_131, %c0_132] : memref<8x16x128xbf16, #tpu.memory_space<vmem>>, vector<1x16x128xbf16>
    %405 = vector.shape_cast %404 : vector<1x16x128xbf16> to vector<16x128xbf16>
    %406 = vector.shape_cast %402 : vector<16x128xbf16> to vector<1x16x128xbf16>
    tpu.vector_store %arg10[%403, %c0_131, %c0_132], %406 {strides = array<i32>} : memref<8x16x128xbf16, #tpu.memory_space<vmem>>, vector<1x16x128xbf16>,
    %c6_i32 = arith.constant 6 : i32
    %407 = arith.index_cast %c6_i32 : i32 to index
    %c0_133 = arith.constant 0 : index
    %c0_134 = arith.constant 0 : index
    %408 = vector.load %arg11[%407, %c0_133, %c0_134] : memref<8x16x512xf32, #tpu.memory_space<vmem>>, vector<1x16x512xf32>
    %409 = vector.shape_cast %408 : vector<1x16x512xf32> to vector<16x512xf32>
    %410 = arith.truncf %375 : vector<16x128xf32> to vector<16x128xbf16>
    %c0_135 = arith.constant 0 : index
    %c0_136 = arith.constant 0 : index
    %c0_137 = arith.constant 0 : index
    %411 = vector.load %arg3[%c0_135, %c0_136, %c0_137] : memref<2x128x512xbf16, #tpu.memory_space<vmem>>, vector<1x128x512xbf16>
    %412 = vector.shape_cast %411 : vector<1x128x512xbf16> to vector<128x512xbf16>
    %cst_138 = arith.constant dense<0.000000e+00> : vector<16x512xf32>
    %413 = tpu.matmul %410, %412, %cst_138 {dimension_numbers = #tpu.dot_dimension_numbers<[1], [0], [0], [1], [0, 0, 1, 1], [], []>} : vector<16x128xbf16>, vector<128x512xbf16>, vector<16x512xf32> -> vector<16x512xf32>
    %414 = arith.addf %409, %413 : vector<16x512xf32>
    %415 = vector.extract_strided_slice %414 {offsets = [0, 0], sizes = [16, 128], strides = [1, 1]} : vector<16x512xf32> to vector<16x128xf32>
    %416 = arith.negf %415 : vector<16x128xf32>
    %417 = math.exp %416 : vector<16x128xf32>
    %cst_139 = arith.constant 1.000000e+00 : f32
    %418 = vector.broadcast %cst_139 : f32 to vector<16x128xf32>
    %419 = arith.addf %418, %417 : vector<16x128xf32>
    %420 = arith.divf %418, %419 : vector<16x128xf32>
    %421 = vector.extract_strided_slice %414 {offsets = [0, 128], sizes = [16, 128], strides = [1, 1]} : vector<16x512xf32> to vector<16x128xf32>
    %422 = arith.negf %421 : vector<16x128xf32>
    %423 = math.exp %422 : vector<16x128xf32>
    %cst_140 = arith.constant 1.000000e+00 : f32
    %424 = vector.broadcast %cst_140 : f32 to vector<16x128xf32>
    %425 = arith.addf %424, %423 : vector<16x128xf32>
    %426 = arith.divf %424, %425 : vector<16x128xf32>
    %427 = vector.extract_strided_slice %414 {offsets = [0, 256], sizes = [16, 128], strides = [1, 1]} : vector<16x512xf32> to vector<16x128xf32>
    %428 = math.tanh %427 : vector<16x128xf32>
    %429 = vector.extract_strided_slice %414 {offsets = [0, 384], sizes = [16, 128], strides = [1, 1]} : vector<16x512xf32> to vector<16x128xf32>
    %430 = arith.negf %429 : vector<16x128xf32>
    %431 = math.exp %430 : vector<16x128xf32>
    %cst_141 = arith.constant 1.000000e+00 : f32
    %432 = vector.broadcast %cst_141 : f32 to vector<16x128xf32>
    %433 = arith.addf %432, %431 : vector<16x128xf32>
    %434 = arith.divf %432, %433 : vector<16x128xf32>
    %435 = arith.mulf %426, %373 : vector<16x128xf32>
    %436 = arith.mulf %420, %428 : vector<16x128xf32>
    %437 = arith.addf %435, %436 : vector<16x128xf32>
    %438 = math.tanh %437 : vector<16x128xf32>
    %439 = arith.mulf %434, %438 : vector<16x128xf32>
    %cst_142 = arith.constant dense<0.000000e+00> : vector<16xf32>
    %440 = vector.multi_reduction <add>, %439, %cst_142 [1] : vector<16x128xf32> to vector<16xf32>
    %441 = vector.shape_cast %440 : vector<16xf32> to vector<16x1xf32>
    %cst_143 = arith.constant 1.280000e+02 : f32
    %442 = vector.broadcast %cst_143 : f32 to vector<16x1xf32>
    %443 = arith.divf %441, %442 : vector<16x1xf32>
    %444 = arith.mulf %439, %439 : vector<16x128xf32>
    %cst_144 = arith.constant dense<0.000000e+00> : vector<16xf32>
    %445 = vector.multi_reduction <add>, %444, %cst_144 [1] : vector<16x128xf32> to vector<16xf32>
    %446 = vector.shape_cast %445 : vector<16xf32> to vector<16x1xf32>
    %cst_145 = arith.constant 1.280000e+02 : f32
    %447 = vector.broadcast %cst_145 : f32 to vector<16x1xf32>
    %448 = arith.divf %446, %447 : vector<16x1xf32>
    %449 = arith.mulf %443, %443 : vector<16x1xf32>
    %450 = arith.subf %448, %449 : vector<16x1xf32>
    %451 = vector.broadcast %443 : vector<16x1xf32> to vector<16x128xf32>
    %452 = arith.subf %439, %451 : vector<16x128xf32>
    %cst_146 = arith.constant 9.99999974E-6 : f32
    %453 = vector.broadcast %cst_146 : f32 to vector<16x1xf32>
    %454 = arith.addf %450, %453 : vector<16x1xf32>
    %455 = math.rsqrt %454 : vector<16x1xf32>
    %456 = vector.broadcast %455 : vector<16x1xf32> to vector<16x128xf32>
    %457 = arith.mulf %452, %456 : vector<16x128xf32>
    %458 = arith.mulf %457, %16 : vector<16x128xf32>
    %459 = arith.addf %458, %20 : vector<16x128xf32>
    %cst_147 = arith.constant 0.000000e+00 : f32
    %460 = vector.broadcast %cst_147 : f32 to vector<16x128xf32>
    %461 = arith.maximumf %459, %460 : vector<16x128xf32>
    %462 = arith.index_cast %c6_i32 : i32 to index
    %c0_148 = arith.constant 0 : index
    %c0_149 = arith.constant 0 : index
    %463 = vector.load %arg1[%462, %c0_148, %c0_149] : memref<8x16x128xf32, #tpu.memory_space<vmem>>, vector<1x16x128xf32>
    %464 = vector.shape_cast %463 : vector<1x16x128xf32> to vector<16x128xf32>
    %465 = arith.addf %461, %464 : vector<16x128xf32>
    %466 = arith.truncf %465 : vector<16x128xf32> to vector<16x128xbf16>
    %467 = arith.index_cast %c6_i32 : i32 to index
    %c0_150 = arith.constant 0 : index
    %c0_151 = arith.constant 0 : index
    %468 = vector.load %arg10[%467, %c0_150, %c0_151] : memref<8x16x128xbf16, #tpu.memory_space<vmem>>, vector<1x16x128xbf16>
    %469 = vector.shape_cast %468 : vector<1x16x128xbf16> to vector<16x128xbf16>
    %470 = vector.shape_cast %466 : vector<16x128xbf16> to vector<1x16x128xbf16>
    tpu.vector_store %arg10[%467, %c0_150, %c0_151], %470 {strides = array<i32>} : memref<8x16x128xbf16, #tpu.memory_space<vmem>>, vector<1x16x128xbf16>,
    %c7_i32 = arith.constant 7 : i32
    %471 = arith.index_cast %c7_i32 : i32 to index
    %c0_152 = arith.constant 0 : index
    %c0_153 = arith.constant 0 : index
    %472 = vector.load %arg11[%471, %c0_152, %c0_153] : memref<8x16x512xf32, #tpu.memory_space<vmem>>, vector<1x16x512xf32>
    %473 = vector.shape_cast %472 : vector<1x16x512xf32> to vector<16x512xf32>
    %474 = arith.truncf %439 : vector<16x128xf32> to vector<16x128xbf16>
    %c0_154 = arith.constant 0 : index
    %c0_155 = arith.constant 0 : index
    %c0_156 = arith.constant 0 : index
    %475 = vector.load %arg3[%c0_154, %c0_155, %c0_156] : memref<2x128x512xbf16, #tpu.memory_space<vmem>>, vector<1x128x512xbf16>
    %476 = vector.shape_cast %475 : vector<1x128x512xbf16> to vector<128x512xbf16>
    %cst_157 = arith.constant dense<0.000000e+00> : vector<16x512xf32>
    %477 = tpu.matmul %474, %476, %cst_157 {dimension_numbers = #tpu.dot_dimension_numbers<[1], [0], [0], [1], [0, 0, 1, 1], [], []>} : vector<16x128xbf16>, vector<128x512xbf16>, vector<16x512xf32> -> vector<16x512xf32>
    %478 = arith.addf %473, %477 : vector<16x512xf32>
    %479 = vector.extract_strided_slice %478 {offsets = [0, 0], sizes = [16, 128], strides = [1, 1]} : vector<16x512xf32> to vector<16x128xf32>
    %480 = arith.negf %479 : vector<16x128xf32>
    %481 = math.exp %480 : vector<16x128xf32>
    %cst_158 = arith.constant 1.000000e+00 : f32
    %482 = vector.broadcast %cst_158 : f32 to vector<16x128xf32>
    %483 = arith.addf %482, %481 : vector<16x128xf32>
    %484 = arith.divf %482, %483 : vector<16x128xf32>
    %485 = vector.extract_strided_slice %478 {offsets = [0, 128], sizes = [16, 128], strides = [1, 1]} : vector<16x512xf32> to vector<16x128xf32>
    %486 = arith.negf %485 : vector<16x128xf32>
    %487 = math.exp %486 : vector<16x128xf32>
    %cst_159 = arith.constant 1.000000e+00 : f32
    %488 = vector.broadcast %cst_159 : f32 to vector<16x128xf32>
    %489 = arith.addf %488, %487 : vector<16x128xf32>
    %490 = arith.divf %488, %489 : vector<16x128xf32>
    %491 = vector.extract_strided_slice %478 {offsets = [0, 256], sizes = [16, 128], strides = [1, 1]} : vector<16x512xf32> to vector<16x128xf32>
    %492 = math.tanh %491 : vector<16x128xf32>
    %493 = vector.extract_strided_slice %478 {offsets = [0, 384], sizes = [16, 128], strides = [1, 1]} : vector<16x512xf32> to vector<16x128xf32>
    %494 = arith.negf %493 : vector<16x128xf32>
    %495 = math.exp %494 : vector<16x128xf32>
    %cst_160 = arith.constant 1.000000e+00 : f32
    %496 = vector.broadcast %cst_160 : f32 to vector<16x128xf32>
    %497 = arith.addf %496, %495 : vector<16x128xf32>
    %498 = arith.divf %496, %497 : vector<16x128xf32>
    %499 = arith.mulf %490, %437 : vector<16x128xf32>
    %500 = arith.mulf %484, %492 : vector<16x128xf32>
    %501 = arith.addf %499, %500 : vector<16x128xf32>
    %502 = math.tanh %501 : vector<16x128xf32>
    %503 = arith.mulf %498, %502 : vector<16x128xf32>
    %cst_161 = arith.constant dense<0.000000e+00> : vector<16xf32>
    %504 = vector.multi_reduction <add>, %503, %cst_161 [1] : vector<16x128xf32> to vector<16xf32>
    %505 = vector.shape_cast %504 : vector<16xf32> to vector<16x1xf32>
    %cst_162 = arith.constant 1.280000e+02 : f32
    %506 = vector.broadcast %cst_162 : f32 to vector<16x1xf32>
    %507 = arith.divf %505, %506 : vector<16x1xf32>
    %508 = arith.mulf %503, %503 : vector<16x128xf32>
    %cst_163 = arith.constant dense<0.000000e+00> : vector<16xf32>
    %509 = vector.multi_reduction <add>, %508, %cst_163 [1] : vector<16x128xf32> to vector<16xf32>
    %510 = vector.shape_cast %509 : vector<16xf32> to vector<16x1xf32>
    %cst_164 = arith.constant 1.280000e+02 : f32
    %511 = vector.broadcast %cst_164 : f32 to vector<16x1xf32>
    %512 = arith.divf %510, %511 : vector<16x1xf32>
    %513 = arith.mulf %507, %507 : vector<16x1xf32>
    %514 = arith.subf %512, %513 : vector<16x1xf32>
    %515 = vector.broadcast %507 : vector<16x1xf32> to vector<16x128xf32>
    %516 = arith.subf %503, %515 : vector<16x128xf32>
    %cst_165 = arith.constant 9.99999974E-6 : f32
    %517 = vector.broadcast %cst_165 : f32 to vector<16x1xf32>
    %518 = arith.addf %514, %517 : vector<16x1xf32>
    %519 = math.rsqrt %518 : vector<16x1xf32>
    %520 = vector.broadcast %519 : vector<16x1xf32> to vector<16x128xf32>
    %521 = arith.mulf %516, %520 : vector<16x128xf32>
    %522 = arith.mulf %521, %16 : vector<16x128xf32>
    %523 = arith.addf %522, %20 : vector<16x128xf32>
    %cst_166 = arith.constant 0.000000e+00 : f32
    %524 = vector.broadcast %cst_166 : f32 to vector<16x128xf32>
    %525 = arith.maximumf %523, %524 : vector<16x128xf32>
    %526 = arith.index_cast %c7_i32 : i32 to index
    %c0_167 = arith.constant 0 : index
    %c0_168 = arith.constant 0 : index
    %527 = vector.load %arg1[%526, %c0_167, %c0_168] : memref<8x16x128xf32, #tpu.memory_space<vmem>>, vector<1x16x128xf32>
    %528 = vector.shape_cast %527 : vector<1x16x128xf32> to vector<16x128xf32>
    %529 = arith.addf %525, %528 : vector<16x128xf32>
    %530 = arith.truncf %529 : vector<16x128xf32> to vector<16x128xbf16>
    %531 = arith.index_cast %c7_i32 : i32 to index
    %c0_169 = arith.constant 0 : index
    %c0_170 = arith.constant 0 : index
    %532 = vector.load %arg10[%531, %c0_169, %c0_170] : memref<8x16x128xbf16, #tpu.memory_space<vmem>>, vector<1x16x128xbf16>
    %533 = vector.shape_cast %532 : vector<1x16x128xbf16> to vector<16x128xbf16>
    %534 = vector.shape_cast %530 : vector<16x128xbf16> to vector<1x16x128xbf16>
    tpu.vector_store %arg10[%531, %c0_169, %c0_170], %534 {strides = array<i32>} : memref<8x16x128xbf16, #tpu.memory_space<vmem>>, vector<1x16x128xbf16>,
    %c8_i32 = arith.constant 8 : i32
    %c1 = arith.constant 1 : index
    %c0_171 = arith.constant 0 : index
    %c0_172 = arith.constant 0 : index
    %535 = vector.load %arg4[%c1, %c0_171, %c0_172] : memref<2x1x512xf32, #tpu.memory_space<vmem>>, vector<1x1x512xf32>
    %536 = vector.shape_cast %535 : vector<1x1x512xf32> to vector<1x512xf32>
    %c0_173 = arith.constant 0 : index
    %c0_174 = arith.constant 0 : index
    %c0_175 = arith.constant 0 : index
    %537 = vector.load %arg10[%c0_173, %c0_174, %c0_175] : memref<8x16x128xbf16, #tpu.memory_space<vmem>>, vector<8x16x128xbf16>
    %538 = vector.shape_cast %537 : vector<8x16x128xbf16> to vector<128x128xbf16>
    %c1_176 = arith.constant 1 : index
    %c0_177 = arith.constant 0 : index
    %c0_178 = arith.constant 0 : index
    %539 = vector.load %arg2[%c1_176, %c0_177, %c0_178] : memref<2x128x512xbf16, #tpu.memory_space<vmem>>, vector<1x128x512xbf16>
    %540 = vector.shape_cast %539 : vector<1x128x512xbf16> to vector<128x512xbf16>
    %cst_179 = arith.constant dense<0.000000e+00> : vector<128x512xf32>
    %541 = tpu.matmul %538, %540, %cst_179 {dimension_numbers = #tpu.dot_dimension_numbers<[1], [0], [0], [1], [0, 0, 1, 1], [], []>} : vector<128x128xbf16>, vector<128x512xbf16>, vector<128x512xf32> -> vector<128x512xf32>
    %542 = vector.shape_cast %541 : vector<128x512xf32> to vector<8x16x512xf32>
    %543 = vector.shape_cast %536 : vector<1x512xf32> to vector<1x1x512xf32>
    %544 = vector.broadcast %543 : vector<1x1x512xf32> to vector<8x16x512xf32>
    %545 = arith.addf %542, %544 : vector<8x16x512xf32>
    %c0_180 = arith.constant 0 : index
    %c0_181 = arith.constant 0 : index
    %c0_182 = arith.constant 0 : index
    %546 = vector.load %arg11[%c0_180, %c0_181, %c0_182] : memref<8x16x512xf32, #tpu.memory_space<vmem>>, vector<8x16x512xf32>
    tpu.vector_store %arg11[%c0_180, %c0_181, %c0_182], %545 {strides = array<i32>} : memref<8x16x512xf32, #tpu.memory_space<vmem>>, vector<8x16x512xf32>,
    %c1_183 = arith.constant 1 : index
    %c0_184 = arith.constant 0 : index
    %c0_185 = arith.constant 0 : index
    %547 = vector.load %arg5[%c1_183, %c0_184, %c0_185] : memref<2x1x128xf32, #tpu.memory_space<vmem>>, vector<1x1x128xf32>
    %548 = vector.shape_cast %547 : vector<1x1x128xf32> to vector<1x128xf32>
    %549 = vector.shape_cast %548 : vector<1x128xf32> to vector<1x128xf32>
    %550 = vector.broadcast %549 : vector<1x128xf32> to vector<16x128xf32>
    %c1_186 = arith.constant 1 : index
    %c0_187 = arith.constant 0 : index
    %c0_188 = arith.constant 0 : index
    %551 = vector.load %arg6[%c1_186, %c0_187, %c0_188] : memref<2x1x128xf32, #tpu.memory_space<vmem>>, vector<1x1x128xf32>
    %552 = vector.shape_cast %551 : vector<1x1x128xf32> to vector<1x128xf32>
    %553 = vector.shape_cast %552 : vector<1x128xf32> to vector<1x128xf32>
    %554 = vector.broadcast %553 : vector<1x128xf32> to vector<16x128xf32>
    %cst_189 = arith.constant 0.000000e+00 : f32
    %555 = vector.broadcast %cst_189 : f32 to vector<16x128xf32>
    %cst_190 = arith.constant 0.000000e+00 : f32
    %556 = vector.broadcast %cst_190 : f32 to vector<16x128xf32>
    %c0_i32_191 = arith.constant 0 : i32
    %557 = arith.index_cast %c0_i32_191 : i32 to index
    %c0_192 = arith.constant 0 : index
    %c0_193 = arith.constant 0 : index
    %558 = vector.load %arg11[%557, %c0_192, %c0_193] : memref<8x16x512xf32, #tpu.memory_space<vmem>>, vector<1x16x512xf32>
    %559 = vector.shape_cast %558 : vector<1x16x512xf32> to vector<16x512xf32>
    %560 = arith.truncf %555 : vector<16x128xf32> to vector<16x128xbf16>
    %c1_194 = arith.constant 1 : index
    %c0_195 = arith.constant 0 : index
    %c0_196 = arith.constant 0 : index
    %561 = vector.load %arg3[%c1_194, %c0_195, %c0_196] : memref<2x128x512xbf16, #tpu.memory_space<vmem>>, vector<1x128x512xbf16>
    %562 = vector.shape_cast %561 : vector<1x128x512xbf16> to vector<128x512xbf16>
    %cst_197 = arith.constant dense<0.000000e+00> : vector<16x512xf32>
    %563 = tpu.matmul %560, %562, %cst_197 {dimension_numbers = #tpu.dot_dimension_numbers<[1], [0], [0], [1], [0, 0, 1, 1], [], []>} : vector<16x128xbf16>, vector<128x512xbf16>, vector<16x512xf32> -> vector<16x512xf32>
    %564 = arith.addf %559, %563 : vector<16x512xf32>
    %565 = vector.extract_strided_slice %564 {offsets = [0, 0], sizes = [16, 128], strides = [1, 1]} : vector<16x512xf32> to vector<16x128xf32>
    %566 = arith.negf %565 : vector<16x128xf32>
    %567 = math.exp %566 : vector<16x128xf32>
    %cst_198 = arith.constant 1.000000e+00 : f32
    %568 = vector.broadcast %cst_198 : f32 to vector<16x128xf32>
    %569 = arith.addf %568, %567 : vector<16x128xf32>
    %570 = arith.divf %568, %569 : vector<16x128xf32>
    %571 = vector.extract_strided_slice %564 {offsets = [0, 128], sizes = [16, 128], strides = [1, 1]} : vector<16x512xf32> to vector<16x128xf32>
    %572 = arith.negf %571 : vector<16x128xf32>
    %573 = math.exp %572 : vector<16x128xf32>
    %cst_199 = arith.constant 1.000000e+00 : f32
    %574 = vector.broadcast %cst_199 : f32 to vector<16x128xf32>
    %575 = arith.addf %574, %573 : vector<16x128xf32>
    %576 = arith.divf %574, %575 : vector<16x128xf32>
    %577 = vector.extract_strided_slice %564 {offsets = [0, 256], sizes = [16, 128], strides = [1, 1]} : vector<16x512xf32> to vector<16x128xf32>
    %578 = math.tanh %577 : vector<16x128xf32>
    %579 = vector.extract_strided_slice %564 {offsets = [0, 384], sizes = [16, 128], strides = [1, 1]} : vector<16x512xf32> to vector<16x128xf32>
    %580 = arith.negf %579 : vector<16x128xf32>
    %581 = math.exp %580 : vector<16x128xf32>
    %cst_200 = arith.constant 1.000000e+00 : f32
    %582 = vector.broadcast %cst_200 : f32 to vector<16x128xf32>
    %583 = arith.addf %582, %581 : vector<16x128xf32>
    %584 = arith.divf %582, %583 : vector<16x128xf32>
    %585 = arith.mulf %576, %556 : vector<16x128xf32>
    %586 = arith.mulf %570, %578 : vector<16x128xf32>
    %587 = arith.addf %585, %586 : vector<16x128xf32>
    %588 = math.tanh %587 : vector<16x128xf32>
    %589 = arith.mulf %584, %588 : vector<16x128xf32>
    %cst_201 = arith.constant dense<0.000000e+00> : vector<16xf32>
    %590 = vector.multi_reduction <add>, %589, %cst_201 [1] : vector<16x128xf32> to vector<16xf32>
    %591 = vector.shape_cast %590 : vector<16xf32> to vector<16x1xf32>
    %cst_202 = arith.constant 1.280000e+02 : f32
    %592 = vector.broadcast %cst_202 : f32 to vector<16x1xf32>
    %593 = arith.divf %591, %592 : vector<16x1xf32>
    %594 = arith.mulf %589, %589 : vector<16x128xf32>
    %cst_203 = arith.constant dense<0.000000e+00> : vector<16xf32>
    %595 = vector.multi_reduction <add>, %594, %cst_203 [1] : vector<16x128xf32> to vector<16xf32>
    %596 = vector.shape_cast %595 : vector<16xf32> to vector<16x1xf32>
    %cst_204 = arith.constant 1.280000e+02 : f32
    %597 = vector.broadcast %cst_204 : f32 to vector<16x1xf32>
    %598 = arith.divf %596, %597 : vector<16x1xf32>
    %599 = arith.mulf %593, %593 : vector<16x1xf32>
    %600 = arith.subf %598, %599 : vector<16x1xf32>
    %601 = vector.broadcast %593 : vector<16x1xf32> to vector<16x128xf32>
    %602 = arith.subf %589, %601 : vector<16x128xf32>
    %cst_205 = arith.constant 9.99999974E-6 : f32
    %603 = vector.broadcast %cst_205 : f32 to vector<16x1xf32>
    %604 = arith.addf %600, %603 : vector<16x1xf32>
    %605 = math.rsqrt %604 : vector<16x1xf32>
    %606 = vector.broadcast %605 : vector<16x1xf32> to vector<16x128xf32>
    %607 = arith.mulf %602, %606 : vector<16x128xf32>
    %608 = arith.mulf %607, %550 : vector<16x128xf32>
    %609 = arith.addf %608, %554 : vector<16x128xf32>
    %cst_206 = arith.constant 0.000000e+00 : f32
    %610 = vector.broadcast %cst_206 : f32 to vector<16x128xf32>
    %611 = arith.maximumf %609, %610 : vector<16x128xf32>
    %612 = arith.index_cast %c0_i32_191 : i32 to index
    %c0_207 = arith.constant 0 : index
    %c0_208 = arith.constant 0 : index
    %613 = vector.load %arg1[%612, %c0_207, %c0_208] : memref<8x16x128xf32, #tpu.memory_space<vmem>>, vector<1x16x128xf32>
    %614 = vector.shape_cast %613 : vector<1x16x128xf32> to vector<16x128xf32>
    %615 = arith.addf %611, %614 : vector<16x128xf32>
    %616 = arith.truncf %615 : vector<16x128xf32> to vector<16x128xbf16>
    %617 = arith.index_cast %c0_i32_191 : i32 to index
    %c0_209 = arith.constant 0 : index
    %c0_210 = arith.constant 0 : index
    %618 = vector.load %arg10[%617, %c0_209, %c0_210] : memref<8x16x128xbf16, #tpu.memory_space<vmem>>, vector<1x16x128xbf16>
    %619 = vector.shape_cast %618 : vector<1x16x128xbf16> to vector<16x128xbf16>
    %620 = vector.shape_cast %616 : vector<16x128xbf16> to vector<1x16x128xbf16>
    tpu.vector_store %arg10[%617, %c0_209, %c0_210], %620 {strides = array<i32>} : memref<8x16x128xbf16, #tpu.memory_space<vmem>>, vector<1x16x128xbf16>,
    %c1_i32_211 = arith.constant 1 : i32
    %621 = arith.index_cast %c1_i32_211 : i32 to index
    %c0_212 = arith.constant 0 : index
    %c0_213 = arith.constant 0 : index
    %622 = vector.load %arg11[%621, %c0_212, %c0_213] : memref<8x16x512xf32, #tpu.memory_space<vmem>>, vector<1x16x512xf32>
    %623 = vector.shape_cast %622 : vector<1x16x512xf32> to vector<16x512xf32>
    %624 = arith.truncf %589 : vector<16x128xf32> to vector<16x128xbf16>
    %c1_214 = arith.constant 1 : index
    %c0_215 = arith.constant 0 : index
    %c0_216 = arith.constant 0 : index
    %625 = vector.load %arg3[%c1_214, %c0_215, %c0_216] : memref<2x128x512xbf16, #tpu.memory_space<vmem>>, vector<1x128x512xbf16>
    %626 = vector.shape_cast %625 : vector<1x128x512xbf16> to vector<128x512xbf16>
    %cst_217 = arith.constant dense<0.000000e+00> : vector<16x512xf32>
    %627 = tpu.matmul %624, %626, %cst_217 {dimension_numbers = #tpu.dot_dimension_numbers<[1], [0], [0], [1], [0, 0, 1, 1], [], []>} : vector<16x128xbf16>, vector<128x512xbf16>, vector<16x512xf32> -> vector<16x512xf32>
    %628 = arith.addf %623, %627 : vector<16x512xf32>
    %629 = vector.extract_strided_slice %628 {offsets = [0, 0], sizes = [16, 128], strides = [1, 1]} : vector<16x512xf32> to vector<16x128xf32>
    %630 = arith.negf %629 : vector<16x128xf32>
    %631 = math.exp %630 : vector<16x128xf32>
    %cst_218 = arith.constant 1.000000e+00 : f32
    %632 = vector.broadcast %cst_218 : f32 to vector<16x128xf32>
    %633 = arith.addf %632, %631 : vector<16x128xf32>
    %634 = arith.divf %632, %633 : vector<16x128xf32>
    %635 = vector.extract_strided_slice %628 {offsets = [0, 128], sizes = [16, 128], strides = [1, 1]} : vector<16x512xf32> to vector<16x128xf32>
    %636 = arith.negf %635 : vector<16x128xf32>
    %637 = math.exp %636 : vector<16x128xf32>
    %cst_219 = arith.constant 1.000000e+00 : f32
    %638 = vector.broadcast %cst_219 : f32 to vector<16x128xf32>
    %639 = arith.addf %638, %637 : vector<16x128xf32>
    %640 = arith.divf %638, %639 : vector<16x128xf32>
    %641 = vector.extract_strided_slice %628 {offsets = [0, 256], sizes = [16, 128], strides = [1, 1]} : vector<16x512xf32> to vector<16x128xf32>
    %642 = math.tanh %641 : vector<16x128xf32>
    %643 = vector.extract_strided_slice %628 {offsets = [0, 384], sizes = [16, 128], strides = [1, 1]} : vector<16x512xf32> to vector<16x128xf32>
    %644 = arith.negf %643 : vector<16x128xf32>
    %645 = math.exp %644 : vector<16x128xf32>
    %cst_220 = arith.constant 1.000000e+00 : f32
    %646 = vector.broadcast %cst_220 : f32 to vector<16x128xf32>
    %647 = arith.addf %646, %645 : vector<16x128xf32>
    %648 = arith.divf %646, %647 : vector<16x128xf32>
    %649 = arith.mulf %640, %587 : vector<16x128xf32>
    %650 = arith.mulf %634, %642 : vector<16x128xf32>
    %651 = arith.addf %649, %650 : vector<16x128xf32>
    %652 = math.tanh %651 : vector<16x128xf32>
    %653 = arith.mulf %648, %652 : vector<16x128xf32>
    %cst_221 = arith.constant dense<0.000000e+00> : vector<16xf32>
    %654 = vector.multi_reduction <add>, %653, %cst_221 [1] : vector<16x128xf32> to vector<16xf32>
    %655 = vector.shape_cast %654 : vector<16xf32> to vector<16x1xf32>
    %cst_222 = arith.constant 1.280000e+02 : f32
    %656 = vector.broadcast %cst_222 : f32 to vector<16x1xf32>
    %657 = arith.divf %655, %656 : vector<16x1xf32>
    %658 = arith.mulf %653, %653 : vector<16x128xf32>
    %cst_223 = arith.constant dense<0.000000e+00> : vector<16xf32>
    %659 = vector.multi_reduction <add>, %658, %cst_223 [1] : vector<16x128xf32> to vector<16xf32>
    %660 = vector.shape_cast %659 : vector<16xf32> to vector<16x1xf32>
    %cst_224 = arith.constant 1.280000e+02 : f32
    %661 = vector.broadcast %cst_224 : f32 to vector<16x1xf32>
    %662 = arith.divf %660, %661 : vector<16x1xf32>
    %663 = arith.mulf %657, %657 : vector<16x1xf32>
    %664 = arith.subf %662, %663 : vector<16x1xf32>
    %665 = vector.broadcast %657 : vector<16x1xf32> to vector<16x128xf32>
    %666 = arith.subf %653, %665 : vector<16x128xf32>
    %cst_225 = arith.constant 9.99999974E-6 : f32
    %667 = vector.broadcast %cst_225 : f32 to vector<16x1xf32>
    %668 = arith.addf %664, %667 : vector<16x1xf32>
    %669 = math.rsqrt %668 : vector<16x1xf32>
    %670 = vector.broadcast %669 : vector<16x1xf32> to vector<16x128xf32>
    %671 = arith.mulf %666, %670 : vector<16x128xf32>
    %672 = arith.mulf %671, %550 : vector<16x128xf32>
    %673 = arith.addf %672, %554 : vector<16x128xf32>
    %cst_226 = arith.constant 0.000000e+00 : f32
    %674 = vector.broadcast %cst_226 : f32 to vector<16x128xf32>
    %675 = arith.maximumf %673, %674 : vector<16x128xf32>
    %676 = arith.index_cast %c1_i32_211 : i32 to index
    %c0_227 = arith.constant 0 : index
    %c0_228 = arith.constant 0 : index
    %677 = vector.load %arg1[%676, %c0_227, %c0_228] : memref<8x16x128xf32, #tpu.memory_space<vmem>>, vector<1x16x128xf32>
    %678 = vector.shape_cast %677 : vector<1x16x128xf32> to vector<16x128xf32>
    %679 = arith.addf %675, %678 : vector<16x128xf32>
    %680 = arith.truncf %679 : vector<16x128xf32> to vector<16x128xbf16>
    %681 = arith.index_cast %c1_i32_211 : i32 to index
    %c0_229 = arith.constant 0 : index
    %c0_230 = arith.constant 0 : index
    %682 = vector.load %arg10[%681, %c0_229, %c0_230] : memref<8x16x128xbf16, #tpu.memory_space<vmem>>, vector<1x16x128xbf16>
    %683 = vector.shape_cast %682 : vector<1x16x128xbf16> to vector<16x128xbf16>
    %684 = vector.shape_cast %680 : vector<16x128xbf16> to vector<1x16x128xbf16>
    tpu.vector_store %arg10[%681, %c0_229, %c0_230], %684 {strides = array<i32>} : memref<8x16x128xbf16, #tpu.memory_space<vmem>>, vector<1x16x128xbf16>,
    %c2_i32_231 = arith.constant 2 : i32
    %685 = arith.index_cast %c2_i32_231 : i32 to index
    %c0_232 = arith.constant 0 : index
    %c0_233 = arith.constant 0 : index
    %686 = vector.load %arg11[%685, %c0_232, %c0_233] : memref<8x16x512xf32, #tpu.memory_space<vmem>>, vector<1x16x512xf32>
    %687 = vector.shape_cast %686 : vector<1x16x512xf32> to vector<16x512xf32>
    %688 = arith.truncf %653 : vector<16x128xf32> to vector<16x128xbf16>
    %c1_234 = arith.constant 1 : index
    %c0_235 = arith.constant 0 : index
    %c0_236 = arith.constant 0 : index
    %689 = vector.load %arg3[%c1_234, %c0_235, %c0_236] : memref<2x128x512xbf16, #tpu.memory_space<vmem>>, vector<1x128x512xbf16>
    %690 = vector.shape_cast %689 : vector<1x128x512xbf16> to vector<128x512xbf16>
    %cst_237 = arith.constant dense<0.000000e+00> : vector<16x512xf32>
    %691 = tpu.matmul %688, %690, %cst_237 {dimension_numbers = #tpu.dot_dimension_numbers<[1], [0], [0], [1], [0, 0, 1, 1], [], []>} : vector<16x128xbf16>, vector<128x512xbf16>, vector<16x512xf32> -> vector<16x512xf32>
    %692 = arith.addf %687, %691 : vector<16x512xf32>
    %693 = vector.extract_strided_slice %692 {offsets = [0, 0], sizes = [16, 128], strides = [1, 1]} : vector<16x512xf32> to vector<16x128xf32>
    %694 = arith.negf %693 : vector<16x128xf32>
    %695 = math.exp %694 : vector<16x128xf32>
    %cst_238 = arith.constant 1.000000e+00 : f32
    %696 = vector.broadcast %cst_238 : f32 to vector<16x128xf32>
    %697 = arith.addf %696, %695 : vector<16x128xf32>
    %698 = arith.divf %696, %697 : vector<16x128xf32>
    %699 = vector.extract_strided_slice %692 {offsets = [0, 128], sizes = [16, 128], strides = [1, 1]} : vector<16x512xf32> to vector<16x128xf32>
    %700 = arith.negf %699 : vector<16x128xf32>
    %701 = math.exp %700 : vector<16x128xf32>
    %cst_239 = arith.constant 1.000000e+00 : f32
    %702 = vector.broadcast %cst_239 : f32 to vector<16x128xf32>
    %703 = arith.addf %702, %701 : vector<16x128xf32>
    %704 = arith.divf %702, %703 : vector<16x128xf32>
    %705 = vector.extract_strided_slice %692 {offsets = [0, 256], sizes = [16, 128], strides = [1, 1]} : vector<16x512xf32> to vector<16x128xf32>
    %706 = math.tanh %705 : vector<16x128xf32>
    %707 = vector.extract_strided_slice %692 {offsets = [0, 384], sizes = [16, 128], strides = [1, 1]} : vector<16x512xf32> to vector<16x128xf32>
    %708 = arith.negf %707 : vector<16x128xf32>
    %709 = math.exp %708 : vector<16x128xf32>
    %cst_240 = arith.constant 1.000000e+00 : f32
    %710 = vector.broadcast %cst_240 : f32 to vector<16x128xf32>
    %711 = arith.addf %710, %709 : vector<16x128xf32>
    %712 = arith.divf %710, %711 : vector<16x128xf32>
    %713 = arith.mulf %704, %651 : vector<16x128xf32>
    %714 = arith.mulf %698, %706 : vector<16x128xf32>
    %715 = arith.addf %713, %714 : vector<16x128xf32>
    %716 = math.tanh %715 : vector<16x128xf32>
    %717 = arith.mulf %712, %716 : vector<16x128xf32>
    %cst_241 = arith.constant dense<0.000000e+00> : vector<16xf32>
    %718 = vector.multi_reduction <add>, %717, %cst_241 [1] : vector<16x128xf32> to vector<16xf32>
    %719 = vector.shape_cast %718 : vector<16xf32> to vector<16x1xf32>
    %cst_242 = arith.constant 1.280000e+02 : f32
    %720 = vector.broadcast %cst_242 : f32 to vector<16x1xf32>
    %721 = arith.divf %719, %720 : vector<16x1xf32>
    %722 = arith.mulf %717, %717 : vector<16x128xf32>
    %cst_243 = arith.constant dense<0.000000e+00> : vector<16xf32>
    %723 = vector.multi_reduction <add>, %722, %cst_243 [1] : vector<16x128xf32> to vector<16xf32>
    %724 = vector.shape_cast %723 : vector<16xf32> to vector<16x1xf32>
    %cst_244 = arith.constant 1.280000e+02 : f32
    %725 = vector.broadcast %cst_244 : f32 to vector<16x1xf32>
    %726 = arith.divf %724, %725 : vector<16x1xf32>
    %727 = arith.mulf %721, %721 : vector<16x1xf32>
    %728 = arith.subf %726, %727 : vector<16x1xf32>
    %729 = vector.broadcast %721 : vector<16x1xf32> to vector<16x128xf32>
    %730 = arith.subf %717, %729 : vector<16x128xf32>
    %cst_245 = arith.constant 9.99999974E-6 : f32
    %731 = vector.broadcast %cst_245 : f32 to vector<16x1xf32>
    %732 = arith.addf %728, %731 : vector<16x1xf32>
    %733 = math.rsqrt %732 : vector<16x1xf32>
    %734 = vector.broadcast %733 : vector<16x1xf32> to vector<16x128xf32>
    %735 = arith.mulf %730, %734 : vector<16x128xf32>
    %736 = arith.mulf %735, %550 : vector<16x128xf32>
    %737 = arith.addf %736, %554 : vector<16x128xf32>
    %cst_246 = arith.constant 0.000000e+00 : f32
    %738 = vector.broadcast %cst_246 : f32 to vector<16x128xf32>
    %739 = arith.maximumf %737, %738 : vector<16x128xf32>
    %740 = arith.index_cast %c2_i32_231 : i32 to index
    %c0_247 = arith.constant 0 : index
    %c0_248 = arith.constant 0 : index
    %741 = vector.load %arg1[%740, %c0_247, %c0_248] : memref<8x16x128xf32, #tpu.memory_space<vmem>>, vector<1x16x128xf32>
    %742 = vector.shape_cast %741 : vector<1x16x128xf32> to vector<16x128xf32>
    %743 = arith.addf %739, %742 : vector<16x128xf32>
    %744 = arith.truncf %743 : vector<16x128xf32> to vector<16x128xbf16>
    %745 = arith.index_cast %c2_i32_231 : i32 to index
    %c0_249 = arith.constant 0 : index
    %c0_250 = arith.constant 0 : index
    %746 = vector.load %arg10[%745, %c0_249, %c0_250] : memref<8x16x128xbf16, #tpu.memory_space<vmem>>, vector<1x16x128xbf16>
    %747 = vector.shape_cast %746 : vector<1x16x128xbf16> to vector<16x128xbf16>
    %748 = vector.shape_cast %744 : vector<16x128xbf16> to vector<1x16x128xbf16>
    tpu.vector_store %arg10[%745, %c0_249, %c0_250], %748 {strides = array<i32>} : memref<8x16x128xbf16, #tpu.memory_space<vmem>>, vector<1x16x128xbf16>,
    %c3_i32_251 = arith.constant 3 : i32
    %749 = arith.index_cast %c3_i32_251 : i32 to index
    %c0_252 = arith.constant 0 : index
    %c0_253 = arith.constant 0 : index
    %750 = vector.load %arg11[%749, %c0_252, %c0_253] : memref<8x16x512xf32, #tpu.memory_space<vmem>>, vector<1x16x512xf32>
    %751 = vector.shape_cast %750 : vector<1x16x512xf32> to vector<16x512xf32>
    %752 = arith.truncf %717 : vector<16x128xf32> to vector<16x128xbf16>
    %c1_254 = arith.constant 1 : index
    %c0_255 = arith.constant 0 : index
    %c0_256 = arith.constant 0 : index
    %753 = vector.load %arg3[%c1_254, %c0_255, %c0_256] : memref<2x128x512xbf16, #tpu.memory_space<vmem>>, vector<1x128x512xbf16>
    %754 = vector.shape_cast %753 : vector<1x128x512xbf16> to vector<128x512xbf16>
    %cst_257 = arith.constant dense<0.000000e+00> : vector<16x512xf32>
    %755 = tpu.matmul %752, %754, %cst_257 {dimension_numbers = #tpu.dot_dimension_numbers<[1], [0], [0], [1], [0, 0, 1, 1], [], []>} : vector<16x128xbf16>, vector<128x512xbf16>, vector<16x512xf32> -> vector<16x512xf32>
    %756 = arith.addf %751, %755 : vector<16x512xf32>
    %757 = vector.extract_strided_slice %756 {offsets = [0, 0], sizes = [16, 128], strides = [1, 1]} : vector<16x512xf32> to vector<16x128xf32>
    %758 = arith.negf %757 : vector<16x128xf32>
    %759 = math.exp %758 : vector<16x128xf32>
    %cst_258 = arith.constant 1.000000e+00 : f32
    %760 = vector.broadcast %cst_258 : f32 to vector<16x128xf32>
    %761 = arith.addf %760, %759 : vector<16x128xf32>
    %762 = arith.divf %760, %761 : vector<16x128xf32>
    %763 = vector.extract_strided_slice %756 {offsets = [0, 128], sizes = [16, 128], strides = [1, 1]} : vector<16x512xf32> to vector<16x128xf32>
    %764 = arith.negf %763 : vector<16x128xf32>
    %765 = math.exp %764 : vector<16x128xf32>
    %cst_259 = arith.constant 1.000000e+00 : f32
    %766 = vector.broadcast %cst_259 : f32 to vector<16x128xf32>
    %767 = arith.addf %766, %765 : vector<16x128xf32>
    %768 = arith.divf %766, %767 : vector<16x128xf32>
    %769 = vector.extract_strided_slice %756 {offsets = [0, 256], sizes = [16, 128], strides = [1, 1]} : vector<16x512xf32> to vector<16x128xf32>
    %770 = math.tanh %769 : vector<16x128xf32>
    %771 = vector.extract_strided_slice %756 {offsets = [0, 384], sizes = [16, 128], strides = [1, 1]} : vector<16x512xf32> to vector<16x128xf32>
    %772 = arith.negf %771 : vector<16x128xf32>
    %773 = math.exp %772 : vector<16x128xf32>
    %cst_260 = arith.constant 1.000000e+00 : f32
    %774 = vector.broadcast %cst_260 : f32 to vector<16x128xf32>
    %775 = arith.addf %774, %773 : vector<16x128xf32>
    %776 = arith.divf %774, %775 : vector<16x128xf32>
    %777 = arith.mulf %768, %715 : vector<16x128xf32>
    %778 = arith.mulf %762, %770 : vector<16x128xf32>
    %779 = arith.addf %777, %778 : vector<16x128xf32>
    %780 = math.tanh %779 : vector<16x128xf32>
    %781 = arith.mulf %776, %780 : vector<16x128xf32>
    %cst_261 = arith.constant dense<0.000000e+00> : vector<16xf32>
    %782 = vector.multi_reduction <add>, %781, %cst_261 [1] : vector<16x128xf32> to vector<16xf32>
    %783 = vector.shape_cast %782 : vector<16xf32> to vector<16x1xf32>
    %cst_262 = arith.constant 1.280000e+02 : f32
    %784 = vector.broadcast %cst_262 : f32 to vector<16x1xf32>
    %785 = arith.divf %783, %784 : vector<16x1xf32>
    %786 = arith.mulf %781, %781 : vector<16x128xf32>
    %cst_263 = arith.constant dense<0.000000e+00> : vector<16xf32>
    %787 = vector.multi_reduction <add>, %786, %cst_263 [1] : vector<16x128xf32> to vector<16xf32>
    %788 = vector.shape_cast %787 : vector<16xf32> to vector<16x1xf32>
    %cst_264 = arith.constant 1.280000e+02 : f32
    %789 = vector.broadcast %cst_264 : f32 to vector<16x1xf32>
    %790 = arith.divf %788, %789 : vector<16x1xf32>
    %791 = arith.mulf %785, %785 : vector<16x1xf32>
    %792 = arith.subf %790, %791 : vector<16x1xf32>
    %793 = vector.broadcast %785 : vector<16x1xf32> to vector<16x128xf32>
    %794 = arith.subf %781, %793 : vector<16x128xf32>
    %cst_265 = arith.constant 9.99999974E-6 : f32
    %795 = vector.broadcast %cst_265 : f32 to vector<16x1xf32>
    %796 = arith.addf %792, %795 : vector<16x1xf32>
    %797 = math.rsqrt %796 : vector<16x1xf32>
    %798 = vector.broadcast %797 : vector<16x1xf32> to vector<16x128xf32>
    %799 = arith.mulf %794, %798 : vector<16x128xf32>
    %800 = arith.mulf %799, %550 : vector<16x128xf32>
    %801 = arith.addf %800, %554 : vector<16x128xf32>
    %cst_266 = arith.constant 0.000000e+00 : f32
    %802 = vector.broadcast %cst_266 : f32 to vector<16x128xf32>
    %803 = arith.maximumf %801, %802 : vector<16x128xf32>
    %804 = arith.index_cast %c3_i32_251 : i32 to index
    %c0_267 = arith.constant 0 : index
    %c0_268 = arith.constant 0 : index
    %805 = vector.load %arg1[%804, %c0_267, %c0_268] : memref<8x16x128xf32, #tpu.memory_space<vmem>>, vector<1x16x128xf32>
    %806 = vector.shape_cast %805 : vector<1x16x128xf32> to vector<16x128xf32>
    %807 = arith.addf %803, %806 : vector<16x128xf32>
    %808 = arith.truncf %807 : vector<16x128xf32> to vector<16x128xbf16>
    %809 = arith.index_cast %c3_i32_251 : i32 to index
    %c0_269 = arith.constant 0 : index
    %c0_270 = arith.constant 0 : index
    %810 = vector.load %arg10[%809, %c0_269, %c0_270] : memref<8x16x128xbf16, #tpu.memory_space<vmem>>, vector<1x16x128xbf16>
    %811 = vector.shape_cast %810 : vector<1x16x128xbf16> to vector<16x128xbf16>
    %812 = vector.shape_cast %808 : vector<16x128xbf16> to vector<1x16x128xbf16>
    tpu.vector_store %arg10[%809, %c0_269, %c0_270], %812 {strides = array<i32>} : memref<8x16x128xbf16, #tpu.memory_space<vmem>>, vector<1x16x128xbf16>,
    %c4_i32_271 = arith.constant 4 : i32
    %813 = arith.index_cast %c4_i32_271 : i32 to index
    %c0_272 = arith.constant 0 : index
    %c0_273 = arith.constant 0 : index
    %814 = vector.load %arg11[%813, %c0_272, %c0_273] : memref<8x16x512xf32, #tpu.memory_space<vmem>>, vector<1x16x512xf32>
    %815 = vector.shape_cast %814 : vector<1x16x512xf32> to vector<16x512xf32>
    %816 = arith.truncf %781 : vector<16x128xf32> to vector<16x128xbf16>
    %c1_274 = arith.constant 1 : index
    %c0_275 = arith.constant 0 : index
    %c0_276 = arith.constant 0 : index
    %817 = vector.load %arg3[%c1_274, %c0_275, %c0_276] : memref<2x128x512xbf16, #tpu.memory_space<vmem>>, vector<1x128x512xbf16>
    %818 = vector.shape_cast %817 : vector<1x128x512xbf16> to vector<128x512xbf16>
    %cst_277 = arith.constant dense<0.000000e+00> : vector<16x512xf32>
    %819 = tpu.matmul %816, %818, %cst_277 {dimension_numbers = #tpu.dot_dimension_numbers<[1], [0], [0], [1], [0, 0, 1, 1], [], []>} : vector<16x128xbf16>, vector<128x512xbf16>, vector<16x512xf32> -> vector<16x512xf32>
    %820 = arith.addf %815, %819 : vector<16x512xf32>
    %821 = vector.extract_strided_slice %820 {offsets = [0, 0], sizes = [16, 128], strides = [1, 1]} : vector<16x512xf32> to vector<16x128xf32>
    %822 = arith.negf %821 : vector<16x128xf32>
    %823 = math.exp %822 : vector<16x128xf32>
    %cst_278 = arith.constant 1.000000e+00 : f32
    %824 = vector.broadcast %cst_278 : f32 to vector<16x128xf32>
    %825 = arith.addf %824, %823 : vector<16x128xf32>
    %826 = arith.divf %824, %825 : vector<16x128xf32>
    %827 = vector.extract_strided_slice %820 {offsets = [0, 128], sizes = [16, 128], strides = [1, 1]} : vector<16x512xf32> to vector<16x128xf32>
    %828 = arith.negf %827 : vector<16x128xf32>
    %829 = math.exp %828 : vector<16x128xf32>
    %cst_279 = arith.constant 1.000000e+00 : f32
    %830 = vector.broadcast %cst_279 : f32 to vector<16x128xf32>
    %831 = arith.addf %830, %829 : vector<16x128xf32>
    %832 = arith.divf %830, %831 : vector<16x128xf32>
    %833 = vector.extract_strided_slice %820 {offsets = [0, 256], sizes = [16, 128], strides = [1, 1]} : vector<16x512xf32> to vector<16x128xf32>
    %834 = math.tanh %833 : vector<16x128xf32>
    %835 = vector.extract_strided_slice %820 {offsets = [0, 384], sizes = [16, 128], strides = [1, 1]} : vector<16x512xf32> to vector<16x128xf32>
    %836 = arith.negf %835 : vector<16x128xf32>
    %837 = math.exp %836 : vector<16x128xf32>
    %cst_280 = arith.constant 1.000000e+00 : f32
    %838 = vector.broadcast %cst_280 : f32 to vector<16x128xf32>
    %839 = arith.addf %838, %837 : vector<16x128xf32>
    %840 = arith.divf %838, %839 : vector<16x128xf32>
    %841 = arith.mulf %832, %779 : vector<16x128xf32>
    %842 = arith.mulf %826, %834 : vector<16x128xf32>
    %843 = arith.addf %841, %842 : vector<16x128xf32>
    %844 = math.tanh %843 : vector<16x128xf32>
    %845 = arith.mulf %840, %844 : vector<16x128xf32>
    %cst_281 = arith.constant dense<0.000000e+00> : vector<16xf32>
    %846 = vector.multi_reduction <add>, %845, %cst_281 [1] : vector<16x128xf32> to vector<16xf32>
    %847 = vector.shape_cast %846 : vector<16xf32> to vector<16x1xf32>
    %cst_282 = arith.constant 1.280000e+02 : f32
    %848 = vector.broadcast %cst_282 : f32 to vector<16x1xf32>
    %849 = arith.divf %847, %848 : vector<16x1xf32>
    %850 = arith.mulf %845, %845 : vector<16x128xf32>
    %cst_283 = arith.constant dense<0.000000e+00> : vector<16xf32>
    %851 = vector.multi_reduction <add>, %850, %cst_283 [1] : vector<16x128xf32> to vector<16xf32>
    %852 = vector.shape_cast %851 : vector<16xf32> to vector<16x1xf32>
    %cst_284 = arith.constant 1.280000e+02 : f32
    %853 = vector.broadcast %cst_284 : f32 to vector<16x1xf32>
    %854 = arith.divf %852, %853 : vector<16x1xf32>
    %855 = arith.mulf %849, %849 : vector<16x1xf32>
    %856 = arith.subf %854, %855 : vector<16x1xf32>
    %857 = vector.broadcast %849 : vector<16x1xf32> to vector<16x128xf32>
    %858 = arith.subf %845, %857 : vector<16x128xf32>
    %cst_285 = arith.constant 9.99999974E-6 : f32
    %859 = vector.broadcast %cst_285 : f32 to vector<16x1xf32>
    %860 = arith.addf %856, %859 : vector<16x1xf32>
    %861 = math.rsqrt %860 : vector<16x1xf32>
    %862 = vector.broadcast %861 : vector<16x1xf32> to vector<16x128xf32>
    %863 = arith.mulf %858, %862 : vector<16x128xf32>
    %864 = arith.mulf %863, %550 : vector<16x128xf32>
    %865 = arith.addf %864, %554 : vector<16x128xf32>
    %cst_286 = arith.constant 0.000000e+00 : f32
    %866 = vector.broadcast %cst_286 : f32 to vector<16x128xf32>
    %867 = arith.maximumf %865, %866 : vector<16x128xf32>
    %868 = arith.index_cast %c4_i32_271 : i32 to index
    %c0_287 = arith.constant 0 : index
    %c0_288 = arith.constant 0 : index
    %869 = vector.load %arg1[%868, %c0_287, %c0_288] : memref<8x16x128xf32, #tpu.memory_space<vmem>>, vector<1x16x128xf32>
    %870 = vector.shape_cast %869 : vector<1x16x128xf32> to vector<16x128xf32>
    %871 = arith.addf %867, %870 : vector<16x128xf32>
    %872 = arith.truncf %871 : vector<16x128xf32> to vector<16x128xbf16>
    %873 = arith.index_cast %c4_i32_271 : i32 to index
    %c0_289 = arith.constant 0 : index
    %c0_290 = arith.constant 0 : index
    %874 = vector.load %arg10[%873, %c0_289, %c0_290] : memref<8x16x128xbf16, #tpu.memory_space<vmem>>, vector<1x16x128xbf16>
    %875 = vector.shape_cast %874 : vector<1x16x128xbf16> to vector<16x128xbf16>
    %876 = vector.shape_cast %872 : vector<16x128xbf16> to vector<1x16x128xbf16>
    tpu.vector_store %arg10[%873, %c0_289, %c0_290], %876 {strides = array<i32>} : memref<8x16x128xbf16, #tpu.memory_space<vmem>>, vector<1x16x128xbf16>,
    %c5_i32_291 = arith.constant 5 : i32
    %877 = arith.index_cast %c5_i32_291 : i32 to index
    %c0_292 = arith.constant 0 : index
    %c0_293 = arith.constant 0 : index
    %878 = vector.load %arg11[%877, %c0_292, %c0_293] : memref<8x16x512xf32, #tpu.memory_space<vmem>>, vector<1x16x512xf32>
    %879 = vector.shape_cast %878 : vector<1x16x512xf32> to vector<16x512xf32>
    %880 = arith.truncf %845 : vector<16x128xf32> to vector<16x128xbf16>
    %c1_294 = arith.constant 1 : index
    %c0_295 = arith.constant 0 : index
    %c0_296 = arith.constant 0 : index
    %881 = vector.load %arg3[%c1_294, %c0_295, %c0_296] : memref<2x128x512xbf16, #tpu.memory_space<vmem>>, vector<1x128x512xbf16>
    %882 = vector.shape_cast %881 : vector<1x128x512xbf16> to vector<128x512xbf16>
    %cst_297 = arith.constant dense<0.000000e+00> : vector<16x512xf32>
    %883 = tpu.matmul %880, %882, %cst_297 {dimension_numbers = #tpu.dot_dimension_numbers<[1], [0], [0], [1], [0, 0, 1, 1], [], []>} : vector<16x128xbf16>, vector<128x512xbf16>, vector<16x512xf32> -> vector<16x512xf32>
    %884 = arith.addf %879, %883 : vector<16x512xf32>
    %885 = vector.extract_strided_slice %884 {offsets = [0, 0], sizes = [16, 128], strides = [1, 1]} : vector<16x512xf32> to vector<16x128xf32>
    %886 = arith.negf %885 : vector<16x128xf32>
    %887 = math.exp %886 : vector<16x128xf32>
    %cst_298 = arith.constant 1.000000e+00 : f32
    %888 = vector.broadcast %cst_298 : f32 to vector<16x128xf32>
    %889 = arith.addf %888, %887 : vector<16x128xf32>
    %890 = arith.divf %888, %889 : vector<16x128xf32>
    %891 = vector.extract_strided_slice %884 {offsets = [0, 128], sizes = [16, 128], strides = [1, 1]} : vector<16x512xf32> to vector<16x128xf32>
    %892 = arith.negf %891 : vector<16x128xf32>
    %893 = math.exp %892 : vector<16x128xf32>
    %cst_299 = arith.constant 1.000000e+00 : f32
    %894 = vector.broadcast %cst_299 : f32 to vector<16x128xf32>
    %895 = arith.addf %894, %893 : vector<16x128xf32>
    %896 = arith.divf %894, %895 : vector<16x128xf32>
    %897 = vector.extract_strided_slice %884 {offsets = [0, 256], sizes = [16, 128], strides = [1, 1]} : vector<16x512xf32> to vector<16x128xf32>
    %898 = math.tanh %897 : vector<16x128xf32>
    %899 = vector.extract_strided_slice %884 {offsets = [0, 384], sizes = [16, 128], strides = [1, 1]} : vector<16x512xf32> to vector<16x128xf32>
    %900 = arith.negf %899 : vector<16x128xf32>
    %901 = math.exp %900 : vector<16x128xf32>
    %cst_300 = arith.constant 1.000000e+00 : f32
    %902 = vector.broadcast %cst_300 : f32 to vector<16x128xf32>
    %903 = arith.addf %902, %901 : vector<16x128xf32>
    %904 = arith.divf %902, %903 : vector<16x128xf32>
    %905 = arith.mulf %896, %843 : vector<16x128xf32>
    %906 = arith.mulf %890, %898 : vector<16x128xf32>
    %907 = arith.addf %905, %906 : vector<16x128xf32>
    %908 = math.tanh %907 : vector<16x128xf32>
    %909 = arith.mulf %904, %908 : vector<16x128xf32>
    %cst_301 = arith.constant dense<0.000000e+00> : vector<16xf32>
    %910 = vector.multi_reduction <add>, %909, %cst_301 [1] : vector<16x128xf32> to vector<16xf32>
    %911 = vector.shape_cast %910 : vector<16xf32> to vector<16x1xf32>
    %cst_302 = arith.constant 1.280000e+02 : f32
    %912 = vector.broadcast %cst_302 : f32 to vector<16x1xf32>
    %913 = arith.divf %911, %912 : vector<16x1xf32>
    %914 = arith.mulf %909, %909 : vector<16x128xf32>
    %cst_303 = arith.constant dense<0.000000e+00> : vector<16xf32>
    %915 = vector.multi_reduction <add>, %914, %cst_303 [1] : vector<16x128xf32> to vector<16xf32>
    %916 = vector.shape_cast %915 : vector<16xf32> to vector<16x1xf32>
    %cst_304 = arith.constant 1.280000e+02 : f32
    %917 = vector.broadcast %cst_304 : f32 to vector<16x1xf32>
    %918 = arith.divf %916, %917 : vector<16x1xf32>
    %919 = arith.mulf %913, %913 : vector<16x1xf32>
    %920 = arith.subf %918, %919 : vector<16x1xf32>
    %921 = vector.broadcast %913 : vector<16x1xf32> to vector<16x128xf32>
    %922 = arith.subf %909, %921 : vector<16x128xf32>
    %cst_305 = arith.constant 9.99999974E-6 : f32
    %923 = vector.broadcast %cst_305 : f32 to vector<16x1xf32>
    %924 = arith.addf %920, %923 : vector<16x1xf32>
    %925 = math.rsqrt %924 : vector<16x1xf32>
    %926 = vector.broadcast %925 : vector<16x1xf32> to vector<16x128xf32>
    %927 = arith.mulf %922, %926 : vector<16x128xf32>
    %928 = arith.mulf %927, %550 : vector<16x128xf32>
    %929 = arith.addf %928, %554 : vector<16x128xf32>
    %cst_306 = arith.constant 0.000000e+00 : f32
    %930 = vector.broadcast %cst_306 : f32 to vector<16x128xf32>
    %931 = arith.maximumf %929, %930 : vector<16x128xf32>
    %932 = arith.index_cast %c5_i32_291 : i32 to index
    %c0_307 = arith.constant 0 : index
    %c0_308 = arith.constant 0 : index
    %933 = vector.load %arg1[%932, %c0_307, %c0_308] : memref<8x16x128xf32, #tpu.memory_space<vmem>>, vector<1x16x128xf32>
    %934 = vector.shape_cast %933 : vector<1x16x128xf32> to vector<16x128xf32>
    %935 = arith.addf %931, %934 : vector<16x128xf32>
    %936 = arith.truncf %935 : vector<16x128xf32> to vector<16x128xbf16>
    %937 = arith.index_cast %c5_i32_291 : i32 to index
    %c0_309 = arith.constant 0 : index
    %c0_310 = arith.constant 0 : index
    %938 = vector.load %arg10[%937, %c0_309, %c0_310] : memref<8x16x128xbf16, #tpu.memory_space<vmem>>, vector<1x16x128xbf16>
    %939 = vector.shape_cast %938 : vector<1x16x128xbf16> to vector<16x128xbf16>
    %940 = vector.shape_cast %936 : vector<16x128xbf16> to vector<1x16x128xbf16>
    tpu.vector_store %arg10[%937, %c0_309, %c0_310], %940 {strides = array<i32>} : memref<8x16x128xbf16, #tpu.memory_space<vmem>>, vector<1x16x128xbf16>,
    %c6_i32_311 = arith.constant 6 : i32
    %941 = arith.index_cast %c6_i32_311 : i32 to index
    %c0_312 = arith.constant 0 : index
    %c0_313 = arith.constant 0 : index
    %942 = vector.load %arg11[%941, %c0_312, %c0_313] : memref<8x16x512xf32, #tpu.memory_space<vmem>>, vector<1x16x512xf32>
    %943 = vector.shape_cast %942 : vector<1x16x512xf32> to vector<16x512xf32>
    %944 = arith.truncf %909 : vector<16x128xf32> to vector<16x128xbf16>
    %c1_314 = arith.constant 1 : index
    %c0_315 = arith.constant 0 : index
    %c0_316 = arith.constant 0 : index
    %945 = vector.load %arg3[%c1_314, %c0_315, %c0_316] : memref<2x128x512xbf16, #tpu.memory_space<vmem>>, vector<1x128x512xbf16>
    %946 = vector.shape_cast %945 : vector<1x128x512xbf16> to vector<128x512xbf16>
    %cst_317 = arith.constant dense<0.000000e+00> : vector<16x512xf32>
    %947 = tpu.matmul %944, %946, %cst_317 {dimension_numbers = #tpu.dot_dimension_numbers<[1], [0], [0], [1], [0, 0, 1, 1], [], []>} : vector<16x128xbf16>, vector<128x512xbf16>, vector<16x512xf32> -> vector<16x512xf32>
    %948 = arith.addf %943, %947 : vector<16x512xf32>
    %949 = vector.extract_strided_slice %948 {offsets = [0, 0], sizes = [16, 128], strides = [1, 1]} : vector<16x512xf32> to vector<16x128xf32>
    %950 = arith.negf %949 : vector<16x128xf32>
    %951 = math.exp %950 : vector<16x128xf32>
    %cst_318 = arith.constant 1.000000e+00 : f32
    %952 = vector.broadcast %cst_318 : f32 to vector<16x128xf32>
    %953 = arith.addf %952, %951 : vector<16x128xf32>
    %954 = arith.divf %952, %953 : vector<16x128xf32>
    %955 = vector.extract_strided_slice %948 {offsets = [0, 128], sizes = [16, 128], strides = [1, 1]} : vector<16x512xf32> to vector<16x128xf32>
    %956 = arith.negf %955 : vector<16x128xf32>
    %957 = math.exp %956 : vector<16x128xf32>
    %cst_319 = arith.constant 1.000000e+00 : f32
    %958 = vector.broadcast %cst_319 : f32 to vector<16x128xf32>
    %959 = arith.addf %958, %957 : vector<16x128xf32>
    %960 = arith.divf %958, %959 : vector<16x128xf32>
    %961 = vector.extract_strided_slice %948 {offsets = [0, 256], sizes = [16, 128], strides = [1, 1]} : vector<16x512xf32> to vector<16x128xf32>
    %962 = math.tanh %961 : vector<16x128xf32>
    %963 = vector.extract_strided_slice %948 {offsets = [0, 384], sizes = [16, 128], strides = [1, 1]} : vector<16x512xf32> to vector<16x128xf32>
    %964 = arith.negf %963 : vector<16x128xf32>
    %965 = math.exp %964 : vector<16x128xf32>
    %cst_320 = arith.constant 1.000000e+00 : f32
    %966 = vector.broadcast %cst_320 : f32 to vector<16x128xf32>
    %967 = arith.addf %966, %965 : vector<16x128xf32>
    %968 = arith.divf %966, %967 : vector<16x128xf32>
    %969 = arith.mulf %960, %907 : vector<16x128xf32>
    %970 = arith.mulf %954, %962 : vector<16x128xf32>
    %971 = arith.addf %969, %970 : vector<16x128xf32>
    %972 = math.tanh %971 : vector<16x128xf32>
    %973 = arith.mulf %968, %972 : vector<16x128xf32>
    %cst_321 = arith.constant dense<0.000000e+00> : vector<16xf32>
    %974 = vector.multi_reduction <add>, %973, %cst_321 [1] : vector<16x128xf32> to vector<16xf32>
    %975 = vector.shape_cast %974 : vector<16xf32> to vector<16x1xf32>
    %cst_322 = arith.constant 1.280000e+02 : f32
    %976 = vector.broadcast %cst_322 : f32 to vector<16x1xf32>
    %977 = arith.divf %975, %976 : vector<16x1xf32>
    %978 = arith.mulf %973, %973 : vector<16x128xf32>
    %cst_323 = arith.constant dense<0.000000e+00> : vector<16xf32>
    %979 = vector.multi_reduction <add>, %978, %cst_323 [1] : vector<16x128xf32> to vector<16xf32>
    %980 = vector.shape_cast %979 : vector<16xf32> to vector<16x1xf32>
    %cst_324 = arith.constant 1.280000e+02 : f32
    %981 = vector.broadcast %cst_324 : f32 to vector<16x1xf32>
    %982 = arith.divf %980, %981 : vector<16x1xf32>
    %983 = arith.mulf %977, %977 : vector<16x1xf32>
    %984 = arith.subf %982, %983 : vector<16x1xf32>
    %985 = vector.broadcast %977 : vector<16x1xf32> to vector<16x128xf32>
    %986 = arith.subf %973, %985 : vector<16x128xf32>
    %cst_325 = arith.constant 9.99999974E-6 : f32
    %987 = vector.broadcast %cst_325 : f32 to vector<16x1xf32>
    %988 = arith.addf %984, %987 : vector<16x1xf32>
    %989 = math.rsqrt %988 : vector<16x1xf32>
    %990 = vector.broadcast %989 : vector<16x1xf32> to vector<16x128xf32>
    %991 = arith.mulf %986, %990 : vector<16x128xf32>
    %992 = arith.mulf %991, %550 : vector<16x128xf32>
    %993 = arith.addf %992, %554 : vector<16x128xf32>
    %cst_326 = arith.constant 0.000000e+00 : f32
    %994 = vector.broadcast %cst_326 : f32 to vector<16x128xf32>
    %995 = arith.maximumf %993, %994 : vector<16x128xf32>
    %996 = arith.index_cast %c6_i32_311 : i32 to index
    %c0_327 = arith.constant 0 : index
    %c0_328 = arith.constant 0 : index
    %997 = vector.load %arg1[%996, %c0_327, %c0_328] : memref<8x16x128xf32, #tpu.memory_space<vmem>>, vector<1x16x128xf32>
    %998 = vector.shape_cast %997 : vector<1x16x128xf32> to vector<16x128xf32>
    %999 = arith.addf %995, %998 : vector<16x128xf32>
    %1000 = arith.truncf %999 : vector<16x128xf32> to vector<16x128xbf16>
    %1001 = arith.index_cast %c6_i32_311 : i32 to index
    %c0_329 = arith.constant 0 : index
    %c0_330 = arith.constant 0 : index
    %1002 = vector.load %arg10[%1001, %c0_329, %c0_330] : memref<8x16x128xbf16, #tpu.memory_space<vmem>>, vector<1x16x128xbf16>
    %1003 = vector.shape_cast %1002 : vector<1x16x128xbf16> to vector<16x128xbf16>
    %1004 = vector.shape_cast %1000 : vector<16x128xbf16> to vector<1x16x128xbf16>
    tpu.vector_store %arg10[%1001, %c0_329, %c0_330], %1004 {strides = array<i32>} : memref<8x16x128xbf16, #tpu.memory_space<vmem>>, vector<1x16x128xbf16>,
    %c7_i32_331 = arith.constant 7 : i32
    %1005 = arith.index_cast %c7_i32_331 : i32 to index
    %c0_332 = arith.constant 0 : index
    %c0_333 = arith.constant 0 : index
    %1006 = vector.load %arg11[%1005, %c0_332, %c0_333] : memref<8x16x512xf32, #tpu.memory_space<vmem>>, vector<1x16x512xf32>
    %1007 = vector.shape_cast %1006 : vector<1x16x512xf32> to vector<16x512xf32>
    %1008 = arith.truncf %973 : vector<16x128xf32> to vector<16x128xbf16>
    %c1_334 = arith.constant 1 : index
    %c0_335 = arith.constant 0 : index
    %c0_336 = arith.constant 0 : index
    %1009 = vector.load %arg3[%c1_334, %c0_335, %c0_336] : memref<2x128x512xbf16, #tpu.memory_space<vmem>>, vector<1x128x512xbf16>
    %1010 = vector.shape_cast %1009 : vector<1x128x512xbf16> to vector<128x512xbf16>
    %cst_337 = arith.constant dense<0.000000e+00> : vector<16x512xf32>
    %1011 = tpu.matmul %1008, %1010, %cst_337 {dimension_numbers = #tpu.dot_dimension_numbers<[1], [0], [0], [1], [0, 0, 1, 1], [], []>} : vector<16x128xbf16>, vector<128x512xbf16>, vector<16x512xf32> -> vector<16x512xf32>
    %1012 = arith.addf %1007, %1011 : vector<16x512xf32>
    %1013 = vector.extract_strided_slice %1012 {offsets = [0, 0], sizes = [16, 128], strides = [1, 1]} : vector<16x512xf32> to vector<16x128xf32>
    %1014 = arith.negf %1013 : vector<16x128xf32>
    %1015 = math.exp %1014 : vector<16x128xf32>
    %cst_338 = arith.constant 1.000000e+00 : f32
    %1016 = vector.broadcast %cst_338 : f32 to vector<16x128xf32>
    %1017 = arith.addf %1016, %1015 : vector<16x128xf32>
    %1018 = arith.divf %1016, %1017 : vector<16x128xf32>
    %1019 = vector.extract_strided_slice %1012 {offsets = [0, 128], sizes = [16, 128], strides = [1, 1]} : vector<16x512xf32> to vector<16x128xf32>
    %1020 = arith.negf %1019 : vector<16x128xf32>
    %1021 = math.exp %1020 : vector<16x128xf32>
    %cst_339 = arith.constant 1.000000e+00 : f32
    %1022 = vector.broadcast %cst_339 : f32 to vector<16x128xf32>
    %1023 = arith.addf %1022, %1021 : vector<16x128xf32>
    %1024 = arith.divf %1022, %1023 : vector<16x128xf32>
    %1025 = vector.extract_strided_slice %1012 {offsets = [0, 256], sizes = [16, 128], strides = [1, 1]} : vector<16x512xf32> to vector<16x128xf32>
    %1026 = math.tanh %1025 : vector<16x128xf32>
    %1027 = vector.extract_strided_slice %1012 {offsets = [0, 384], sizes = [16, 128], strides = [1, 1]} : vector<16x512xf32> to vector<16x128xf32>
    %1028 = arith.negf %1027 : vector<16x128xf32>
    %1029 = math.exp %1028 : vector<16x128xf32>
    %cst_340 = arith.constant 1.000000e+00 : f32
    %1030 = vector.broadcast %cst_340 : f32 to vector<16x128xf32>
    %1031 = arith.addf %1030, %1029 : vector<16x128xf32>
    %1032 = arith.divf %1030, %1031 : vector<16x128xf32>
    %1033 = arith.mulf %1024, %971 : vector<16x128xf32>
    %1034 = arith.mulf %1018, %1026 : vector<16x128xf32>
    %1035 = arith.addf %1033, %1034 : vector<16x128xf32>
    %1036 = math.tanh %1035 : vector<16x128xf32>
    %1037 = arith.mulf %1032, %1036 : vector<16x128xf32>
    %cst_341 = arith.constant dense<0.000000e+00> : vector<16xf32>
    %1038 = vector.multi_reduction <add>, %1037, %cst_341 [1] : vector<16x128xf32> to vector<16xf32>
    %1039 = vector.shape_cast %1038 : vector<16xf32> to vector<16x1xf32>
    %cst_342 = arith.constant 1.280000e+02 : f32
    %1040 = vector.broadcast %cst_342 : f32 to vector<16x1xf32>
    %1041 = arith.divf %1039, %1040 : vector<16x1xf32>
    %1042 = arith.mulf %1037, %1037 : vector<16x128xf32>
    %cst_343 = arith.constant dense<0.000000e+00> : vector<16xf32>
    %1043 = vector.multi_reduction <add>, %1042, %cst_343 [1] : vector<16x128xf32> to vector<16xf32>
    %1044 = vector.shape_cast %1043 : vector<16xf32> to vector<16x1xf32>
    %cst_344 = arith.constant 1.280000e+02 : f32
    %1045 = vector.broadcast %cst_344 : f32 to vector<16x1xf32>
    %1046 = arith.divf %1044, %1045 : vector<16x1xf32>
    %1047 = arith.mulf %1041, %1041 : vector<16x1xf32>
    %1048 = arith.subf %1046, %1047 : vector<16x1xf32>
    %1049 = vector.broadcast %1041 : vector<16x1xf32> to vector<16x128xf32>
    %1050 = arith.subf %1037, %1049 : vector<16x128xf32>
    %cst_345 = arith.constant 9.99999974E-6 : f32
    %1051 = vector.broadcast %cst_345 : f32 to vector<16x1xf32>
    %1052 = arith.addf %1048, %1051 : vector<16x1xf32>
    %1053 = math.rsqrt %1052 : vector<16x1xf32>
    %1054 = vector.broadcast %1053 : vector<16x1xf32> to vector<16x128xf32>
    %1055 = arith.mulf %1050, %1054 : vector<16x128xf32>
    %1056 = arith.mulf %1055, %550 : vector<16x128xf32>
    %1057 = arith.addf %1056, %554 : vector<16x128xf32>
    %cst_346 = arith.constant 0.000000e+00 : f32
    %1058 = vector.broadcast %cst_346 : f32 to vector<16x128xf32>
    %1059 = arith.maximumf %1057, %1058 : vector<16x128xf32>
    %1060 = arith.index_cast %c7_i32_331 : i32 to index
    %c0_347 = arith.constant 0 : index
    %c0_348 = arith.constant 0 : index
    %1061 = vector.load %arg1[%1060, %c0_347, %c0_348] : memref<8x16x128xf32, #tpu.memory_space<vmem>>, vector<1x16x128xf32>
    %1062 = vector.shape_cast %1061 : vector<1x16x128xf32> to vector<16x128xf32>
    %1063 = arith.addf %1059, %1062 : vector<16x128xf32>
    %1064 = arith.truncf %1063 : vector<16x128xf32> to vector<16x128xbf16>
    %1065 = arith.index_cast %c7_i32_331 : i32 to index
    %c0_349 = arith.constant 0 : index
    %c0_350 = arith.constant 0 : index
    %1066 = vector.load %arg10[%1065, %c0_349, %c0_350] : memref<8x16x128xbf16, #tpu.memory_space<vmem>>, vector<1x16x128xbf16>
    %1067 = vector.shape_cast %1066 : vector<1x16x128xbf16> to vector<16x128xbf16>
    %1068 = vector.shape_cast %1064 : vector<16x128xbf16> to vector<1x16x128xbf16>
    tpu.vector_store %arg10[%1065, %c0_349, %c0_350], %1068 {strides = array<i32>} : memref<8x16x128xbf16, #tpu.memory_space<vmem>>, vector<1x16x128xbf16>,
    %c8_i32_351 = arith.constant 8 : i32
    %c7 = arith.constant 7 : index
    %c0_352 = arith.constant 0 : index
    %c0_353 = arith.constant 0 : index
    %1069 = vector.load %arg10[%c7, %c0_352, %c0_353] : memref<8x16x128xbf16, #tpu.memory_space<vmem>>, vector<1x16x128xbf16>
    %1070 = vector.shape_cast %1069 : vector<1x16x128xbf16> to vector<16x128xbf16>
    %c0_354 = arith.constant 0 : index
    %c0_355 = arith.constant 0 : index
    %1071 = vector.load %arg7[%c0_354, %c0_355] : memref<128x5xbf16, #tpu.memory_space<vmem>>, vector<128x5xbf16>
    %cst_356 = arith.constant dense<0.000000e+00> : vector<16x5xf32>
    %1072 = tpu.matmul %1070, %1071, %cst_356 {dimension_numbers = #tpu.dot_dimension_numbers<[1], [0], [0], [1], [0, 0, 1, 1], [], []>} : vector<16x128xbf16>, vector<128x5xbf16>, vector<16x5xf32> -> vector<16x5xf32>
    %c0_357 = arith.constant 0 : index
    %c0_358 = arith.constant 0 : index
    %1073 = vector.load %arg8[%c0_357, %c0_358] : memref<1x5xf32, #tpu.memory_space<vmem>>, vector<1x5xf32>
    %1074 = vector.broadcast %1073 : vector<1x5xf32> to vector<16x5xf32>
    %1075 = arith.addf %1072, %1074 : vector<16x5xf32>
    %c0_359 = arith.constant 0 : index
    %c0_360 = arith.constant 0 : index
    %1076 = vector.load %arg9[%c0_359, %c0_360] : memref<16x5xf32, #tpu.memory_space<vmem>>, vector<16x5xf32>
    tpu.vector_store %arg9[%c0_359, %c0_360], %1075 {strides = array<i32>} : memref<16x5xf32, #tpu.memory_space<vmem>>, vector<16x5xf32>,
    return
  }
  func.func @transform_0(%arg0: i32) -> (i32, i32, i32) {
    %c0_i32 = arith.constant 0 : i32
    %c0_i32_0 = arith.constant 0 : i32
    %c0_i32_1 = arith.constant 0 : i32
    return %c0_i32, %arg0, %c0_i32_0 : i32, i32, i32
  }
  func.func @transform_1(%arg0: i32) -> (i32, i32, i32) {
    %c0_i32 = arith.constant 0 : i32
    %c0_i32_0 = arith.constant 0 : i32
    %c0_i32_1 = arith.constant 0 : i32
    %c0_i32_2 = arith.constant 0 : i32
    return %c0_i32, %c0_i32_0, %c0_i32_1 : i32, i32, i32
  }
  func.func @transform_2(%arg0: i32) -> (i32, i32, i32) {
    %c0_i32 = arith.constant 0 : i32
    %c0_i32_0 = arith.constant 0 : i32
    %c0_i32_1 = arith.constant 0 : i32
    %c0_i32_2 = arith.constant 0 : i32
    return %c0_i32, %c0_i32_0, %c0_i32_1 : i32, i32, i32
  }
  func.func @transform_3(%arg0: i32) -> (i32, i32, i32) {
    %c0_i32 = arith.constant 0 : i32
    %c0_i32_0 = arith.constant 0 : i32
    %c0_i32_1 = arith.constant 0 : i32
    %c0_i32_2 = arith.constant 0 : i32
    return %c0_i32, %c0_i32_0, %c0_i32_1 : i32, i32, i32
  }
  func.func @transform_4(%arg0: i32) -> (i32, i32, i32) {
    %c0_i32 = arith.constant 0 : i32
    %c0_i32_0 = arith.constant 0 : i32
    %c0_i32_1 = arith.constant 0 : i32
    %c0_i32_2 = arith.constant 0 : i32
    return %c0_i32, %c0_i32_0, %c0_i32_1 : i32, i32, i32
  }
  func.func @transform_5(%arg0: i32) -> (i32, i32, i32) {
    %c0_i32 = arith.constant 0 : i32
    %c0_i32_0 = arith.constant 0 : i32
    %c0_i32_1 = arith.constant 0 : i32
    %c0_i32_2 = arith.constant 0 : i32
    return %c0_i32, %c0_i32_0, %c0_i32_1 : i32, i32, i32
  }
  func.func @transform_6(%arg0: i32) -> (i32, i32) {
    %c0_i32 = arith.constant 0 : i32
    %c0_i32_0 = arith.constant 0 : i32
    %c0_i32_1 = arith.constant 0 : i32
    return %c0_i32, %c0_i32_0 : i32, i32
  }
  func.func @transform_7(%arg0: i32) -> (i32, i32) {
    %c0_i32 = arith.constant 0 : i32
    %c0_i32_0 = arith.constant 0 : i32
    %c0_i32_1 = arith.constant 0 : i32
    return %c0_i32, %c0_i32_0 : i32, i32
  }
  func.func @transform_8(%arg0: i32) -> (i32, i32) {
    %c0_i32 = arith.constant 0 : i32
    %c0_i32_0 = arith.constant 0 : i32
    return %arg0, %c0_i32 : i32, i32
  }
}

</mosaic_0001>

<llo_original>
// kernel: rnn_forward_pallas.1
$region0: #{rnn_forward_pallas.1}
  #allocation0 [shape = 'u32[]', space=smem, size = 0x4, offset = 0x4, fixed_abs, tag = 'smem constant byte address 0x4 - core index']
  #allocation1 [shape = 'u32[144,128]{1,0:T(1,128)}', space=vmem, size = 0x12000, scoped, tag = 'internal scratch']
  #allocation2 [shape = 'bf16[8,16,128]{2,1,0:T(16,128)(2,1)}', space=vmem, size = 0x8000, scoped, tag = 'scratch operand']
  #allocation3 [shape = 'f32[8,16,512]{2,1,0:T(8,128)}', space=vmem, size = 0x40000, scoped, tag = 'scratch operand']
  %s0 = inlined_call_operand.vmem [shape: f32[8,32,128], index: 0, kind: input, shape index: {}]
  %s1 = inlined_call_operand.vmem [shape: bf16[2,128,512], index: 1, kind: input, shape index: {}]
  %s2 = inlined_call_operand.vmem [shape: bf16[2,128,512], index: 2, kind: input, shape index: {}]
  %s3 = inlined_call_operand.vmem [shape: f32[2,1,512], index: 3, kind: input, shape index: {}]
  %s4 = inlined_call_operand.vmem [shape: f32[2,1,128], index: 4, kind: input, shape index: {}]
  %s5 = inlined_call_operand.vmem [shape: f32[2,1,128], index: 5, kind: input, shape index: {}]
  %s6 = inlined_call_operand.vmem [shape: bf16[128,5], index: 6, kind: input, shape index: {}]
  %s7 = inlined_call_operand.vmem [shape: f32[1,5], index: 7, kind: input, shape index: {}]
  %s8 = inlined_call_operand.vmem [shape: f32[32,5], index: 8, kind: output, shape index: {}]
  %s9 = sld [smem:[#allocation0]]
  $region103: #{rnn_forward_pallas.1} parent=0
    _
  %s11 = ssub.s32 1, %s9
  %s12 = scalar_select 0, %s11, %s9
  $region1: #{rnn_forward_pallas.1} parent=0
    #allocation4 [shape = 'u8[131072]{0}', space=vmem, size = 0x20000, scoped, tag = 'input window, operand 0']
    loop: start=0, step=1, limit=4
    $region2: #{rnn_forward_pallas.1} parent=1 // loop_pre_header
      _
    $region3: #{rnn_forward_pallas.1} parent=1 // loop_header
      %s14 = sphi 0, %s18
      %p15 = scmp.ge.s32.totalorder %s14, 4
      %s24 = sphi 0, %s26
      %s27 = sphi 0, %s24
      %s28 = sphi 0, %s27
      %s44 = sphi 0, %s28
      %s48 = sphi 0, %s48
      %s50 = sphi 0, %s48
      %s51 = sphi 0, %s50
      %s65 = sphi 0, %s51
      %s69 = sphi 0, %s69
      %s71 = sphi 0, %s69
      %s72 = sphi 0, %s71
      %s86 = sphi 0, %s72
      %s90 = sphi 0, %s90
      %s92 = sphi 0, %s90
      %s93 = sphi 0, %s92
      %s107 = sphi 0, %s93
      %s111 = sphi 0, %s111
      %s113 = sphi 0, %s111
      %s114 = sphi 0, %s113
      %s128 = sphi 0, %s114
      %s132 = sphi 0, %s132
      %s134 = sphi 0, %s132
      %s135 = sphi 0, %s134
      %s149 = sphi 0, %s135
      %s153 = sphi 0, %s153
      %s155 = sphi 0, %s153
      %s156 = sphi 0, %s155
      %s170 = sphi 0, %s156
      %s174 = sphi 0, %s174
      %s176 = sphi 0, %s174
      %s177 = sphi 0, %s176
      %s191 = sphi 0, %s177
      %s197 = sphi 0, %s199
      %s200 = sphi 0, %s197
      %s201 = sphi 0, %s200
      %s217 = sphi 0, %s201
    $region4: #{rnn_forward_pallas.1} parent=1 // loop_header_branch
      %17 = sbr.rel (%p15) target = $region8
    $region5: #{rnn_forward_pallas.1} parent=1 // loop_body
      %s19 = ssub.s32 %s14, 1
      %s20 = ssub.s32 %s14, 2
      %s21 = sadd.s32 %s14, 1
      %s22 = ssub.s32 %s14, %s21
      %p23 = scmp.eq.s32.totalorder %s22, 0
      %s25 = sadd.s32 %s24, 1
      %s26 = scalar_select %p23, %s24, %s25
      %p29 = pneg %p23
      %p30 = scmp.eq.s32.totalorder %s14, 1
      %p31 = por %p29, %p30
      %p32 = scmp.ne.s32.totalorder %s24, %s27
      %p33 = scmp.eq.s32.totalorder %s14, 0
      %p34 = por %p32, %p33
      %p35 = scmp.ne.s32.totalorder %s24, %s27
      %p36 = scmp.eq.s32.totalorder %s19, 1
      %p37 = por %p35, %p36
      %p38 = scmp.ne.s32.totalorder %s27, %s28
      %p39 = scmp.eq.s32.totalorder %s19, 0
      %p40 = por %p38, %p39
      %p41 = scmp.ne.s32.totalorder %s27, %s28
      %p42 = scmp.eq.s32.totalorder %s20, 1
      %p43 = por %p41, %p42
      %p45 = scmp.ne.s32.totalorder %s28, %s44
      %p46 = scmp.eq.s32.totalorder %s20, 0
      %p47 = por %p45, %p46
      %s49 = sadd.s32 %s48, 1
      %p52 = scmp.eq.s32.totalorder %s14, 1
      %p53 = scmp.ne.s32.totalorder %s48, %s50
      %p54 = scmp.eq.s32.totalorder %s14, 0
      %p55 = por %p53, %p54
      %p56 = scmp.ne.s32.totalorder %s48, %s50
      %p57 = scmp.eq.s32.totalorder %s19, 1
      %p58 = por %p56, %p57
      %p59 = scmp.ne.s32.totalorder %s50, %s51
      %p60 = scmp.eq.s32.totalorder %s19, 0
      %p61 = por %p59, %p60
      %p62 = scmp.ne.s32.totalorder %s50, %s51
      %p63 = scmp.eq.s32.totalorder %s20, 1
      %p64 = por %p62, %p63
      %p66 = scmp.ne.s32.totalorder %s51, %s65
      %p67 = scmp.eq.s32.totalorder %s20, 0
      %p68 = por %p66, %p67
      %s70 = sadd.s32 %s69, 1
      %p73 = scmp.eq.s32.totalorder %s14, 1
      %p74 = scmp.ne.s32.totalorder %s69, %s71
      %p75 = scmp.eq.s32.totalorder %s14, 0
      %p76 = por %p74, %p75
      %p77 = scmp.ne.s32.totalorder %s69, %s71
      %p78 = scmp.eq.s32.totalorder %s19, 1
      %p79 = por %p77, %p78
      %p80 = scmp.ne.s32.totalorder %s71, %s72
      %p81 = scmp.eq.s32.totalorder %s19, 0
      %p82 = por %p80, %p81
      %p83 = scmp.ne.s32.totalorder %s71, %s72
      %p84 = scmp.eq.s32.totalorder %s20, 1
      %p85 = por %p83, %p84
      %p87 = scmp.ne.s32.totalorder %s72, %s86
      %p88 = scmp.eq.s32.totalorder %s20, 0
      %p89 = por %p87, %p88
      %s91 = sadd.s32 %s90, 1
      %p94 = scmp.eq.s32.totalorder %s14, 1
      %p95 = scmp.ne.s32.totalorder %s90, %s92
      %p96 = scmp.eq.s32.totalorder %s14, 0
      %p97 = por %p95, %p96
      %p98 = scmp.ne.s32.totalorder %s90, %s92
      %p99 = scmp.eq.s32.totalorder %s19, 1
      %p100 = por %p98, %p99
      %p101 = scmp.ne.s32.totalorder %s92, %s93
      %p102 = scmp.eq.s32.totalorder %s19, 0
      %p103 = por %p101, %p102
      %p104 = scmp.ne.s32.totalorder %s92, %s93
      %p105 = scmp.eq.s32.totalorder %s20, 1
      %p106 = por %p104, %p105
      %p108 = scmp.ne.s32.totalorder %s93, %s107
      %p109 = scmp.eq.s32.totalorder %s20, 0
      %p110 = por %p108, %p109
      %s112 = sadd.s32 %s111, 1
      %p115 = scmp.eq.s32.totalorder %s14, 1
      %p116 = scmp.ne.s32.totalorder %s111, %s113
      %p117 = scmp.eq.s32.totalorder %s14, 0
      %p118 = por %p116, %p117
      %p119 = scmp.ne.s32.totalorder %s111, %s113
      %p120 = scmp.eq.s32.totalorder %s19, 1
      %p121 = por %p119, %p120
      %p122 = scmp.ne.s32.totalorder %s113, %s114
      %p123 = scmp.eq.s32.totalorder %s19, 0
      %p124 = por %p122, %p123
      %p125 = scmp.ne.s32.totalorder %s113, %s114
      %p126 = scmp.eq.s32.totalorder %s20, 1
      %p127 = por %p125, %p126
      %p129 = scmp.ne.s32.totalorder %s114, %s128
      %p130 = scmp.eq.s32.totalorder %s20, 0
      %p131 = por %p129, %p130
      %s133 = sadd.s32 %s132, 1
      %p136 = scmp.eq.s32.totalorder %s14, 1
      %p137 = scmp.ne.s32.totalorder %s132, %s134
      %p138 = scmp.eq.s32.totalorder %s14, 0
      %p139 = por %p137, %p138
      %p140 = scmp.ne.s32.totalorder %s132, %s134
      %p141 = scmp.eq.s32.totalorder %s19, 1
      %p142 = por %p140, %p141
      %p143 = scmp.ne.s32.totalorder %s134, %s135
      %p144 = scmp.eq.s32.totalorder %s19, 0
      %p145 = por %p143, %p144
      %p146 = scmp.ne.s32.totalorder %s134, %s135
      %p147 = scmp.eq.s32.totalorder %s20, 1
      %p148 = por %p146, %p147
      %p150 = scmp.ne.s32.totalorder %s135, %s149
      %p151 = scmp.eq.s32.totalorder %s20, 0
      %p152 = por %p150, %p151
      %s154 = sadd.s32 %s153, 1
      %p157 = scmp.eq.s32.totalorder %s14, 1
      %p158 = scmp.ne.s32.totalorder %s153, %s155
      %p159 = scmp.eq.s32.totalorder %s14, 0
      %p160 = por %p158, %p159
      %p161 = scmp.ne.s32.totalorder %s153, %s155
      %p162 = scmp.eq.s32.totalorder %s19, 1
      %p163 = por %p161, %p162
      %p164 = scmp.ne.s32.totalorder %s155, %s156
      %p165 = scmp.eq.s32.totalorder %s19, 0
      %p166 = por %p164, %p165
      %p167 = scmp.ne.s32.totalorder %s155, %s156
      %p168 = scmp.eq.s32.totalorder %s20, 1
      %p169 = por %p167, %p168
      %p171 = scmp.ne.s32.totalorder %s156, %s170
      %p172 = scmp.eq.s32.totalorder %s20, 0
      %p173 = por %p171, %p172
      %s175 = sadd.s32 %s174, 1
      %p178 = scmp.eq.s32.totalorder %s14, 1
      %p179 = scmp.ne.s32.totalorder %s174, %s176
      %p180 = scmp.eq.s32.totalorder %s14, 0
      %p181 = por %p179, %p180
      %p182 = scmp.ne.s32.totalorder %s174, %s176
      %p183 = scmp.eq.s32.totalorder %s19, 1
      %p184 = por %p182, %p183
      %p185 = scmp.ne.s32.totalorder %s176, %s177
      %p186 = scmp.eq.s32.totalorder %s19, 0
      %p187 = por %p185, %p186
      %p188 = scmp.ne.s32.totalorder %s176, %s177
      %p189 = scmp.eq.s32.totalorder %s20, 1
      %p190 = por %p188, %p189
      %p192 = scmp.ne.s32.totalorder %s177, %s191
      %p193 = scmp.eq.s32.totalorder %s20, 0
      %p194 = por %p192, %p193
      %s195 = ssub.s32 %s14, %s21
      %p196 = scmp.eq.s32.totalorder %s195, 0
      %s198 = sadd.s32 %s197, 1
      %s199 = scalar_select %p196, %s197, %s198
      %p202 = pneg %p196
      %p203 = scmp.eq.s32.totalorder %s14, 1
      %p204 = por %p202, %p203
      %p205 = scmp.ne.s32.totalorder %s197, %s200
      %p206 = scmp.eq.s32.totalorder %s14, 0
      %p207 = por %p205, %p206
      %p208 = scmp.ne.s32.totalorder %s197, %s200
      %p209 = scmp.eq.s32.totalorder %s19, 1
      %p210 = por %p208, %p209
      %p211 = scmp.ne.s32.totalorder %s200, %s201
      %p212 = scmp.eq.s32.totalorder %s19, 0
      %p213 = por %p211, %p212
      %p214 = scmp.ne.s32.totalorder %s200, %s201
      %p215 = scmp.eq.s32.totalorder %s20, 1
      %p216 = por %p214, %p215
      %p218 = scmp.ne.s32.totalorder %s201, %s217
      %p219 = scmp.eq.s32.totalorder %s20, 0
      %p220 = por %p218, %p219
      %p221 = scmp.le.s32.totalorder 1, %s14
      %p222 = scmp.lt.s32.totalorder %s14, 3
      %p223 = pnand %p221, %p222
      %p224 = pneg %p223
      // Predicated region
      $region9: #{rnn_forward_pallas.1} parent=5 // pred_check
        _
      $region10: #{rnn_forward_pallas.1} parent=5 // pred_check_branch
        %226 = sbr.rel (%p223) target = $region12
      $region11: #{rnn_forward_pallas.1} parent=5 // pred_region
        %s227 = ssub.s32 %s14, 1
        // Predicated region
        $region13: #{rnn_forward_pallas.1} parent=11 // pred_check
          %p228 = pneg %p61
        $region14: #{rnn_forward_pallas.1} parent=11 // pred_check_branch
          %230 = sbr.rel (%p228) target = $region16
        $region15: #{rnn_forward_pallas.1} parent=11 // pred_region
          _
        $region16: #{rnn_forward_pallas.1} parent=11 // pred_fallthru
          _
        // Predicated region
        $region17: #{rnn_forward_pallas.1} parent=11 // pred_check
          %p231 = pneg %p82
        $region18: #{rnn_forward_pallas.1} parent=11 // pred_check_branch
          %233 = sbr.rel (%p231) target = $region20
        $region19: #{rnn_forward_pallas.1} parent=11 // pred_region
          _
        $region20: #{rnn_forward_pallas.1} parent=11 // pred_fallthru
          _
        // Predicated region
        $region21: #{rnn_forward_pallas.1} parent=11 // pred_check
          %p234 = pneg %p103
        $region22: #{rnn_forward_pallas.1} parent=11 // pred_check_branch
          %236 = sbr.rel (%p234) target = $region24
        $region23: #{rnn_forward_pallas.1} parent=11 // pred_region
          _
        $region24: #{rnn_forward_pallas.1} parent=11 // pred_fallthru
          _
        // Predicated region
        $region25: #{rnn_forward_pallas.1} parent=11 // pred_check
          %p237 = pneg %p124
        $region26: #{rnn_forward_pallas.1} parent=11 // pred_check_branch
          %239 = sbr.rel (%p237) target = $region28
        $region27: #{rnn_forward_pallas.1} parent=11 // pred_region
          _
        $region28: #{rnn_forward_pallas.1} parent=11 // pred_fallthru
          _
        // Predicated region
        $region29: #{rnn_forward_pallas.1} parent=11 // pred_check
          %p240 = pneg %p145
        $region30: #{rnn_forward_pallas.1} parent=11 // pred_check_branch
          %242 = sbr.rel (%p240) target = $region32
        $region31: #{rnn_forward_pallas.1} parent=11 // pred_region
          _
        $region32: #{rnn_forward_pallas.1} parent=11 // pred_fallthru
          _
        // Predicated region
        $region33: #{rnn_forward_pallas.1} parent=11 // pred_check
          %p243 = pneg %p166
        $region34: #{rnn_forward_pallas.1} parent=11 // pred_check_branch
          %245 = sbr.rel (%p243) target = $region36
        $region35: #{rnn_forward_pallas.1} parent=11 // pred_region
          _
        $region36: #{rnn_forward_pallas.1} parent=11 // pred_fallthru
          _
        // Predicated region
        $region37: #{rnn_forward_pallas.1} parent=11 // pred_check
          %p246 = pneg %p187
        $region38: #{rnn_forward_pallas.1} parent=11 // pred_check_branch
          %248 = sbr.rel (%p246) target = $region40
        $region39: #{rnn_forward_pallas.1} parent=11 // pred_region
          _
        $region40: #{rnn_forward_pallas.1} parent=11 // pred_fallthru
          _
      $region12: #{rnn_forward_pallas.1} parent=5 // pred_fallthru
        _
      %p249 = scmp.lt.s32.totalorder %s14, 2
      // Predicated region
      $region41: #{rnn_forward_pallas.1} parent=5 // pred_check
        %p250 = pneg %p249
      $region42: #{rnn_forward_pallas.1} parent=5 // pred_check_branch
        %252 = sbr.rel (%p250) target = $region44
      $region43: #{rnn_forward_pallas.1} parent=5 // pred_region
        // Predicated region
        $region45: #{rnn_forward_pallas.1} parent=43 // pred_check
          %p253 = pneg %p34
        $region46: #{rnn_forward_pallas.1} parent=43 // pred_check_branch
          %255 = sbr.rel (%p253) target = $region48
        $region47: #{rnn_forward_pallas.1} parent=43 // pred_region
          %s256 = sand.u32 %s24, 1
          %s257 = sand.u32 %s24, 1
          %s258 = smul.addr %s257, 128
          %s259 = scalar_lea.vmem [#allocation4], %s258
          %s260 = smul.u32 2, %s14
          %s261 = smul.addr %s260, 8
          %s262 = scalar_lea.vmem %s0, %s261
          // Predicated region
          $region49: #{rnn_forward_pallas.1} parent=47 // pred_check
            _
          $region50: #{rnn_forward_pallas.1} parent=47 // pred_check_branch
            %264 = sbr.rel (0) target = $region52
          $region51: #{rnn_forward_pallas.1} parent=47 // pred_region
            // Predicated region
            $region53: #{rnn_forward_pallas.1} parent=51 // pred_check
              _
            $region54: #{rnn_forward_pallas.1} parent=51 // pred_check_branch
              %266 = sbr.rel (0) target = $region56
            $region55: #{rnn_forward_pallas.1} parent=51 // pred_region
              // Predicated region
              $region68: #{rnn_forward_pallas.1} parent=55 // pred_check
                _
              $region69: #{rnn_forward_pallas.1} parent=55 // pred_check_branch
                %311 = sbr.rel (0) target = $region71
              $region70: #{rnn_forward_pallas.1} parent=55 // pred_region
                loop: start=0, step=1, limit=1
                $region72: #{rnn_forward_pallas.1} parent=70 // loop_pre_header
                  _
                $region73: #{rnn_forward_pallas.1} parent=70 // loop_header
                  %s313 = sphi 0, %s317
                  %p314 = scmp.ge.s32.totalorder %s313, 1
                  %s318 = sphi %s262, %s262
                  %s319 = sphi %s259, %s259
                $region74: #{rnn_forward_pallas.1} parent=70 // loop_header_branch
                  %316 = sbr.rel (%p314) target = $region78
                $region75: #{rnn_forward_pallas.1} parent=70 // loop_body
                  %v320 = vld [vmem:[%s318] sm:$0xff]
                  %321 = vst [vmem:[%s319] sm:$0xff] %v320
                  %v322 = vld [vmem:[%s318 + $0x8] sm:$0xff]
                  %323 = vst [vmem:[%s319 + $0x8] sm:$0xff] %v322
                  %v324 = vld [vmem:[%s318 + $0x20] sm:$0xff]
                  %325 = vst [vmem:[%s319 + $0x10] sm:$0xff] %v324
                  %v326 = vld [vmem:[%s318 + $0x28] sm:$0xff]
                  %327 = vst [vmem:[%s319 + $0x18] sm:$0xff] %v326
                  %v328 = vld [vmem:[%s318 + $0x40] sm:$0xff]
                  %329 = vst [vmem:[%s319 + $0x20] sm:$0xff] %v328
                  %v330 = vld [vmem:[%s318 + $0x48] sm:$0xff]
                  %331 = vst [vmem:[%s319 + $0x28] sm:$0xff] %v330
                  %v332 = vld [vmem:[%s318 + $0x60] sm:$0xff]
                  %333 = vst [vmem:[%s319 + $0x30] sm:$0xff] %v332
                  %v334 = vld [vmem:[%s318 + $0x68] sm:$0xff]
                  %335 = vst [vmem:[%s319 + $0x38] sm:$0xff] %v334
                  %v336 = vld [vmem:[%s318 + $0x80] sm:$0xff]
                  %337 = vst [vmem:[%s319 + $0x40] sm:$0xff] %v336
                  %v338 = vld [vmem:[%s318 + $0x88] sm:$0xff]
                  %339 = vst [vmem:[%s319 + $0x48] sm:$0xff] %v338
                  %v340 = vld [vmem:[%s318 + $0xa0] sm:$0xff]
                  %341 = vst [vmem:[%s319 + $0x50] sm:$0xff] %v340
                  %v342 = vld [vmem:[%s318 + $0xa8] sm:$0xff]
                  %343 = vst [vmem:[%s319 + $0x58] sm:$0xff] %v342
                  %v344 = vld [vmem:[%s318 + $0xc0] sm:$0xff]
                  %345 = vst [vmem:[%s319 + $0x60] sm:$0xff] %v344
                  %v346 = vld [vmem:[%s318 + $0xc8] sm:$0xff]
                  %347 = vst [vmem:[%s319 + $0x68] sm:$0xff] %v346
                  %v348 = vld [vmem:[%s318 + $0xe0] sm:$0xff]
                  %349 = vst [vmem:[%s319 + $0x70] sm:$0xff] %v348
                  %v350 = vld [vmem:[%s318 + $0xe8] sm:$0xff]
                  %351 = vst [vmem:[%s319 + $0x78] sm:$0xff] %v350
                $region76: #{rnn_forward_pallas.1} parent=70 // loop_footer
                  %s317 = sadd.s32 1, %s313
                $region77: #{rnn_forward_pallas.1} parent=70 // loop_footer_branch
                  %312 = sbr.rel target = $region73
                $region78: #{rnn_forward_pallas.1} parent=70 // loop_exit
                  _
              $region71: #{rnn_forward_pallas.1} parent=55 // pred_fallthru
                _
              // Predicated region
              $region79: #{rnn_forward_pallas.1} parent=55 // pred_check
                _
              $region80: #{rnn_forward_pallas.1} parent=55 // pred_check_branch
                %353 = sbr.rel target = $region82
              $region81: #{rnn_forward_pallas.1} parent=55 // pred_region
                _
              $region82: #{rnn_forward_pallas.1} parent=55 // pred_fallthru
                _
            $region56: #{rnn_forward_pallas.1} parent=51 // pred_fallthru
              _
            // Predicated region
            $region57: #{rnn_forward_pallas.1} parent=51 // pred_check
              _
            $region58: #{rnn_forward_pallas.1} parent=51 // pred_check_branch
              %268 = sbr.rel target = $region60
            $region59: #{rnn_forward_pallas.1} parent=51 // pred_region
              loop: start=0, step=1, limit=1
              $region61: #{rnn_forward_pallas.1} parent=59 // loop_pre_header
                _
              $region62: #{rnn_forward_pallas.1} parent=59 // loop_header
                %s271 = sphi 0, %s275
                %p272 = scmp.ge.s32.totalorder %s271, 1
                %s276 = sphi %s262, %s262
                %s277 = sphi %s259, %s259
              $region63: #{rnn_forward_pallas.1} parent=59 // loop_header_branch
                %274 = sbr.rel (%p272) target = $region67
              $region64: #{rnn_forward_pallas.1} parent=59 // loop_body
                %v278 = vld [vmem:[%s276] sm:$0xff]
                %279 = vst [vmem:[%s277] sm:$0xff] %v278
                %v280 = vld [vmem:[%s276 + $0x8] sm:$0xff]
                %281 = vst [vmem:[%s277 + $0x8] sm:$0xff] %v280
                %v282 = vld [vmem:[%s276 + $0x20] sm:$0xff]
                %283 = vst [vmem:[%s277 + $0x10] sm:$0xff] %v282
                %v284 = vld [vmem:[%s276 + $0x28] sm:$0xff]
                %285 = vst [vmem:[%s277 + $0x18] sm:$0xff] %v284
                %v286 = vld [vmem:[%s276 + $0x40] sm:$0xff]
                %287 = vst [vmem:[%s277 + $0x20] sm:$0xff] %v286
                %v288 = vld [vmem:[%s276 + $0x48] sm:$0xff]
                %289 = vst [vmem:[%s277 + $0x28] sm:$0xff] %v288
                %v290 = vld [vmem:[%s276 + $0x60] sm:$0xff]
                %291 = vst [vmem:[%s277 + $0x30] sm:$0xff] %v290
                %v292 = vld [vmem:[%s276 + $0x68] sm:$0xff]
                %293 = vst [vmem:[%s277 + $0x38] sm:$0xff] %v292
                %v294 = vld [vmem:[%s276 + $0x80] sm:$0xff]
                %295 = vst [vmem:[%s277 + $0x40] sm:$0xff] %v294
                %v296 = vld [vmem:[%s276 + $0x88] sm:$0xff]
                %297 = vst [vmem:[%s277 + $0x48] sm:$0xff] %v296
                %v298 = vld [vmem:[%s276 + $0xa0] sm:$0xff]
                %299 = vst [vmem:[%s277 + $0x50] sm:$0xff] %v298
                %v300 = vld [vmem:[%s276 + $0xa8] sm:$0xff]
                %301 = vst [vmem:[%s277 + $0x58] sm:$0xff] %v300
                %v302 = vld [vmem:[%s276 + $0xc0] sm:$0xff]
                %303 = vst [vmem:[%s277 + $0x60] sm:$0xff] %v302
                %v304 = vld [vmem:[%s276 + $0xc8] sm:$0xff]
                %305 = vst [vmem:[%s277 + $0x68] sm:$0xff] %v304
                %v306 = vld [vmem:[%s276 + $0xe0] sm:$0xff]
                %307 = vst [vmem:[%s277 + $0x70] sm:$0xff] %v306
                %v308 = vld [vmem:[%s276 + $0xe8] sm:$0xff]
                %309 = vst [vmem:[%s277 + $0x78] sm:$0xff] %v308
              $region65: #{rnn_forward_pallas.1} parent=59 // loop_footer
                %s275 = sadd.s32 1, %s271
              $region66: #{rnn_forward_pallas.1} parent=59 // loop_footer_branch
                %270 = sbr.rel target = $region62
              $region67: #{rnn_forward_pallas.1} parent=59 // loop_exit
                _
            $region60: #{rnn_forward_pallas.1} parent=51 // pred_fallthru
              _
          $region52: #{rnn_forward_pallas.1} parent=47 // pred_fallthru
            _
          %354 = vnop
        $region48: #{rnn_forward_pallas.1} parent=43 // pred_fallthru
          _
      $region44: #{rnn_forward_pallas.1} parent=5 // pred_fallthru
        _
      %p355 = scmp.le.s32.totalorder 1, %s14
      %p356 = scmp.lt.s32.totalorder %s14, 3
      %p357 = pnand %p355, %p356
      %p358 = pneg %p357
      // Predicated region
      $region83: #{rnn_forward_pallas.1} parent=5 // pred_check
        _
      $region84: #{rnn_forward_pallas.1} parent=5 // pred_check_branch
        %360 = sbr.rel (%p357) target = $region86
      $region85: #{rnn_forward_pallas.1} parent=5 // pred_region
        %s361 = ssub.s32 %s14, 1
        %s362 = sand.u32 %s27, 1
        %s363 = sand.u32 %s27, 1
        %s364 = smul.addr %s363, 128
        %s365 = scalar_lea.vmem [#allocation4], %s364
        // Predicated region
        $region87: #{rnn_forward_pallas.1} parent=85 // pred_check
          %p366 = pneg %p40
        $region88: #{rnn_forward_pallas.1} parent=85 // pred_check_branch
          %368 = sbr.rel (%p366) target = $region90
        $region89: #{rnn_forward_pallas.1} parent=85 // pred_region
          _
        $region90: #{rnn_forward_pallas.1} parent=85 // pred_fallthru
          _
        %s369 = sand.u32 %s27, 1
        %s370 = sand.u32 %s27, 1
        %s371 = smul.addr %s370, 128
        %s372 = scalar_lea.vmem [#allocation4], %s371
        %p373 = pneg %p40
        %p374 = pneg %p37
        %p375 = pneg %p61
        %p376 = pneg %p58
        %p377 = pneg %p82
        %p378 = pneg %p79
        %p379 = pneg %p103
        %p380 = pneg %p100
        %p381 = pneg %p124
        %p382 = pneg %p121
        %p383 = pneg %p145
        %p384 = pneg %p142
        %p385 = pneg %p166
        %p386 = pneg %p163
        %p387 = pneg %p187
        %p388 = pneg %p184
        %p389 = pneg %p213
        %p390 = pneg %p210
        %s391 = smul.u32 2, %s19
        %p392 = scmp.lt.s32.totalorder %s391, 3
        %s393 = scalar_select %p392, %s391, 3
        %s394 = smul.addr %s393, 8
        %s395 = scalar_lea.vmem %s8, %s394
        %s396 = smul.u32 2, %s19
        %s397 = smul.u32 2, %s19
        %p398 = scmp.lt.s32.totalorder %s397, 3
        %s399 = scalar_select %p398, %s397, 3
        %s400 = smul.addr %s399, 8
        %s401 = scalar_lea.vmem %s8, %s400
        %s402 = smul.u32 2, %s19
        %v404 = vld [vmem:[%s3] sm:$0xf]
        %v405 = vld [vmem:[%s365] sm:$0xff]
        %v406 = vld [vmem:[%s365 + $0x8] sm:$0xff]
        %v407 = vld [vmem:[%s365 + $0x10] sm:$0xff]
        %v408 = vld [vmem:[%s365 + $0x18] sm:$0xff]
        %v409 = vld [vmem:[%s365 + $0x20] sm:$0xff]
        %v410 = vld [vmem:[%s365 + $0x28] sm:$0xff]
        %v411 = vld [vmem:[%s365 + $0x30] sm:$0xff]
        %v412 = vld [vmem:[%s365 + $0x38] sm:$0xff]
        %v413 = vld [vmem:[%s365 + $0x40] sm:$0xff]
        %v414 = vld [vmem:[%s365 + $0x48] sm:$0xff]
        %v415 = vld [vmem:[%s365 + $0x50] sm:$0xff]
        %v416 = vld [vmem:[%s365 + $0x58] sm:$0xff]
        %v417 = vld [vmem:[%s365 + $0x60] sm:$0xff]
        %v418 = vld [vmem:[%s365 + $0x68] sm:$0xff]
        %v419 = vld [vmem:[%s365 + $0x70] sm:$0xff]
        %v420 = vld [vmem:[%s365 + $0x78] sm:$0xff]
        %v421 = vpack.c.bf16 %v406, %v405
        %v422 = vpack.c.bf16 %v408, %v407
        %v423 = vpack.c.bf16 %v410, %v409
        %v424 = vpack.c.bf16 %v412, %v411
        %v425 = vpack.c.bf16 %v414, %v413
        %v426 = vpack.c.bf16 %v416, %v415
        %v427 = vpack.c.bf16 %v418, %v417
        %v428 = vpack.c.bf16 %v420, %v419
        %v429 = vld [vmem:[%s1] sm:$0xff]
        %v430 = vld [vmem:[%s1 + $0x8] sm:$0xff]
        %v431 = vld [vmem:[%s1 + $0x10] sm:$0xff]
        %v432 = vld [vmem:[%s1 + $0x18] sm:$0xff]
        %v433 = vld [vmem:[%s1 + $0x20] sm:$0xff]
        %v434 = vld [vmem:[%s1 + $0x28] sm:$0xff]
        %v435 = vld [vmem:[%s1 + $0x30] sm:$0xff]
        %v436 = vld [vmem:[%s1 + $0x38] sm:$0xff]
        %v437 = vld [vmem:[%s1 + $0x40] sm:$0xff]
        %v438 = vld [vmem:[%s1 + $0x48] sm:$0xff]
        %v439 = vld [vmem:[%s1 + $0x50] sm:$0xff]
        %v440 = vld [vmem:[%s1 + $0x58] sm:$0xff]
        %v441 = vld [vmem:[%s1 + $0x60] sm:$0xff]
        %v442 = vld [vmem:[%s1 + $0x68] sm:$0xff]
        %v443 = vld [vmem:[%s1 + $0x70] sm:$0xff]
        %v444 = vld [vmem:[%s1 + $0x78] sm:$0xff]
        %v445 = vld [vmem:[%s1 + $0x80] sm:$0xff]
        %v446 = vld [vmem:[%s1 + $0x88] sm:$0xff]
        %v447 = vld [vmem:[%s1 + $0x90] sm:$0xff]
        %v448 = vld [vmem:[%s1 + $0x98] sm:$0xff]
        %v449 = vld [vmem:[%s1 + $0xa0] sm:$0xff]
        %v450 = vld [vmem:[%s1 + $0xa8] sm:$0xff]
        %v451 = vld [vmem:[%s1 + $0xb0] sm:$0xff]
        %v452 = vld [vmem:[%s1 + $0xb8] sm:$0xff]
        %v453 = vld [vmem:[%s1 + $0xc0] sm:$0xff]
        %v454 = vld [vmem:[%s1 + $0xc8] sm:$0xff]
        %v455 = vld [vmem:[%s1 + $0xd0] sm:$0xff]
        %v456 = vld [vmem:[%s1 + $0xd8] sm:$0xff]
        %v457 = vld [vmem:[%s1 + $0xe0] sm:$0xff]
        %v458 = vld [vmem:[%s1 + $0xe8] sm:$0xff]
        %v459 = vld [vmem:[%s1 + $0xf0] sm:$0xff]
        %v460 = vld [vmem:[%s1 + $0xf8] sm:$0xff]
        %v493 = vunpack.c.l.b16 %v429
        %v494 = vunpack.c.h.b16 %v429
        %v495 = vunpack.c.l.b16 %v430
        %v496 = vunpack.c.h.b16 %v430
        %v497 = vunpack.c.l.b16 %v431
        %v498 = vunpack.c.h.b16 %v431
        %v499 = vunpack.c.l.b16 %v432
        %v500 = vunpack.c.h.b16 %v432
        %v501 = vunpack.c.l.b16 %v433
        %v502 = vunpack.c.h.b16 %v433
        %v503 = vunpack.c.l.b16 %v434
        %v504 = vunpack.c.h.b16 %v434
        %v505 = vunpack.c.l.b16 %v435
        %v506 = vunpack.c.h.b16 %v435
        %v507 = vunpack.c.l.b16 %v436
        %v508 = vunpack.c.h.b16 %v436
        %v509 = vunpack.c.l.b16 %v437
        %v510 = vunpack.c.h.b16 %v437
        %v511 = vunpack.c.l.b16 %v438
        %v512 = vunpack.c.h.b16 %v438
        %v513 = vunpack.c.l.b16 %v439
        %v514 = vunpack.c.h.b16 %v439
        %v515 = vunpack.c.l.b16 %v440
        %v516 = vunpack.c.h.b16 %v440
        %v517 = vunpack.c.l.b16 %v441
        %v518 = vunpack.c.h.b16 %v441
        %v519 = vunpack.c.l.b16 %v442
        %v520 = vunpack.c.h.b16 %v442
        %v521 = vunpack.c.l.b16 %v443
        %v522 = vunpack.c.h.b16 %v443
        %v523 = vunpack.c.l.b16 %v444
        %v524 = vunpack.c.h.b16 %v444
        %v525 = vunpack.c.l.b16 %v445
        %v526 = vunpack.c.h.b16 %v445
        %v527 = vunpack.c.l.b16 %v446
        %v528 = vunpack.c.h.b16 %v446
        %v529 = vunpack.c.l.b16 %v447
        %v530 = vunpack.c.h.b16 %v447
        %v531 = vunpack.c.l.b16 %v448
        %v532 = vunpack.c.h.b16 %v448
        %v533 = vunpack.c.l.b16 %v449
        %v534 = vunpack.c.h.b16 %v449
        %v535 = vunpack.c.l.b16 %v450
        %v536 = vunpack.c.h.b16 %v450
        %v537 = vunpack.c.l.b16 %v451
        %v538 = vunpack.c.h.b16 %v451
        %v539 = vunpack.c.l.b16 %v452
        %v540 = vunpack.c.h.b16 %v452
        %v541 = vunpack.c.l.b16 %v453
        %v542 = vunpack.c.h.b16 %v453
        %v543 = vunpack.c.l.b16 %v454
        %v544 = vunpack.c.h.b16 %v454
        %v545 = vunpack.c.l.b16 %v455
        %v546 = vunpack.c.h.b16 %v455
        %v547 = vunpack.c.l.b16 %v456
        %v548 = vunpack.c.h.b16 %v456
        %v549 = vunpack.c.l.b16 %v457
        %v550 = vunpack.c.h.b16 %v457
        %v551 = vunpack.c.l.b16 %v458
        %v552 = vunpack.c.h.b16 %v458
        %v553 = vunpack.c.l.b16 %v459
        %v554 = vunpack.c.h.b16 %v459
        %v555 = vunpack.c.l.b16 %v460
        %v556 = vunpack.c.h.b16 %v460
        %v557 = vpack.c.b16 %v497, %v493
        %v558 = vpack.c.b16 %v498, %v494
        %v559 = vpack.c.b16 %v499, %v495
        %v560 = vpack.c.b16 %v500, %v496
        %v561 = vpack.c.b16 %v505, %v501
        %v562 = vpack.c.b16 %v506, %v502
        %v563 = vpack.c.b16 %v507, %v503
        %v564 = vpack.c.b16 %v508, %v504
        %v565 = vpack.c.b16 %v513, %v509
        %v566 = vpack.c.b16 %v514, %v510
        %v567 = vpack.c.b16 %v515, %v511
        %v568 = vpack.c.b16 %v516, %v512
        %v569 = vpack.c.b16 %v521, %v517
        %v570 = vpack.c.b16 %v522, %v518
        %v571 = vpack.c.b16 %v523, %v519
        %v572 = vpack.c.b16 %v524, %v520
        %v573 = vpack.c.b16 %v529, %v525
        %v574 = vpack.c.b16 %v530, %v526
        %v575 = vpack.c.b16 %v531, %v527
        %v576 = vpack.c.b16 %v532, %v528
        %v577 = vpack.c.b16 %v537, %v533
        %v578 = vpack.c.b16 %v538, %v534
        %v579 = vpack.c.b16 %v539, %v535
        %v580 = vpack.c.b16 %v540, %v536
        %v581 = vpack.c.b16 %v545, %v541
        %v582 = vpack.c.b16 %v546, %v542
        %v583 = vpack.c.b16 %v547, %v543
        %v584 = vpack.c.b16 %v548, %v544
        %v585 = vpack.c.b16 %v553, %v549
        %v586 = vpack.c.b16 %v554, %v550
        %v587 = vpack.c.b16 %v555, %v551
        %v588 = vpack.c.b16 %v556, %v552
        %621 = vmatprep.subr.bf16.mxu0 %v558
        %622 = vmatpush1.bf16.msra.mxu0 %v557
        %623 = vmatprep.subr.bf16.mxu0 %v562
        %624 = vmatpush1.bf16.msra.mxu0 %v561
        %625 = vmatprep.subr.bf16.mxu0 %v566
        %626 = vmatpush1.bf16.msra.mxu0 %v565
        %627 = vmatprep.subr.bf16.mxu0 %v570
        %628 = vmatpush1.bf16.msra.mxu0 %v569
        %629 = vmatprep.subr.bf16.mxu0 %v574
        %630 = vmatpush1.bf16.msra.mxu0 %v573
        %631 = vmatprep.subr.bf16.mxu0 %v578
        %632 = vmatpush1.bf16.msra.mxu0 %v577
        %633 = vmatprep.subr.bf16.mxu0 %v582
        %634 = vmatpush1.bf16.msra.mxu0 %v581
        %635 = vmatprep.subr.bf16.mxu0 %v586
        %636 = vmatpush1.bf16.msra.mxu0 %v585
        %637 = vmatprep.subr.bf16.mxu0 0
        %638 = vmatpush1.bf16.msra.mxu0 0
        %639 = vmatprep.subr.bf16.mxu0 0
        %640 = vmatpush1.bf16.msra.mxu0 0
        %641 = vmatprep.subr.bf16.mxu0 0
        %642 = vmatpush1.bf16.msra.mxu0 0
        %643 = vmatprep.subr.bf16.mxu0 0
        %644 = vmatpush1.bf16.msra.mxu0 0
        %645 = vmatprep.subr.bf16.mxu0 0
        %646 = vmatpush1.bf16.msra.mxu0 0
        %647 = vmatprep.subr.bf16.mxu0 0
        %648 = vmatpush1.bf16.msra.mxu0 0
        %649 = vmatprep.subr.bf16.mxu0 0
        %650 = vmatpush1.bf16.msra.mxu0 0
        %651 = vmatprep.subr.bf16.mxu0 0
        %652 = vmatpush1.bf16.msra.mxu0 0
        %653 = vmatprep.mubr.bf16.mxu0 0
        %654 = vmatmul.mubr.bf16.gmra.mrb[0].mxu0 %v421
        %v655 = vpop.f32.mrb[0].mxu0
        %v656 = vadd.f32 0.0, %v655
        %v657 = vpop.f32.mrb[0].mxu0
        %v658 = vadd.f32 0.0, %v657
        %v659 = vpop.f32.mrb[0].mxu0
        %v660 = vadd.f32 0.0, %v659
        %v661 = vpop.f32.mrb[0].mxu0
        %v662 = vadd.f32 0.0, %v661
        %663 = vmatprep.mubr.bf16.mxu0 0
        %664 = vmatmul.mubr.bf16.gmra.mrb[0].mxu0 %v422
        %v665 = vpop.f32.mrb[0].mxu0
        %v666 = vadd.f32 0.0, %v665
        %v667 = vpop.f32.mrb[0].mxu0
        %v668 = vadd.f32 0.0, %v667
        %v669 = vpop.f32.mrb[0].mxu0
        %v670 = vadd.f32 0.0, %v669
        %v671 = vpop.f32.mrb[0].mxu0
        %v672 = vadd.f32 0.0, %v671
        %673 = vmatprep.mubr.bf16.mxu0 0
        %674 = vmatmul.mubr.bf16.gmra.mrb[0].mxu0 %v423
        %v675 = vpop.f32.mrb[0].mxu0
        %v676 = vadd.f32 0.0, %v675
        %v677 = vpop.f32.mrb[0].mxu0
        %v678 = vadd.f32 0.0, %v677
        %v679 = vpop.f32.mrb[0].mxu0
        %v680 = vadd.f32 0.0, %v679
        %v681 = vpop.f32.mrb[0].mxu0
        %v682 = vadd.f32 0.0, %v681
        %683 = vmatprep.mubr.bf16.mxu0 0
        %684 = vmatmul.mubr.bf16.gmra.mrb[0].mxu0 %v424
        %v685 = vpop.f32.mrb[0].mxu0
        %v686 = vadd.f32 0.0, %v685
        %v687 = vpop.f32.mrb[0].mxu0
        %v688 = vadd.f32 0.0, %v687
        %v689 = vpop.f32.mrb[0].mxu0
        %v690 = vadd.f32 0.0, %v689
        %v691 = vpop.f32.mrb[0].mxu0
        %v692 = vadd.f32 0.0, %v691
        %693 = vmatprep.mubr.bf16.mxu0 0
        %694 = vmatmul.mubr.bf16.gmra.mrb[0].mxu0 %v425
        %v695 = vpop.f32.mrb[0].mxu0
        %v696 = vadd.f32 0.0, %v695
        %v697 = vpop.f32.mrb[0].mxu0
        %v698 = vadd.f32 0.0, %v697
        %v699 = vpop.f32.mrb[0].mxu0
        %v700 = vadd.f32 0.0, %v699
        %v701 = vpop.f32.mrb[0].mxu0
        %v702 = vadd.f32 0.0, %v701
        %703 = vmatprep.mubr.bf16.mxu0 0
        %704 = vmatmul.mubr.bf16.gmra.mrb[0].mxu0 %v426
        %v705 = vpop.f32.mrb[0].mxu0
        %v706 = vadd.f32 0.0, %v705
        %v707 = vpop.f32.mrb[0].mxu0
        %v708 = vadd.f32 0.0, %v707
        %v709 = vpop.f32.mrb[0].mxu0
        %v710 = vadd.f32 0.0, %v709
        %v711 = vpop.f32.mrb[0].mxu0
        %v712 = vadd.f32 0.0, %v711
        %713 = vmatprep.mubr.bf16.mxu0 0
        %714 = vmatmul.mubr.bf16.gmra.mrb[0].mxu0 %v427
        %v715 = vpop.f32.mrb[0].mxu0
        %v716 = vadd.f32 0.0, %v715
        %v717 = vpop.f32.mrb[0].mxu0
        %v718 = vadd.f32 0.0, %v717
        %v719 = vpop.f32.mrb[0].mxu0
        %v720 = vadd.f32 0.0, %v719
        %v721 = vpop.f32.mrb[0].mxu0
        %v722 = vadd.f32 0.0, %v721
        %723 = vmatprep.mubr.bf16.mxu0 0
        %724 = vmatmul.mubr.bf16.gmra.mrb[0].mxu0 %v428
        %v725 = vpop.f32.mrb[0].mxu0
        %v726 = vadd.f32 0.0, %v725
        %v727 = vpop.f32.mrb[0].mxu0
        %v728 = vadd.f32 0.0, %v727
        %v729 = vpop.f32.mrb[0].mxu0
        %v730 = vadd.f32 0.0, %v729
        %v731 = vpop.f32.mrb[0].mxu0
        %v732 = vadd.f32 0.0, %v731
        %733 = vdwg.mxu0
        %734 = vmatprep.subr.bf16.mxu0 %v560
        %735 = vmatpush1.bf16.msra.mxu0 %v559
        %736 = vmatprep.subr.bf16.mxu0 %v564
        %737 = vmatpush1.bf16.msra.mxu0 %v563
        %738 = vmatprep.subr.bf16.mxu0 %v568
        %739 = vmatpush1.bf16.msra.mxu0 %v567
        %740 = vmatprep.subr.bf16.mxu0 %v572
        %741 = vmatpush1.bf16.msra.mxu0 %v571
        %742 = vmatprep.subr.bf16.mxu0 %v576
        %743 = vmatpush1.bf16.msra.mxu0 %v575
        %744 = vmatprep.subr.bf16.mxu0 %v580
        %745 = vmatpush1.bf16.msra.mxu0 %v579
        %746 = vmatprep.subr.bf16.mxu0 %v584
        %747 = vmatpush1.bf16.msra.mxu0 %v583
        %748 = vmatprep.subr.bf16.mxu0 %v588
        %749 = vmatpush1.bf16.msra.mxu0 %v587
        %750 = vmatprep.subr.bf16.mxu0 0
        %751 = vmatpush1.bf16.msra.mxu0 0
        %752 = vmatprep.subr.bf16.mxu0 0
        %753 = vmatpush1.bf16.msra.mxu0 0
        %754 = vmatprep.subr.bf16.mxu0 0
        %755 = vmatpush1.bf16.msra.mxu0 0
        %756 = vmatprep.subr.bf16.mxu0 0
        %757 = vmatpush1.bf16.msra.mxu0 0
        %758 = vmatprep.subr.bf16.mxu0 0
        %759 = vmatpush1.bf16.msra.mxu0 0
        %760 = vmatprep.subr.bf16.mxu0 0
        %761 = vmatpush1.bf16.msra.mxu0 0
        %762 = vmatprep.subr.bf16.mxu0 0
        %763 = vmatpush1.bf16.msra.mxu0 0
        %764 = vmatprep.subr.bf16.mxu0 0
        %765 = vmatpush1.bf16.msra.mxu0 0
        %766 = vmatprep.mubr.bf16.mxu0 0
        %767 = vmatmul.mubr.bf16.gmra.mrb[0].mxu0 %v421
        %v768 = vpop.f32.mrb[0].mxu0
        %v769 = vadd.f32 0.0, %v768
        %v770 = vpop.f32.mrb[0].mxu0
        %v771 = vadd.f32 0.0, %v770
        %v772 = vpop.f32.mrb[0].mxu0
        %v773 = vadd.f32 0.0, %v772
        %v774 = vpop.f32.mrb[0].mxu0
        %v775 = vadd.f32 0.0, %v774
        %776 = vmatprep.mubr.bf16.mxu0 0
        %777 = vmatmul.mubr.bf16.gmra.mrb[0].mxu0 %v422
        %v778 = vpop.f32.mrb[0].mxu0
        %v779 = vadd.f32 0.0, %v778
        %v780 = vpop.f32.mrb[0].mxu0
        %v781 = vadd.f32 0.0, %v780
        %v782 = vpop.f32.mrb[0].mxu0
        %v783 = vadd.f32 0.0, %v782
        %v784 = vpop.f32.mrb[0].mxu0
        %v785 = vadd.f32 0.0, %v784
        %786 = vmatprep.mubr.bf16.mxu0 0
        %787 = vmatmul.mubr.bf16.gmra.mrb[0].mxu0 %v423
        %v788 = vpop.f32.mrb[0].mxu0
        %v789 = vadd.f32 0.0, %v788
        %v790 = vpop.f32.mrb[0].mxu0
        %v791 = vadd.f32 0.0, %v790
        %v792 = vpop.f32.mrb[0].mxu0
        %v793 = vadd.f32 0.0, %v792
        %v794 = vpop.f32.mrb[0].mxu0
        %v795 = vadd.f32 0.0, %v794
        %796 = vmatprep.mubr.bf16.mxu0 0
        %797 = vmatmul.mubr.bf16.gmra.mrb[0].mxu0 %v424
        %v798 = vpop.f32.mrb[0].mxu0
        %v799 = vadd.f32 0.0, %v798
        %v800 = vpop.f32.mrb[0].mxu0
        %v801 = vadd.f32 0.0, %v800
        %v802 = vpop.f32.mrb[0].mxu0
        %v803 = vadd.f32 0.0, %v802
        %v804 = vpop.f32.mrb[0].mxu0
        %v805 = vadd.f32 0.0, %v804
        %806 = vmatprep.mubr.bf16.mxu0 0
        %807 = vmatmul.mubr.bf16.gmra.mrb[0].mxu0 %v425
        %v808 = vpop.f32.mrb[0].mxu0
        %v809 = vadd.f32 0.0, %v808
        %v810 = vpop.f32.mrb[0].mxu0
        %v811 = vadd.f32 0.0, %v810
        %v812 = vpop.f32.mrb[0].mxu0
        %v813 = vadd.f32 0.0, %v812
        %v814 = vpop.f32.mrb[0].mxu0
        %v815 = vadd.f32 0.0, %v814
        %816 = vmatprep.mubr.bf16.mxu0 0
        %817 = vmatmul.mubr.bf16.gmra.mrb[0].mxu0 %v426
        %v818 = vpop.f32.mrb[0].mxu0
        %v819 = vadd.f32 0.0, %v818
        %v820 = vpop.f32.mrb[0].mxu0
        %v821 = vadd.f32 0.0, %v820
        %v822 = vpop.f32.mrb[0].mxu0
        %v823 = vadd.f32 0.0, %v822
        %v824 = vpop.f32.mrb[0].mxu0
        %v825 = vadd.f32 0.0, %v824
        %826 = vmatprep.mubr.bf16.mxu0 0
        %827 = vmatmul.mubr.bf16.gmra.mrb[0].mxu0 %v427
        %v828 = vpop.f32.mrb[0].mxu0
        %v829 = vadd.f32 0.0, %v828
        %v830 = vpop.f32.mrb[0].mxu0
        %v831 = vadd.f32 0.0, %v830
        %v832 = vpop.f32.mrb[0].mxu0
        %v833 = vadd.f32 0.0, %v832
        %v834 = vpop.f32.mrb[0].mxu0
        %v835 = vadd.f32 0.0, %v834
        %836 = vmatprep.mubr.bf16.mxu0 0
        %837 = vmatmul.mubr.bf16.gmra.mrb[0].mxu0 %v428
        %v838 = vpop.f32.mrb[0].mxu0
        %v839 = vadd.f32 0.0, %v838
        %v840 = vpop.f32.mrb[0].mxu0
        %v841 = vadd.f32 0.0, %v840
        %v842 = vpop.f32.mrb[0].mxu0
        %v843 = vadd.f32 0.0, %v842
        %v844 = vpop.f32.mrb[0].mxu0
        %v845 = vadd.f32 0.0, %v844
        %846 = vdwg.mxu0
        %v848 = vlaneseq
        %v849 = vshrl.u32 %v848, 7
        %v850 = vsub.s32 0, %v849
        %v851 = vrot.slane %v404, %v850
        %v852 = vlaneseq
        %v853 = vshrl.u32 %v852, 7
        %v854 = vsub.s32 1, %v853
        %v855 = vrot.slane %v404, %v854
        %v856 = vlaneseq
        %v857 = vshrl.u32 %v856, 7
        %v858 = vsub.s32 2, %v857
        %v859 = vrot.slane %v404, %v858
        %v860 = vlaneseq
        %v861 = vshrl.u32 %v860, 7
        %v862 = vsub.s32 3, %v861
        %v863 = vrot.slane %v404, %v862
        %v868 = vadd.f32 %v656, %v851
        %v869 = vadd.f32 %v658, %v855
        %v870 = vadd.f32 %v769, %v859
        %v871 = vadd.f32 %v771, %v863
        %v872 = vadd.f32 %v660, %v851
        %v873 = vadd.f32 %v662, %v855
        %v874 = vadd.f32 %v773, %v859
        %v875 = vadd.f32 %v775, %v863
        %v876 = vadd.f32 %v666, %v851
        %v877 = vadd.f32 %v668, %v855
        %v878 = vadd.f32 %v779, %v859
        %v879 = vadd.f32 %v781, %v863
        %v880 = vadd.f32 %v670, %v851
        %v881 = vadd.f32 %v672, %v855
        %v882 = vadd.f32 %v783, %v859
        %v883 = vadd.f32 %v785, %v863
        %v884 = vadd.f32 %v676, %v851
        %v885 = vadd.f32 %v678, %v855
        %v886 = vadd.f32 %v789, %v859
        %v887 = vadd.f32 %v791, %v863
        %v888 = vadd.f32 %v680, %v851
        %v889 = vadd.f32 %v682, %v855
        %v890 = vadd.f32 %v793, %v859
        %v891 = vadd.f32 %v795, %v863
        %v892 = vadd.f32 %v686, %v851
        %v893 = vadd.f32 %v688, %v855
        %v894 = vadd.f32 %v799, %v859
        %v895 = vadd.f32 %v801, %v863
        %v896 = vadd.f32 %v690, %v851
        %v897 = vadd.f32 %v692, %v855
        %v898 = vadd.f32 %v803, %v859
        %v899 = vadd.f32 %v805, %v863
        %v900 = vadd.f32 %v696, %v851
        %v901 = vadd.f32 %v698, %v855
        %v902 = vadd.f32 %v809, %v859
        %v903 = vadd.f32 %v811, %v863
        %v904 = vadd.f32 %v700, %v851
        %v905 = vadd.f32 %v702, %v855
        %v906 = vadd.f32 %v813, %v859
        %v907 = vadd.f32 %v815, %v863
        %v908 = vadd.f32 %v706, %v851
        %v909 = vadd.f32 %v708, %v855
        %v910 = vadd.f32 %v819, %v859
        %v911 = vadd.f32 %v821, %v863
        %v912 = vadd.f32 %v710, %v851
        %v913 = vadd.f32 %v712, %v855
        %v914 = vadd.f32 %v823, %v859
        %v915 = vadd.f32 %v825, %v863
        %v916 = vadd.f32 %v716, %v851
        %v917 = vadd.f32 %v718, %v855
        %v918 = vadd.f32 %v829, %v859
        %v919 = vadd.f32 %v831, %v863
        %v920 = vadd.f32 %v720, %v851
        %v921 = vadd.f32 %v722, %v855
        %v922 = vadd.f32 %v833, %v859
        %v923 = vadd.f32 %v835, %v863
        %v924 = vadd.f32 %v726, %v851
        %v925 = vadd.f32 %v728, %v855
        %v926 = vadd.f32 %v839, %v859
        %v927 = vadd.f32 %v841, %v863
        %v928 = vadd.f32 %v730, %v851
        %v929 = vadd.f32 %v732, %v855
        %v930 = vadd.f32 %v843, %v859
        %v931 = vadd.f32 %v845, %v863
        %932 = vst [vmem:[#allocation3] sm:$0xff] %v868
        %933 = vst [vmem:[#allocation3 + $0x8] sm:$0xff] %v869
        %934 = vst [vmem:[#allocation3 + $0x10] sm:$0xff] %v870
        %935 = vst [vmem:[#allocation3 + $0x18] sm:$0xff] %v871
        %936 = vst [vmem:[#allocation3 + $0x20] sm:$0xff] %v872
        %937 = vst [vmem:[#allocation3 + $0x28] sm:$0xff] %v873
        %938 = vst [vmem:[#allocation3 + $0x30] sm:$0xff] %v874
        %939 = vst [vmem:[#allocation3 + $0x38] sm:$0xff] %v875
        %940 = vst [vmem:[#allocation3 + $0x40] sm:$0xff] %v876
        %941 = vst [vmem:[#allocation3 + $0x48] sm:$0xff] %v877
        %942 = vst [vmem:[#allocation3 + $0x50] sm:$0xff] %v878
        %943 = vst [vmem:[#allocation3 + $0x58] sm:$0xff] %v879
        %944 = vst [vmem:[#allocation3 + $0x60] sm:$0xff] %v880
        %945 = vst [vmem:[#allocation3 + $0x68] sm:$0xff] %v881
        %946 = vst [vmem:[#allocation3 + $0x70] sm:$0xff] %v882
        %947 = vst [vmem:[#allocation3 + $0x78] sm:$0xff] %v883
        %948 = vst [vmem:[#allocation3 + $0x80] sm:$0xff] %v884
        %949 = vst [vmem:[#allocation3 + $0x88] sm:$0xff] %v885
        %950 = vst [vmem:[#allocation3 + $0x90] sm:$0xff] %v886
        %951 = vst [vmem:[#allocation3 + $0x98] sm:$0xff] %v887
        %952 = vst [vmem:[#allocation3 + $0xa0] sm:$0xff] %v888
        %953 = vst [vmem:[#allocation3 + $0xa8] sm:$0xff] %v889
        %954 = vst [vmem:[#allocation3 + $0xb0] sm:$0xff] %v890
        %955 = vst [vmem:[#allocation3 + $0xb8] sm:$0xff] %v891
        %956 = vst [vmem:[#allocation3 + $0xc0] sm:$0xff] %v892
        %957 = vst [vmem:[#allocation3 + $0xc8] sm:$0xff] %v893
        %958 = vst [vmem:[#allocation3 + $0xd0] sm:$0xff] %v894
        %959 = vst [vmem:[#allocation3 + $0xd8] sm:$0xff] %v895
        %960 = vst [vmem:[#allocation3 + $0xe0] sm:$0xff] %v896
        %961 = vst [vmem:[#allocation3 + $0xe8] sm:$0xff] %v897
        %962 = vst [vmem:[#allocation3 + $0xf0] sm:$0xff] %v898
        %963 = vst [vmem:[#allocation3 + $0xf8] sm:$0xff] %v899
        %964 = vst [vmem:[#allocation3 + $0x100] sm:$0xff] %v900
        %965 = vst [vmem:[#allocation3 + $0x108] sm:$0xff] %v901
        %966 = vst [vmem:[#allocation3 + $0x110] sm:$0xff] %v902
        %967 = vst [vmem:[#allocation3 + $0x118] sm:$0xff] %v903
        %968 = vst [vmem:[#allocation3 + $0x120] sm:$0xff] %v904
        %969 = vst [vmem:[#allocation3 + $0x128] sm:$0xff] %v905
        %970 = vst [vmem:[#allocation3 + $0x130] sm:$0xff] %v906
        %971 = vst [vmem:[#allocation3 + $0x138] sm:$0xff] %v907
        %972 = vst [vmem:[#allocation3 + $0x140] sm:$0xff] %v908
        %973 = vst [vmem:[#allocation3 + $0x148] sm:$0xff] %v909
        %974 = vst [vmem:[#allocation3 + $0x150] sm:$0xff] %v910
        %975 = vst [vmem:[#allocation3 + $0x158] sm:$0xff] %v911
        %976 = vst [vmem:[#allocation3 + $0x160] sm:$0xff] %v912
        %977 = vst [vmem:[#allocation3 + $0x168] sm:$0xff] %v913
        %978 = vst [vmem:[#allocation3 + $0x170] sm:$0xff] %v914
        %979 = vst [vmem:[#allocation3 + $0x178] sm:$0xff] %v915
        %980 = vst [vmem:[#allocation3 + $0x180] sm:$0xff] %v916
        %981 = vst [vmem:[#allocation3 + $0x188] sm:$0xff] %v917
        %982 = vst [vmem:[#allocation3 + $0x190] sm:$0xff] %v918
        %983 = vst [vmem:[#allocation3 + $0x198] sm:$0xff] %v919
        %984 = vst [vmem:[#allocation3 + $0x1a0] sm:$0xff] %v920
        %985 = vst [vmem:[#allocation3 + $0x1a8] sm:$0xff] %v921
        %986 = vst [vmem:[#allocation3 + $0x1b0] sm:$0xff] %v922
        %987 = vst [vmem:[#allocation3 + $0x1b8] sm:$0xff] %v923
        %988 = vst [vmem:[#allocation3 + $0x1c0] sm:$0xff] %v924
        %989 = vst [vmem:[#allocation3 + $0x1c8] sm:$0xff] %v925
        %990 = vst [vmem:[#allocation3 + $0x1d0] sm:$0xff] %v926
        %991 = vst [vmem:[#allocation3 + $0x1d8] sm:$0xff] %v927
        %992 = vst [vmem:[#allocation3 + $0x1e0] sm:$0xff] %v928
        %993 = vst [vmem:[#allocation3 + $0x1e8] sm:$0xff] %v929
        %994 = vst [vmem:[#allocation3 + $0x1f0] sm:$0xff] %v930
        %995 = vst [vmem:[#allocation3 + $0x1f8] sm:$0xff] %v931
        %v996 = vld [vmem:[%s4] sm:$0x1]
        %v998 = vlaneseq
        %v999 = vshrl.u32 %v998, 7
        %v1000 = vsub.s32 0, %v999
        %v1001 = vrot.slane %v996, %v1000
        %v1003 = vld [vmem:[%s5] sm:$0x1]
        %v1005 = vlaneseq
        %v1006 = vshrl.u32 %v1005, 7
        %v1007 = vsub.s32 0, %v1006
        %v1008 = vrot.slane %v1003, %v1007
        %v1010 = vld [vmem:[#allocation3] sm:$0xff]
        %v1011 = vld [vmem:[#allocation3 + $0x8] sm:$0xff]
        %v1012 = vld [vmem:[#allocation3 + $0x10] sm:$0xff]
        %v1013 = vld [vmem:[#allocation3 + $0x18] sm:$0xff]
        %v1014 = vld [vmem:[#allocation3 + $0x20] sm:$0xff]
        %v1015 = vld [vmem:[#allocation3 + $0x28] sm:$0xff]
        %v1016 = vld [vmem:[#allocation3 + $0x30] sm:$0xff]
        %v1017 = vld [vmem:[#allocation3 + $0x38] sm:$0xff]
        %v1018 = vld [vmem:[%s2] sm:$0xff]
        %v1019 = vld [vmem:[%s2 + $0x8] sm:$0xff]
        %v1020 = vld [vmem:[%s2 + $0x10] sm:$0xff]
        %v1021 = vld [vmem:[%s2 + $0x18] sm:$0xff]
        %v1022 = vld [vmem:[%s2 + $0x20] sm:$0xff]
        %v1023 = vld [vmem:[%s2 + $0x28] sm:$0xff]
        %v1024 = vld [vmem:[%s2 + $0x30] sm:$0xff]
        %v1025 = vld [vmem:[%s2 + $0x38] sm:$0xff]
        %v1026 = vld [vmem:[%s2 + $0x40] sm:$0xff]
        %v1027 = vld [vmem:[%s2 + $0x48] sm:$0xff]
        %v1028 = vld [vmem:[%s2 + $0x50] sm:$0xff]
        %v1029 = vld [vmem:[%s2 + $0x58] sm:$0xff]
        %v1030 = vld [vmem:[%s2 + $0x60] sm:$0xff]
        %v1031 = vld [vmem:[%s2 + $0x68] sm:$0xff]
        %v1032 = vld [vmem:[%s2 + $0x70] sm:$0xff]
        %v1033 = vld [vmem:[%s2 + $0x78] sm:$0xff]
        %v1034 = vld [vmem:[%s2 + $0x80] sm:$0xff]
        %v1035 = vld [vmem:[%s2 + $0x88] sm:$0xff]
        %v1036 = vld [vmem:[%s2 + $0x90] sm:$0xff]
        %v1037 = vld [vmem:[%s2 + $0x98] sm:$0xff]
        %v1038 = vld [vmem:[%s2 + $0xa0] sm:$0xff]
        %v1039 = vld [vmem:[%s2 + $0xa8] sm:$0xff]
        %v1040 = vld [vmem:[%s2 + $0xb0] sm:$0xff]
        %v1041 = vld [vmem:[%s2 + $0xb8] sm:$0xff]
        %v1042 = vld [vmem:[%s2 + $0xc0] sm:$0xff]
        %v1043 = vld [vmem:[%s2 + $0xc8] sm:$0xff]
        %v1044 = vld [vmem:[%s2 + $0xd0] sm:$0xff]
        %v1045 = vld [vmem:[%s2 + $0xd8] sm:$0xff]
        %v1046 = vld [vmem:[%s2 + $0xe0] sm:$0xff]
        %v1047 = vld [vmem:[%s2 + $0xe8] sm:$0xff]
        %v1048 = vld [vmem:[%s2 + $0xf0] sm:$0xff]
        %v1049 = vld [vmem:[%s2 + $0xf8] sm:$0xff]
        %v1082 = vunpack.c.l.b16 %v1018
        %v1083 = vunpack.c.h.b16 %v1018
        %v1084 = vunpack.c.l.b16 %v1019
        %v1085 = vunpack.c.h.b16 %v1019
        %v1086 = vunpack.c.l.b16 %v1020
        %v1087 = vunpack.c.h.b16 %v1020
        %v1088 = vunpack.c.l.b16 %v1021
        %v1089 = vunpack.c.h.b16 %v1021
        %v1090 = vunpack.c.l.b16 %v1022
        %v1091 = vunpack.c.h.b16 %v1022
        %v1092 = vunpack.c.l.b16 %v1023
        %v1093 = vunpack.c.h.b16 %v1023
        %v1094 = vunpack.c.l.b16 %v1024
        %v1095 = vunpack.c.h.b16 %v1024
        %v1096 = vunpack.c.l.b16 %v1025
        %v1097 = vunpack.c.h.b16 %v1025
        %v1098 = vunpack.c.l.b16 %v1026
        %v1099 = vunpack.c.h.b16 %v1026
        %v1100 = vunpack.c.l.b16 %v1027
        %v1101 = vunpack.c.h.b16 %v1027
        %v1102 = vunpack.c.l.b16 %v1028
        %v1103 = vunpack.c.h.b16 %v1028
        %v1104 = vunpack.c.l.b16 %v1029
        %v1105 = vunpack.c.h.b16 %v1029
        %v1106 = vunpack.c.l.b16 %v1030
        %v1107 = vunpack.c.h.b16 %v1030
        %v1108 = vunpack.c.l.b16 %v1031
        %v1109 = vunpack.c.h.b16 %v1031
        %v1110 = vunpack.c.l.b16 %v1032
        %v1111 = vunpack.c.h.b16 %v1032
        %v1112 = vunpack.c.l.b16 %v1033
        %v1113 = vunpack.c.h.b16 %v1033
        %v1114 = vunpack.c.l.b16 %v1034
        %v1115 = vunpack.c.h.b16 %v1034
        %v1116 = vunpack.c.l.b16 %v1035
        %v1117 = vunpack.c.h.b16 %v1035
        %v1118 = vunpack.c.l.b16 %v1036
        %v1119 = vunpack.c.h.b16 %v1036
        %v1120 = vunpack.c.l.b16 %v1037
        %v1121 = vunpack.c.h.b16 %v1037
        %v1122 = vunpack.c.l.b16 %v1038
        %v1123 = vunpack.c.h.b16 %v1038
        %v1124 = vunpack.c.l.b16 %v1039
        %v1125 = vunpack.c.h.b16 %v1039
        %v1126 = vunpack.c.l.b16 %v1040
        %v1127 = vunpack.c.h.b16 %v1040
        %v1128 = vunpack.c.l.b16 %v1041
        %v1129 = vunpack.c.h.b16 %v1041
        %v1130 = vunpack.c.l.b16 %v1042
        %v1131 = vunpack.c.h.b16 %v1042
        %v1132 = vunpack.c.l.b16 %v1043
        %v1133 = vunpack.c.h.b16 %v1043
        %v1134 = vunpack.c.l.b16 %v1044
        %v1135 = vunpack.c.h.b16 %v1044
        %v1136 = vunpack.c.l.b16 %v1045
        %v1137 = vunpack.c.h.b16 %v1045
        %v1138 = vunpack.c.l.b16 %v1046
        %v1139 = vunpack.c.h.b16 %v1046
        %v1140 = vunpack.c.l.b16 %v1047
        %v1141 = vunpack.c.h.b16 %v1047
        %v1142 = vunpack.c.l.b16 %v1048
        %v1143 = vunpack.c.h.b16 %v1048
        %v1144 = vunpack.c.l.b16 %v1049
        %v1145 = vunpack.c.h.b16 %v1049
        %v1146 = vpack.c.b16 %v1086, %v1082
        %v1147 = vpack.c.b16 %v1087, %v1083
        %v1148 = vpack.c.b16 %v1088, %v1084
        %v1149 = vpack.c.b16 %v1089, %v1085
        %v1150 = vpack.c.b16 %v1094, %v1090
        %v1151 = vpack.c.b16 %v1095, %v1091
        %v1152 = vpack.c.b16 %v1096, %v1092
        %v1153 = vpack.c.b16 %v1097, %v1093
        %v1154 = vpack.c.b16 %v1102, %v1098
        %v1155 = vpack.c.b16 %v1103, %v1099
        %v1156 = vpack.c.b16 %v1104, %v1100
        %v1157 = vpack.c.b16 %v1105, %v1101
        %v1158 = vpack.c.b16 %v1110, %v1106
        %v1159 = vpack.c.b16 %v1111, %v1107
        %v1160 = vpack.c.b16 %v1112, %v1108
        %v1161 = vpack.c.b16 %v1113, %v1109
        %v1162 = vpack.c.b16 %v1118, %v1114
        %v1163 = vpack.c.b16 %v1119, %v1115
        %v1164 = vpack.c.b16 %v1120, %v1116
        %v1165 = vpack.c.b16 %v1121, %v1117
        %v1166 = vpack.c.b16 %v1126, %v1122
        %v1167 = vpack.c.b16 %v1127, %v1123
        %v1168 = vpack.c.b16 %v1128, %v1124
        %v1169 = vpack.c.b16 %v1129, %v1125
        %v1170 = vpack.c.b16 %v1134, %v1130
        %v1171 = vpack.c.b16 %v1135, %v1131
        %v1172 = vpack.c.b16 %v1136, %v1132
        %v1173 = vpack.c.b16 %v1137, %v1133
        %v1174 = vpack.c.b16 %v1142, %v1138
        %v1175 = vpack.c.b16 %v1143, %v1139
        %v1176 = vpack.c.b16 %v1144, %v1140
        %v1177 = vpack.c.b16 %v1145, %v1141
        %1210 = vmatprep.subr.bf16.mxu0 %v1147
        %1211 = vmatpush1.bf16.msra.mxu0 %v1146
        %1212 = vmatprep.subr.bf16.mxu0 %v1151
        %1213 = vmatpush1.bf16.msra.mxu0 %v1150
        %1214 = vmatprep.subr.bf16.mxu0 %v1155
        %1215 = vmatpush1.bf16.msra.mxu0 %v1154
        %1216 = vmatprep.subr.bf16.mxu0 %v1159
        %1217 = vmatpush1.bf16.msra.mxu0 %v1158
        %1218 = vmatprep.subr.bf16.mxu0 %v1163
        %1219 = vmatpush1.bf16.msra.mxu0 %v1162
        %1220 = vmatprep.subr.bf16.mxu0 %v1167
        %1221 = vmatpush1.bf16.msra.mxu0 %v1166
        %1222 = vmatprep.subr.bf16.mxu0 %v1171
        %1223 = vmatpush1.bf16.msra.mxu0 %v1170
        %1224 = vmatprep.subr.bf16.mxu0 %v1175
        %1225 = vmatpush1.bf16.msra.mxu0 %v1174
        %1226 = vmatprep.subr.bf16.mxu0 0
        %1227 = vmatpush1.bf16.msra.mxu0 0
        %1228 = vmatprep.subr.bf16.mxu0 0
        %1229 = vmatpush1.bf16.msra.mxu0 0
        %1230 = vmatprep.subr.bf16.mxu0 0
        %1231 = vmatpush1.bf16.msra.mxu0 0
        %1232 = vmatprep.subr.bf16.mxu0 0
        %1233 = vmatpush1.bf16.msra.mxu0 0
        %1234 = vmatprep.subr.bf16.mxu0 0
        %1235 = vmatpush1.bf16.msra.mxu0 0
        %1236 = vmatprep.subr.bf16.mxu0 0
        %1237 = vmatpush1.bf16.msra.mxu0 0
        %1238 = vmatprep.subr.bf16.mxu0 0
        %1239 = vmatpush1.bf16.msra.mxu0 0
        %1240 = vmatprep.subr.bf16.mxu0 0
        %1241 = vmatpush1.bf16.msra.mxu0 0
        %1242 = vmatprep.mubr.bf16.mxu0 0
        %1243 = vmatmul.mubr.bf16.gmra.mrb[0].mxu0 0
        %v1244 = vpop.f32.mrb[0].mxu0
        %v1245 = vadd.f32 0.0, %v1244
        %v1246 = vpop.f32.mrb[0].mxu0
        %v1247 = vadd.f32 0.0, %v1246
        %v1248 = vpop.f32.mrb[0].mxu0
        %v1249 = vadd.f32 0.0, %v1248
        %v1250 = vpop.f32.mrb[0].mxu0
        %v1251 = vadd.f32 0.0, %v1250
        %1252 = vdwg.mxu0
        %1253 = vmatprep.subr.bf16.mxu0 %v1149
        %1254 = vmatpush1.bf16.msra.mxu0 %v1148
        %1255 = vmatprep.subr.bf16.mxu0 %v1153
        %1256 = vmatpush1.bf16.msra.mxu0 %v1152
        %1257 = vmatprep.subr.bf16.mxu0 %v1157
        %1258 = vmatpush1.bf16.msra.mxu0 %v1156
        %1259 = vmatprep.subr.bf16.mxu0 %v1161
        %1260 = vmatpush1.bf16.msra.mxu0 %v1160
        %1261 = vmatprep.subr.bf16.mxu0 %v1165
        %1262 = vmatpush1.bf16.msra.mxu0 %v1164
        %1263 = vmatprep.subr.bf16.mxu0 %v1169
        %1264 = vmatpush1.bf16.msra.mxu0 %v1168
        %1265 = vmatprep.subr.bf16.mxu0 %v1173
        %1266 = vmatpush1.bf16.msra.mxu0 %v1172
        %1267 = vmatprep.subr.bf16.mxu0 %v1177
        %1268 = vmatpush1.bf16.msra.mxu0 %v1176
        %1269 = vmatprep.subr.bf16.mxu0 0
        %1270 = vmatpush1.bf16.msra.mxu0 0
        %1271 = vmatprep.subr.bf16.mxu0 0
        %1272 = vmatpush1.bf16.msra.mxu0 0
        %1273 = vmatprep.subr.bf16.mxu0 0
        %1274 = vmatpush1.bf16.msra.mxu0 0
        %1275 = vmatprep.subr.bf16.mxu0 0
        %1276 = vmatpush1.bf16.msra.mxu0 0
        %1277 = vmatprep.subr.bf16.mxu0 0
        %1278 = vmatpush1.bf16.msra.mxu0 0
        %1279 = vmatprep.subr.bf16.mxu0 0
        %1280 = vmatpush1.bf16.msra.mxu0 0
        %1281 = vmatprep.subr.bf16.mxu0 0
        %1282 = vmatpush1.bf16.msra.mxu0 0
        %1283 = vmatprep.subr.bf16.mxu0 0
        %1284 = vmatpush1.bf16.msra.mxu0 0
        %1285 = vmatprep.mubr.bf16.mxu0 0
        %1286 = vmatmul.mubr.bf16.gmra.mrb[0].mxu0 0
        %v1287 = vpop.f32.mrb[0].mxu0
        %v1288 = vadd.f32 0.0, %v1287
        %v1289 = vpop.f32.mrb[0].mxu0
        %v1290 = vadd.f32 0.0, %v1289
        %v1291 = vpop.f32.mrb[0].mxu0
        %v1292 = vadd.f32 0.0, %v1291
        %v1293 = vpop.f32.mrb[0].mxu0
        %v1294 = vadd.f32 0.0, %v1293
        %1295 = vdwg.mxu0
        %v1296 = vadd.f32 %v1010, %v1245
        %v1297 = vadd.f32 %v1011, %v1247
        %v1298 = vadd.f32 %v1012, %v1288
        %v1299 = vadd.f32 %v1013, %v1290
        %v1300 = vadd.f32 %v1014, %v1249
        %v1301 = vadd.f32 %v1015, %v1251
        %v1302 = vadd.f32 %v1016, %v1292
        %v1303 = vadd.f32 %v1017, %v1294
        %v1304 = vxor.u32 %v1296, 2147483648
        %v1305 = vxor.u32 %v1300, 2147483648
        %v1306 = vmul.f32 %v1304, 1.442695
        %v1307 = vpow.pop %v1306
        %v1308 = vmul.f32 %v1305, 1.442695
        %v1309 = vpow.pop %v1308
        %v1310 = vadd.f32 %v1307, 1.0
        %v1311 = vadd.f32 %v1309, 1.0
        %v1312 = vrcp.pop %v1310
        %v1313 = vmul.f32 1.0, %v1312
        %v1314 = vrcp.pop %v1311
        %v1315 = vmul.f32 1.0, %v1314
        %v1316 = vxor.u32 %v1297, 2147483648
        %v1317 = vxor.u32 %v1301, 2147483648
        %v1318 = vmul.f32 %v1316, 1.442695
        %v1319 = vpow.pop %v1318
        %v1320 = vmul.f32 %v1317, 1.442695
        %v1321 = vpow.pop %v1320
        %v1322 = vadd.f32 %v1319, 1.0
        %v1323 = vadd.f32 %v1321, 1.0
        %v1324 = vrcp.pop %v1322
        %v1325 = vmul.f32 1.0, %v1324
        %v1326 = vrcp.pop %v1323
        %v1327 = vmul.f32 1.0, %v1326
        %v1328 = vtanh.pop %v1298
        %v1329 = vtanh.pop %v1302
        %v1330 = vxor.u32 %v1299, 2147483648
        %v1331 = vxor.u32 %v1303, 2147483648
        %v1332 = vmul.f32 %v1330, 1.442695
        %v1333 = vpow.pop %v1332
        %v1334 = vmul.f32 %v1331, 1.442695
        %v1335 = vpow.pop %v1334
        %v1336 = vadd.f32 %v1333, 1.0
        %v1337 = vadd.f32 %v1335, 1.0
        %v1338 = vrcp.pop %v1336
        %v1339 = vmul.f32 1.0, %v1338
        %v1340 = vrcp.pop %v1337
        %v1341 = vmul.f32 1.0, %v1340
        %v1342 = vmul.f32 %v1325, 0.0
        %v1343 = vmul.f32 %v1327, 0.0
        %v1344 = vmul.f32 %v1313, %v1328
        %v1345 = vmul.f32 %v1315, %v1329
        %v1346 = vadd.f32 %v1342, %v1344
        %v1347 = vadd.f32 %v1343, %v1345
        %v1348 = vtanh.pop %v1346
        %v1349 = vtanh.pop %v1347
        %v1350 = vmul.f32 %v1339, %v1348
        %v1351 = vmul.f32 %v1341, %v1349
        %1352 = vadd.xlane.f32.xlu0 %v1350
        %v1353 = vpop.xlane.xlu0 %1352
        %1354 = vadd.xlane.f32.xlu0 %v1351
        %v1355 = vpop.xlane.xlu0 %1354
        %v1356 = vrcp.pop 128.0
        %v1357 = vmul.f32 %v1353, %v1356
        %v1358 = vmul.f32 %v1355, %v1356
        %v1359 = vmul.f32 %v1350, %v1350
        %v1360 = vmul.f32 %v1351, %v1351
        %1361 = vadd.xlane.f32.xlu0 %v1359
        %v1362 = vpop.xlane.xlu0 %1361
        %1363 = vadd.xlane.f32.xlu0 %v1360
        %v1364 = vpop.xlane.xlu0 %1363
        %v1365 = vmul.f32 %v1362, %v1356
        %v1366 = vmul.f32 %v1364, %v1356
        %v1367 = vmul.f32 %v1357, %v1357
        %v1368 = vmul.f32 %v1358, %v1358
        %v1369 = vsub.f32 %v1365, %v1367
        %v1370 = vsub.f32 %v1366, %v1368
        %v1371 = vsub.f32 %v1350, %v1357
        %v1372 = vsub.f32 %v1351, %v1358
        %v1373 = vadd.f32 %v1369, 1e-05
        %v1374 = vadd.f32 %v1370, 1e-05
        %v1375 = vrsqrt.pop %v1373
        %v1376 = vrsqrt.pop %v1374
        %v1377 = vmul.f32 %v1371, %v1375
        %v1378 = vmul.f32 %v1372, %v1376
        %v1379 = vmul.f32 %v1377, %v1001
        %v1380 = vmul.f32 %v1378, %v1001
        %v1381 = vadd.f32 %v1379, %v1008
        %v1382 = vadd.f32 %v1380, %v1008
        %v1383 = vmax.f32 %v1381, 0.0
        %v1384 = vmax.f32 %v1382, 0.0
        %v1385 = vld [vmem:[%s365] sm:$0xff]
        %v1386 = vld [vmem:[%s365 + $0x8] sm:$0xff]
        %v1387 = vadd.f32 %v1383, %v1385
        %v1388 = vadd.f32 %v1384, %v1386
        %v1389 = vpack.c.bf16 %v1388, %v1387
        %1390 = vst [vmem:[#allocation2] sm:$0xff] %v1389
        %s1391 = scalar_lea.vmem [#allocation3], 64
        %v1392 = vld [vmem:[%s1391] sm:$0xff]
        %v1393 = vld [vmem:[%s1391 + $0x8] sm:$0xff]
        %v1394 = vld [vmem:[%s1391 + $0x10] sm:$0xff]
        %v1395 = vld [vmem:[%s1391 + $0x18] sm:$0xff]
        %v1396 = vld [vmem:[%s1391 + $0x20] sm:$0xff]
        %v1397 = vld [vmem:[%s1391 + $0x28] sm:$0xff]
        %v1398 = vld [vmem:[%s1391 + $0x30] sm:$0xff]
        %v1399 = vld [vmem:[%s1391 + $0x38] sm:$0xff]
        %v1400 = vpack.c.bf16 %v1351, %v1350
        %v1401 = vld [vmem:[%s2] sm:$0xff]
        %v1402 = vld [vmem:[%s2 + $0x8] sm:$0xff]
        %v1403 = vld [vmem:[%s2 + $0x10] sm:$0xff]
        %v1404 = vld [vmem:[%s2 + $0x18] sm:$0xff]
        %v1405 = vld [vmem:[%s2 + $0x20] sm:$0xff]
        %v1406 = vld [vmem:[%s2 + $0x28] sm:$0xff]
        %v1407 = vld [vmem:[%s2 + $0x30] sm:$0xff]
        %v1408 = vld [vmem:[%s2 + $0x38] sm:$0xff]
        %v1409 = vld [vmem:[%s2 + $0x40] sm:$0xff]
        %v1410 = vld [vmem:[%s2 + $0x48] sm:$0xff]
        %v1411 = vld [vmem:[%s2 + $0x50] sm:$0xff]
        %v1412 = vld [vmem:[%s2 + $0x58] sm:$0xff]
        %v1413 = vld [vmem:[%s2 + $0x60] sm:$0xff]
        %v1414 = vld [vmem:[%s2 + $0x68] sm:$0xff]
        %v1415 = vld [vmem:[%s2 + $0x70] sm:$0xff]
        %v1416 = vld [vmem:[%s2 + $0x78] sm:$0xff]
        %v1417 = vld [vmem:[%s2 + $0x80] sm:$0xff]
        %v1418 = vld [vmem:[%s2 + $0x88] sm:$0xff]
        %v1419 = vld [vmem:[%s2 + $0x90] sm:$0xff]
        %v1420 = vld [vmem:[%s2 + $0x98] sm:$0xff]
        %v1421 = vld [vmem:[%s2 + $0xa0] sm:$0xff]
        %v1422 = vld [vmem:[%s2 + $0xa8] sm:$0xff]
        %v1423 = vld [vmem:[%s2 + $0xb0] sm:$0xff]
        %v1424 = vld [vmem:[%s2 + $0xb8] sm:$0xff]
        %v1425 = vld [vmem:[%s2 + $0xc0] sm:$0xff]
        %v1426 = vld [vmem:[%s2 + $0xc8] sm:$0xff]
        %v1427 = vld [vmem:[%s2 + $0xd0] sm:$0xff]
        %v1428 = vld [vmem:[%s2 + $0xd8] sm:$0xff]
        %v1429 = vld [vmem:[%s2 + $0xe0] sm:$0xff]
        %v1430 = vld [vmem:[%s2 + $0xe8] sm:$0xff]
        %v1431 = vld [vmem:[%s2 + $0xf0] sm:$0xff]
        %v1432 = vld [vmem:[%s2 + $0xf8] sm:$0xff]
        %v1465 = vunpack.c.l.b16 %v1401
        %v1466 = vunpack.c.h.b16 %v1401
        %v1467 = vunpack.c.l.b16 %v1402
        %v1468 = vunpack.c.h.b16 %v1402
        %v1469 = vunpack.c.l.b16 %v1403
        %v1470 = vunpack.c.h.b16 %v1403
        %v1471 = vunpack.c.l.b16 %v1404
        %v1472 = vunpack.c.h.b16 %v1404
        %v1473 = vunpack.c.l.b16 %v1405
        %v1474 = vunpack.c.h.b16 %v1405
        %v1475 = vunpack.c.l.b16 %v1406
        %v1476 = vunpack.c.h.b16 %v1406
        %v1477 = vunpack.c.l.b16 %v1407
        %v1478 = vunpack.c.h.b16 %v1407
        %v1479 = vunpack.c.l.b16 %v1408
        %v1480 = vunpack.c.h.b16 %v1408
        %v1481 = vunpack.c.l.b16 %v1409
        %v1482 = vunpack.c.h.b16 %v1409
        %v1483 = vunpack.c.l.b16 %v1410
        %v1484 = vunpack.c.h.b16 %v1410
        %v1485 = vunpack.c.l.b16 %v1411
        %v1486 = vunpack.c.h.b16 %v1411
        %v1487 = vunpack.c.l.b16 %v1412
        %v1488 = vunpack.c.h.b16 %v1412
        %v1489 = vunpack.c.l.b16 %v1413
        %v1490 = vunpack.c.h.b16 %v1413
        %v1491 = vunpack.c.l.b16 %v1414
        %v1492 = vunpack.c.h.b16 %v1414
        %v1493 = vunpack.c.l.b16 %v1415
        %v1494 = vunpack.c.h.b16 %v1415
        %v1495 = vunpack.c.l.b16 %v1416
        %v1496 = vunpack.c.h.b16 %v1416
        %v1497 = vunpack.c.l.b16 %v1417
        %v1498 = vunpack.c.h.b16 %v1417
        %v1499 = vunpack.c.l.b16 %v1418
        %v1500 = vunpack.c.h.b16 %v1418
        %v1501 = vunpack.c.l.b16 %v1419
        %v1502 = vunpack.c.h.b16 %v1419
        %v1503 = vunpack.c.l.b16 %v1420
        %v1504 = vunpack.c.h.b16 %v1420
        %v1505 = vunpack.c.l.b16 %v1421
        %v1506 = vunpack.c.h.b16 %v1421
        %v1507 = vunpack.c.l.b16 %v1422
        %v1508 = vunpack.c.h.b16 %v1422
        %v1509 = vunpack.c.l.b16 %v1423
        %v1510 = vunpack.c.h.b16 %v1423
        %v1511 = vunpack.c.l.b16 %v1424
        %v1512 = vunpack.c.h.b16 %v1424
        %v1513 = vunpack.c.l.b16 %v1425
        %v1514 = vunpack.c.h.b16 %v1425
        %v1515 = vunpack.c.l.b16 %v1426
        %v1516 = vunpack.c.h.b16 %v1426
        %v1517 = vunpack.c.l.b16 %v1427
        %v1518 = vunpack.c.h.b16 %v1427
        %v1519 = vunpack.c.l.b16 %v1428
        %v1520 = vunpack.c.h.b16 %v1428
        %v1521 = vunpack.c.l.b16 %v1429
        %v1522 = vunpack.c.h.b16 %v1429
        %v1523 = vunpack.c.l.b16 %v1430
        %v1524 = vunpack.c.h.b16 %v1430
        %v1525 = vunpack.c.l.b16 %v1431
        %v1526 = vunpack.c.h.b16 %v1431
        %v1527 = vunpack.c.l.b16 %v1432
        %v1528 = vunpack.c.h.b16 %v1432
        %v1529 = vpack.c.b16 %v1469, %v1465
        %v1530 = vpack.c.b16 %v1470, %v1466
        %v1531 = vpack.c.b16 %v1471, %v1467
        %v1532 = vpack.c.b16 %v1472, %v1468
        %v1533 = vpack.c.b16 %v1477, %v1473
        %v1534 = vpack.c.b16 %v1478, %v1474
        %v1535 = vpack.c.b16 %v1479, %v1475
        %v1536 = vpack.c.b16 %v1480, %v1476
        %v1537 = vpack.c.b16 %v1485, %v1481
        %v1538 = vpack.c.b16 %v1486, %v1482
        %v1539 = vpack.c.b16 %v1487, %v1483
        %v1540 = vpack.c.b16 %v1488, %v1484
        %v1541 = vpack.c.b16 %v1493, %v1489
        %v1542 = vpack.c.b16 %v1494, %v1490
        %v1543 = vpack.c.b16 %v1495, %v1491
        %v1544 = vpack.c.b16 %v1496, %v1492
        %v1545 = vpack.c.b16 %v1501, %v1497
        %v1546 = vpack.c.b16 %v1502, %v1498
        %v1547 = vpack.c.b16 %v1503, %v1499
        %v1548 = vpack.c.b16 %v1504, %v1500
        %v1549 = vpack.c.b16 %v1509, %v1505
        %v1550 = vpack.c.b16 %v1510, %v1506
        %v1551 = vpack.c.b16 %v1511, %v1507
        %v1552 = vpack.c.b16 %v1512, %v1508
        %v1553 = vpack.c.b16 %v1517, %v1513
        %v1554 = vpack.c.b16 %v1518, %v1514
        %v1555 = vpack.c.b16 %v1519, %v1515
        %v1556 = vpack.c.b16 %v1520, %v1516
        %v1557 = vpack.c.b16 %v1525, %v1521
        %v1558 = vpack.c.b16 %v1526, %v1522
        %v1559 = vpack.c.b16 %v1527, %v1523
        %v1560 = vpack.c.b16 %v1528, %v1524
        %1593 = vmatprep.subr.bf16.mxu0 %v1530
        %1594 = vmatpush1.bf16.msra.mxu0 %v1529
        %1595 = vmatprep.subr.bf16.mxu0 %v1534
        %1596 = vmatpush1.bf16.msra.mxu0 %v1533
        %1597 = vmatprep.subr.bf16.mxu0 %v1538
        %1598 = vmatpush1.bf16.msra.mxu0 %v1537
        %1599 = vmatprep.subr.bf16.mxu0 %v1542
        %1600 = vmatpush1.bf16.msra.mxu0 %v1541
        %1601 = vmatprep.subr.bf16.mxu0 %v1546
        %1602 = vmatpush1.bf16.msra.mxu0 %v1545
        %1603 = vmatprep.subr.bf16.mxu0 %v1550
        %1604 = vmatpush1.bf16.msra.mxu0 %v1549
        %1605 = vmatprep.subr.bf16.mxu0 %v1554
        %1606 = vmatpush1.bf16.msra.mxu0 %v1553
        %1607 = vmatprep.subr.bf16.mxu0 %v1558
        %1608 = vmatpush1.bf16.msra.mxu0 %v1557
        %1609 = vmatprep.subr.bf16.mxu0 0
        %1610 = vmatpush1.bf16.msra.mxu0 0
        %1611 = vmatprep.subr.bf16.mxu0 0
        %1612 = vmatpush1.bf16.msra.mxu0 0
        %1613 = vmatprep.subr.bf16.mxu0 0
        %1614 = vmatpush1.bf16.msra.mxu0 0
        %1615 = vmatprep.subr.bf16.mxu0 0
        %1616 = vmatpush1.bf16.msra.mxu0 0
        %1617 = vmatprep.subr.bf16.mxu0 0
        %1618 = vmatpush1.bf16.msra.mxu0 0
        %1619 = vmatprep.subr.bf16.mxu0 0
        %1620 = vmatpush1.bf16.msra.mxu0 0
        %1621 = vmatprep.subr.bf16.mxu0 0
        %1622 = vmatpush1.bf16.msra.mxu0 0
        %1623 = vmatprep.subr.bf16.mxu0 0
        %1624 = vmatpush1.bf16.msra.mxu0 0
        %1625 = vmatprep.mubr.bf16.mxu0 0
        %1626 = vmatmul.mubr.bf16.gmra.mrb[0].mxu0 %v1400
        %v1627 = vpop.f32.mrb[0].mxu0
        %v1628 = vadd.f32 0.0, %v1627
        %v1629 = vpop.f32.mrb[0].mxu0
        %v1630 = vadd.f32 0.0, %v1629
        %v1631 = vpop.f32.mrb[0].mxu0
        %v1632 = vadd.f32 0.0, %v1631
        %v1633 = vpop.f32.mrb[0].mxu0
        %v1634 = vadd.f32 0.0, %v1633
        %1635 = vdwg.mxu0
        %1636 = vmatprep.subr.bf16.mxu0 %v1532
        %1637 = vmatpush1.bf16.msra.mxu0 %v1531
        %1638 = vmatprep.subr.bf16.mxu0 %v1536
        %1639 = vmatpush1.bf16.msra.mxu0 %v1535
        %1640 = vmatprep.subr.bf16.mxu0 %v1540
        %1641 = vmatpush1.bf16.msra.mxu0 %v1539
        %1642 = vmatprep.subr.bf16.mxu0 %v1544
        %1643 = vmatpush1.bf16.msra.mxu0 %v1543
        %1644 = vmatprep.subr.bf16.mxu0 %v1548
        %1645 = vmatpush1.bf16.msra.mxu0 %v1547
        %1646 = vmatprep.subr.bf16.mxu0 %v1552
        %1647 = vmatpush1.bf16.msra.mxu0 %v1551
        %1648 = vmatprep.subr.bf16.mxu0 %v1556
        %1649 = vmatpush1.bf16.msra.mxu0 %v1555
        %1650 = vmatprep.subr.bf16.mxu0 %v1560
        %1651 = vmatpush1.bf16.msra.mxu0 %v1559
        %1652 = vmatprep.subr.bf16.mxu0 0
        %1653 = vmatpush1.bf16.msra.mxu0 0
        %1654 = vmatprep.subr.bf16.mxu0 0
        %1655 = vmatpush1.bf16.msra.mxu0 0
        %1656 = vmatprep.subr.bf16.mxu0 0
        %1657 = vmatpush1.bf16.msra.mxu0 0
        %1658 = vmatprep.subr.bf16.mxu0 0
        %1659 = vmatpush1.bf16.msra.mxu0 0
        %1660 = vmatprep.subr.bf16.mxu0 0
        %1661 = vmatpush1.bf16.msra.mxu0 0
        %1662 = vmatprep.subr.bf16.mxu0 0
        %1663 = vmatpush1.bf16.msra.mxu0 0
        %1664 = vmatprep.subr.bf16.mxu0 0
        %1665 = vmatpush1.bf16.msra.mxu0 0
        %1666 = vmatprep.subr.bf16.mxu0 0
        %1667 = vmatpush1.bf16.msra.mxu0 0
        %1668 = vmatprep.mubr.bf16.mxu0 0
        %1669 = vmatmul.mubr.bf16.gmra.mrb[0].mxu0 %v1400
        %v1670 = vpop.f32.mrb[0].mxu0
        %v1671 = vadd.f32 0.0, %v1670
        %v1672 = vpop.f32.mrb[0].mxu0
        %v1673 = vadd.f32 0.0, %v1672
        %v1674 = vpop.f32.mrb[0].mxu0
        %v1675 = vadd.f32 0.0, %v1674
        %v1676 = vpop.f32.mrb[0].mxu0
        %v1677 = vadd.f32 0.0, %v1676
        %1678 = vdwg.mxu0
        %v1679 = vadd.f32 %v1392, %v1628
        %v1680 = vadd.f32 %v1393, %v1630
        %v1681 = vadd.f32 %v1394, %v1671
        %v1682 = vadd.f32 %v1395, %v1673
        %v1683 = vadd.f32 %v1396, %v1632
        %v1684 = vadd.f32 %v1397, %v1634
        %v1685 = vadd.f32 %v1398, %v1675
        %v1686 = vadd.f32 %v1399, %v1677
        %v1687 = vxor.u32 %v1679, 2147483648
        %v1688 = vxor.u32 %v1683, 2147483648
        %v1689 = vmul.f32 %v1687, 1.442695
        %v1690 = vpow.pop %v1689
        %v1691 = vmul.f32 %v1688, 1.442695
        %v1692 = vpow.pop %v1691
        %v1693 = vadd.f32 %v1690, 1.0
        %v1694 = vadd.f32 %v1692, 1.0
        %v1695 = vrcp.pop %v1693
        %v1696 = vmul.f32 1.0, %v1695
        %v1697 = vrcp.pop %v1694
        %v1698 = vmul.f32 1.0, %v1697
        %v1699 = vxor.u32 %v1680, 2147483648
        %v1700 = vxor.u32 %v1684, 2147483648
        %v1701 = vmul.f32 %v1699, 1.442695
        %v1702 = vpow.pop %v1701
        %v1703 = vmul.f32 %v1700, 1.442695
        %v1704 = vpow.pop %v1703
        %v1705 = vadd.f32 %v1702, 1.0
        %v1706 = vadd.f32 %v1704, 1.0
        %v1707 = vrcp.pop %v1705
        %v1708 = vmul.f32 1.0, %v1707
        %v1709 = vrcp.pop %v1706
        %v1710 = vmul.f32 1.0, %v1709
        %v1711 = vtanh.pop %v1681
        %v1712 = vtanh.pop %v1685
        %v1713 = vxor.u32 %v1682, 2147483648
        %v1714 = vxor.u32 %v1686, 2147483648
        %v1715 = vmul.f32 %v1713, 1.442695
        %v1716 = vpow.pop %v1715
        %v1717 = vmul.f32 %v1714, 1.442695
        %v1718 = vpow.pop %v1717
        %v1719 = vadd.f32 %v1716, 1.0
        %v1720 = vadd.f32 %v1718, 1.0
        %v1721 = vrcp.pop %v1719
        %v1722 = vmul.f32 1.0, %v1721
        %v1723 = vrcp.pop %v1720
        %v1724 = vmul.f32 1.0, %v1723
        %v1725 = vmul.f32 %v1708, %v1346
        %v1726 = vmul.f32 %v1710, %v1347
        %v1727 = vmul.f32 %v1696, %v1711
        %v1728 = vmul.f32 %v1698, %v1712
        %v1729 = vadd.f32 %v1725, %v1727
        %v1730 = vadd.f32 %v1726, %v1728
        %v1731 = vtanh.pop %v1729
        %v1732 = vtanh.pop %v1730
        %v1733 = vmul.f32 %v1722, %v1731
        %v1734 = vmul.f32 %v1724, %v1732
        %1735 = vadd.xlane.f32.xlu0 %v1733
        %v1736 = vpop.xlane.xlu0 %1735
        %1737 = vadd.xlane.f32.xlu0 %v1734
        %v1738 = vpop.xlane.xlu0 %1737
        %v1739 = vmul.f32 %v1736, %v1356
        %v1740 = vmul.f32 %v1738, %v1356
        %v1741 = vmul.f32 %v1733, %v1733
        %v1742 = vmul.f32 %v1734, %v1734
        %1743 = vadd.xlane.f32.xlu0 %v1741
        %v1744 = vpop.xlane.xlu0 %1743
        %1745 = vadd.xlane.f32.xlu0 %v1742
        %v1746 = vpop.xlane.xlu0 %1745
        %v1747 = vmul.f32 %v1744, %v1356
        %v1748 = vmul.f32 %v1746, %v1356
        %v1749 = vmul.f32 %v1739, %v1739
        %v1750 = vmul.f32 %v1740, %v1740
        %v1751 = vsub.f32 %v1747, %v1749
        %v1752 = vsub.f32 %v1748, %v1750
        %v1753 = vsub.f32 %v1733, %v1739
        %v1754 = vsub.f32 %v1734, %v1740
        %v1755 = vadd.f32 %v1751, 1e-05
        %v1756 = vadd.f32 %v1752, 1e-05
        %v1757 = vrsqrt.pop %v1755
        %v1758 = vrsqrt.pop %v1756
        %v1759 = vmul.f32 %v1753, %v1757
        %v1760 = vmul.f32 %v1754, %v1758
        %v1761 = vmul.f32 %v1759, %v1001
        %v1762 = vmul.f32 %v1760, %v1001
        %v1763 = vadd.f32 %v1761, %v1008
        %v1764 = vadd.f32 %v1762, %v1008
        %v1765 = vmax.f32 %v1763, 0.0
        %v1766 = vmax.f32 %v1764, 0.0
        %s1767 = scalar_lea.vmem %s365, 16 [#allocation4]
        %v1768 = vld [vmem:[%s1767] sm:$0xff]
        %v1769 = vld [vmem:[%s1767 + $0x8] sm:$0xff]
        %v1770 = vadd.f32 %v1765, %v1768
        %v1771 = vadd.f32 %v1766, %v1769
        %v1772 = vpack.c.bf16 %v1771, %v1770
        %s1773 = scalar_lea.vmem [#allocation2], 8
        %1774 = vst [vmem:[%s1773] sm:$0xff] %v1772
        %s1775 = scalar_lea.vmem [#allocation3], 128
        %v1776 = vld [vmem:[%s1775] sm:$0xff]
        %v1777 = vld [vmem:[%s1775 + $0x8] sm:$0xff]
        %v1778 = vld [vmem:[%s1775 + $0x10] sm:$0xff]
        %v1779 = vld [vmem:[%s1775 + $0x18] sm:$0xff]
        %v1780 = vld [vmem:[%s1775 + $0x20] sm:$0xff]
        %v1781 = vld [vmem:[%s1775 + $0x28] sm:$0xff]
        %v1782 = vld [vmem:[%s1775 + $0x30] sm:$0xff]
        %v1783 = vld [vmem:[%s1775 + $0x38] sm:$0xff]
        %v1784 = vpack.c.bf16 %v1734, %v1733
        %v1785 = vld [vmem:[%s2] sm:$0xff]
        %v1786 = vld [vmem:[%s2 + $0x8] sm:$0xff]
        %v1787 = vld [vmem:[%s2 + $0x10] sm:$0xff]
        %v1788 = vld [vmem:[%s2 + $0x18] sm:$0xff]
        %v1789 = vld [vmem:[%s2 + $0x20] sm:$0xff]
        %v1790 = vld [vmem:[%s2 + $0x28] sm:$0xff]
        %v1791 = vld [vmem:[%s2 + $0x30] sm:$0xff]
        %v1792 = vld [vmem:[%s2 + $0x38] sm:$0xff]
        %v1793 = vld [vmem:[%s2 + $0x40] sm:$0xff]
        %v1794 = vld [vmem:[%s2 + $0x48] sm:$0xff]
        %v1795 = vld [vmem:[%s2 + $0x50] sm:$0xff]
        %v1796 = vld [vmem:[%s2 + $0x58] sm:$0xff]
        %v1797 = vld [vmem:[%s2 + $0x60] sm:$0xff]
        %v1798 = vld [vmem:[%s2 + $0x68] sm:$0xff]
        %v1799 = vld [vmem:[%s2 + $0x70] sm:$0xff]
        %v1800 = vld [vmem:[%s2 + $0x78] sm:$0xff]
        %v1801 = vld [vmem:[%s2 + $0x80] sm:$0xff]
        %v1802 = vld [vmem:[%s2 + $0x88] sm:$0xff]
        %v1803 = vld [vmem:[%s2 + $0x90] sm:$0xff]
        %v1804 = vld [vmem:[%s2 + $0x98] sm:$0xff]
        %v1805 = vld [vmem:[%s2 + $0xa0] sm:$0xff]
        %v1806 = vld [vmem:[%s2 + $0xa8] sm:$0xff]
        %v1807 = vld [vmem:[%s2 + $0xb0] sm:$0xff]
        %v1808 = vld [vmem:[%s2 + $0xb8] sm:$0xff]
        %v1809 = vld [vmem:[%s2 + $0xc0] sm:$0xff]
        %v1810 = vld [vmem:[%s2 + $0xc8] sm:$0xff]
        %v1811 = vld [vmem:[%s2 + $0xd0] sm:$0xff]
        %v1812 = vld [vmem:[%s2 + $0xd8] sm:$0xff]
        %v1813 = vld [vmem:[%s2 + $0xe0] sm:$0xff]
        %v1814 = vld [vmem:[%s2 + $0xe8] sm:$0xff]
        %v1815 = vld [vmem:[%s2 + $0xf0] sm:$0xff]
        %v1816 = vld [vmem:[%s2 + $0xf8] sm:$0xff]
        %v1849 = vunpack.c.l.b16 %v1785
        %v1850 = vunpack.c.h.b16 %v1785
        %v1851 = vunpack.c.l.b16 %v1786
        %v1852 = vunpack.c.h.b16 %v1786
        %v1853 = vunpack.c.l.b16 %v1787
        %v1854 = vunpack.c.h.b16 %v1787
        %v1855 = vunpack.c.l.b16 %v1788
        %v1856 = vunpack.c.h.b16 %v1788
        %v1857 = vunpack.c.l.b16 %v1789
        %v1858 = vunpack.c.h.b16 %v1789
        %v1859 = vunpack.c.l.b16 %v1790
        %v1860 = vunpack.c.h.b16 %v1790
        %v1861 = vunpack.c.l.b16 %v1791
        %v1862 = vunpack.c.h.b16 %v1791
        %v1863 = vunpack.c.l.b16 %v1792
        %v1864 = vunpack.c.h.b16 %v1792
        %v1865 = vunpack.c.l.b16 %v1793
        %v1866 = vunpack.c.h.b16 %v1793
        %v1867 = vunpack.c.l.b16 %v1794
        %v1868 = vunpack.c.h.b16 %v1794
        %v1869 = vunpack.c.l.b16 %v1795
        %v1870 = vunpack.c.h.b16 %v1795
        %v1871 = vunpack.c.l.b16 %v1796
        %v1872 = vunpack.c.h.b16 %v1796
        %v1873 = vunpack.c.l.b16 %v1797
        %v1874 = vunpack.c.h.b16 %v1797
        %v1875 = vunpack.c.l.b16 %v1798
        %v1876 = vunpack.c.h.b16 %v1798
        %v1877 = vunpack.c.l.b16 %v1799
        %v1878 = vunpack.c.h.b16 %v1799
        %v1879 = vunpack.c.l.b16 %v1800
        %v1880 = vunpack.c.h.b16 %v1800
        %v1881 = vunpack.c.l.b16 %v1801
        %v1882 = vunpack.c.h.b16 %v1801
        %v1883 = vunpack.c.l.b16 %v1802
        %v1884 = vunpack.c.h.b16 %v1802
        %v1885 = vunpack.c.l.b16 %v1803
        %v1886 = vunpack.c.h.b16 %v1803
        %v1887 = vunpack.c.l.b16 %v1804
        %v1888 = vunpack.c.h.b16 %v1804
        %v1889 = vunpack.c.l.b16 %v1805
        %v1890 = vunpack.c.h.b16 %v1805
        %v1891 = vunpack.c.l.b16 %v1806
        %v1892 = vunpack.c.h.b16 %v1806
        %v1893 = vunpack.c.l.b16 %v1807
        %v1894 = vunpack.c.h.b16 %v1807
        %v1895 = vunpack.c.l.b16 %v1808
        %v1896 = vunpack.c.h.b16 %v1808
        %v1897 = vunpack.c.l.b16 %v1809
        %v1898 = vunpack.c.h.b16 %v1809
        %v1899 = vunpack.c.l.b16 %v1810
        %v1900 = vunpack.c.h.b16 %v1810
        %v1901 = vunpack.c.l.b16 %v1811
        %v1902 = vunpack.c.h.b16 %v1811
        %v1903 = vunpack.c.l.b16 %v1812
        %v1904 = vunpack.c.h.b16 %v1812
        %v1905 = vunpack.c.l.b16 %v1813
        %v1906 = vunpack.c.h.b16 %v1813
        %v1907 = vunpack.c.l.b16 %v1814
        %v1908 = vunpack.c.h.b16 %v1814
        %v1909 = vunpack.c.l.b16 %v1815
        %v1910 = vunpack.c.h.b16 %v1815
        %v1911 = vunpack.c.l.b16 %v1816
        %v1912 = vunpack.c.h.b16 %v1816
        %v1913 = vpack.c.b16 %v1853, %v1849
        %v1914 = vpack.c.b16 %v1854, %v1850
        %v1915 = vpack.c.b16 %v1855, %v1851
        %v1916 = vpack.c.b16 %v1856, %v1852
        %v1917 = vpack.c.b16 %v1861, %v1857
        %v1918 = vpack.c.b16 %v1862, %v1858
        %v1919 = vpack.c.b16 %v1863, %v1859
        %v1920 = vpack.c.b16 %v1864, %v1860
        %v1921 = vpack.c.b16 %v1869, %v1865
        %v1922 = vpack.c.b16 %v1870, %v1866
        %v1923 = vpack.c.b16 %v1871, %v1867
        %v1924 = vpack.c.b16 %v1872, %v1868
        %v1925 = vpack.c.b16 %v1877, %v1873
        %v1926 = vpack.c.b16 %v1878, %v1874
        %v1927 = vpack.c.b16 %v1879, %v1875
        %v1928 = vpack.c.b16 %v1880, %v1876
        %v1929 = vpack.c.b16 %v1885, %v1881
        %v1930 = vpack.c.b16 %v1886, %v1882
        %v1931 = vpack.c.b16 %v1887, %v1883
        %v1932 = vpack.c.b16 %v1888, %v1884
        %v1933 = vpack.c.b16 %v1893, %v1889
        %v1934 = vpack.c.b16 %v1894, %v1890
        %v1935 = vpack.c.b16 %v1895, %v1891
        %v1936 = vpack.c.b16 %v1896, %v1892
        %v1937 = vpack.c.b16 %v1901, %v1897
        %v1938 = vpack.c.b16 %v1902, %v1898
        %v1939 = vpack.c.b16 %v1903, %v1899
        %v1940 = vpack.c.b16 %v1904, %v1900
        %v1941 = vpack.c.b16 %v1909, %v1905
        %v1942 = vpack.c.b16 %v1910, %v1906
        %v1943 = vpack.c.b16 %v1911, %v1907
        %v1944 = vpack.c.b16 %v1912, %v1908
        %1977 = vmatprep.subr.bf16.mxu0 %v1914
        %1978 = vmatpush1.bf16.msra.mxu0 %v1913
        %1979 = vmatprep.subr.bf16.mxu0 %v1918
        %1980 = vmatpush1.bf16.msra.mxu0 %v1917
        %1981 = vmatprep.subr.bf16.mxu0 %v1922
        %1982 = vmatpush1.bf16.msra.mxu0 %v1921
        %1983 = vmatprep.subr.bf16.mxu0 %v1926
        %1984 = vmatpush1.bf16.msra.mxu0 %v1925
        %1985 = vmatprep.subr.bf16.mxu0 %v1930
        %1986 = vmatpush1.bf16.msra.mxu0 %v1929
        %1987 = vmatprep.subr.bf16.mxu0 %v1934
        %1988 = vmatpush1.bf16.msra.mxu0 %v1933
        %1989 = vmatprep.subr.bf16.mxu0 %v1938
        %1990 = vmatpush1.bf16.msra.mxu0 %v1937
        %1991 = vmatprep.subr.bf16.mxu0 %v1942
        %1992 = vmatpush1.bf16.msra.mxu0 %v1941
        %1993 = vmatprep.subr.bf16.mxu0 0
        %1994 = vmatpush1.bf16.msra.mxu0 0
        %1995 = vmatprep.subr.bf16.mxu0 0
        %1996 = vmatpush1.bf16.msra.mxu0 0
        %1997 = vmatprep.subr.bf16.mxu0 0
        %1998 = vmatpush1.bf16.msra.mxu0 0
        %1999 = vmatprep.subr.bf16.mxu0 0
        %2000 = vmatpush1.bf16.msra.mxu0 0
        %2001 = vmatprep.subr.bf16.mxu0 0
        %2002 = vmatpush1.bf16.msra.mxu0 0
        %2003 = vmatprep.subr.bf16.mxu0 0
        %2004 = vmatpush1.bf16.msra.mxu0 0
        %2005 = vmatprep.subr.bf16.mxu0 0
        %2006 = vmatpush1.bf16.msra.mxu0 0
        %2007 = vmatprep.subr.bf16.mxu0 0
        %2008 = vmatpush1.bf16.msra.mxu0 0
        %2009 = vmatprep.mubr.bf16.mxu0 0
        %2010 = vmatmul.mubr.bf16.gmra.mrb[0].mxu0 %v1784
        %v2011 = vpop.f32.mrb[0].mxu0
        %v2012 = vadd.f32 0.0, %v2011
        %v2013 = vpop.f32.mrb[0].mxu0
        %v2014 = vadd.f32 0.0, %v2013
        %v2015 = vpop.f32.mrb[0].mxu0
        %v2016 = vadd.f32 0.0, %v2015
        %v2017 = vpop.f32.mrb[0].mxu0
        %v2018 = vadd.f32 0.0, %v2017
        %2019 = vdwg.mxu0
        %2020 = vmatprep.subr.bf16.mxu0 %v1916
        %2021 = vmatpush1.bf16.msra.mxu0 %v1915
        %2022 = vmatprep.subr.bf16.mxu0 %v1920
        %2023 = vmatpush1.bf16.msra.mxu0 %v1919
        %2024 = vmatprep.subr.bf16.mxu0 %v1924
        %2025 = vmatpush1.bf16.msra.mxu0 %v1923
        %2026 = vmatprep.subr.bf16.mxu0 %v1928
        %2027 = vmatpush1.bf16.msra.mxu0 %v1927
        %2028 = vmatprep.subr.bf16.mxu0 %v1932
        %2029 = vmatpush1.bf16.msra.mxu0 %v1931
        %2030 = vmatprep.subr.bf16.mxu0 %v1936
        %2031 = vmatpush1.bf16.msra.mxu0 %v1935
        %2032 = vmatprep.subr.bf16.mxu0 %v1940
        %2033 = vmatpush1.bf16.msra.mxu0 %v1939
        %2034 = vmatprep.subr.bf16.mxu0 %v1944
        %2035 = vmatpush1.bf16.msra.mxu0 %v1943
        %2036 = vmatprep.subr.bf16.mxu0 0
        %2037 = vmatpush1.bf16.msra.mxu0 0
        %2038 = vmatprep.subr.bf16.mxu0 0
        %2039 = vmatpush1.bf16.msra.mxu0 0
        %2040 = vmatprep.subr.bf16.mxu0 0
        %2041 = vmatpush1.bf16.msra.mxu0 0
        %2042 = vmatprep.subr.bf16.mxu0 0
        %2043 = vmatpush1.bf16.msra.mxu0 0
        %2044 = vmatprep.subr.bf16.mxu0 0
        %2045 = vmatpush1.bf16.msra.mxu0 0
        %2046 = vmatprep.subr.bf16.mxu0 0
        %2047 = vmatpush1.bf16.msra.mxu0 0
        %2048 = vmatprep.subr.bf16.mxu0 0
        %2049 = vmatpush1.bf16.msra.mxu0 0
        %2050 = vmatprep.subr.bf16.mxu0 0
        %2051 = vmatpush1.bf16.msra.mxu0 0
        %2052 = vmatprep.mubr.bf16.mxu0 0
        %2053 = vmatmul.mubr.bf16.gmra.mrb[0].mxu0 %v1784
        %v2054 = vpop.f32.mrb[0].mxu0
        %v2055 = vadd.f32 0.0, %v2054
        %v2056 = vpop.f32.mrb[0].mxu0
        %v2057 = vadd.f32 0.0, %v2056
        %v2058 = vpop.f32.mrb[0].mxu0
        %v2059 = vadd.f32 0.0, %v2058
        %v2060 = vpop.f32.mrb[0].mxu0
        %v2061 = vadd.f32 0.0, %v2060
        %2062 = vdwg.mxu0
        %v2063 = vadd.f32 %v1776, %v2012
        %v2064 = vadd.f32 %v1777, %v2014
        %v2065 = vadd.f32 %v1778, %v2055
        %v2066 = vadd.f32 %v1779, %v2057
        %v2067 = vadd.f32 %v1780, %v2016
        %v2068 = vadd.f32 %v1781, %v2018
        %v2069 = vadd.f32 %v1782, %v2059
        %v2070 = vadd.f32 %v1783, %v2061
        %v2071 = vxor.u32 %v2063, 2147483648
        %v2072 = vxor.u32 %v2067, 2147483648
        %v2073 = vmul.f32 %v2071, 1.442695
        %v2074 = vpow.pop %v2073
        %v2075 = vmul.f32 %v2072, 1.442695
        %v2076 = vpow.pop %v2075
        %v2077 = vadd.f32 %v2074, 1.0
        %v2078 = vadd.f32 %v2076, 1.0
        %v2079 = vrcp.pop %v2077
        %v2080 = vmul.f32 1.0, %v2079
        %v2081 = vrcp.pop %v2078
        %v2082 = vmul.f32 1.0, %v2081
        %v2083 = vxor.u32 %v2064, 2147483648
        %v2084 = vxor.u32 %v2068, 2147483648
        %v2085 = vmul.f32 %v2083, 1.442695
        %v2086 = vpow.pop %v2085
        %v2087 = vmul.f32 %v2084, 1.442695
        %v2088 = vpow.pop %v2087
        %v2089 = vadd.f32 %v2086, 1.0
        %v2090 = vadd.f32 %v2088, 1.0
        %v2091 = vrcp.pop %v2089
        %v2092 = vmul.f32 1.0, %v2091
        %v2093 = vrcp.pop %v2090
        %v2094 = vmul.f32 1.0, %v2093
        %v2095 = vtanh.pop %v2065
        %v2096 = vtanh.pop %v2069
        %v2097 = vxor.u32 %v2066, 2147483648
        %v2098 = vxor.u32 %v2070, 2147483648
        %v2099 = vmul.f32 %v2097, 1.442695
        %v2100 = vpow.pop %v2099
        %v2101 = vmul.f32 %v2098, 1.442695
        %v2102 = vpow.pop %v2101
        %v2103 = vadd.f32 %v2100, 1.0
        %v2104 = vadd.f32 %v2102, 1.0
        %v2105 = vrcp.pop %v2103
        %v2106 = vmul.f32 1.0, %v2105
        %v2107 = vrcp.pop %v2104
        %v2108 = vmul.f32 1.0, %v2107
        %v2109 = vmul.f32 %v2092, %v1729
        %v2110 = vmul.f32 %v2094, %v1730
        %v2111 = vmul.f32 %v2080, %v2095
        %v2112 = vmul.f32 %v2082, %v2096
        %v2113 = vadd.f32 %v2109, %v2111
        %v2114 = vadd.f32 %v2110, %v2112
        %v2115 = vtanh.pop %v2113
        %v2116 = vtanh.pop %v2114
        %v2117 = vmul.f32 %v2106, %v2115
        %v2118 = vmul.f32 %v2108, %v2116
        %2119 = vadd.xlane.f32.xlu0 %v2117
        %v2120 = vpop.xlane.xlu0 %2119
        %2121 = vadd.xlane.f32.xlu0 %v2118
        %v2122 = vpop.xlane.xlu0 %2121
        %v2123 = vmul.f32 %v2120, %v1356
        %v2124 = vmul.f32 %v2122, %v1356
        %v2125 = vmul.f32 %v2117, %v2117
        %v2126 = vmul.f32 %v2118, %v2118
        %2127 = vadd.xlane.f32.xlu0 %v2125
        %v2128 = vpop.xlane.xlu0 %2127
        %2129 = vadd.xlane.f32.xlu0 %v2126
        %v2130 = vpop.xlane.xlu0 %2129
        %v2131 = vmul.f32 %v2128, %v1356
        %v2132 = vmul.f32 %v2130, %v1356
        %v2133 = vmul.f32 %v2123, %v2123
        %v2134 = vmul.f32 %v2124, %v2124
        %v2135 = vsub.f32 %v2131, %v2133
        %v2136 = vsub.f32 %v2132, %v2134
        %v2137 = vsub.f32 %v2117, %v2123
        %v2138 = vsub.f32 %v2118, %v2124
        %v2139 = vadd.f32 %v2135, 1e-05
        %v2140 = vadd.f32 %v2136, 1e-05
        %v2141 = vrsqrt.pop %v2139
        %v2142 = vrsqrt.pop %v2140
        %v2143 = vmul.f32 %v2137, %v2141
        %v2144 = vmul.f32 %v2138, %v2142
        %v2145 = vmul.f32 %v2143, %v1001
        %v2146 = vmul.f32 %v2144, %v1001
        %v2147 = vadd.f32 %v2145, %v1008
        %v2148 = vadd.f32 %v2146, %v1008
        %v2149 = vmax.f32 %v2147, 0.0
        %v2150 = vmax.f32 %v2148, 0.0
        %s2151 = scalar_lea.vmem %s365, 32 [#allocation4]
        %v2152 = vld [vmem:[%s2151] sm:$0xff]
        %v2153 = vld [vmem:[%s2151 + $0x8] sm:$0xff]
        %v2154 = vadd.f32 %v2149, %v2152
        %v2155 = vadd.f32 %v2150, %v2153
        %v2156 = vpack.c.bf16 %v2155, %v2154
        %s2157 = scalar_lea.vmem [#allocation2], 16
        %2158 = vst [vmem:[%s2157] sm:$0xff] %v2156
        %s2159 = scalar_lea.vmem [#allocation3], 192
        %v2160 = vld [vmem:[%s2159] sm:$0xff]
        %v2161 = vld [vmem:[%s2159 + $0x8] sm:$0xff]
        %v2162 = vld [vmem:[%s2159 + $0x10] sm:$0xff]
        %v2163 = vld [vmem:[%s2159 + $0x18] sm:$0xff]
        %v2164 = vld [vmem:[%s2159 + $0x20] sm:$0xff]
        %v2165 = vld [vmem:[%s2159 + $0x28] sm:$0xff]
        %v2166 = vld [vmem:[%s2159 + $0x30] sm:$0xff]
        %v2167 = vld [vmem:[%s2159 + $0x38] sm:$0xff]
        %v2168 = vpack.c.bf16 %v2118, %v2117
        %v2169 = vld [vmem:[%s2] sm:$0xff]
        %v2170 = vld [vmem:[%s2 + $0x8] sm:$0xff]
        %v2171 = vld [vmem:[%s2 + $0x10] sm:$0xff]
        %v2172 = vld [vmem:[%s2 + $0x18] sm:$0xff]
        %v2173 = vld [vmem:[%s2 + $0x20] sm:$0xff]
        %v2174 = vld [vmem:[%s2 + $0x28] sm:$0xff]
        %v2175 = vld [vmem:[%s2 + $0x30] sm:$0xff]
        %v2176 = vld [vmem:[%s2 + $0x38] sm:$0xff]
        %v2177 = vld [vmem:[%s2 + $0x40] sm:$0xff]
        %v2178 = vld [vmem:[%s2 + $0x48] sm:$0xff]
        %v2179 = vld [vmem:[%s2 + $0x50] sm:$0xff]
        %v2180 = vld [vmem:[%s2 + $0x58] sm:$0xff]
        %v2181 = vld [vmem:[%s2 + $0x60] sm:$0xff]
        %v2182 = vld [vmem:[%s2 + $0x68] sm:$0xff]
        %v2183 = vld [vmem:[%s2 + $0x70] sm:$0xff]
        %v2184 = vld [vmem:[%s2 + $0x78] sm:$0xff]
        %v2185 = vld [vmem:[%s2 + $0x80] sm:$0xff]
        %v2186 = vld [vmem:[%s2 + $0x88] sm:$0xff]
        %v2187 = vld [vmem:[%s2 + $0x90] sm:$0xff]
        %v2188 = vld [vmem:[%s2 + $0x98] sm:$0xff]
        %v2189 = vld [vmem:[%s2 + $0xa0] sm:$0xff]
        %v2190 = vld [vmem:[%s2 + $0xa8] sm:$0xff]
        %v2191 = vld [vmem:[%s2 + $0xb0] sm:$0xff]
        %v2192 = vld [vmem:[%s2 + $0xb8] sm:$0xff]
        %v2193 = vld [vmem:[%s2 + $0xc0] sm:$0xff]
        %v2194 = vld [vmem:[%s2 + $0xc8] sm:$0xff]
        %v2195 = vld [vmem:[%s2 + $0xd0] sm:$0xff]
        %v2196 = vld [vmem:[%s2 + $0xd8] sm:$0xff]
        %v2197 = vld [vmem:[%s2 + $0xe0] sm:$0xff]
        %v2198 = vld [vmem:[%s2 + $0xe8] sm:$0xff]
        %v2199 = vld [vmem:[%s2 + $0xf0] sm:$0xff]
        %v2200 = vld [vmem:[%s2 + $0xf8] sm:$0xff]
        %v2233 = vunpack.c.l.b16 %v2169
        %v2234 = vunpack.c.h.b16 %v2169
        %v2235 = vunpack.c.l.b16 %v2170
        %v2236 = vunpack.c.h.b16 %v2170
        %v2237 = vunpack.c.l.b16 %v2171
        %v2238 = vunpack.c.h.b16 %v2171
        %v2239 = vunpack.c.l.b16 %v2172
        %v2240 = vunpack.c.h.b16 %v2172
        %v2241 = vunpack.c.l.b16 %v2173
        %v2242 = vunpack.c.h.b16 %v2173
        %v2243 = vunpack.c.l.b16 %v2174
        %v2244 = vunpack.c.h.b16 %v2174
        %v2245 = vunpack.c.l.b16 %v2175
        %v2246 = vunpack.c.h.b16 %v2175
        %v2247 = vunpack.c.l.b16 %v2176
        %v2248 = vunpack.c.h.b16 %v2176
        %v2249 = vunpack.c.l.b16 %v2177
        %v2250 = vunpack.c.h.b16 %v2177
        %v2251 = vunpack.c.l.b16 %v2178
        %v2252 = vunpack.c.h.b16 %v2178
        %v2253 = vunpack.c.l.b16 %v2179
        %v2254 = vunpack.c.h.b16 %v2179
        %v2255 = vunpack.c.l.b16 %v2180
        %v2256 = vunpack.c.h.b16 %v2180
        %v2257 = vunpack.c.l.b16 %v2181
        %v2258 = vunpack.c.h.b16 %v2181
        %v2259 = vunpack.c.l.b16 %v2182
        %v2260 = vunpack.c.h.b16 %v2182
        %v2261 = vunpack.c.l.b16 %v2183
        %v2262 = vunpack.c.h.b16 %v2183
        %v2263 = vunpack.c.l.b16 %v2184
        %v2264 = vunpack.c.h.b16 %v2184
        %v2265 = vunpack.c.l.b16 %v2185
        %v2266 = vunpack.c.h.b16 %v2185
        %v2267 = vunpack.c.l.b16 %v2186
        %v2268 = vunpack.c.h.b16 %v2186
        %v2269 = vunpack.c.l.b16 %v2187
        %v2270 = vunpack.c.h.b16 %v2187
        %v2271 = vunpack.c.l.b16 %v2188
        %v2272 = vunpack.c.h.b16 %v2188
        %v2273 = vunpack.c.l.b16 %v2189
        %v2274 = vunpack.c.h.b16 %v2189
        %v2275 = vunpack.c.l.b16 %v2190
        %v2276 = vunpack.c.h.b16 %v2190
        %v2277 = vunpack.c.l.b16 %v2191
        %v2278 = vunpack.c.h.b16 %v2191
        %v2279 = vunpack.c.l.b16 %v2192
        %v2280 = vunpack.c.h.b16 %v2192
        %v2281 = vunpack.c.l.b16 %v2193
        %v2282 = vunpack.c.h.b16 %v2193
        %v2283 = vunpack.c.l.b16 %v2194
        %v2284 = vunpack.c.h.b16 %v2194
        %v2285 = vunpack.c.l.b16 %v2195
        %v2286 = vunpack.c.h.b16 %v2195
        %v2287 = vunpack.c.l.b16 %v2196
        %v2288 = vunpack.c.h.b16 %v2196
        %v2289 = vunpack.c.l.b16 %v2197
        %v2290 = vunpack.c.h.b16 %v2197
        %v2291 = vunpack.c.l.b16 %v2198
        %v2292 = vunpack.c.h.b16 %v2198
        %v2293 = vunpack.c.l.b16 %v2199
        %v2294 = vunpack.c.h.b16 %v2199
        %v2295 = vunpack.c.l.b16 %v2200
        %v2296 = vunpack.c.h.b16 %v2200
        %v2297 = vpack.c.b16 %v2237, %v2233
        %v2298 = vpack.c.b16 %v2238, %v2234
        %v2299 = vpack.c.b16 %v2239, %v2235
        %v2300 = vpack.c.b16 %v2240, %v2236
        %v2301 = vpack.c.b16 %v2245, %v2241
        %v2302 = vpack.c.b16 %v2246, %v2242
        %v2303 = vpack.c.b16 %v2247, %v2243
        %v2304 = vpack.c.b16 %v2248, %v2244
        %v2305 = vpack.c.b16 %v2253, %v2249
        %v2306 = vpack.c.b16 %v2254, %v2250
        %v2307 = vpack.c.b16 %v2255, %v2251
        %v2308 = vpack.c.b16 %v2256, %v2252
        %v2309 = vpack.c.b16 %v2261, %v2257
        %v2310 = vpack.c.b16 %v2262, %v2258
        %v2311 = vpack.c.b16 %v2263, %v2259
        %v2312 = vpack.c.b16 %v2264, %v2260
        %v2313 = vpack.c.b16 %v2269, %v2265
        %v2314 = vpack.c.b16 %v2270, %v2266
        %v2315 = vpack.c.b16 %v2271, %v2267
        %v2316 = vpack.c.b16 %v2272, %v2268
        %v2317 = vpack.c.b16 %v2277, %v2273
        %v2318 = vpack.c.b16 %v2278, %v2274
        %v2319 = vpack.c.b16 %v2279, %v2275
        %v2320 = vpack.c.b16 %v2280, %v2276
        %v2321 = vpack.c.b16 %v2285, %v2281
        %v2322 = vpack.c.b16 %v2286, %v2282
        %v2323 = vpack.c.b16 %v2287, %v2283
        %v2324 = vpack.c.b16 %v2288, %v2284
        %v2325 = vpack.c.b16 %v2293, %v2289
        %v2326 = vpack.c.b16 %v2294, %v2290
        %v2327 = vpack.c.b16 %v2295, %v2291
        %v2328 = vpack.c.b16 %v2296, %v2292
        %2361 = vmatprep.subr.bf16.mxu0 %v2298
        %2362 = vmatpush1.bf16.msra.mxu0 %v2297
        %2363 = vmatprep.subr.bf16.mxu0 %v2302
        %2364 = vmatpush1.bf16.msra.mxu0 %v2301
        %2365 = vmatprep.subr.bf16.mxu0 %v2306
        %2366 = vmatpush1.bf16.msra.mxu0 %v2305
        %2367 = vmatprep.subr.bf16.mxu0 %v2310
        %2368 = vmatpush1.bf16.msra.mxu0 %v2309
        %2369 = vmatprep.subr.bf16.mxu0 %v2314
        %2370 = vmatpush1.bf16.msra.mxu0 %v2313
        %2371 = vmatprep.subr.bf16.mxu0 %v2318
        %2372 = vmatpush1.bf16.msra.mxu0 %v2317
        %2373 = vmatprep.subr.bf16.mxu0 %v2322
        %2374 = vmatpush1.bf16.msra.mxu0 %v2321
        %2375 = vmatprep.subr.bf16.mxu0 %v2326
        %2376 = vmatpush1.bf16.msra.mxu0 %v2325
        %2377 = vmatprep.subr.bf16.mxu0 0
        %2378 = vmatpush1.bf16.msra.mxu0 0
        %2379 = vmatprep.subr.bf16.mxu0 0
        %2380 = vmatpush1.bf16.msra.mxu0 0
        %2381 = vmatprep.subr.bf16.mxu0 0
        %2382 = vmatpush1.bf16.msra.mxu0 0
        %2383 = vmatprep.subr.bf16.mxu0 0
        %2384 = vmatpush1.bf16.msra.mxu0 0
        %2385 = vmatprep.subr.bf16.mxu0 0
        %2386 = vmatpush1.bf16.msra.mxu0 0
        %2387 = vmatprep.subr.bf16.mxu0 0
        %2388 = vmatpush1.bf16.msra.mxu0 0
        %2389 = vmatprep.subr.bf16.mxu0 0
        %2390 = vmatpush1.bf16.msra.mxu0 0
        %2391 = vmatprep.subr.bf16.mxu0 0
        %2392 = vmatpush1.bf16.msra.mxu0 0
        %2393 = vmatprep.mubr.bf16.mxu0 0
        %2394 = vmatmul.mubr.bf16.gmra.mrb[0].mxu0 %v2168
        %v2395 = vpop.f32.mrb[0].mxu0
        %v2396 = vadd.f32 0.0, %v2395
        %v2397 = vpop.f32.mrb[0].mxu0
        %v2398 = vadd.f32 0.0, %v2397
        %v2399 = vpop.f32.mrb[0].mxu0
        %v2400 = vadd.f32 0.0, %v2399
        %v2401 = vpop.f32.mrb[0].mxu0
        %v2402 = vadd.f32 0.0, %v2401
        %2403 = vdwg.mxu0
        %2404 = vmatprep.subr.bf16.mxu0 %v2300
        %2405 = vmatpush1.bf16.msra.mxu0 %v2299
        %2406 = vmatprep.subr.bf16.mxu0 %v2304
        %2407 = vmatpush1.bf16.msra.mxu0 %v2303
        %2408 = vmatprep.subr.bf16.mxu0 %v2308
        %2409 = vmatpush1.bf16.msra.mxu0 %v2307
        %2410 = vmatprep.subr.bf16.mxu0 %v2312
        %2411 = vmatpush1.bf16.msra.mxu0 %v2311
        %2412 = vmatprep.subr.bf16.mxu0 %v2316
        %2413 = vmatpush1.bf16.msra.mxu0 %v2315
        %2414 = vmatprep.subr.bf16.mxu0 %v2320
        %2415 = vmatpush1.bf16.msra.mxu0 %v2319
        %2416 = vmatprep.subr.bf16.mxu0 %v2324
        %2417 = vmatpush1.bf16.msra.mxu0 %v2323
        %2418 = vmatprep.subr.bf16.mxu0 %v2328
        %2419 = vmatpush1.bf16.msra.mxu0 %v2327
        %2420 = vmatprep.subr.bf16.mxu0 0
        %2421 = vmatpush1.bf16.msra.mxu0 0
        %2422 = vmatprep.subr.bf16.mxu0 0
        %2423 = vmatpush1.bf16.msra.mxu0 0
        %2424 = vmatprep.subr.bf16.mxu0 0
        %2425 = vmatpush1.bf16.msra.mxu0 0
        %2426 = vmatprep.subr.bf16.mxu0 0
        %2427 = vmatpush1.bf16.msra.mxu0 0
        %2428 = vmatprep.subr.bf16.mxu0 0
        %2429 = vmatpush1.bf16.msra.mxu0 0
        %2430 = vmatprep.subr.bf16.mxu0 0
        %2431 = vmatpush1.bf16.msra.mxu0 0
        %2432 = vmatprep.subr.bf16.mxu0 0
        %2433 = vmatpush1.bf16.msra.mxu0 0
        %2434 = vmatprep.subr.bf16.mxu0 0
        %2435 = vmatpush1.bf16.msra.mxu0 0
        %2436 = vmatprep.mubr.bf16.mxu0 0
        %2437 = vmatmul.mubr.bf16.gmra.mrb[0].mxu0 %v2168
        %v2438 = vpop.f32.mrb[0].mxu0
        %v2439 = vadd.f32 0.0, %v2438
        %v2440 = vpop.f32.mrb[0].mxu0
        %v2441 = vadd.f32 0.0, %v2440
        %v2442 = vpop.f32.mrb[0].mxu0
        %v2443 = vadd.f32 0.0, %v2442
        %v2444 = vpop.f32.mrb[0].mxu0
        %v2445 = vadd.f32 0.0, %v2444
        %2446 = vdwg.mxu0
        %v2447 = vadd.f32 %v2160, %v2396
        %v2448 = vadd.f32 %v2161, %v2398
        %v2449 = vadd.f32 %v2162, %v2439
        %v2450 = vadd.f32 %v2163, %v2441
        %v2451 = vadd.f32 %v2164, %v2400
        %v2452 = vadd.f32 %v2165, %v2402
        %v2453 = vadd.f32 %v2166, %v2443
        %v2454 = vadd.f32 %v2167, %v2445
        %v2455 = vxor.u32 %v2447, 2147483648
        %v2456 = vxor.u32 %v2451, 2147483648
        %v2457 = vmul.f32 %v2455, 1.442695
        %v2458 = vpow.pop %v2457
        %v2459 = vmul.f32 %v2456, 1.442695
        %v2460 = vpow.pop %v2459
        %v2461 = vadd.f32 %v2458, 1.0
        %v2462 = vadd.f32 %v2460, 1.0
        %v2463 = vrcp.pop %v2461
        %v2464 = vmul.f32 1.0, %v2463
        %v2465 = vrcp.pop %v2462
        %v2466 = vmul.f32 1.0, %v2465
        %v2467 = vxor.u32 %v2448, 2147483648
        %v2468 = vxor.u32 %v2452, 2147483648
        %v2469 = vmul.f32 %v2467, 1.442695
        %v2470 = vpow.pop %v2469
        %v2471 = vmul.f32 %v2468, 1.442695
        %v2472 = vpow.pop %v2471
        %v2473 = vadd.f32 %v2470, 1.0
        %v2474 = vadd.f32 %v2472, 1.0
        %v2475 = vrcp.pop %v2473
        %v2476 = vmul.f32 1.0, %v2475
        %v2477 = vrcp.pop %v2474
        %v2478 = vmul.f32 1.0, %v2477
        %v2479 = vtanh.pop %v2449
        %v2480 = vtanh.pop %v2453
        %v2481 = vxor.u32 %v2450, 2147483648
        %v2482 = vxor.u32 %v2454, 2147483648
        %v2483 = vmul.f32 %v2481, 1.442695
        %v2484 = vpow.pop %v2483
        %v2485 = vmul.f32 %v2482, 1.442695
        %v2486 = vpow.pop %v2485
        %v2487 = vadd.f32 %v2484, 1.0
        %v2488 = vadd.f32 %v2486, 1.0
        %v2489 = vrcp.pop %v2487
        %v2490 = vmul.f32 1.0, %v2489
        %v2491 = vrcp.pop %v2488
        %v2492 = vmul.f32 1.0, %v2491
        %v2493 = vmul.f32 %v2476, %v2113
        %v2494 = vmul.f32 %v2478, %v2114
        %v2495 = vmul.f32 %v2464, %v2479
        %v2496 = vmul.f32 %v2466, %v2480
        %v2497 = vadd.f32 %v2493, %v2495
        %v2498 = vadd.f32 %v2494, %v2496
        %v2499 = vtanh.pop %v2497
        %v2500 = vtanh.pop %v2498
        %v2501 = vmul.f32 %v2490, %v2499
        %v2502 = vmul.f32 %v2492, %v2500
        %2503 = vadd.xlane.f32.xlu0 %v2501
        %v2504 = vpop.xlane.xlu0 %2503
        %2505 = vadd.xlane.f32.xlu0 %v2502
        %v2506 = vpop.xlane.xlu0 %2505
        %v2507 = vmul.f32 %v2504, %v1356
        %v2508 = vmul.f32 %v2506, %v1356
        %v2509 = vmul.f32 %v2501, %v2501
        %v2510 = vmul.f32 %v2502, %v2502
        %2511 = vadd.xlane.f32.xlu0 %v2509
        %v2512 = vpop.xlane.xlu0 %2511
        %2513 = vadd.xlane.f32.xlu0 %v2510
        %v2514 = vpop.xlane.xlu0 %2513
        %v2515 = vmul.f32 %v2512, %v1356
        %v2516 = vmul.f32 %v2514, %v1356
        %v2517 = vmul.f32 %v2507, %v2507
        %v2518 = vmul.f32 %v2508, %v2508
        %v2519 = vsub.f32 %v2515, %v2517
        %v2520 = vsub.f32 %v2516, %v2518
        %v2521 = vsub.f32 %v2501, %v2507
        %v2522 = vsub.f32 %v2502, %v2508
        %v2523 = vadd.f32 %v2519, 1e-05
        %v2524 = vadd.f32 %v2520, 1e-05
        %v2525 = vrsqrt.pop %v2523
        %v2526 = vrsqrt.pop %v2524
        %v2527 = vmul.f32 %v2521, %v2525
        %v2528 = vmul.f32 %v2522, %v2526
        %v2529 = vmul.f32 %v2527, %v1001
        %v2530 = vmul.f32 %v2528, %v1001
        %v2531 = vadd.f32 %v2529, %v1008
        %v2532 = vadd.f32 %v2530, %v1008
        %v2533 = vmax.f32 %v2531, 0.0
        %v2534 = vmax.f32 %v2532, 0.0
        %s2535 = scalar_lea.vmem %s365, 48 [#allocation4]
        %v2536 = vld [vmem:[%s2535] sm:$0xff]
        %v2537 = vld [vmem:[%s2535 + $0x8] sm:$0xff]
        %v2538 = vadd.f32 %v2533, %v2536
        %v2539 = vadd.f32 %v2534, %v2537
        %v2540 = vpack.c.bf16 %v2539, %v2538
        %s2541 = scalar_lea.vmem [#allocation2], 24
        %2542 = vst [vmem:[%s2541] sm:$0xff] %v2540
        %s2543 = scalar_lea.vmem [#allocation3], 256
        %v2544 = vld [vmem:[%s2543] sm:$0xff]
        %v2545 = vld [vmem:[%s2543 + $0x8] sm:$0xff]
        %v2546 = vld [vmem:[%s2543 + $0x10] sm:$0xff]
        %v2547 = vld [vmem:[%s2543 + $0x18] sm:$0xff]
        %v2548 = vld [vmem:[%s2543 + $0x20] sm:$0xff]
        %v2549 = vld [vmem:[%s2543 + $0x28] sm:$0xff]
        %v2550 = vld [vmem:[%s2543 + $0x30] sm:$0xff]
        %v2551 = vld [vmem:[%s2543 + $0x38] sm:$0xff]
        %v2552 = vpack.c.bf16 %v2502, %v2501
        %v2553 = vld [vmem:[%s2] sm:$0xff]
        %v2554 = vld [vmem:[%s2 + $0x8] sm:$0xff]
        %v2555 = vld [vmem:[%s2 + $0x10] sm:$0xff]
        %v2556 = vld [vmem:[%s2 + $0x18] sm:$0xff]
        %v2557 = vld [vmem:[%s2 + $0x20] sm:$0xff]
        %v2558 = vld [vmem:[%s2 + $0x28] sm:$0xff]
        %v2559 = vld [vmem:[%s2 + $0x30] sm:$0xff]
        %v2560 = vld [vmem:[%s2 + $0x38] sm:$0xff]
        %v2561 = vld [vmem:[%s2 + $0x40] sm:$0xff]
        %v2562 = vld [vmem:[%s2 + $0x48] sm:$0xff]
        %v2563 = vld [vmem:[%s2 + $0x50] sm:$0xff]
        %v2564 = vld [vmem:[%s2 + $0x58] sm:$0xff]
        %v2565 = vld [vmem:[%s2 + $0x60] sm:$0xff]
        %v2566 = vld [vmem:[%s2 + $0x68] sm:$0xff]
        %v2567 = vld [vmem:[%s2 + $0x70] sm:$0xff]
        %v2568 = vld [vmem:[%s2 + $0x78] sm:$0xff]
        %v2569 = vld [vmem:[%s2 + $0x80] sm:$0xff]
        %v2570 = vld [vmem:[%s2 + $0x88] sm:$0xff]
        %v2571 = vld [vmem:[%s2 + $0x90] sm:$0xff]
        %v2572 = vld [vmem:[%s2 + $0x98] sm:$0xff]
        %v2573 = vld [vmem:[%s2 + $0xa0] sm:$0xff]
        %v2574 = vld [vmem:[%s2 + $0xa8] sm:$0xff]
        %v2575 = vld [vmem:[%s2 + $0xb0] sm:$0xff]
        %v2576 = vld [vmem:[%s2 + $0xb8] sm:$0xff]
        %v2577 = vld [vmem:[%s2 + $0xc0] sm:$0xff]
        %v2578 = vld [vmem:[%s2 + $0xc8] sm:$0xff]
        %v2579 = vld [vmem:[%s2 + $0xd0] sm:$0xff]
        %v2580 = vld [vmem:[%s2 + $0xd8] sm:$0xff]
        %v2581 = vld [vmem:[%s2 + $0xe0] sm:$0xff]
        %v2582 = vld [vmem:[%s2 + $0xe8] sm:$0xff]
        %v2583 = vld [vmem:[%s2 + $0xf0] sm:$0xff]
        %v2584 = vld [vmem:[%s2 + $0xf8] sm:$0xff]
        %v2617 = vunpack.c.l.b16 %v2553
        %v2618 = vunpack.c.h.b16 %v2553
        %v2619 = vunpack.c.l.b16 %v2554
        %v2620 = vunpack.c.h.b16 %v2554
        %v2621 = vunpack.c.l.b16 %v2555
        %v2622 = vunpack.c.h.b16 %v2555
        %v2623 = vunpack.c.l.b16 %v2556
        %v2624 = vunpack.c.h.b16 %v2556
        %v2625 = vunpack.c.l.b16 %v2557
        %v2626 = vunpack.c.h.b16 %v2557
        %v2627 = vunpack.c.l.b16 %v2558
        %v2628 = vunpack.c.h.b16 %v2558
        %v2629 = vunpack.c.l.b16 %v2559
        %v2630 = vunpack.c.h.b16 %v2559
        %v2631 = vunpack.c.l.b16 %v2560
        %v2632 = vunpack.c.h.b16 %v2560
        %v2633 = vunpack.c.l.b16 %v2561
        %v2634 = vunpack.c.h.b16 %v2561
        %v2635 = vunpack.c.l.b16 %v2562
        %v2636 = vunpack.c.h.b16 %v2562
        %v2637 = vunpack.c.l.b16 %v2563
        %v2638 = vunpack.c.h.b16 %v2563
        %v2639 = vunpack.c.l.b16 %v2564
        %v2640 = vunpack.c.h.b16 %v2564
        %v2641 = vunpack.c.l.b16 %v2565
        %v2642 = vunpack.c.h.b16 %v2565
        %v2643 = vunpack.c.l.b16 %v2566
        %v2644 = vunpack.c.h.b16 %v2566
        %v2645 = vunpack.c.l.b16 %v2567
        %v2646 = vunpack.c.h.b16 %v2567
        %v2647 = vunpack.c.l.b16 %v2568
        %v2648 = vunpack.c.h.b16 %v2568
        %v2649 = vunpack.c.l.b16 %v2569
        %v2650 = vunpack.c.h.b16 %v2569
        %v2651 = vunpack.c.l.b16 %v2570
        %v2652 = vunpack.c.h.b16 %v2570
        %v2653 = vunpack.c.l.b16 %v2571
        %v2654 = vunpack.c.h.b16 %v2571
        %v2655 = vunpack.c.l.b16 %v2572
        %v2656 = vunpack.c.h.b16 %v2572
        %v2657 = vunpack.c.l.b16 %v2573
        %v2658 = vunpack.c.h.b16 %v2573
        %v2659 = vunpack.c.l.b16 %v2574
        %v2660 = vunpack.c.h.b16 %v2574
        %v2661 = vunpack.c.l.b16 %v2575
        %v2662 = vunpack.c.h.b16 %v2575
        %v2663 = vunpack.c.l.b16 %v2576
        %v2664 = vunpack.c.h.b16 %v2576
        %v2665 = vunpack.c.l.b16 %v2577
        %v2666 = vunpack.c.h.b16 %v2577
        %v2667 = vunpack.c.l.b16 %v2578
        %v2668 = vunpack.c.h.b16 %v2578
        %v2669 = vunpack.c.l.b16 %v2579
        %v2670 = vunpack.c.h.b16 %v2579
        %v2671 = vunpack.c.l.b16 %v2580
        %v2672 = vunpack.c.h.b16 %v2580
        %v2673 = vunpack.c.l.b16 %v2581
        %v2674 = vunpack.c.h.b16 %v2581
        %v2675 = vunpack.c.l.b16 %v2582
        %v2676 = vunpack.c.h.b16 %v2582
        %v2677 = vunpack.c.l.b16 %v2583
        %v2678 = vunpack.c.h.b16 %v2583
        %v2679 = vunpack.c.l.b16 %v2584
        %v2680 = vunpack.c.h.b16 %v2584
        %v2681 = vpack.c.b16 %v2621, %v2617
        %v2682 = vpack.c.b16 %v2622, %v2618
        %v2683 = vpack.c.b16 %v2623, %v2619
        %v2684 = vpack.c.b16 %v2624, %v2620
        %v2685 = vpack.c.b16 %v2629, %v2625
        %v2686 = vpack.c.b16 %v2630, %v2626
        %v2687 = vpack.c.b16 %v2631, %v2627
        %v2688 = vpack.c.b16 %v2632, %v2628
        %v2689 = vpack.c.b16 %v2637, %v2633
        %v2690 = vpack.c.b16 %v2638, %v2634
        %v2691 = vpack.c.b16 %v2639, %v2635
        %v2692 = vpack.c.b16 %v2640, %v2636
        %v2693 = vpack.c.b16 %v2645, %v2641
        %v2694 = vpack.c.b16 %v2646, %v2642
        %v2695 = vpack.c.b16 %v2647, %v2643
        %v2696 = vpack.c.b16 %v2648, %v2644
        %v2697 = vpack.c.b16 %v2653, %v2649
        %v2698 = vpack.c.b16 %v2654, %v2650
        %v2699 = vpack.c.b16 %v2655, %v2651
        %v2700 = vpack.c.b16 %v2656, %v2652
        %v2701 = vpack.c.b16 %v2661, %v2657
        %v2702 = vpack.c.b16 %v2662, %v2658
        %v2703 = vpack.c.b16 %v2663, %v2659
        %v2704 = vpack.c.b16 %v2664, %v2660
        %v2705 = vpack.c.b16 %v2669, %v2665
        %v2706 = vpack.c.b16 %v2670, %v2666
        %v2707 = vpack.c.b16 %v2671, %v2667
        %v2708 = vpack.c.b16 %v2672, %v2668
        %v2709 = vpack.c.b16 %v2677, %v2673
        %v2710 = vpack.c.b16 %v2678, %v2674
        %v2711 = vpack.c.b16 %v2679, %v2675
        %v2712 = vpack.c.b16 %v2680, %v2676
        %2745 = vmatprep.subr.bf16.mxu0 %v2682
        %2746 = vmatpush1.bf16.msra.mxu0 %v2681
        %2747 = vmatprep.subr.bf16.mxu0 %v2686
        %2748 = vmatpush1.bf16.msra.mxu0 %v2685
        %2749 = vmatprep.subr.bf16.mxu0 %v2690
        %2750 = vmatpush1.bf16.msra.mxu0 %v2689
        %2751 = vmatprep.subr.bf16.mxu0 %v2694
        %2752 = vmatpush1.bf16.msra.mxu0 %v2693
        %2753 = vmatprep.subr.bf16.mxu0 %v2698
        %2754 = vmatpush1.bf16.msra.mxu0 %v2697
        %2755 = vmatprep.subr.bf16.mxu0 %v2702
        %2756 = vmatpush1.bf16.msra.mxu0 %v2701
        %2757 = vmatprep.subr.bf16.mxu0 %v2706
        %2758 = vmatpush1.bf16.msra.mxu0 %v2705
        %2759 = vmatprep.subr.bf16.mxu0 %v2710
        %2760 = vmatpush1.bf16.msra.mxu0 %v2709
        %2761 = vmatprep.subr.bf16.mxu0 0
        %2762 = vmatpush1.bf16.msra.mxu0 0
        %2763 = vmatprep.subr.bf16.mxu0 0
        %2764 = vmatpush1.bf16.msra.mxu0 0
        %2765 = vmatprep.subr.bf16.mxu0 0
        %2766 = vmatpush1.bf16.msra.mxu0 0
        %2767 = vmatprep.subr.bf16.mxu0 0
        %2768 = vmatpush1.bf16.msra.mxu0 0
        %2769 = vmatprep.subr.bf16.mxu0 0
        %2770 = vmatpush1.bf16.msra.mxu0 0
        %2771 = vmatprep.subr.bf16.mxu0 0
        %2772 = vmatpush1.bf16.msra.mxu0 0
        %2773 = vmatprep.subr.bf16.mxu0 0
        %2774 = vmatpush1.bf16.msra.mxu0 0
        %2775 = vmatprep.subr.bf16.mxu0 0
        %2776 = vmatpush1.bf16.msra.mxu0 0
        %2777 = vmatprep.mubr.bf16.mxu0 0
        %2778 = vmatmul.mubr.bf16.gmra.mrb[0].mxu0 %v2552
        %v2779 = vpop.f32.mrb[0].mxu0
        %v2780 = vadd.f32 0.0, %v2779
        %v2781 = vpop.f32.mrb[0].mxu0
        %v2782 = vadd.f32 0.0, %v2781
        %v2783 = vpop.f32.mrb[0].mxu0
        %v2784 = vadd.f32 0.0, %v2783
        %v2785 = vpop.f32.mrb[0].mxu0
        %v2786 = vadd.f32 0.0, %v2785
        %2787 = vdwg.mxu0
        %2788 = vmatprep.subr.bf16.mxu0 %v2684
        %2789 = vmatpush1.bf16.msra.mxu0 %v2683
        %2790 = vmatprep.subr.bf16.mxu0 %v2688
        %2791 = vmatpush1.bf16.msra.mxu0 %v2687
        %2792 = vmatprep.subr.bf16.mxu0 %v2692
        %2793 = vmatpush1.bf16.msra.mxu0 %v2691
        %2794 = vmatprep.subr.bf16.mxu0 %v2696
        %2795 = vmatpush1.bf16.msra.mxu0 %v2695
        %2796 = vmatprep.subr.bf16.mxu0 %v2700
        %2797 = vmatpush1.bf16.msra.mxu0 %v2699
        %2798 = vmatprep.subr.bf16.mxu0 %v2704
        %2799 = vmatpush1.bf16.msra.mxu0 %v2703
        %2800 = vmatprep.subr.bf16.mxu0 %v2708
        %2801 = vmatpush1.bf16.msra.mxu0 %v2707
        %2802 = vmatprep.subr.bf16.mxu0 %v2712
        %2803 = vmatpush1.bf16.msra.mxu0 %v2711
        %2804 = vmatprep.subr.bf16.mxu0 0
        %2805 = vmatpush1.bf16.msra.mxu0 0
        %2806 = vmatprep.subr.bf16.mxu0 0
        %2807 = vmatpush1.bf16.msra.mxu0 0
        %2808 = vmatprep.subr.bf16.mxu0 0
        %2809 = vmatpush1.bf16.msra.mxu0 0
        %2810 = vmatprep.subr.bf16.mxu0 0
        %2811 = vmatpush1.bf16.msra.mxu0 0
        %2812 = vmatprep.subr.bf16.mxu0 0
        %2813 = vmatpush1.bf16.msra.mxu0 0
        %2814 = vmatprep.subr.bf16.mxu0 0
        %2815 = vmatpush1.bf16.msra.mxu0 0
        %2816 = vmatprep.subr.bf16.mxu0 0
        %2817 = vmatpush1.bf16.msra.mxu0 0
        %2818 = vmatprep.subr.bf16.mxu0 0
        %2819 = vmatpush1.bf16.msra.mxu0 0
        %2820 = vmatprep.mubr.bf16.mxu0 0
        %2821 = vmatmul.mubr.bf16.gmra.mrb[0].mxu0 %v2552
        %v2822 = vpop.f32.mrb[0].mxu0
        %v2823 = vadd.f32 0.0, %v2822
        %v2824 = vpop.f32.mrb[0].mxu0
        %v2825 = vadd.f32 0.0, %v2824
        %v2826 = vpop.f32.mrb[0].mxu0
        %v2827 = vadd.f32 0.0, %v2826
        %v2828 = vpop.f32.mrb[0].mxu0
        %v2829 = vadd.f32 0.0, %v2828
        %2830 = vdwg.mxu0
        %v2831 = vadd.f32 %v2544, %v2780
        %v2832 = vadd.f32 %v2545, %v2782
        %v2833 = vadd.f32 %v2546, %v2823
        %v2834 = vadd.f32 %v2547, %v2825
        %v2835 = vadd.f32 %v2548, %v2784
        %v2836 = vadd.f32 %v2549, %v2786
        %v2837 = vadd.f32 %v2550, %v2827
        %v2838 = vadd.f32 %v2551, %v2829
        %v2839 = vxor.u32 %v2831, 2147483648
        %v2840 = vxor.u32 %v2835, 2147483648
        %v2841 = vmul.f32 %v2839, 1.442695
        %v2842 = vpow.pop %v2841
        %v2843 = vmul.f32 %v2840, 1.442695
        %v2844 = vpow.pop %v2843
        %v2845 = vadd.f32 %v2842, 1.0
        %v2846 = vadd.f32 %v2844, 1.0
        %v2847 = vrcp.pop %v2845
        %v2848 = vmul.f32 1.0, %v2847
        %v2849 = vrcp.pop %v2846
        %v2850 = vmul.f32 1.0, %v2849
        %v2851 = vxor.u32 %v2832, 2147483648
        %v2852 = vxor.u32 %v2836, 2147483648
        %v2853 = vmul.f32 %v2851, 1.442695
        %v2854 = vpow.pop %v2853
        %v2855 = vmul.f32 %v2852, 1.442695
        %v2856 = vpow.pop %v2855
        %v2857 = vadd.f32 %v2854, 1.0
        %v2858 = vadd.f32 %v2856, 1.0
        %v2859 = vrcp.pop %v2857
        %v2860 = vmul.f32 1.0, %v2859
        %v2861 = vrcp.pop %v2858
        %v2862 = vmul.f32 1.0, %v2861
        %v2863 = vtanh.pop %v2833
        %v2864 = vtanh.pop %v2837
        %v2865 = vxor.u32 %v2834, 2147483648
        %v2866 = vxor.u32 %v2838, 2147483648
        %v2867 = vmul.f32 %v2865, 1.442695
        %v2868 = vpow.pop %v2867
        %v2869 = vmul.f32 %v2866, 1.442695
        %v2870 = vpow.pop %v2869
        %v2871 = vadd.f32 %v2868, 1.0
        %v2872 = vadd.f32 %v2870, 1.0
        %v2873 = vrcp.pop %v2871
        %v2874 = vmul.f32 1.0, %v2873
        %v2875 = vrcp.pop %v2872
        %v2876 = vmul.f32 1.0, %v2875
        %v2877 = vmul.f32 %v2860, %v2497
        %v2878 = vmul.f32 %v2862, %v2498
        %v2879 = vmul.f32 %v2848, %v2863
        %v2880 = vmul.f32 %v2850, %v2864
        %v2881 = vadd.f32 %v2877, %v2879
        %v2882 = vadd.f32 %v2878, %v2880
        %v2883 = vtanh.pop %v2881
        %v2884 = vtanh.pop %v2882
        %v2885 = vmul.f32 %v2874, %v2883
        %v2886 = vmul.f32 %v2876, %v2884
        %2887 = vadd.xlane.f32.xlu0 %v2885
        %v2888 = vpop.xlane.xlu0 %2887
        %2889 = vadd.xlane.f32.xlu0 %v2886
        %v2890 = vpop.xlane.xlu0 %2889
        %v2891 = vmul.f32 %v2888, %v1356
        %v2892 = vmul.f32 %v2890, %v1356
        %v2893 = vmul.f32 %v2885, %v2885
        %v2894 = vmul.f32 %v2886, %v2886
        %2895 = vadd.xlane.f32.xlu0 %v2893
        %v2896 = vpop.xlane.xlu0 %2895
        %2897 = vadd.xlane.f32.xlu0 %v2894
        %v2898 = vpop.xlane.xlu0 %2897
        %v2899 = vmul.f32 %v2896, %v1356
        %v2900 = vmul.f32 %v2898, %v1356
        %v2901 = vmul.f32 %v2891, %v2891
        %v2902 = vmul.f32 %v2892, %v2892
        %v2903 = vsub.f32 %v2899, %v2901
        %v2904 = vsub.f32 %v2900, %v2902
        %v2905 = vsub.f32 %v2885, %v2891
        %v2906 = vsub.f32 %v2886, %v2892
        %v2907 = vadd.f32 %v2903, 1e-05
        %v2908 = vadd.f32 %v2904, 1e-05
        %v2909 = vrsqrt.pop %v2907
        %v2910 = vrsqrt.pop %v2908
        %v2911 = vmul.f32 %v2905, %v2909
        %v2912 = vmul.f32 %v2906, %v2910
        %v2913 = vmul.f32 %v2911, %v1001
        %v2914 = vmul.f32 %v2912, %v1001
        %v2915 = vadd.f32 %v2913, %v1008
        %v2916 = vadd.f32 %v2914, %v1008
        %v2917 = vmax.f32 %v2915, 0.0
        %v2918 = vmax.f32 %v2916, 0.0
        %s2919 = scalar_lea.vmem %s365, 64 [#allocation4]
        %v2920 = vld [vmem:[%s2919] sm:$0xff]
        %v2921 = vld [vmem:[%s2919 + $0x8] sm:$0xff]
        %v2922 = vadd.f32 %v2917, %v2920
        %v2923 = vadd.f32 %v2918, %v2921
        %v2924 = vpack.c.bf16 %v2923, %v2922
        %s2925 = scalar_lea.vmem [#allocation2], 32
        %2926 = vst [vmem:[%s2925] sm:$0xff] %v2924
        %s2927 = scalar_lea.vmem [#allocation3], 320
        %v2928 = vld [vmem:[%s2927] sm:$0xff]
        %v2929 = vld [vmem:[%s2927 + $0x8] sm:$0xff]
        %v2930 = vld [vmem:[%s2927 + $0x10] sm:$0xff]
        %v2931 = vld [vmem:[%s2927 + $0x18] sm:$0xff]
        %v2932 = vld [vmem:[%s2927 + $0x20] sm:$0xff]
        %v2933 = vld [vmem:[%s2927 + $0x28] sm:$0xff]
        %v2934 = vld [vmem:[%s2927 + $0x30] sm:$0xff]
        %v2935 = vld [vmem:[%s2927 + $0x38] sm:$0xff]
        %v2936 = vpack.c.bf16 %v2886, %v2885
        %v2937 = vld [vmem:[%s2] sm:$0xff]
        %v2938 = vld [vmem:[%s2 + $0x8] sm:$0xff]
        %v2939 = vld [vmem:[%s2 + $0x10] sm:$0xff]
        %v2940 = vld [vmem:[%s2 + $0x18] sm:$0xff]
        %v2941 = vld [vmem:[%s2 + $0x20] sm:$0xff]
        %v2942 = vld [vmem:[%s2 + $0x28] sm:$0xff]
        %v2943 = vld [vmem:[%s2 + $0x30] sm:$0xff]
        %v2944 = vld [vmem:[%s2 + $0x38] sm:$0xff]
        %v2945 = vld [vmem:[%s2 + $0x40] sm:$0xff]
        %v2946 = vld [vmem:[%s2 + $0x48] sm:$0xff]
        %v2947 = vld [vmem:[%s2 + $0x50] sm:$0xff]
        %v2948 = vld [vmem:[%s2 + $0x58] sm:$0xff]
        %v2949 = vld [vmem:[%s2 + $0x60] sm:$0xff]
        %v2950 = vld [vmem:[%s2 + $0x68] sm:$0xff]
        %v2951 = vld [vmem:[%s2 + $0x70] sm:$0xff]
        %v2952 = vld [vmem:[%s2 + $0x78] sm:$0xff]
        %v2953 = vld [vmem:[%s2 + $0x80] sm:$0xff]
        %v2954 = vld [vmem:[%s2 + $0x88] sm:$0xff]
        %v2955 = vld [vmem:[%s2 + $0x90] sm:$0xff]
        %v2956 = vld [vmem:[%s2 + $0x98] sm:$0xff]
        %v2957 = vld [vmem:[%s2 + $0xa0] sm:$0xff]
        %v2958 = vld [vmem:[%s2 + $0xa8] sm:$0xff]
        %v2959 = vld [vmem:[%s2 + $0xb0] sm:$0xff]
        %v2960 = vld [vmem:[%s2 + $0xb8] sm:$0xff]
        %v2961 = vld [vmem:[%s2 + $0xc0] sm:$0xff]
        %v2962 = vld [vmem:[%s2 + $0xc8] sm:$0xff]
        %v2963 = vld [vmem:[%s2 + $0xd0] sm:$0xff]
        %v2964 = vld [vmem:[%s2 + $0xd8] sm:$0xff]
        %v2965 = vld [vmem:[%s2 + $0xe0] sm:$0xff]
        %v2966 = vld [vmem:[%s2 + $0xe8] sm:$0xff]
        %v2967 = vld [vmem:[%s2 + $0xf0] sm:$0xff]
        %v2968 = vld [vmem:[%s2 + $0xf8] sm:$0xff]
        %v3001 = vunpack.c.l.b16 %v2937
        %v3002 = vunpack.c.h.b16 %v2937
        %v3003 = vunpack.c.l.b16 %v2938
        %v3004 = vunpack.c.h.b16 %v2938
        %v3005 = vunpack.c.l.b16 %v2939
        %v3006 = vunpack.c.h.b16 %v2939
        %v3007 = vunpack.c.l.b16 %v2940
        %v3008 = vunpack.c.h.b16 %v2940
        %v3009 = vunpack.c.l.b16 %v2941
        %v3010 = vunpack.c.h.b16 %v2941
        %v3011 = vunpack.c.l.b16 %v2942
        %v3012 = vunpack.c.h.b16 %v2942
        %v3013 = vunpack.c.l.b16 %v2943
        %v3014 = vunpack.c.h.b16 %v2943
        %v3015 = vunpack.c.l.b16 %v2944
        %v3016 = vunpack.c.h.b16 %v2944
        %v3017 = vunpack.c.l.b16 %v2945
        %v3018 = vunpack.c.h.b16 %v2945
        %v3019 = vunpack.c.l.b16 %v2946
        %v3020 = vunpack.c.h.b16 %v2946
        %v3021 = vunpack.c.l.b16 %v2947
        %v3022 = vunpack.c.h.b16 %v2947
        %v3023 = vunpack.c.l.b16 %v2948
        %v3024 = vunpack.c.h.b16 %v2948
        %v3025 = vunpack.c.l.b16 %v2949
        %v3026 = vunpack.c.h.b16 %v2949
        %v3027 = vunpack.c.l.b16 %v2950
        %v3028 = vunpack.c.h.b16 %v2950
        %v3029 = vunpack.c.l.b16 %v2951
        %v3030 = vunpack.c.h.b16 %v2951
        %v3031 = vunpack.c.l.b16 %v2952
        %v3032 = vunpack.c.h.b16 %v2952
        %v3033 = vunpack.c.l.b16 %v2953
        %v3034 = vunpack.c.h.b16 %v2953
        %v3035 = vunpack.c.l.b16 %v2954
        %v3036 = vunpack.c.h.b16 %v2954
        %v3037 = vunpack.c.l.b16 %v2955
        %v3038 = vunpack.c.h.b16 %v2955
        %v3039 = vunpack.c.l.b16 %v2956
        %v3040 = vunpack.c.h.b16 %v2956
        %v3041 = vunpack.c.l.b16 %v2957
        %v3042 = vunpack.c.h.b16 %v2957
        %v3043 = vunpack.c.l.b16 %v2958
        %v3044 = vunpack.c.h.b16 %v2958
        %v3045 = vunpack.c.l.b16 %v2959
        %v3046 = vunpack.c.h.b16 %v2959
        %v3047 = vunpack.c.l.b16 %v2960
        %v3048 = vunpack.c.h.b16 %v2960
        %v3049 = vunpack.c.l.b16 %v2961
        %v3050 = vunpack.c.h.b16 %v2961
        %v3051 = vunpack.c.l.b16 %v2962
        %v3052 = vunpack.c.h.b16 %v2962
        %v3053 = vunpack.c.l.b16 %v2963
        %v3054 = vunpack.c.h.b16 %v2963
        %v3055 = vunpack.c.l.b16 %v2964
        %v3056 = vunpack.c.h.b16 %v2964
        %v3057 = vunpack.c.l.b16 %v2965
        %v3058 = vunpack.c.h.b16 %v2965
        %v3059 = vunpack.c.l.b16 %v2966
        %v3060 = vunpack.c.h.b16 %v2966
        %v3061 = vunpack.c.l.b16 %v2967
        %v3062 = vunpack.c.h.b16 %v2967
        %v3063 = vunpack.c.l.b16 %v2968
        %v3064 = vunpack.c.h.b16 %v2968
        %v3065 = vpack.c.b16 %v3005, %v3001
        %v3066 = vpack.c.b16 %v3006, %v3002
        %v3067 = vpack.c.b16 %v3007, %v3003
        %v3068 = vpack.c.b16 %v3008, %v3004
        %v3069 = vpack.c.b16 %v3013, %v3009
        %v3070 = vpack.c.b16 %v3014, %v3010
        %v3071 = vpack.c.b16 %v3015, %v3011
        %v3072 = vpack.c.b16 %v3016, %v3012
        %v3073 = vpack.c.b16 %v3021, %v3017
        %v3074 = vpack.c.b16 %v3022, %v3018
        %v3075 = vpack.c.b16 %v3023, %v3019
        %v3076 = vpack.c.b16 %v3024, %v3020
        %v3077 = vpack.c.b16 %v3029, %v3025
        %v3078 = vpack.c.b16 %v3030, %v3026
        %v3079 = vpack.c.b16 %v3031, %v3027
        %v3080 = vpack.c.b16 %v3032, %v3028
        %v3081 = vpack.c.b16 %v3037, %v3033
        %v3082 = vpack.c.b16 %v3038, %v3034
        %v3083 = vpack.c.b16 %v3039, %v3035
        %v3084 = vpack.c.b16 %v3040, %v3036
        %v3085 = vpack.c.b16 %v3045, %v3041
        %v3086 = vpack.c.b16 %v3046, %v3042
        %v3087 = vpack.c.b16 %v3047, %v3043
        %v3088 = vpack.c.b16 %v3048, %v3044
        %v3089 = vpack.c.b16 %v3053, %v3049
        %v3090 = vpack.c.b16 %v3054, %v3050
        %v3091 = vpack.c.b16 %v3055, %v3051
        %v3092 = vpack.c.b16 %v3056, %v3052
        %v3093 = vpack.c.b16 %v3061, %v3057
        %v3094 = vpack.c.b16 %v3062, %v3058
        %v3095 = vpack.c.b16 %v3063, %v3059
        %v3096 = vpack.c.b16 %v3064, %v3060
        %3129 = vmatprep.subr.bf16.mxu0 %v3066
        %3130 = vmatpush1.bf16.msra.mxu0 %v3065
        %3131 = vmatprep.subr.bf16.mxu0 %v3070
        %3132 = vmatpush1.bf16.msra.mxu0 %v3069
        %3133 = vmatprep.subr.bf16.mxu0 %v3074
        %3134 = vmatpush1.bf16.msra.mxu0 %v3073
        %3135 = vmatprep.subr.bf16.mxu0 %v3078
        %3136 = vmatpush1.bf16.msra.mxu0 %v3077
        %3137 = vmatprep.subr.bf16.mxu0 %v3082
        %3138 = vmatpush1.bf16.msra.mxu0 %v3081
        %3139 = vmatprep.subr.bf16.mxu0 %v3086
        %3140 = vmatpush1.bf16.msra.mxu0 %v3085
        %3141 = vmatprep.subr.bf16.mxu0 %v3090
        %3142 = vmatpush1.bf16.msra.mxu0 %v3089
        %3143 = vmatprep.subr.bf16.mxu0 %v3094
        %3144 = vmatpush1.bf16.msra.mxu0 %v3093
        %3145 = vmatprep.subr.bf16.mxu0 0
        %3146 = vmatpush1.bf16.msra.mxu0 0
        %3147 = vmatprep.subr.bf16.mxu0 0
        %3148 = vmatpush1.bf16.msra.mxu0 0
        %3149 = vmatprep.subr.bf16.mxu0 0
        %3150 = vmatpush1.bf16.msra.mxu0 0
        %3151 = vmatprep.subr.bf16.mxu0 0
        %3152 = vmatpush1.bf16.msra.mxu0 0
        %3153 = vmatprep.subr.bf16.mxu0 0
        %3154 = vmatpush1.bf16.msra.mxu0 0
        %3155 = vmatprep.subr.bf16.mxu0 0
        %3156 = vmatpush1.bf16.msra.mxu0 0
        %3157 = vmatprep.subr.bf16.mxu0 0
        %3158 = vmatpush1.bf16.msra.mxu0 0
        %3159 = vmatprep.subr.bf16.mxu0 0
        %3160 = vmatpush1.bf16.msra.mxu0 0
        %3161 = vmatprep.mubr.bf16.mxu0 0
        %3162 = vmatmul.mubr.bf16.gmra.mrb[0].mxu0 %v2936
        %v3163 = vpop.f32.mrb[0].mxu0
        %v3164 = vadd.f32 0.0, %v3163
        %v3165 = vpop.f32.mrb[0].mxu0
        %v3166 = vadd.f32 0.0, %v3165
        %v3167 = vpop.f32.mrb[0].mxu0
        %v3168 = vadd.f32 0.0, %v3167
        %v3169 = vpop.f32.mrb[0].mxu0
        %v3170 = vadd.f32 0.0, %v3169
        %3171 = vdwg.mxu0
        %3172 = vmatprep.subr.bf16.mxu0 %v3068
        %3173 = vmatpush1.bf16.msra.mxu0 %v3067
        %3174 = vmatprep.subr.bf16.mxu0 %v3072
        %3175 = vmatpush1.bf16.msra.mxu0 %v3071
        %3176 = vmatprep.subr.bf16.mxu0 %v3076
        %3177 = vmatpush1.bf16.msra.mxu0 %v3075
        %3178 = vmatprep.subr.bf16.mxu0 %v3080
        %3179 = vmatpush1.bf16.msra.mxu0 %v3079
        %3180 = vmatprep.subr.bf16.mxu0 %v3084
        %3181 = vmatpush1.bf16.msra.mxu0 %v3083
        %3182 = vmatprep.subr.bf16.mxu0 %v3088
        %3183 = vmatpush1.bf16.msra.mxu0 %v3087
        %3184 = vmatprep.subr.bf16.mxu0 %v3092
        %3185 = vmatpush1.bf16.msra.mxu0 %v3091
        %3186 = vmatprep.subr.bf16.mxu0 %v3096
        %3187 = vmatpush1.bf16.msra.mxu0 %v3095
        %3188 = vmatprep.subr.bf16.mxu0 0
        %3189 = vmatpush1.bf16.msra.mxu0 0
        %3190 = vmatprep.subr.bf16.mxu0 0
        %3191 = vmatpush1.bf16.msra.mxu0 0
        %3192 = vmatprep.subr.bf16.mxu0 0
        %3193 = vmatpush1.bf16.msra.mxu0 0
        %3194 = vmatprep.subr.bf16.mxu0 0
        %3195 = vmatpush1.bf16.msra.mxu0 0
        %3196 = vmatprep.subr.bf16.mxu0 0
        %3197 = vmatpush1.bf16.msra.mxu0 0
        %3198 = vmatprep.subr.bf16.mxu0 0
        %3199 = vmatpush1.bf16.msra.mxu0 0
        %3200 = vmatprep.subr.bf16.mxu0 0
        %3201 = vmatpush1.bf16.msra.mxu0 0
        %3202 = vmatprep.subr.bf16.mxu0 0
        %3203 = vmatpush1.bf16.msra.mxu0 0
        %3204 = vmatprep.mubr.bf16.mxu0 0
        %3205 = vmatmul.mubr.bf16.gmra.mrb[0].mxu0 %v2936
        %v3206 = vpop.f32.mrb[0].mxu0
        %v3207 = vadd.f32 0.0, %v3206
        %v3208 = vpop.f32.mrb[0].mxu0
        %v3209 = vadd.f32 0.0, %v3208
        %v3210 = vpop.f32.mrb[0].mxu0
        %v3211 = vadd.f32 0.0, %v3210
        %v3212 = vpop.f32.mrb[0].mxu0
        %v3213 = vadd.f32 0.0, %v3212
        %3214 = vdwg.mxu0
        %v3215 = vadd.f32 %v2928, %v3164
        %v3216 = vadd.f32 %v2929, %v3166
        %v3217 = vadd.f32 %v2930, %v3207
        %v3218 = vadd.f32 %v2931, %v3209
        %v3219 = vadd.f32 %v2932, %v3168
        %v3220 = vadd.f32 %v2933, %v3170
        %v3221 = vadd.f32 %v2934, %v3211
        %v3222 = vadd.f32 %v2935, %v3213
        %v3223 = vxor.u32 %v3215, 2147483648
        %v3224 = vxor.u32 %v3219, 2147483648
        %v3225 = vmul.f32 %v3223, 1.442695
        %v3226 = vpow.pop %v3225
        %v3227 = vmul.f32 %v3224, 1.442695
        %v3228 = vpow.pop %v3227
        %v3229 = vadd.f32 %v3226, 1.0
        %v3230 = vadd.f32 %v3228, 1.0
        %v3231 = vrcp.pop %v3229
        %v3232 = vmul.f32 1.0, %v3231
        %v3233 = vrcp.pop %v3230
        %v3234 = vmul.f32 1.0, %v3233
        %v3235 = vxor.u32 %v3216, 2147483648
        %v3236 = vxor.u32 %v3220, 2147483648
        %v3237 = vmul.f32 %v3235, 1.442695
        %v3238 = vpow.pop %v3237
        %v3239 = vmul.f32 %v3236, 1.442695
        %v3240 = vpow.pop %v3239
        %v3241 = vadd.f32 %v3238, 1.0
        %v3242 = vadd.f32 %v3240, 1.0
        %v3243 = vrcp.pop %v3241
        %v3244 = vmul.f32 1.0, %v3243
        %v3245 = vrcp.pop %v3242
        %v3246 = vmul.f32 1.0, %v3245
        %v3247 = vtanh.pop %v3217
        %v3248 = vtanh.pop %v3221
        %v3249 = vxor.u32 %v3218, 2147483648
        %v3250 = vxor.u32 %v3222, 2147483648
        %v3251 = vmul.f32 %v3249, 1.442695
        %v3252 = vpow.pop %v3251
        %v3253 = vmul.f32 %v3250, 1.442695
        %v3254 = vpow.pop %v3253
        %v3255 = vadd.f32 %v3252, 1.0
        %v3256 = vadd.f32 %v3254, 1.0
        %v3257 = vrcp.pop %v3255
        %v3258 = vmul.f32 1.0, %v3257
        %v3259 = vrcp.pop %v3256
        %v3260 = vmul.f32 1.0, %v3259
        %v3261 = vmul.f32 %v3244, %v2881
        %v3262 = vmul.f32 %v3246, %v2882
        %v3263 = vmul.f32 %v3232, %v3247
        %v3264 = vmul.f32 %v3234, %v3248
        %v3265 = vadd.f32 %v3261, %v3263
        %v3266 = vadd.f32 %v3262, %v3264
        %v3267 = vtanh.pop %v3265
        %v3268 = vtanh.pop %v3266
        %v3269 = vmul.f32 %v3258, %v3267
        %v3270 = vmul.f32 %v3260, %v3268
        %3271 = vadd.xlane.f32.xlu0 %v3269
        %v3272 = vpop.xlane.xlu0 %3271
        %3273 = vadd.xlane.f32.xlu0 %v3270
        %v3274 = vpop.xlane.xlu0 %3273
        %v3275 = vmul.f32 %v3272, %v1356
        %v3276 = vmul.f32 %v3274, %v1356
        %v3277 = vmul.f32 %v3269, %v3269
        %v3278 = vmul.f32 %v3270, %v3270
        %3279 = vadd.xlane.f32.xlu0 %v3277
        %v3280 = vpop.xlane.xlu0 %3279
        %3281 = vadd.xlane.f32.xlu0 %v3278
        %v3282 = vpop.xlane.xlu0 %3281
        %v3283 = vmul.f32 %v3280, %v1356
        %v3284 = vmul.f32 %v3282, %v1356
        %v3285 = vmul.f32 %v3275, %v3275
        %v3286 = vmul.f32 %v3276, %v3276
        %v3287 = vsub.f32 %v3283, %v3285
        %v3288 = vsub.f32 %v3284, %v3286
        %v3289 = vsub.f32 %v3269, %v3275
        %v3290 = vsub.f32 %v3270, %v3276
        %v3291 = vadd.f32 %v3287, 1e-05
        %v3292 = vadd.f32 %v3288, 1e-05
        %v3293 = vrsqrt.pop %v3291
        %v3294 = vrsqrt.pop %v3292
        %v3295 = vmul.f32 %v3289, %v3293
        %v3296 = vmul.f32 %v3290, %v3294
        %v3297 = vmul.f32 %v3295, %v1001
        %v3298 = vmul.f32 %v3296, %v1001
        %v3299 = vadd.f32 %v3297, %v1008
        %v3300 = vadd.f32 %v3298, %v1008
        %v3301 = vmax.f32 %v3299, 0.0
        %v3302 = vmax.f32 %v3300, 0.0
        %s3303 = scalar_lea.vmem %s365, 80 [#allocation4]
        %v3304 = vld [vmem:[%s3303] sm:$0xff]
        %v3305 = vld [vmem:[%s3303 + $0x8] sm:$0xff]
        %v3306 = vadd.f32 %v3301, %v3304
        %v3307 = vadd.f32 %v3302, %v3305
        %v3308 = vpack.c.bf16 %v3307, %v3306
        %s3309 = scalar_lea.vmem [#allocation2], 40
        %3310 = vst [vmem:[%s3309] sm:$0xff] %v3308
        %s3311 = scalar_lea.vmem [#allocation3], 384
        %v3312 = vld [vmem:[%s3311] sm:$0xff]
        %v3313 = vld [vmem:[%s3311 + $0x8] sm:$0xff]
        %v3314 = vld [vmem:[%s3311 + $0x10] sm:$0xff]
        %v3315 = vld [vmem:[%s3311 + $0x18] sm:$0xff]
        %v3316 = vld [vmem:[%s3311 + $0x20] sm:$0xff]
        %v3317 = vld [vmem:[%s3311 + $0x28] sm:$0xff]
        %v3318 = vld [vmem:[%s3311 + $0x30] sm:$0xff]
        %v3319 = vld [vmem:[%s3311 + $0x38] sm:$0xff]
        %v3320 = vpack.c.bf16 %v3270, %v3269
        %v3321 = vld [vmem:[%s2] sm:$0xff]
        %v3322 = vld [vmem:[%s2 + $0x8] sm:$0xff]
        %v3323 = vld [vmem:[%s2 + $0x10] sm:$0xff]
        %v3324 = vld [vmem:[%s2 + $0x18] sm:$0xff]
        %v3325 = vld [vmem:[%s2 + $0x20] sm:$0xff]
        %v3326 = vld [vmem:[%s2 + $0x28] sm:$0xff]
        %v3327 = vld [vmem:[%s2 + $0x30] sm:$0xff]
        %v3328 = vld [vmem:[%s2 + $0x38] sm:$0xff]
        %v3329 = vld [vmem:[%s2 + $0x40] sm:$0xff]
        %v3330 = vld [vmem:[%s2 + $0x48] sm:$0xff]
        %v3331 = vld [vmem:[%s2 + $0x50] sm:$0xff]
        %v3332 = vld [vmem:[%s2 + $0x58] sm:$0xff]
        %v3333 = vld [vmem:[%s2 + $0x60] sm:$0xff]
        %v3334 = vld [vmem:[%s2 + $0x68] sm:$0xff]
        %v3335 = vld [vmem:[%s2 + $0x70] sm:$0xff]
        %v3336 = vld [vmem:[%s2 + $0x78] sm:$0xff]
        %v3337 = vld [vmem:[%s2 + $0x80] sm:$0xff]
        %v3338 = vld [vmem:[%s2 + $0x88] sm:$0xff]
        %v3339 = vld [vmem:[%s2 + $0x90] sm:$0xff]
        %v3340 = vld [vmem:[%s2 + $0x98] sm:$0xff]
        %v3341 = vld [vmem:[%s2 + $0xa0] sm:$0xff]
        %v3342 = vld [vmem:[%s2 + $0xa8] sm:$0xff]
        %v3343 = vld [vmem:[%s2 + $0xb0] sm:$0xff]
        %v3344 = vld [vmem:[%s2 + $0xb8] sm:$0xff]
        %v3345 = vld [vmem:[%s2 + $0xc0] sm:$0xff]
        %v3346 = vld [vmem:[%s2 + $0xc8] sm:$0xff]
        %v3347 = vld [vmem:[%s2 + $0xd0] sm:$0xff]
        %v3348 = vld [vmem:[%s2 + $0xd8] sm:$0xff]
        %v3349 = vld [vmem:[%s2 + $0xe0] sm:$0xff]
        %v3350 = vld [vmem:[%s2 + $0xe8] sm:$0xff]
        %v3351 = vld [vmem:[%s2 + $0xf0] sm:$0xff]
        %v3352 = vld [vmem:[%s2 + $0xf8] sm:$0xff]
        %v3385 = vunpack.c.l.b16 %v3321
        %v3386 = vunpack.c.h.b16 %v3321
        %v3387 = vunpack.c.l.b16 %v3322
        %v3388 = vunpack.c.h.b16 %v3322
        %v3389 = vunpack.c.l.b16 %v3323
        %v3390 = vunpack.c.h.b16 %v3323
        %v3391 = vunpack.c.l.b16 %v3324
        %v3392 = vunpack.c.h.b16 %v3324
        %v3393 = vunpack.c.l.b16 %v3325
        %v3394 = vunpack.c.h.b16 %v3325
        %v3395 = vunpack.c.l.b16 %v3326
        %v3396 = vunpack.c.h.b16 %v3326
        %v3397 = vunpack.c.l.b16 %v3327
        %v3398 = vunpack.c.h.b16 %v3327
        %v3399 = vunpack.c.l.b16 %v3328
        %v3400 = vunpack.c.h.b16 %v3328
        %v3401 = vunpack.c.l.b16 %v3329
        %v3402 = vunpack.c.h.b16 %v3329
        %v3403 = vunpack.c.l.b16 %v3330
        %v3404 = vunpack.c.h.b16 %v3330
        %v3405 = vunpack.c.l.b16 %v3331
        %v3406 = vunpack.c.h.b16 %v3331
        %v3407 = vunpack.c.l.b16 %v3332
        %v3408 = vunpack.c.h.b16 %v3332
        %v3409 = vunpack.c.l.b16 %v3333
        %v3410 = vunpack.c.h.b16 %v3333
        %v3411 = vunpack.c.l.b16 %v3334
        %v3412 = vunpack.c.h.b16 %v3334
        %v3413 = vunpack.c.l.b16 %v3335
        %v3414 = vunpack.c.h.b16 %v3335
        %v3415 = vunpack.c.l.b16 %v3336
        %v3416 = vunpack.c.h.b16 %v3336
        %v3417 = vunpack.c.l.b16 %v3337
        %v3418 = vunpack.c.h.b16 %v3337
        %v3419 = vunpack.c.l.b16 %v3338
        %v3420 = vunpack.c.h.b16 %v3338
        %v3421 = vunpack.c.l.b16 %v3339
        %v3422 = vunpack.c.h.b16 %v3339
        %v3423 = vunpack.c.l.b16 %v3340
        %v3424 = vunpack.c.h.b16 %v3340
        %v3425 = vunpack.c.l.b16 %v3341
        %v3426 = vunpack.c.h.b16 %v3341
        %v3427 = vunpack.c.l.b16 %v3342
        %v3428 = vunpack.c.h.b16 %v3342
        %v3429 = vunpack.c.l.b16 %v3343
        %v3430 = vunpack.c.h.b16 %v3343
        %v3431 = vunpack.c.l.b16 %v3344
        %v3432 = vunpack.c.h.b16 %v3344
        %v3433 = vunpack.c.l.b16 %v3345
        %v3434 = vunpack.c.h.b16 %v3345
        %v3435 = vunpack.c.l.b16 %v3346
        %v3436 = vunpack.c.h.b16 %v3346
        %v3437 = vunpack.c.l.b16 %v3347
        %v3438 = vunpack.c.h.b16 %v3347
        %v3439 = vunpack.c.l.b16 %v3348
        %v3440 = vunpack.c.h.b16 %v3348
        %v3441 = vunpack.c.l.b16 %v3349
        %v3442 = vunpack.c.h.b16 %v3349
        %v3443 = vunpack.c.l.b16 %v3350
        %v3444 = vunpack.c.h.b16 %v3350
        %v3445 = vunpack.c.l.b16 %v3351
        %v3446 = vunpack.c.h.b16 %v3351
        %v3447 = vunpack.c.l.b16 %v3352
        %v3448 = vunpack.c.h.b16 %v3352
        %v3449 = vpack.c.b16 %v3389, %v3385
        %v3450 = vpack.c.b16 %v3390, %v3386
        %v3451 = vpack.c.b16 %v3391, %v3387
        %v3452 = vpack.c.b16 %v3392, %v3388
        %v3453 = vpack.c.b16 %v3397, %v3393
        %v3454 = vpack.c.b16 %v3398, %v3394
        %v3455 = vpack.c.b16 %v3399, %v3395
        %v3456 = vpack.c.b16 %v3400, %v3396
        %v3457 = vpack.c.b16 %v3405, %v3401
        %v3458 = vpack.c.b16 %v3406, %v3402
        %v3459 = vpack.c.b16 %v3407, %v3403
        %v3460 = vpack.c.b16 %v3408, %v3404
        %v3461 = vpack.c.b16 %v3413, %v3409
        %v3462 = vpack.c.b16 %v3414, %v3410
        %v3463 = vpack.c.b16 %v3415, %v3411
        %v3464 = vpack.c.b16 %v3416, %v3412
        %v3465 = vpack.c.b16 %v3421, %v3417
        %v3466 = vpack.c.b16 %v3422, %v3418
        %v3467 = vpack.c.b16 %v3423, %v3419
        %v3468 = vpack.c.b16 %v3424, %v3420
        %v3469 = vpack.c.b16 %v3429, %v3425
        %v3470 = vpack.c.b16 %v3430, %v3426
        %v3471 = vpack.c.b16 %v3431, %v3427
        %v3472 = vpack.c.b16 %v3432, %v3428
        %v3473 = vpack.c.b16 %v3437, %v3433
        %v3474 = vpack.c.b16 %v3438, %v3434
        %v3475 = vpack.c.b16 %v3439, %v3435
        %v3476 = vpack.c.b16 %v3440, %v3436
        %v3477 = vpack.c.b16 %v3445, %v3441
        %v3478 = vpack.c.b16 %v3446, %v3442
        %v3479 = vpack.c.b16 %v3447, %v3443
        %v3480 = vpack.c.b16 %v3448, %v3444
        %3513 = vmatprep.subr.bf16.mxu0 %v3450
        %3514 = vmatpush1.bf16.msra.mxu0 %v3449
        %3515 = vmatprep.subr.bf16.mxu0 %v3454
        %3516 = vmatpush1.bf16.msra.mxu0 %v3453
        %3517 = vmatprep.subr.bf16.mxu0 %v3458
        %3518 = vmatpush1.bf16.msra.mxu0 %v3457
        %3519 = vmatprep.subr.bf16.mxu0 %v3462
        %3520 = vmatpush1.bf16.msra.mxu0 %v3461
        %3521 = vmatprep.subr.bf16.mxu0 %v3466
        %3522 = vmatpush1.bf16.msra.mxu0 %v3465
        %3523 = vmatprep.subr.bf16.mxu0 %v3470
        %3524 = vmatpush1.bf16.msra.mxu0 %v3469
        %3525 = vmatprep.subr.bf16.mxu0 %v3474
        %3526 = vmatpush1.bf16.msra.mxu0 %v3473
        %3527 = vmatprep.subr.bf16.mxu0 %v3478
        %3528 = vmatpush1.bf16.msra.mxu0 %v3477
        %3529 = vmatprep.subr.bf16.mxu0 0
        %3530 = vmatpush1.bf16.msra.mxu0 0
        %3531 = vmatprep.subr.bf16.mxu0 0
        %3532 = vmatpush1.bf16.msra.mxu0 0
        %3533 = vmatprep.subr.bf16.mxu0 0
        %3534 = vmatpush1.bf16.msra.mxu0 0
        %3535 = vmatprep.subr.bf16.mxu0 0
        %3536 = vmatpush1.bf16.msra.mxu0 0
        %3537 = vmatprep.subr.bf16.mxu0 0
        %3538 = vmatpush1.bf16.msra.mxu0 0
        %3539 = vmatprep.subr.bf16.mxu0 0
        %3540 = vmatpush1.bf16.msra.mxu0 0
        %3541 = vmatprep.subr.bf16.mxu0 0
        %3542 = vmatpush1.bf16.msra.mxu0 0
        %3543 = vmatprep.subr.bf16.mxu0 0
        %3544 = vmatpush1.bf16.msra.mxu0 0
        %3545 = vmatprep.mubr.bf16.mxu0 0
        %3546 = vmatmul.mubr.bf16.gmra.mrb[0].mxu0 %v3320
        %v3547 = vpop.f32.mrb[0].mxu0
        %v3548 = vadd.f32 0.0, %v3547
        %v3549 = vpop.f32.mrb[0].mxu0
        %v3550 = vadd.f32 0.0, %v3549
        %v3551 = vpop.f32.mrb[0].mxu0
        %v3552 = vadd.f32 0.0, %v3551
        %v3553 = vpop.f32.mrb[0].mxu0
        %v3554 = vadd.f32 0.0, %v3553
        %3555 = vdwg.mxu0
        %3556 = vmatprep.subr.bf16.mxu0 %v3452
        %3557 = vmatpush1.bf16.msra.mxu0 %v3451
        %3558 = vmatprep.subr.bf16.mxu0 %v3456
        %3559 = vmatpush1.bf16.msra.mxu0 %v3455
        %3560 = vmatprep.subr.bf16.mxu0 %v3460
        %3561 = vmatpush1.bf16.msra.mxu0 %v3459
        %3562 = vmatprep.subr.bf16.mxu0 %v3464
        %3563 = vmatpush1.bf16.msra.mxu0 %v3463
        %3564 = vmatprep.subr.bf16.mxu0 %v3468
        %3565 = vmatpush1.bf16.msra.mxu0 %v3467
        %3566 = vmatprep.subr.bf16.mxu0 %v3472
        %3567 = vmatpush1.bf16.msra.mxu0 %v3471
        %3568 = vmatprep.subr.bf16.mxu0 %v3476
        %3569 = vmatpush1.bf16.msra.mxu0 %v3475
        %3570 = vmatprep.subr.bf16.mxu0 %v3480
        %3571 = vmatpush1.bf16.msra.mxu0 %v3479
        %3572 = vmatprep.subr.bf16.mxu0 0
        %3573 = vmatpush1.bf16.msra.mxu0 0
        %3574 = vmatprep.subr.bf16.mxu0 0
        %3575 = vmatpush1.bf16.msra.mxu0 0
        %3576 = vmatprep.subr.bf16.mxu0 0
        %3577 = vmatpush1.bf16.msra.mxu0 0
        %3578 = vmatprep.subr.bf16.mxu0 0
        %3579 = vmatpush1.bf16.msra.mxu0 0
        %3580 = vmatprep.subr.bf16.mxu0 0
        %3581 = vmatpush1.bf16.msra.mxu0 0
        %3582 = vmatprep.subr.bf16.mxu0 0
        %3583 = vmatpush1.bf16.msra.mxu0 0
        %3584 = vmatprep.subr.bf16.mxu0 0
        %3585 = vmatpush1.bf16.msra.mxu0 0
        %3586 = vmatprep.subr.bf16.mxu0 0
        %3587 = vmatpush1.bf16.msra.mxu0 0
        %3588 = vmatprep.mubr.bf16.mxu0 0
        %3589 = vmatmul.mubr.bf16.gmra.mrb[0].mxu0 %v3320
        %v3590 = vpop.f32.mrb[0].mxu0
        %v3591 = vadd.f32 0.0, %v3590
        %v3592 = vpop.f32.mrb[0].mxu0
        %v3593 = vadd.f32 0.0, %v3592
        %v3594 = vpop.f32.mrb[0].mxu0
        %v3595 = vadd.f32 0.0, %v3594
        %v3596 = vpop.f32.mrb[0].mxu0
        %v3597 = vadd.f32 0.0, %v3596
        %3598 = vdwg.mxu0
        %v3599 = vadd.f32 %v3312, %v3548
        %v3600 = vadd.f32 %v3313, %v3550
        %v3601 = vadd.f32 %v3314, %v3591
        %v3602 = vadd.f32 %v3315, %v3593
        %v3603 = vadd.f32 %v3316, %v3552
        %v3604 = vadd.f32 %v3317, %v3554
        %v3605 = vadd.f32 %v3318, %v3595
        %v3606 = vadd.f32 %v3319, %v3597
        %v3607 = vxor.u32 %v3599, 2147483648
        %v3608 = vxor.u32 %v3603, 2147483648
        %v3609 = vmul.f32 %v3607, 1.442695
        %v3610 = vpow.pop %v3609
        %v3611 = vmul.f32 %v3608, 1.442695
        %v3612 = vpow.pop %v3611
        %v3613 = vadd.f32 %v3610, 1.0
        %v3614 = vadd.f32 %v3612, 1.0
        %v3615 = vrcp.pop %v3613
        %v3616 = vmul.f32 1.0, %v3615
        %v3617 = vrcp.pop %v3614
        %v3618 = vmul.f32 1.0, %v3617
        %v3619 = vxor.u32 %v3600, 2147483648
        %v3620 = vxor.u32 %v3604, 2147483648
        %v3621 = vmul.f32 %v3619, 1.442695
        %v3622 = vpow.pop %v3621
        %v3623 = vmul.f32 %v3620, 1.442695
        %v3624 = vpow.pop %v3623
        %v3625 = vadd.f32 %v3622, 1.0
        %v3626 = vadd.f32 %v3624, 1.0
        %v3627 = vrcp.pop %v3625
        %v3628 = vmul.f32 1.0, %v3627
        %v3629 = vrcp.pop %v3626
        %v3630 = vmul.f32 1.0, %v3629
        %v3631 = vtanh.pop %v3601
        %v3632 = vtanh.pop %v3605
        %v3633 = vxor.u32 %v3602, 2147483648
        %v3634 = vxor.u32 %v3606, 2147483648
        %v3635 = vmul.f32 %v3633, 1.442695
        %v3636 = vpow.pop %v3635
        %v3637 = vmul.f32 %v3634, 1.442695
        %v3638 = vpow.pop %v3637
        %v3639 = vadd.f32 %v3636, 1.0
        %v3640 = vadd.f32 %v3638, 1.0
        %v3641 = vrcp.pop %v3639
        %v3642 = vmul.f32 1.0, %v3641
        %v3643 = vrcp.pop %v3640
        %v3644 = vmul.f32 1.0, %v3643
        %v3645 = vmul.f32 %v3628, %v3265
        %v3646 = vmul.f32 %v3630, %v3266
        %v3647 = vmul.f32 %v3616, %v3631
        %v3648 = vmul.f32 %v3618, %v3632
        %v3649 = vadd.f32 %v3645, %v3647
        %v3650 = vadd.f32 %v3646, %v3648
        %v3651 = vtanh.pop %v3649
        %v3652 = vtanh.pop %v3650
        %v3653 = vmul.f32 %v3642, %v3651
        %v3654 = vmul.f32 %v3644, %v3652
        %3655 = vadd.xlane.f32.xlu0 %v3653
        %v3656 = vpop.xlane.xlu0 %3655
        %3657 = vadd.xlane.f32.xlu0 %v3654
        %v3658 = vpop.xlane.xlu0 %3657
        %v3659 = vmul.f32 %v3656, %v1356
        %v3660 = vmul.f32 %v3658, %v1356
        %v3661 = vmul.f32 %v3653, %v3653
        %v3662 = vmul.f32 %v3654, %v3654
        %3663 = vadd.xlane.f32.xlu0 %v3661
        %v3664 = vpop.xlane.xlu0 %3663
        %3665 = vadd.xlane.f32.xlu0 %v3662
        %v3666 = vpop.xlane.xlu0 %3665
        %v3667 = vmul.f32 %v3664, %v1356
        %v3668 = vmul.f32 %v3666, %v1356
        %v3669 = vmul.f32 %v3659, %v3659
        %v3670 = vmul.f32 %v3660, %v3660
        %v3671 = vsub.f32 %v3667, %v3669
        %v3672 = vsub.f32 %v3668, %v3670
        %v3673 = vsub.f32 %v3653, %v3659
        %v3674 = vsub.f32 %v3654, %v3660
        %v3675 = vadd.f32 %v3671, 1e-05
        %v3676 = vadd.f32 %v3672, 1e-05
        %v3677 = vrsqrt.pop %v3675
        %v3678 = vrsqrt.pop %v3676
        %v3679 = vmul.f32 %v3673, %v3677
        %v3680 = vmul.f32 %v3674, %v3678
        %v3681 = vmul.f32 %v3679, %v1001
        %v3682 = vmul.f32 %v3680, %v1001
        %v3683 = vadd.f32 %v3681, %v1008
        %v3684 = vadd.f32 %v3682, %v1008
        %v3685 = vmax.f32 %v3683, 0.0
        %v3686 = vmax.f32 %v3684, 0.0
        %s3687 = scalar_lea.vmem %s365, 96 [#allocation4]
        %v3688 = vld [vmem:[%s3687] sm:$0xff]
        %v3689 = vld [vmem:[%s3687 + $0x8] sm:$0xff]
        %v3690 = vadd.f32 %v3685, %v3688
        %v3691 = vadd.f32 %v3686, %v3689
        %v3692 = vpack.c.bf16 %v3691, %v3690
        %s3693 = scalar_lea.vmem [#allocation2], 48
        %3694 = vst [vmem:[%s3693] sm:$0xff] %v3692
        %s3695 = scalar_lea.vmem [#allocation3], 448
        %v3696 = vld [vmem:[%s3695] sm:$0xff]
        %v3697 = vld [vmem:[%s3695 + $0x8] sm:$0xff]
        %v3698 = vld [vmem:[%s3695 + $0x10] sm:$0xff]
        %v3699 = vld [vmem:[%s3695 + $0x18] sm:$0xff]
        %v3700 = vld [vmem:[%s3695 + $0x20] sm:$0xff]
        %v3701 = vld [vmem:[%s3695 + $0x28] sm:$0xff]
        %v3702 = vld [vmem:[%s3695 + $0x30] sm:$0xff]
        %v3703 = vld [vmem:[%s3695 + $0x38] sm:$0xff]
        %v3704 = vpack.c.bf16 %v3654, %v3653
        %v3705 = vld [vmem:[%s2] sm:$0xff]
        %v3706 = vld [vmem:[%s2 + $0x8] sm:$0xff]
        %v3707 = vld [vmem:[%s2 + $0x10] sm:$0xff]
        %v3708 = vld [vmem:[%s2 + $0x18] sm:$0xff]
        %v3709 = vld [vmem:[%s2 + $0x20] sm:$0xff]
        %v3710 = vld [vmem:[%s2 + $0x28] sm:$0xff]
        %v3711 = vld [vmem:[%s2 + $0x30] sm:$0xff]
        %v3712 = vld [vmem:[%s2 + $0x38] sm:$0xff]
        %v3713 = vld [vmem:[%s2 + $0x40] sm:$0xff]
        %v3714 = vld [vmem:[%s2 + $0x48] sm:$0xff]
        %v3715 = vld [vmem:[%s2 + $0x50] sm:$0xff]
        %v3716 = vld [vmem:[%s2 + $0x58] sm:$0xff]
        %v3717 = vld [vmem:[%s2 + $0x60] sm:$0xff]
        %v3718 = vld [vmem:[%s2 + $0x68] sm:$0xff]
        %v3719 = vld [vmem:[%s2 + $0x70] sm:$0xff]
        %v3720 = vld [vmem:[%s2 + $0x78] sm:$0xff]
        %v3721 = vld [vmem:[%s2 + $0x80] sm:$0xff]
        %v3722 = vld [vmem:[%s2 + $0x88] sm:$0xff]
        %v3723 = vld [vmem:[%s2 + $0x90] sm:$0xff]
        %v3724 = vld [vmem:[%s2 + $0x98] sm:$0xff]
        %v3725 = vld [vmem:[%s2 + $0xa0] sm:$0xff]
        %v3726 = vld [vmem:[%s2 + $0xa8] sm:$0xff]
        %v3727 = vld [vmem:[%s2 + $0xb0] sm:$0xff]
        %v3728 = vld [vmem:[%s2 + $0xb8] sm:$0xff]
        %v3729 = vld [vmem:[%s2 + $0xc0] sm:$0xff]
        %v3730 = vld [vmem:[%s2 + $0xc8] sm:$0xff]
        %v3731 = vld [vmem:[%s2 + $0xd0] sm:$0xff]
        %v3732 = vld [vmem:[%s2 + $0xd8] sm:$0xff]
        %v3733 = vld [vmem:[%s2 + $0xe0] sm:$0xff]
        %v3734 = vld [vmem:[%s2 + $0xe8] sm:$0xff]
        %v3735 = vld [vmem:[%s2 + $0xf0] sm:$0xff]
        %v3736 = vld [vmem:[%s2 + $0xf8] sm:$0xff]
        %v3769 = vunpack.c.l.b16 %v3705
        %v3770 = vunpack.c.h.b16 %v3705
        %v3771 = vunpack.c.l.b16 %v3706
        %v3772 = vunpack.c.h.b16 %v3706
        %v3773 = vunpack.c.l.b16 %v3707
        %v3774 = vunpack.c.h.b16 %v3707
        %v3775 = vunpack.c.l.b16 %v3708
        %v3776 = vunpack.c.h.b16 %v3708
        %v3777 = vunpack.c.l.b16 %v3709
        %v3778 = vunpack.c.h.b16 %v3709
        %v3779 = vunpack.c.l.b16 %v3710
        %v3780 = vunpack.c.h.b16 %v3710
        %v3781 = vunpack.c.l.b16 %v3711
        %v3782 = vunpack.c.h.b16 %v3711
        %v3783 = vunpack.c.l.b16 %v3712
        %v3784 = vunpack.c.h.b16 %v3712
        %v3785 = vunpack.c.l.b16 %v3713
        %v3786 = vunpack.c.h.b16 %v3713
        %v3787 = vunpack.c.l.b16 %v3714
        %v3788 = vunpack.c.h.b16 %v3714
        %v3789 = vunpack.c.l.b16 %v3715
        %v3790 = vunpack.c.h.b16 %v3715
        %v3791 = vunpack.c.l.b16 %v3716
        %v3792 = vunpack.c.h.b16 %v3716
        %v3793 = vunpack.c.l.b16 %v3717
        %v3794 = vunpack.c.h.b16 %v3717
        %v3795 = vunpack.c.l.b16 %v3718
        %v3796 = vunpack.c.h.b16 %v3718
        %v3797 = vunpack.c.l.b16 %v3719
        %v3798 = vunpack.c.h.b16 %v3719
        %v3799 = vunpack.c.l.b16 %v3720
        %v3800 = vunpack.c.h.b16 %v3720
        %v3801 = vunpack.c.l.b16 %v3721
        %v3802 = vunpack.c.h.b16 %v3721
        %v3803 = vunpack.c.l.b16 %v3722
        %v3804 = vunpack.c.h.b16 %v3722
        %v3805 = vunpack.c.l.b16 %v3723
        %v3806 = vunpack.c.h.b16 %v3723
        %v3807 = vunpack.c.l.b16 %v3724
        %v3808 = vunpack.c.h.b16 %v3724
        %v3809 = vunpack.c.l.b16 %v3725
        %v3810 = vunpack.c.h.b16 %v3725
        %v3811 = vunpack.c.l.b16 %v3726
        %v3812 = vunpack.c.h.b16 %v3726
        %v3813 = vunpack.c.l.b16 %v3727
        %v3814 = vunpack.c.h.b16 %v3727
        %v3815 = vunpack.c.l.b16 %v3728
        %v3816 = vunpack.c.h.b16 %v3728
        %v3817 = vunpack.c.l.b16 %v3729
        %v3818 = vunpack.c.h.b16 %v3729
        %v3819 = vunpack.c.l.b16 %v3730
        %v3820 = vunpack.c.h.b16 %v3730
        %v3821 = vunpack.c.l.b16 %v3731
        %v3822 = vunpack.c.h.b16 %v3731
        %v3823 = vunpack.c.l.b16 %v3732
        %v3824 = vunpack.c.h.b16 %v3732
        %v3825 = vunpack.c.l.b16 %v3733
        %v3826 = vunpack.c.h.b16 %v3733
        %v3827 = vunpack.c.l.b16 %v3734
        %v3828 = vunpack.c.h.b16 %v3734
        %v3829 = vunpack.c.l.b16 %v3735
        %v3830 = vunpack.c.h.b16 %v3735
        %v3831 = vunpack.c.l.b16 %v3736
        %v3832 = vunpack.c.h.b16 %v3736
        %v3833 = vpack.c.b16 %v3773, %v3769
        %v3834 = vpack.c.b16 %v3774, %v3770
        %v3835 = vpack.c.b16 %v3775, %v3771
        %v3836 = vpack.c.b16 %v3776, %v3772
        %v3837 = vpack.c.b16 %v3781, %v3777
        %v3838 = vpack.c.b16 %v3782, %v3778
        %v3839 = vpack.c.b16 %v3783, %v3779
        %v3840 = vpack.c.b16 %v3784, %v3780
        %v3841 = vpack.c.b16 %v3789, %v3785
        %v3842 = vpack.c.b16 %v3790, %v3786
        %v3843 = vpack.c.b16 %v3791, %v3787
        %v3844 = vpack.c.b16 %v3792, %v3788
        %v3845 = vpack.c.b16 %v3797, %v3793
        %v3846 = vpack.c.b16 %v3798, %v3794
        %v3847 = vpack.c.b16 %v3799, %v3795
        %v3848 = vpack.c.b16 %v3800, %v3796
        %v3849 = vpack.c.b16 %v3805, %v3801
        %v3850 = vpack.c.b16 %v3806, %v3802
        %v3851 = vpack.c.b16 %v3807, %v3803
        %v3852 = vpack.c.b16 %v3808, %v3804
        %v3853 = vpack.c.b16 %v3813, %v3809
        %v3854 = vpack.c.b16 %v3814, %v3810
        %v3855 = vpack.c.b16 %v3815, %v3811
        %v3856 = vpack.c.b16 %v3816, %v3812
        %v3857 = vpack.c.b16 %v3821, %v3817
        %v3858 = vpack.c.b16 %v3822, %v3818
        %v3859 = vpack.c.b16 %v3823, %v3819
        %v3860 = vpack.c.b16 %v3824, %v3820
        %v3861 = vpack.c.b16 %v3829, %v3825
        %v3862 = vpack.c.b16 %v3830, %v3826
        %v3863 = vpack.c.b16 %v3831, %v3827
        %v3864 = vpack.c.b16 %v3832, %v3828
        %3897 = vmatprep.subr.bf16.mxu0 %v3834
        %3898 = vmatpush1.bf16.msra.mxu0 %v3833
        %3899 = vmatprep.subr.bf16.mxu0 %v3838
        %3900 = vmatpush1.bf16.msra.mxu0 %v3837
        %3901 = vmatprep.subr.bf16.mxu0 %v3842
        %3902 = vmatpush1.bf16.msra.mxu0 %v3841
        %3903 = vmatprep.subr.bf16.mxu0 %v3846
        %3904 = vmatpush1.bf16.msra.mxu0 %v3845
        %3905 = vmatprep.subr.bf16.mxu0 %v3850
        %3906 = vmatpush1.bf16.msra.mxu0 %v3849
        %3907 = vmatprep.subr.bf16.mxu0 %v3854
        %3908 = vmatpush1.bf16.msra.mxu0 %v3853
        %3909 = vmatprep.subr.bf16.mxu0 %v3858
        %3910 = vmatpush1.bf16.msra.mxu0 %v3857
        %3911 = vmatprep.subr.bf16.mxu0 %v3862
        %3912 = vmatpush1.bf16.msra.mxu0 %v3861
        %3913 = vmatprep.subr.bf16.mxu0 0
        %3914 = vmatpush1.bf16.msra.mxu0 0
        %3915 = vmatprep.subr.bf16.mxu0 0
        %3916 = vmatpush1.bf16.msra.mxu0 0
        %3917 = vmatprep.subr.bf16.mxu0 0
        %3918 = vmatpush1.bf16.msra.mxu0 0
        %3919 = vmatprep.subr.bf16.mxu0 0
        %3920 = vmatpush1.bf16.msra.mxu0 0
        %3921 = vmatprep.subr.bf16.mxu0 0
        %3922 = vmatpush1.bf16.msra.mxu0 0
        %3923 = vmatprep.subr.bf16.mxu0 0
        %3924 = vmatpush1.bf16.msra.mxu0 0
        %3925 = vmatprep.subr.bf16.mxu0 0
        %3926 = vmatpush1.bf16.msra.mxu0 0
        %3927 = vmatprep.subr.bf16.mxu0 0
        %3928 = vmatpush1.bf16.msra.mxu0 0
        %3929 = vmatprep.mubr.bf16.mxu0 0
        %3930 = vmatmul.mubr.bf16.gmra.mrb[0].mxu0 %v3704
        %v3931 = vpop.f32.mrb[0].mxu0
        %v3932 = vadd.f32 0.0, %v3931
        %v3933 = vpop.f32.mrb[0].mxu0
        %v3934 = vadd.f32 0.0, %v3933
        %v3935 = vpop.f32.mrb[0].mxu0
        %v3936 = vadd.f32 0.0, %v3935
        %v3937 = vpop.f32.mrb[0].mxu0
        %v3938 = vadd.f32 0.0, %v3937
        %3939 = vdwg.mxu0
        %3940 = vmatprep.subr.bf16.mxu0 %v3836
        %3941 = vmatpush1.bf16.msra.mxu0 %v3835
        %3942 = vmatprep.subr.bf16.mxu0 %v3840
        %3943 = vmatpush1.bf16.msra.mxu0 %v3839
        %3944 = vmatprep.subr.bf16.mxu0 %v3844
        %3945 = vmatpush1.bf16.msra.mxu0 %v3843
        %3946 = vmatprep.subr.bf16.mxu0 %v3848
        %3947 = vmatpush1.bf16.msra.mxu0 %v3847
        %3948 = vmatprep.subr.bf16.mxu0 %v3852
        %3949 = vmatpush1.bf16.msra.mxu0 %v3851
        %3950 = vmatprep.subr.bf16.mxu0 %v3856
        %3951 = vmatpush1.bf16.msra.mxu0 %v3855
        %3952 = vmatprep.subr.bf16.mxu0 %v3860
        %3953 = vmatpush1.bf16.msra.mxu0 %v3859
        %3954 = vmatprep.subr.bf16.mxu0 %v3864
        %3955 = vmatpush1.bf16.msra.mxu0 %v3863
        %3956 = vmatprep.subr.bf16.mxu0 0
        %3957 = vmatpush1.bf16.msra.mxu0 0
        %3958 = vmatprep.subr.bf16.mxu0 0
        %3959 = vmatpush1.bf16.msra.mxu0 0
        %3960 = vmatprep.subr.bf16.mxu0 0
        %3961 = vmatpush1.bf16.msra.mxu0 0
        %3962 = vmatprep.subr.bf16.mxu0 0
        %3963 = vmatpush1.bf16.msra.mxu0 0
        %3964 = vmatprep.subr.bf16.mxu0 0
        %3965 = vmatpush1.bf16.msra.mxu0 0
        %3966 = vmatprep.subr.bf16.mxu0 0
        %3967 = vmatpush1.bf16.msra.mxu0 0
        %3968 = vmatprep.subr.bf16.mxu0 0
        %3969 = vmatpush1.bf16.msra.mxu0 0
        %3970 = vmatprep.subr.bf16.mxu0 0
        %3971 = vmatpush1.bf16.msra.mxu0 0
        %3972 = vmatprep.mubr.bf16.mxu0 0
        %3973 = vmatmul.mubr.bf16.gmra.mrb[0].mxu0 %v3704
        %v3974 = vpop.f32.mrb[0].mxu0
        %v3975 = vadd.f32 0.0, %v3974
        %v3976 = vpop.f32.mrb[0].mxu0
        %v3977 = vadd.f32 0.0, %v3976
        %v3978 = vpop.f32.mrb[0].mxu0
        %v3979 = vadd.f32 0.0, %v3978
        %v3980 = vpop.f32.mrb[0].mxu0
        %v3981 = vadd.f32 0.0, %v3980
        %3982 = vdwg.mxu0
        %v3983 = vadd.f32 %v3696, %v3932
        %v3984 = vadd.f32 %v3697, %v3934
        %v3985 = vadd.f32 %v3698, %v3975
        %v3986 = vadd.f32 %v3699, %v3977
        %v3987 = vadd.f32 %v3700, %v3936
        %v3988 = vadd.f32 %v3701, %v3938
        %v3989 = vadd.f32 %v3702, %v3979
        %v3990 = vadd.f32 %v3703, %v3981
        %v3991 = vxor.u32 %v3983, 2147483648
        %v3992 = vxor.u32 %v3987, 2147483648
        %v3993 = vmul.f32 %v3991, 1.442695
        %v3994 = vpow.pop %v3993
        %v3995 = vmul.f32 %v3992, 1.442695
        %v3996 = vpow.pop %v3995
        %v3997 = vadd.f32 %v3994, 1.0
        %v3998 = vadd.f32 %v3996, 1.0
        %v3999 = vrcp.pop %v3997
        %v4000 = vmul.f32 1.0, %v3999
        %v4001 = vrcp.pop %v3998
        %v4002 = vmul.f32 1.0, %v4001
        %v4003 = vxor.u32 %v3984, 2147483648
        %v4004 = vxor.u32 %v3988, 2147483648
        %v4005 = vmul.f32 %v4003, 1.442695
        %v4006 = vpow.pop %v4005
        %v4007 = vmul.f32 %v4004, 1.442695
        %v4008 = vpow.pop %v4007
        %v4009 = vadd.f32 %v4006, 1.0
        %v4010 = vadd.f32 %v4008, 1.0
        %v4011 = vrcp.pop %v4009
        %v4012 = vmul.f32 1.0, %v4011
        %v4013 = vrcp.pop %v4010
        %v4014 = vmul.f32 1.0, %v4013
        %v4015 = vtanh.pop %v3985
        %v4016 = vtanh.pop %v3989
        %v4017 = vxor.u32 %v3986, 2147483648
        %v4018 = vxor.u32 %v3990, 2147483648
        %v4019 = vmul.f32 %v4017, 1.442695
        %v4020 = vpow.pop %v4019
        %v4021 = vmul.f32 %v4018, 1.442695
        %v4022 = vpow.pop %v4021
        %v4023 = vadd.f32 %v4020, 1.0
        %v4024 = vadd.f32 %v4022, 1.0
        %v4025 = vrcp.pop %v4023
        %v4026 = vmul.f32 1.0, %v4025
        %v4027 = vrcp.pop %v4024
        %v4028 = vmul.f32 1.0, %v4027
        %v4029 = vmul.f32 %v4012, %v3649
        %v4030 = vmul.f32 %v4014, %v3650
        %v4031 = vmul.f32 %v4000, %v4015
        %v4032 = vmul.f32 %v4002, %v4016
        %v4033 = vadd.f32 %v4029, %v4031
        %v4034 = vadd.f32 %v4030, %v4032
        %v4035 = vtanh.pop %v4033
        %v4036 = vtanh.pop %v4034
        %v4037 = vmul.f32 %v4026, %v4035
        %v4038 = vmul.f32 %v4028, %v4036
        %4039 = vadd.xlane.f32.xlu0 %v4037
        %v4040 = vpop.xlane.xlu0 %4039
        %4041 = vadd.xlane.f32.xlu0 %v4038
        %v4042 = vpop.xlane.xlu0 %4041
        %v4043 = vmul.f32 %v4040, %v1356
        %v4044 = vmul.f32 %v4042, %v1356
        %v4045 = vmul.f32 %v4037, %v4037
        %v4046 = vmul.f32 %v4038, %v4038
        %4047 = vadd.xlane.f32.xlu0 %v4045
        %v4048 = vpop.xlane.xlu0 %4047
        %4049 = vadd.xlane.f32.xlu0 %v4046
        %v4050 = vpop.xlane.xlu0 %4049
        %v4051 = vmul.f32 %v4048, %v1356
        %v4052 = vmul.f32 %v4050, %v1356
        %v4053 = vmul.f32 %v4043, %v4043
        %v4054 = vmul.f32 %v4044, %v4044
        %v4055 = vsub.f32 %v4051, %v4053
        %v4056 = vsub.f32 %v4052, %v4054
        %v4057 = vsub.f32 %v4037, %v4043
        %v4058 = vsub.f32 %v4038, %v4044
        %v4059 = vadd.f32 %v4055, 1e-05
        %v4060 = vadd.f32 %v4056, 1e-05
        %v4061 = vrsqrt.pop %v4059
        %v4062 = vrsqrt.pop %v4060
        %v4063 = vmul.f32 %v4057, %v4061
        %v4064 = vmul.f32 %v4058, %v4062
        %v4065 = vmul.f32 %v4063, %v1001
        %v4066 = vmul.f32 %v4064, %v1001
        %v4067 = vadd.f32 %v4065, %v1008
        %v4068 = vadd.f32 %v4066, %v1008
        %v4069 = vmax.f32 %v4067, 0.0
        %v4070 = vmax.f32 %v4068, 0.0
        %s4071 = scalar_lea.vmem %s365, 112 [#allocation4]
        %v4072 = vld [vmem:[%s4071] sm:$0xff]
        %v4073 = vld [vmem:[%s4071 + $0x8] sm:$0xff]
        %v4074 = vadd.f32 %v4069, %v4072
        %v4075 = vadd.f32 %v4070, %v4073
        %v4076 = vpack.c.bf16 %v4075, %v4074
        %s4077 = scalar_lea.vmem [#allocation2], 56
        %4078 = vst [vmem:[%s4077] sm:$0xff] %v4076
        %s4079 = scalar_lea.vmem %s3, 4
        %v4080 = vld [vmem:[%s4079] sm:$0xf]
        %v4081 = vld [vmem:[#allocation2] sm:$0xff]
        %v4082 = vld [vmem:[#allocation2 + $0x8] sm:$0xff]
        %v4083 = vld [vmem:[#allocation2 + $0x10] sm:$0xff]
        %v4084 = vld [vmem:[#allocation2 + $0x18] sm:$0xff]
        %v4085 = vld [vmem:[#allocation2 + $0x20] sm:$0xff]
        %v4086 = vld [vmem:[#allocation2 + $0x28] sm:$0xff]
        %v4087 = vld [vmem:[#allocation2 + $0x30] sm:$0xff]
        %v4088 = vld [vmem:[#allocation2 + $0x38] sm:$0xff]
        %s4089 = scalar_lea.vmem %s1, 256
        %v4090 = vld [vmem:[%s4089] sm:$0xff]
        %v4091 = vld [vmem:[%s4089 + $0x8] sm:$0xff]
        %v4092 = vld [vmem:[%s4089 + $0x10] sm:$0xff]
        %v4093 = vld [vmem:[%s4089 + $0x18] sm:$0xff]
        %v4094 = vld [vmem:[%s4089 + $0x20] sm:$0xff]
        %v4095 = vld [vmem:[%s4089 + $0x28] sm:$0xff]
        %v4096 = vld [vmem:[%s4089 + $0x30] sm:$0xff]
        %v4097 = vld [vmem:[%s4089 + $0x38] sm:$0xff]
        %v4098 = vld [vmem:[%s4089 + $0x40] sm:$0xff]
        %v4099 = vld [vmem:[%s4089 + $0x48] sm:$0xff]
        %v4100 = vld [vmem:[%s4089 + $0x50] sm:$0xff]
        %v4101 = vld [vmem:[%s4089 + $0x58] sm:$0xff]
        %v4102 = vld [vmem:[%s4089 + $0x60] sm:$0xff]
        %v4103 = vld [vmem:[%s4089 + $0x68] sm:$0xff]
        %v4104 = vld [vmem:[%s4089 + $0x70] sm:$0xff]
        %v4105 = vld [vmem:[%s4089 + $0x78] sm:$0xff]
        %v4106 = vld [vmem:[%s4089 + $0x80] sm:$0xff]
        %v4107 = vld [vmem:[%s4089 + $0x88] sm:$0xff]
        %v4108 = vld [vmem:[%s4089 + $0x90] sm:$0xff]
        %v4109 = vld [vmem:[%s4089 + $0x98] sm:$0xff]
        %v4110 = vld [vmem:[%s4089 + $0xa0] sm:$0xff]
        %v4111 = vld [vmem:[%s4089 + $0xa8] sm:$0xff]
        %v4112 = vld [vmem:[%s4089 + $0xb0] sm:$0xff]
        %v4113 = vld [vmem:[%s4089 + $0xb8] sm:$0xff]
        %v4114 = vld [vmem:[%s4089 + $0xc0] sm:$0xff]
        %v4115 = vld [vmem:[%s4089 + $0xc8] sm:$0xff]
        %v4116 = vld [vmem:[%s4089 + $0xd0] sm:$0xff]
        %v4117 = vld [vmem:[%s4089 + $0xd8] sm:$0xff]
        %v4118 = vld [vmem:[%s4089 + $0xe0] sm:$0xff]
        %v4119 = vld [vmem:[%s4089 + $0xe8] sm:$0xff]
        %v4120 = vld [vmem:[%s4089 + $0xf0] sm:$0xff]
        %v4121 = vld [vmem:[%s4089 + $0xf8] sm:$0xff]
        %v4154 = vunpack.c.l.b16 %v4090
        %v4155 = vunpack.c.h.b16 %v4090
        %v4156 = vunpack.c.l.b16 %v4091
        %v4157 = vunpack.c.h.b16 %v4091
        %v4158 = vunpack.c.l.b16 %v4092
        %v4159 = vunpack.c.h.b16 %v4092
        %v4160 = vunpack.c.l.b16 %v4093
        %v4161 = vunpack.c.h.b16 %v4093
        %v4162 = vunpack.c.l.b16 %v4094
        %v4163 = vunpack.c.h.b16 %v4094
        %v4164 = vunpack.c.l.b16 %v4095
        %v4165 = vunpack.c.h.b16 %v4095
        %v4166 = vunpack.c.l.b16 %v4096
        %v4167 = vunpack.c.h.b16 %v4096
        %v4168 = vunpack.c.l.b16 %v4097
        %v4169 = vunpack.c.h.b16 %v4097
        %v4170 = vunpack.c.l.b16 %v4098
        %v4171 = vunpack.c.h.b16 %v4098
        %v4172 = vunpack.c.l.b16 %v4099
        %v4173 = vunpack.c.h.b16 %v4099
        %v4174 = vunpack.c.l.b16 %v4100
        %v4175 = vunpack.c.h.b16 %v4100
        %v4176 = vunpack.c.l.b16 %v4101
        %v4177 = vunpack.c.h.b16 %v4101
        %v4178 = vunpack.c.l.b16 %v4102
        %v4179 = vunpack.c.h.b16 %v4102
        %v4180 = vunpack.c.l.b16 %v4103
        %v4181 = vunpack.c.h.b16 %v4103
        %v4182 = vunpack.c.l.b16 %v4104
        %v4183 = vunpack.c.h.b16 %v4104
        %v4184 = vunpack.c.l.b16 %v4105
        %v4185 = vunpack.c.h.b16 %v4105
        %v4186 = vunpack.c.l.b16 %v4106
        %v4187 = vunpack.c.h.b16 %v4106
        %v4188 = vunpack.c.l.b16 %v4107
        %v4189 = vunpack.c.h.b16 %v4107
        %v4190 = vunpack.c.l.b16 %v4108
        %v4191 = vunpack.c.h.b16 %v4108
        %v4192 = vunpack.c.l.b16 %v4109
        %v4193 = vunpack.c.h.b16 %v4109
        %v4194 = vunpack.c.l.b16 %v4110
        %v4195 = vunpack.c.h.b16 %v4110
        %v4196 = vunpack.c.l.b16 %v4111
        %v4197 = vunpack.c.h.b16 %v4111
        %v4198 = vunpack.c.l.b16 %v4112
        %v4199 = vunpack.c.h.b16 %v4112
        %v4200 = vunpack.c.l.b16 %v4113
        %v4201 = vunpack.c.h.b16 %v4113
        %v4202 = vunpack.c.l.b16 %v4114
        %v4203 = vunpack.c.h.b16 %v4114
        %v4204 = vunpack.c.l.b16 %v4115
        %v4205 = vunpack.c.h.b16 %v4115
        %v4206 = vunpack.c.l.b16 %v4116
        %v4207 = vunpack.c.h.b16 %v4116
        %v4208 = vunpack.c.l.b16 %v4117
        %v4209 = vunpack.c.h.b16 %v4117
        %v4210 = vunpack.c.l.b16 %v4118
        %v4211 = vunpack.c.h.b16 %v4118
        %v4212 = vunpack.c.l.b16 %v4119
        %v4213 = vunpack.c.h.b16 %v4119
        %v4214 = vunpack.c.l.b16 %v4120
        %v4215 = vunpack.c.h.b16 %v4120
        %v4216 = vunpack.c.l.b16 %v4121
        %v4217 = vunpack.c.h.b16 %v4121
        %v4218 = vpack.c.b16 %v4158, %v4154
        %v4219 = vpack.c.b16 %v4159, %v4155
        %v4220 = vpack.c.b16 %v4160, %v4156
        %v4221 = vpack.c.b16 %v4161, %v4157
        %v4222 = vpack.c.b16 %v4166, %v4162
        %v4223 = vpack.c.b16 %v4167, %v4163
        %v4224 = vpack.c.b16 %v4168, %v4164
        %v4225 = vpack.c.b16 %v4169, %v4165
        %v4226 = vpack.c.b16 %v4174, %v4170
        %v4227 = vpack.c.b16 %v4175, %v4171
        %v4228 = vpack.c.b16 %v4176, %v4172
        %v4229 = vpack.c.b16 %v4177, %v4173
        %v4230 = vpack.c.b16 %v4182, %v4178
        %v4231 = vpack.c.b16 %v4183, %v4179
        %v4232 = vpack.c.b16 %v4184, %v4180
        %v4233 = vpack.c.b16 %v4185, %v4181
        %v4234 = vpack.c.b16 %v4190, %v4186
        %v4235 = vpack.c.b16 %v4191, %v4187
        %v4236 = vpack.c.b16 %v4192, %v4188
        %v4237 = vpack.c.b16 %v4193, %v4189
        %v4238 = vpack.c.b16 %v4198, %v4194
        %v4239 = vpack.c.b16 %v4199, %v4195
        %v4240 = vpack.c.b16 %v4200, %v4196
        %v4241 = vpack.c.b16 %v4201, %v4197
        %v4242 = vpack.c.b16 %v4206, %v4202
        %v4243 = vpack.c.b16 %v4207, %v4203
        %v4244 = vpack.c.b16 %v4208, %v4204
        %v4245 = vpack.c.b16 %v4209, %v4205
        %v4246 = vpack.c.b16 %v4214, %v4210
        %v4247 = vpack.c.b16 %v4215, %v4211
        %v4248 = vpack.c.b16 %v4216, %v4212
        %v4249 = vpack.c.b16 %v4217, %v4213
        %4282 = vmatprep.subr.bf16.mxu0 %v4219
        %4283 = vmatpush1.bf16.msra.mxu0 %v4218
        %4284 = vmatprep.subr.bf16.mxu0 %v4223
        %4285 = vmatpush1.bf16.msra.mxu0 %v4222
        %4286 = vmatprep.subr.bf16.mxu0 %v4227
        %4287 = vmatpush1.bf16.msra.mxu0 %v4226
        %4288 = vmatprep.subr.bf16.mxu0 %v4231
        %4289 = vmatpush1.bf16.msra.mxu0 %v4230
        %4290 = vmatprep.subr.bf16.mxu0 %v4235
        %4291 = vmatpush1.bf16.msra.mxu0 %v4234
        %4292 = vmatprep.subr.bf16.mxu0 %v4239
        %4293 = vmatpush1.bf16.msra.mxu0 %v4238
        %4294 = vmatprep.subr.bf16.mxu0 %v4243
        %4295 = vmatpush1.bf16.msra.mxu0 %v4242
        %4296 = vmatprep.subr.bf16.mxu0 %v4247
        %4297 = vmatpush1.bf16.msra.mxu0 %v4246
        %4298 = vmatprep.subr.bf16.mxu0 0
        %4299 = vmatpush1.bf16.msra.mxu0 0
        %4300 = vmatprep.subr.bf16.mxu0 0
        %4301 = vmatpush1.bf16.msra.mxu0 0
        %4302 = vmatprep.subr.bf16.mxu0 0
        %4303 = vmatpush1.bf16.msra.mxu0 0
        %4304 = vmatprep.subr.bf16.mxu0 0
        %4305 = vmatpush1.bf16.msra.mxu0 0
        %4306 = vmatprep.subr.bf16.mxu0 0
        %4307 = vmatpush1.bf16.msra.mxu0 0
        %4308 = vmatprep.subr.bf16.mxu0 0
        %4309 = vmatpush1.bf16.msra.mxu0 0
        %4310 = vmatprep.subr.bf16.mxu0 0
        %4311 = vmatpush1.bf16.msra.mxu0 0
        %4312 = vmatprep.subr.bf16.mxu0 0
        %4313 = vmatpush1.bf16.msra.mxu0 0
        %4314 = vmatprep.mubr.bf16.mxu0 0
        %4315 = vmatmul.mubr.bf16.gmra.mrb[0].mxu0 %v4081
        %v4316 = vpop.f32.mrb[0].mxu0
        %v4317 = vadd.f32 0.0, %v4316
        %v4318 = vpop.f32.mrb[0].mxu0
        %v4319 = vadd.f32 0.0, %v4318
        %v4320 = vpop.f32.mrb[0].mxu0
        %v4321 = vadd.f32 0.0, %v4320
        %v4322 = vpop.f32.mrb[0].mxu0
        %v4323 = vadd.f32 0.0, %v4322
        %4324 = vmatprep.mubr.bf16.mxu0 0
        %4325 = vmatmul.mubr.bf16.gmra.mrb[0].mxu0 %v4082
        %v4326 = vpop.f32.mrb[0].mxu0
        %v4327 = vadd.f32 0.0, %v4326
        %v4328 = vpop.f32.mrb[0].mxu0
        %v4329 = vadd.f32 0.0, %v4328
        %v4330 = vpop.f32.mrb[0].mxu0
        %v4331 = vadd.f32 0.0, %v4330
        %v4332 = vpop.f32.mrb[0].mxu0
        %v4333 = vadd.f32 0.0, %v4332
        %4334 = vmatprep.mubr.bf16.mxu0 0
        %4335 = vmatmul.mubr.bf16.gmra.mrb[0].mxu0 %v4083
        %v4336 = vpop.f32.mrb[0].mxu0
        %v4337 = vadd.f32 0.0, %v4336
        %v4338 = vpop.f32.mrb[0].mxu0
        %v4339 = vadd.f32 0.0, %v4338
        %v4340 = vpop.f32.mrb[0].mxu0
        %v4341 = vadd.f32 0.0, %v4340
        %v4342 = vpop.f32.mrb[0].mxu0
        %v4343 = vadd.f32 0.0, %v4342
        %4344 = vmatprep.mubr.bf16.mxu0 0
        %4345 = vmatmul.mubr.bf16.gmra.mrb[0].mxu0 %v4084
        %v4346 = vpop.f32.mrb[0].mxu0
        %v4347 = vadd.f32 0.0, %v4346
        %v4348 = vpop.f32.mrb[0].mxu0
        %v4349 = vadd.f32 0.0, %v4348
        %v4350 = vpop.f32.mrb[0].mxu0
        %v4351 = vadd.f32 0.0, %v4350
        %v4352 = vpop.f32.mrb[0].mxu0
        %v4353 = vadd.f32 0.0, %v4352
        %4354 = vmatprep.mubr.bf16.mxu0 0
        %4355 = vmatmul.mubr.bf16.gmra.mrb[0].mxu0 %v4085
        %v4356 = vpop.f32.mrb[0].mxu0
        %v4357 = vadd.f32 0.0, %v4356
        %v4358 = vpop.f32.mrb[0].mxu0
        %v4359 = vadd.f32 0.0, %v4358
        %v4360 = vpop.f32.mrb[0].mxu0
        %v4361 = vadd.f32 0.0, %v4360
        %v4362 = vpop.f32.mrb[0].mxu0
        %v4363 = vadd.f32 0.0, %v4362
        %4364 = vmatprep.mubr.bf16.mxu0 0
        %4365 = vmatmul.mubr.bf16.gmra.mrb[0].mxu0 %v4086
        %v4366 = vpop.f32.mrb[0].mxu0
        %v4367 = vadd.f32 0.0, %v4366
        %v4368 = vpop.f32.mrb[0].mxu0
        %v4369 = vadd.f32 0.0, %v4368
        %v4370 = vpop.f32.mrb[0].mxu0
        %v4371 = vadd.f32 0.0, %v4370
        %v4372 = vpop.f32.mrb[0].mxu0
        %v4373 = vadd.f32 0.0, %v4372
        %4374 = vmatprep.mubr.bf16.mxu0 0
        %4375 = vmatmul.mubr.bf16.gmra.mrb[0].mxu0 %v4087
        %v4376 = vpop.f32.mrb[0].mxu0
        %v4377 = vadd.f32 0.0, %v4376
        %v4378 = vpop.f32.mrb[0].mxu0
        %v4379 = vadd.f32 0.0, %v4378
        %v4380 = vpop.f32.mrb[0].mxu0
        %v4381 = vadd.f32 0.0, %v4380
        %v4382 = vpop.f32.mrb[0].mxu0
        %v4383 = vadd.f32 0.0, %v4382
        %4384 = vmatprep.mubr.bf16.mxu0 0
        %4385 = vmatmul.mubr.bf16.gmra.mrb[0].mxu0 %v4088
        %v4386 = vpop.f32.mrb[0].mxu0
        %v4387 = vadd.f32 0.0, %v4386
        %v4388 = vpop.f32.mrb[0].mxu0
        %v4389 = vadd.f32 0.0, %v4388
        %v4390 = vpop.f32.mrb[0].mxu0
        %v4391 = vadd.f32 0.0, %v4390
        %v4392 = vpop.f32.mrb[0].mxu0
        %v4393 = vadd.f32 0.0, %v4392
        %4394 = vdwg.mxu0
        %4395 = vmatprep.subr.bf16.mxu0 %v4221
        %4396 = vmatpush1.bf16.msra.mxu0 %v4220
        %4397 = vmatprep.subr.bf16.mxu0 %v4225
        %4398 = vmatpush1.bf16.msra.mxu0 %v4224
        %4399 = vmatprep.subr.bf16.mxu0 %v4229
        %4400 = vmatpush1.bf16.msra.mxu0 %v4228
        %4401 = vmatprep.subr.bf16.mxu0 %v4233
        %4402 = vmatpush1.bf16.msra.mxu0 %v4232
        %4403 = vmatprep.subr.bf16.mxu0 %v4237
        %4404 = vmatpush1.bf16.msra.mxu0 %v4236
        %4405 = vmatprep.subr.bf16.mxu0 %v4241
        %4406 = vmatpush1.bf16.msra.mxu0 %v4240
        %4407 = vmatprep.subr.bf16.mxu0 %v4245
        %4408 = vmatpush1.bf16.msra.mxu0 %v4244
        %4409 = vmatprep.subr.bf16.mxu0 %v4249
        %4410 = vmatpush1.bf16.msra.mxu0 %v4248
        %4411 = vmatprep.subr.bf16.mxu0 0
        %4412 = vmatpush1.bf16.msra.mxu0 0
        %4413 = vmatprep.subr.bf16.mxu0 0
        %4414 = vmatpush1.bf16.msra.mxu0 0
        %4415 = vmatprep.subr.bf16.mxu0 0
        %4416 = vmatpush1.bf16.msra.mxu0 0
        %4417 = vmatprep.subr.bf16.mxu0 0
        %4418 = vmatpush1.bf16.msra.mxu0 0
        %4419 = vmatprep.subr.bf16.mxu0 0
        %4420 = vmatpush1.bf16.msra.mxu0 0
        %4421 = vmatprep.subr.bf16.mxu0 0
        %4422 = vmatpush1.bf16.msra.mxu0 0
        %4423 = vmatprep.subr.bf16.mxu0 0
        %4424 = vmatpush1.bf16.msra.mxu0 0
        %4425 = vmatprep.subr.bf16.mxu0 0
        %4426 = vmatpush1.bf16.msra.mxu0 0
        %4427 = vmatprep.mubr.bf16.mxu0 0
        %4428 = vmatmul.mubr.bf16.gmra.mrb[0].mxu0 %v4081
        %v4429 = vpop.f32.mrb[0].mxu0
        %v4430 = vadd.f32 0.0, %v4429
        %v4431 = vpop.f32.mrb[0].mxu0
        %v4432 = vadd.f32 0.0, %v4431
        %v4433 = vpop.f32.mrb[0].mxu0
        %v4434 = vadd.f32 0.0, %v4433
        %v4435 = vpop.f32.mrb[0].mxu0
        %v4436 = vadd.f32 0.0, %v4435
        %4437 = vmatprep.mubr.bf16.mxu0 0
        %4438 = vmatmul.mubr.bf16.gmra.mrb[0].mxu0 %v4082
        %v4439 = vpop.f32.mrb[0].mxu0
        %v4440 = vadd.f32 0.0, %v4439
        %v4441 = vpop.f32.mrb[0].mxu0
        %v4442 = vadd.f32 0.0, %v4441
        %v4443 = vpop.f32.mrb[0].mxu0
        %v4444 = vadd.f32 0.0, %v4443
        %v4445 = vpop.f32.mrb[0].mxu0
        %v4446 = vadd.f32 0.0, %v4445
        %4447 = vmatprep.mubr.bf16.mxu0 0
        %4448 = vmatmul.mubr.bf16.gmra.mrb[0].mxu0 %v4083
        %v4449 = vpop.f32.mrb[0].mxu0
        %v4450 = vadd.f32 0.0, %v4449
        %v4451 = vpop.f32.mrb[0].mxu0
        %v4452 = vadd.f32 0.0, %v4451
        %v4453 = vpop.f32.mrb[0].mxu0
        %v4454 = vadd.f32 0.0, %v4453
        %v4455 = vpop.f32.mrb[0].mxu0
        %v4456 = vadd.f32 0.0, %v4455
        %4457 = vmatprep.mubr.bf16.mxu0 0
        %4458 = vmatmul.mubr.bf16.gmra.mrb[0].mxu0 %v4084
        %v4459 = vpop.f32.mrb[0].mxu0
        %v4460 = vadd.f32 0.0, %v4459
        %v4461 = vpop.f32.mrb[0].mxu0
        %v4462 = vadd.f32 0.0, %v4461
        %v4463 = vpop.f32.mrb[0].mxu0
        %v4464 = vadd.f32 0.0, %v4463
        %v4465 = vpop.f32.mrb[0].mxu0
        %v4466 = vadd.f32 0.0, %v4465
        %4467 = vmatprep.mubr.bf16.mxu0 0
        %4468 = vmatmul.mubr.bf16.gmra.mrb[0].mxu0 %v4085
        %v4469 = vpop.f32.mrb[0].mxu0
        %v4470 = vadd.f32 0.0, %v4469
        %v4471 = vpop.f32.mrb[0].mxu0
        %v4472 = vadd.f32 0.0, %v4471
        %v4473 = vpop.f32.mrb[0].mxu0
        %v4474 = vadd.f32 0.0, %v4473
        %v4475 = vpop.f32.mrb[0].mxu0
        %v4476 = vadd.f32 0.0, %v4475
        %4477 = vmatprep.mubr.bf16.mxu0 0
        %4478 = vmatmul.mubr.bf16.gmra.mrb[0].mxu0 %v4086
        %v4479 = vpop.f32.mrb[0].mxu0
        %v4480 = vadd.f32 0.0, %v4479
        %v4481 = vpop.f32.mrb[0].mxu0
        %v4482 = vadd.f32 0.0, %v4481
        %v4483 = vpop.f32.mrb[0].mxu0
        %v4484 = vadd.f32 0.0, %v4483
        %v4485 = vpop.f32.mrb[0].mxu0
        %v4486 = vadd.f32 0.0, %v4485
        %4487 = vmatprep.mubr.bf16.mxu0 0
        %4488 = vmatmul.mubr.bf16.gmra.mrb[0].mxu0 %v4087
        %v4489 = vpop.f32.mrb[0].mxu0
        %v4490 = vadd.f32 0.0, %v4489
        %v4491 = vpop.f32.mrb[0].mxu0
        %v4492 = vadd.f32 0.0, %v4491
        %v4493 = vpop.f32.mrb[0].mxu0
        %v4494 = vadd.f32 0.0, %v4493
        %v4495 = vpop.f32.mrb[0].mxu0
        %v4496 = vadd.f32 0.0, %v4495
        %4497 = vmatprep.mubr.bf16.mxu0 0
        %4498 = vmatmul.mubr.bf16.gmra.mrb[0].mxu0 %v4088
        %v4499 = vpop.f32.mrb[0].mxu0
        %v4500 = vadd.f32 0.0, %v4499
        %v4501 = vpop.f32.mrb[0].mxu0
        %v4502 = vadd.f32 0.0, %v4501
        %v4503 = vpop.f32.mrb[0].mxu0
        %v4504 = vadd.f32 0.0, %v4503
        %v4505 = vpop.f32.mrb[0].mxu0
        %v4506 = vadd.f32 0.0, %v4505
        %4507 = vdwg.mxu0
        %v4509 = vlaneseq
        %v4510 = vshrl.u32 %v4509, 7
        %v4511 = vsub.s32 0, %v4510
        %v4512 = vrot.slane %v4080, %v4511
        %v4513 = vlaneseq
        %v4514 = vshrl.u32 %v4513, 7
        %v4515 = vsub.s32 1, %v4514
        %v4516 = vrot.slane %v4080, %v4515
        %v4517 = vlaneseq
        %v4518 = vshrl.u32 %v4517, 7
        %v4519 = vsub.s32 2, %v4518
        %v4520 = vrot.slane %v4080, %v4519
        %v4521 = vlaneseq
        %v4522 = vshrl.u32 %v4521, 7
        %v4523 = vsub.s32 3, %v4522
        %v4524 = vrot.slane %v4080, %v4523
        %v4529 = vadd.f32 %v4317, %v4512
        %v4530 = vadd.f32 %v4319, %v4516
        %v4531 = vadd.f32 %v4430, %v4520
        %v4532 = vadd.f32 %v4432, %v4524
        %v4533 = vadd.f32 %v4321, %v4512
        %v4534 = vadd.f32 %v4323, %v4516
        %v4535 = vadd.f32 %v4434, %v4520
        %v4536 = vadd.f32 %v4436, %v4524
        %v4537 = vadd.f32 %v4327, %v4512
        %v4538 = vadd.f32 %v4329, %v4516
        %v4539 = vadd.f32 %v4440, %v4520
        %v4540 = vadd.f32 %v4442, %v4524
        %v4541 = vadd.f32 %v4331, %v4512
        %v4542 = vadd.f32 %v4333, %v4516
        %v4543 = vadd.f32 %v4444, %v4520
        %v4544 = vadd.f32 %v4446, %v4524
        %v4545 = vadd.f32 %v4337, %v4512
        %v4546 = vadd.f32 %v4339, %v4516
        %v4547 = vadd.f32 %v4450, %v4520
        %v4548 = vadd.f32 %v4452, %v4524
        %v4549 = vadd.f32 %v4341, %v4512
        %v4550 = vadd.f32 %v4343, %v4516
        %v4551 = vadd.f32 %v4454, %v4520
        %v4552 = vadd.f32 %v4456, %v4524
        %v4553 = vadd.f32 %v4347, %v4512
        %v4554 = vadd.f32 %v4349, %v4516
        %v4555 = vadd.f32 %v4460, %v4520
        %v4556 = vadd.f32 %v4462, %v4524
        %v4557 = vadd.f32 %v4351, %v4512
        %v4558 = vadd.f32 %v4353, %v4516
        %v4559 = vadd.f32 %v4464, %v4520
        %v4560 = vadd.f32 %v4466, %v4524
        %v4561 = vadd.f32 %v4357, %v4512
        %v4562 = vadd.f32 %v4359, %v4516
        %v4563 = vadd.f32 %v4470, %v4520
        %v4564 = vadd.f32 %v4472, %v4524
        %v4565 = vadd.f32 %v4361, %v4512
        %v4566 = vadd.f32 %v4363, %v4516
        %v4567 = vadd.f32 %v4474, %v4520
        %v4568 = vadd.f32 %v4476, %v4524
        %v4569 = vadd.f32 %v4367, %v4512
        %v4570 = vadd.f32 %v4369, %v4516
        %v4571 = vadd.f32 %v4480, %v4520
        %v4572 = vadd.f32 %v4482, %v4524
        %v4573 = vadd.f32 %v4371, %v4512
        %v4574 = vadd.f32 %v4373, %v4516
        %v4575 = vadd.f32 %v4484, %v4520
        %v4576 = vadd.f32 %v4486, %v4524
        %v4577 = vadd.f32 %v4377, %v4512
        %v4578 = vadd.f32 %v4379, %v4516
        %v4579 = vadd.f32 %v4490, %v4520
        %v4580 = vadd.f32 %v4492, %v4524
        %v4581 = vadd.f32 %v4381, %v4512
        %v4582 = vadd.f32 %v4383, %v4516
        %v4583 = vadd.f32 %v4494, %v4520
        %v4584 = vadd.f32 %v4496, %v4524
        %v4585 = vadd.f32 %v4387, %v4512
        %v4586 = vadd.f32 %v4389, %v4516
        %v4587 = vadd.f32 %v4500, %v4520
        %v4588 = vadd.f32 %v4502, %v4524
        %v4589 = vadd.f32 %v4391, %v4512
        %v4590 = vadd.f32 %v4393, %v4516
        %v4591 = vadd.f32 %v4504, %v4520
        %v4592 = vadd.f32 %v4506, %v4524
        %4593 = vst [vmem:[#allocation3] sm:$0xff] %v4529
        %4594 = vst [vmem:[#allocation3 + $0x8] sm:$0xff] %v4530
        %4595 = vst [vmem:[#allocation3 + $0x10] sm:$0xff] %v4531
        %4596 = vst [vmem:[#allocation3 + $0x18] sm:$0xff] %v4532
        %4597 = vst [vmem:[#allocation3 + $0x20] sm:$0xff] %v4533
        %4598 = vst [vmem:[#allocation3 + $0x28] sm:$0xff] %v4534
        %4599 = vst [vmem:[#allocation3 + $0x30] sm:$0xff] %v4535
        %4600 = vst [vmem:[#allocation3 + $0x38] sm:$0xff] %v4536
        %4601 = vst [vmem:[#allocation3 + $0x40] sm:$0xff] %v4537
        %4602 = vst [vmem:[#allocation3 + $0x48] sm:$0xff] %v4538
        %4603 = vst [vmem:[#allocation3 + $0x50] sm:$0xff] %v4539
        %4604 = vst [vmem:[#allocation3 + $0x58] sm:$0xff] %v4540
        %4605 = vst [vmem:[#allocation3 + $0x60] sm:$0xff] %v4541
        %4606 = vst [vmem:[#allocation3 + $0x68] sm:$0xff] %v4542
        %4607 = vst [vmem:[#allocation3 + $0x70] sm:$0xff] %v4543
        %4608 = vst [vmem:[#allocation3 + $0x78] sm:$0xff] %v4544
        %4609 = vst [vmem:[#allocation3 + $0x80] sm:$0xff] %v4545
        %4610 = vst [vmem:[#allocation3 + $0x88] sm:$0xff] %v4546
        %4611 = vst [vmem:[#allocation3 + $0x90] sm:$0xff] %v4547
        %4612 = vst [vmem:[#allocation3 + $0x98] sm:$0xff] %v4548
        %4613 = vst [vmem:[#allocation3 + $0xa0] sm:$0xff] %v4549
        %4614 = vst [vmem:[#allocation3 + $0xa8] sm:$0xff] %v4550
        %4615 = vst [vmem:[#allocation3 + $0xb0] sm:$0xff] %v4551
        %4616 = vst [vmem:[#allocation3 + $0xb8] sm:$0xff] %v4552
        %4617 = vst [vmem:[#allocation3 + $0xc0] sm:$0xff] %v4553
        %4618 = vst [vmem:[#allocation3 + $0xc8] sm:$0xff] %v4554
        %4619 = vst [vmem:[#allocation3 + $0xd0] sm:$0xff] %v4555
        %4620 = vst [vmem:[#allocation3 + $0xd8] sm:$0xff] %v4556
        %4621 = vst [vmem:[#allocation3 + $0xe0] sm:$0xff] %v4557
        %4622 = vst [vmem:[#allocation3 + $0xe8] sm:$0xff] %v4558
        %4623 = vst [vmem:[#allocation3 + $0xf0] sm:$0xff] %v4559
        %4624 = vst [vmem:[#allocation3 + $0xf8] sm:$0xff] %v4560
        %4625 = vst [vmem:[#allocation3 + $0x100] sm:$0xff] %v4561
        %4626 = vst [vmem:[#allocation3 + $0x108] sm:$0xff] %v4562
        %4627 = vst [vmem:[#allocation3 + $0x110] sm:$0xff] %v4563
        %4628 = vst [vmem:[#allocation3 + $0x118] sm:$0xff] %v4564
        %4629 = vst [vmem:[#allocation3 + $0x120] sm:$0xff] %v4565
        %4630 = vst [vmem:[#allocation3 + $0x128] sm:$0xff] %v4566
        %4631 = vst [vmem:[#allocation3 + $0x130] sm:$0xff] %v4567
        %4632 = vst [vmem:[#allocation3 + $0x138] sm:$0xff] %v4568
        %4633 = vst [vmem:[#allocation3 + $0x140] sm:$0xff] %v4569
        %4634 = vst [vmem:[#allocation3 + $0x148] sm:$0xff] %v4570
        %4635 = vst [vmem:[#allocation3 + $0x150] sm:$0xff] %v4571
        %4636 = vst [vmem:[#allocation3 + $0x158] sm:$0xff] %v4572
        %4637 = vst [vmem:[#allocation3 + $0x160] sm:$0xff] %v4573
        %4638 = vst [vmem:[#allocation3 + $0x168] sm:$0xff] %v4574
        %4639 = vst [vmem:[#allocation3 + $0x170] sm:$0xff] %v4575
        %4640 = vst [vmem:[#allocation3 + $0x178] sm:$0xff] %v4576
        %4641 = vst [vmem:[#allocation3 + $0x180] sm:$0xff] %v4577
        %4642 = vst [vmem:[#allocation3 + $0x188] sm:$0xff] %v4578
        %4643 = vst [vmem:[#allocation3 + $0x190] sm:$0xff] %v4579
        %4644 = vst [vmem:[#allocation3 + $0x198] sm:$0xff] %v4580
        %4645 = vst [vmem:[#allocation3 + $0x1a0] sm:$0xff] %v4581
        %4646 = vst [vmem:[#allocation3 + $0x1a8] sm:$0xff] %v4582
        %4647 = vst [vmem:[#allocation3 + $0x1b0] sm:$0xff] %v4583
        %4648 = vst [vmem:[#allocation3 + $0x1b8] sm:$0xff] %v4584
        %4649 = vst [vmem:[#allocation3 + $0x1c0] sm:$0xff] %v4585
        %4650 = vst [vmem:[#allocation3 + $0x1c8] sm:$0xff] %v4586
        %4651 = vst [vmem:[#allocation3 + $0x1d0] sm:$0xff] %v4587
        %4652 = vst [vmem:[#allocation3 + $0x1d8] sm:$0xff] %v4588
        %4653 = vst [vmem:[#allocation3 + $0x1e0] sm:$0xff] %v4589
        %4654 = vst [vmem:[#allocation3 + $0x1e8] sm:$0xff] %v4590
        %4655 = vst [vmem:[#allocation3 + $0x1f0] sm:$0xff] %v4591
        %4656 = vst [vmem:[#allocation3 + $0x1f8] sm:$0xff] %v4592
        %s4657 = scalar_lea.vmem %s4, 1
        %v4658 = vld [vmem:[%s4657] sm:$0x1]
        %v4660 = vlaneseq
        %v4661 = vshrl.u32 %v4660, 7
        %v4662 = vsub.s32 0, %v4661
        %v4663 = vrot.slane %v4658, %v4662
        %s4665 = scalar_lea.vmem %s5, 1
        %v4666 = vld [vmem:[%s4665] sm:$0x1]
        %v4668 = vlaneseq
        %v4669 = vshrl.u32 %v4668, 7
        %v4670 = vsub.s32 0, %v4669
        %v4671 = vrot.slane %v4666, %v4670
        %v4673 = vld [vmem:[#allocation3] sm:$0xff]
        %v4674 = vld [vmem:[#allocation3 + $0x8] sm:$0xff]
        %v4675 = vld [vmem:[#allocation3 + $0x10] sm:$0xff]
        %v4676 = vld [vmem:[#allocation3 + $0x18] sm:$0xff]
        %v4677 = vld [vmem:[#allocation3 + $0x20] sm:$0xff]
        %v4678 = vld [vmem:[#allocation3 + $0x28] sm:$0xff]
        %v4679 = vld [vmem:[#allocation3 + $0x30] sm:$0xff]
        %v4680 = vld [vmem:[#allocation3 + $0x38] sm:$0xff]
        %s4681 = scalar_lea.vmem %s2, 256
        %v4682 = vld [vmem:[%s4681] sm:$0xff]
        %v4683 = vld [vmem:[%s4681 + $0x8] sm:$0xff]
        %v4684 = vld [vmem:[%s4681 + $0x10] sm:$0xff]
        %v4685 = vld [vmem:[%s4681 + $0x18] sm:$0xff]
        %v4686 = vld [vmem:[%s4681 + $0x20] sm:$0xff]
        %v4687 = vld [vmem:[%s4681 + $0x28] sm:$0xff]
        %v4688 = vld [vmem:[%s4681 + $0x30] sm:$0xff]
        %v4689 = vld [vmem:[%s4681 + $0x38] sm:$0xff]
        %v4690 = vld [vmem:[%s4681 + $0x40] sm:$0xff]
        %v4691 = vld [vmem:[%s4681 + $0x48] sm:$0xff]
        %v4692 = vld [vmem:[%s4681 + $0x50] sm:$0xff]
        %v4693 = vld [vmem:[%s4681 + $0x58] sm:$0xff]
        %v4694 = vld [vmem:[%s4681 + $0x60] sm:$0xff]
        %v4695 = vld [vmem:[%s4681 + $0x68] sm:$0xff]
        %v4696 = vld [vmem:[%s4681 + $0x70] sm:$0xff]
        %v4697 = vld [vmem:[%s4681 + $0x78] sm:$0xff]
        %v4698 = vld [vmem:[%s4681 + $0x80] sm:$0xff]
        %v4699 = vld [vmem:[%s4681 + $0x88] sm:$0xff]
        %v4700 = vld [vmem:[%s4681 + $0x90] sm:$0xff]
        %v4701 = vld [vmem:[%s4681 + $0x98] sm:$0xff]
        %v4702 = vld [vmem:[%s4681 + $0xa0] sm:$0xff]
        %v4703 = vld [vmem:[%s4681 + $0xa8] sm:$0xff]
        %v4704 = vld [vmem:[%s4681 + $0xb0] sm:$0xff]
        %v4705 = vld [vmem:[%s4681 + $0xb8] sm:$0xff]
        %v4706 = vld [vmem:[%s4681 + $0xc0] sm:$0xff]
        %v4707 = vld [vmem:[%s4681 + $0xc8] sm:$0xff]
        %v4708 = vld [vmem:[%s4681 + $0xd0] sm:$0xff]
        %v4709 = vld [vmem:[%s4681 + $0xd8] sm:$0xff]
        %v4710 = vld [vmem:[%s4681 + $0xe0] sm:$0xff]
        %v4711 = vld [vmem:[%s4681 + $0xe8] sm:$0xff]
        %v4712 = vld [vmem:[%s4681 + $0xf0] sm:$0xff]
        %v4713 = vld [vmem:[%s4681 + $0xf8] sm:$0xff]
        %v4746 = vunpack.c.l.b16 %v4682
        %v4747 = vunpack.c.h.b16 %v4682
        %v4748 = vunpack.c.l.b16 %v4683
        %v4749 = vunpack.c.h.b16 %v4683
        %v4750 = vunpack.c.l.b16 %v4684
        %v4751 = vunpack.c.h.b16 %v4684
        %v4752 = vunpack.c.l.b16 %v4685
        %v4753 = vunpack.c.h.b16 %v4685
        %v4754 = vunpack.c.l.b16 %v4686
        %v4755 = vunpack.c.h.b16 %v4686
        %v4756 = vunpack.c.l.b16 %v4687
        %v4757 = vunpack.c.h.b16 %v4687
        %v4758 = vunpack.c.l.b16 %v4688
        %v4759 = vunpack.c.h.b16 %v4688
        %v4760 = vunpack.c.l.b16 %v4689
        %v4761 = vunpack.c.h.b16 %v4689
        %v4762 = vunpack.c.l.b16 %v4690
        %v4763 = vunpack.c.h.b16 %v4690
        %v4764 = vunpack.c.l.b16 %v4691
        %v4765 = vunpack.c.h.b16 %v4691
        %v4766 = vunpack.c.l.b16 %v4692
        %v4767 = vunpack.c.h.b16 %v4692
        %v4768 = vunpack.c.l.b16 %v4693
        %v4769 = vunpack.c.h.b16 %v4693
        %v4770 = vunpack.c.l.b16 %v4694
        %v4771 = vunpack.c.h.b16 %v4694
        %v4772 = vunpack.c.l.b16 %v4695
        %v4773 = vunpack.c.h.b16 %v4695
        %v4774 = vunpack.c.l.b16 %v4696
        %v4775 = vunpack.c.h.b16 %v4696
        %v4776 = vunpack.c.l.b16 %v4697
        %v4777 = vunpack.c.h.b16 %v4697
        %v4778 = vunpack.c.l.b16 %v4698
        %v4779 = vunpack.c.h.b16 %v4698
        %v4780 = vunpack.c.l.b16 %v4699
        %v4781 = vunpack.c.h.b16 %v4699
        %v4782 = vunpack.c.l.b16 %v4700
        %v4783 = vunpack.c.h.b16 %v4700
        %v4784 = vunpack.c.l.b16 %v4701
        %v4785 = vunpack.c.h.b16 %v4701
        %v4786 = vunpack.c.l.b16 %v4702
        %v4787 = vunpack.c.h.b16 %v4702
        %v4788 = vunpack.c.l.b16 %v4703
        %v4789 = vunpack.c.h.b16 %v4703
        %v4790 = vunpack.c.l.b16 %v4704
        %v4791 = vunpack.c.h.b16 %v4704
        %v4792 = vunpack.c.l.b16 %v4705
        %v4793 = vunpack.c.h.b16 %v4705
        %v4794 = vunpack.c.l.b16 %v4706
        %v4795 = vunpack.c.h.b16 %v4706
        %v4796 = vunpack.c.l.b16 %v4707
        %v4797 = vunpack.c.h.b16 %v4707
        %v4798 = vunpack.c.l.b16 %v4708
        %v4799 = vunpack.c.h.b16 %v4708
        %v4800 = vunpack.c.l.b16 %v4709
        %v4801 = vunpack.c.h.b16 %v4709
        %v4802 = vunpack.c.l.b16 %v4710
        %v4803 = vunpack.c.h.b16 %v4710
        %v4804 = vunpack.c.l.b16 %v4711
        %v4805 = vunpack.c.h.b16 %v4711
        %v4806 = vunpack.c.l.b16 %v4712
        %v4807 = vunpack.c.h.b16 %v4712
        %v4808 = vunpack.c.l.b16 %v4713
        %v4809 = vunpack.c.h.b16 %v4713
        %v4810 = vpack.c.b16 %v4750, %v4746
        %v4811 = vpack.c.b16 %v4751, %v4747
        %v4812 = vpack.c.b16 %v4752, %v4748
        %v4813 = vpack.c.b16 %v4753, %v4749
        %v4814 = vpack.c.b16 %v4758, %v4754
        %v4815 = vpack.c.b16 %v4759, %v4755
        %v4816 = vpack.c.b16 %v4760, %v4756
        %v4817 = vpack.c.b16 %v4761, %v4757
        %v4818 = vpack.c.b16 %v4766, %v4762
        %v4819 = vpack.c.b16 %v4767, %v4763
        %v4820 = vpack.c.b16 %v4768, %v4764
        %v4821 = vpack.c.b16 %v4769, %v4765
        %v4822 = vpack.c.b16 %v4774, %v4770
        %v4823 = vpack.c.b16 %v4775, %v4771
        %v4824 = vpack.c.b16 %v4776, %v4772
        %v4825 = vpack.c.b16 %v4777, %v4773
        %v4826 = vpack.c.b16 %v4782, %v4778
        %v4827 = vpack.c.b16 %v4783, %v4779
        %v4828 = vpack.c.b16 %v4784, %v4780
        %v4829 = vpack.c.b16 %v4785, %v4781
        %v4830 = vpack.c.b16 %v4790, %v4786
        %v4831 = vpack.c.b16 %v4791, %v4787
        %v4832 = vpack.c.b16 %v4792, %v4788
        %v4833 = vpack.c.b16 %v4793, %v4789
        %v4834 = vpack.c.b16 %v4798, %v4794
        %v4835 = vpack.c.b16 %v4799, %v4795
        %v4836 = vpack.c.b16 %v4800, %v4796
        %v4837 = vpack.c.b16 %v4801, %v4797
        %v4838 = vpack.c.b16 %v4806, %v4802
        %v4839 = vpack.c.b16 %v4807, %v4803
        %v4840 = vpack.c.b16 %v4808, %v4804
        %v4841 = vpack.c.b16 %v4809, %v4805
        %4874 = vmatprep.subr.bf16.mxu0 %v4811
        %4875 = vmatpush1.bf16.msra.mxu0 %v4810
        %4876 = vmatprep.subr.bf16.mxu0 %v4815
        %4877 = vmatpush1.bf16.msra.mxu0 %v4814
        %4878 = vmatprep.subr.bf16.mxu0 %v4819
        %4879 = vmatpush1.bf16.msra.mxu0 %v4818
        %4880 = vmatprep.subr.bf16.mxu0 %v4823
        %4881 = vmatpush1.bf16.msra.mxu0 %v4822
        %4882 = vmatprep.subr.bf16.mxu0 %v4827
        %4883 = vmatpush1.bf16.msra.mxu0 %v4826
        %4884 = vmatprep.subr.bf16.mxu0 %v4831
        %4885 = vmatpush1.bf16.msra.mxu0 %v4830
        %4886 = vmatprep.subr.bf16.mxu0 %v4835
        %4887 = vmatpush1.bf16.msra.mxu0 %v4834
        %4888 = vmatprep.subr.bf16.mxu0 %v4839
        %4889 = vmatpush1.bf16.msra.mxu0 %v4838
        %4890 = vmatprep.subr.bf16.mxu0 0
        %4891 = vmatpush1.bf16.msra.mxu0 0
        %4892 = vmatprep.subr.bf16.mxu0 0
        %4893 = vmatpush1.bf16.msra.mxu0 0
        %4894 = vmatprep.subr.bf16.mxu0 0
        %4895 = vmatpush1.bf16.msra.mxu0 0
        %4896 = vmatprep.subr.bf16.mxu0 0
        %4897 = vmatpush1.bf16.msra.mxu0 0
        %4898 = vmatprep.subr.bf16.mxu0 0
        %4899 = vmatpush1.bf16.msra.mxu0 0
        %4900 = vmatprep.subr.bf16.mxu0 0
        %4901 = vmatpush1.bf16.msra.mxu0 0
        %4902 = vmatprep.subr.bf16.mxu0 0
        %4903 = vmatpush1.bf16.msra.mxu0 0
        %4904 = vmatprep.subr.bf16.mxu0 0
        %4905 = vmatpush1.bf16.msra.mxu0 0
        %4906 = vmatprep.mubr.bf16.mxu0 0
        %4907 = vmatmul.mubr.bf16.gmra.mrb[0].mxu0 0
        %v4908 = vpop.f32.mrb[0].mxu0
        %v4909 = vadd.f32 0.0, %v4908
        %v4910 = vpop.f32.mrb[0].mxu0
        %v4911 = vadd.f32 0.0, %v4910
        %v4912 = vpop.f32.mrb[0].mxu0
        %v4913 = vadd.f32 0.0, %v4912
        %v4914 = vpop.f32.mrb[0].mxu0
        %v4915 = vadd.f32 0.0, %v4914
        %4916 = vdwg.mxu0
        %4917 = vmatprep.subr.bf16.mxu0 %v4813
        %4918 = vmatpush1.bf16.msra.mxu0 %v4812
        %4919 = vmatprep.subr.bf16.mxu0 %v4817
        %4920 = vmatpush1.bf16.msra.mxu0 %v4816
        %4921 = vmatprep.subr.bf16.mxu0 %v4821
        %4922 = vmatpush1.bf16.msra.mxu0 %v4820
        %4923 = vmatprep.subr.bf16.mxu0 %v4825
        %4924 = vmatpush1.bf16.msra.mxu0 %v4824
        %4925 = vmatprep.subr.bf16.mxu0 %v4829
        %4926 = vmatpush1.bf16.msra.mxu0 %v4828
        %4927 = vmatprep.subr.bf16.mxu0 %v4833
        %4928 = vmatpush1.bf16.msra.mxu0 %v4832
        %4929 = vmatprep.subr.bf16.mxu0 %v4837
        %4930 = vmatpush1.bf16.msra.mxu0 %v4836
        %4931 = vmatprep.subr.bf16.mxu0 %v4841
        %4932 = vmatpush1.bf16.msra.mxu0 %v4840
        %4933 = vmatprep.subr.bf16.mxu0 0
        %4934 = vmatpush1.bf16.msra.mxu0 0
        %4935 = vmatprep.subr.bf16.mxu0 0
        %4936 = vmatpush1.bf16.msra.mxu0 0
        %4937 = vmatprep.subr.bf16.mxu0 0
        %4938 = vmatpush1.bf16.msra.mxu0 0
        %4939 = vmatprep.subr.bf16.mxu0 0
        %4940 = vmatpush1.bf16.msra.mxu0 0
        %4941 = vmatprep.subr.bf16.mxu0 0
        %4942 = vmatpush1.bf16.msra.mxu0 0
        %4943 = vmatprep.subr.bf16.mxu0 0
        %4944 = vmatpush1.bf16.msra.mxu0 0
        %4945 = vmatprep.subr.bf16.mxu0 0
        %4946 = vmatpush1.bf16.msra.mxu0 0
        %4947 = vmatprep.subr.bf16.mxu0 0
        %4948 = vmatpush1.bf16.msra.mxu0 0
        %4949 = vmatprep.mubr.bf16.mxu0 0
        %4950 = vmatmul.mubr.bf16.gmra.mrb[0].mxu0 0
        %v4951 = vpop.f32.mrb[0].mxu0
        %v4952 = vadd.f32 0.0, %v4951
        %v4953 = vpop.f32.mrb[0].mxu0
        %v4954 = vadd.f32 0.0, %v4953
        %v4955 = vpop.f32.mrb[0].mxu0
        %v4956 = vadd.f32 0.0, %v4955
        %v4957 = vpop.f32.mrb[0].mxu0
        %v4958 = vadd.f32 0.0, %v4957
        %4959 = vdwg.mxu0
        %v4960 = vadd.f32 %v4673, %v4909
        %v4961 = vadd.f32 %v4674, %v4911
        %v4962 = vadd.f32 %v4675, %v4952
        %v4963 = vadd.f32 %v4676, %v4954
        %v4964 = vadd.f32 %v4677, %v4913
        %v4965 = vadd.f32 %v4678, %v4915
        %v4966 = vadd.f32 %v4679, %v4956
        %v4967 = vadd.f32 %v4680, %v4958
        %v4968 = vxor.u32 %v4960, 2147483648
        %v4969 = vxor.u32 %v4964, 2147483648
        %v4970 = vmul.f32 %v4968, 1.442695
        %v4971 = vpow.pop %v4970
        %v4972 = vmul.f32 %v4969, 1.442695
        %v4973 = vpow.pop %v4972
        %v4974 = vadd.f32 %v4971, 1.0
        %v4975 = vadd.f32 %v4973, 1.0
        %v4976 = vrcp.pop %v4974
        %v4977 = vmul.f32 1.0, %v4976
        %v4978 = vrcp.pop %v4975
        %v4979 = vmul.f32 1.0, %v4978
        %v4980 = vxor.u32 %v4961, 2147483648
        %v4981 = vxor.u32 %v4965, 2147483648
        %v4982 = vmul.f32 %v4980, 1.442695
        %v4983 = vpow.pop %v4982
        %v4984 = vmul.f32 %v4981, 1.442695
        %v4985 = vpow.pop %v4984
        %v4986 = vadd.f32 %v4983, 1.0
        %v4987 = vadd.f32 %v4985, 1.0
        %v4988 = vrcp.pop %v4986
        %v4989 = vmul.f32 1.0, %v4988
        %v4990 = vrcp.pop %v4987
        %v4991 = vmul.f32 1.0, %v4990
        %v4992 = vtanh.pop %v4962
        %v4993 = vtanh.pop %v4966
        %v4994 = vxor.u32 %v4963, 2147483648
        %v4995 = vxor.u32 %v4967, 2147483648
        %v4996 = vmul.f32 %v4994, 1.442695
        %v4997 = vpow.pop %v4996
        %v4998 = vmul.f32 %v4995, 1.442695
        %v4999 = vpow.pop %v4998
        %v5000 = vadd.f32 %v4997, 1.0
        %v5001 = vadd.f32 %v4999, 1.0
        %v5002 = vrcp.pop %v5000
        %v5003 = vmul.f32 1.0, %v5002
        %v5004 = vrcp.pop %v5001
        %v5005 = vmul.f32 1.0, %v5004
        %v5006 = vmul.f32 %v4989, 0.0
        %v5007 = vmul.f32 %v4991, 0.0
        %v5008 = vmul.f32 %v4977, %v4992
        %v5009 = vmul.f32 %v4979, %v4993
        %v5010 = vadd.f32 %v5006, %v5008
        %v5011 = vadd.f32 %v5007, %v5009
        %v5012 = vtanh.pop %v5010
        %v5013 = vtanh.pop %v5011
        %v5014 = vmul.f32 %v5003, %v5012
        %v5015 = vmul.f32 %v5005, %v5013
        %5016 = vadd.xlane.f32.xlu0 %v5014
        %v5017 = vpop.xlane.xlu0 %5016
        %5018 = vadd.xlane.f32.xlu0 %v5015
        %v5019 = vpop.xlane.xlu0 %5018
        %v5020 = vmul.f32 %v5017, %v1356
        %v5021 = vmul.f32 %v5019, %v1356
        %v5022 = vmul.f32 %v5014, %v5014
        %v5023 = vmul.f32 %v5015, %v5015
        %5024 = vadd.xlane.f32.xlu0 %v5022
        %v5025 = vpop.xlane.xlu0 %5024
        %5026 = vadd.xlane.f32.xlu0 %v5023
        %v5027 = vpop.xlane.xlu0 %5026
        %v5028 = vmul.f32 %v5025, %v1356
        %v5029 = vmul.f32 %v5027, %v1356
        %v5030 = vmul.f32 %v5020, %v5020
        %v5031 = vmul.f32 %v5021, %v5021
        %v5032 = vsub.f32 %v5028, %v5030
        %v5033 = vsub.f32 %v5029, %v5031
        %v5034 = vsub.f32 %v5014, %v5020
        %v5035 = vsub.f32 %v5015, %v5021
        %v5036 = vadd.f32 %v5032, 1e-05
        %v5037 = vadd.f32 %v5033, 1e-05
        %v5038 = vrsqrt.pop %v5036
        %v5039 = vrsqrt.pop %v5037
        %v5040 = vmul.f32 %v5034, %v5038
        %v5041 = vmul.f32 %v5035, %v5039
        %v5042 = vmul.f32 %v5040, %v4663
        %v5043 = vmul.f32 %v5041, %v4663
        %v5044 = vadd.f32 %v5042, %v4671
        %v5045 = vadd.f32 %v5043, %v4671
        %v5046 = vmax.f32 %v5044, 0.0
        %v5047 = vmax.f32 %v5045, 0.0
        %v5048 = vld [vmem:[%s365] sm:$0xff]
        %v5049 = vld [vmem:[%s365 + $0x8] sm:$0xff]
        %v5050 = vadd.f32 %v5046, %v5048
        %v5051 = vadd.f32 %v5047, %v5049
        %v5052 = vpack.c.bf16 %v5051, %v5050
        %5053 = vst [vmem:[#allocation2] sm:$0xff] %v5052
        %v5054 = vld [vmem:[%s1391] sm:$0xff]
        %v5055 = vld [vmem:[%s1391 + $0x8] sm:$0xff]
        %v5056 = vld [vmem:[%s1391 + $0x10] sm:$0xff]
        %v5057 = vld [vmem:[%s1391 + $0x18] sm:$0xff]
        %v5058 = vld [vmem:[%s1391 + $0x20] sm:$0xff]
        %v5059 = vld [vmem:[%s1391 + $0x28] sm:$0xff]
        %v5060 = vld [vmem:[%s1391 + $0x30] sm:$0xff]
        %v5061 = vld [vmem:[%s1391 + $0x38] sm:$0xff]
        %v5062 = vpack.c.bf16 %v5015, %v5014
        %v5063 = vld [vmem:[%s4681] sm:$0xff]
        %v5064 = vld [vmem:[%s4681 + $0x8] sm:$0xff]
        %v5065 = vld [vmem:[%s4681 + $0x10] sm:$0xff]
        %v5066 = vld [vmem:[%s4681 + $0x18] sm:$0xff]
        %v5067 = vld [vmem:[%s4681 + $0x20] sm:$0xff]
        %v5068 = vld [vmem:[%s4681 + $0x28] sm:$0xff]
        %v5069 = vld [vmem:[%s4681 + $0x30] sm:$0xff]
        %v5070 = vld [vmem:[%s4681 + $0x38] sm:$0xff]
        %v5071 = vld [vmem:[%s4681 + $0x40] sm:$0xff]
        %v5072 = vld [vmem:[%s4681 + $0x48] sm:$0xff]
        %v5073 = vld [vmem:[%s4681 + $0x50] sm:$0xff]
        %v5074 = vld [vmem:[%s4681 + $0x58] sm:$0xff]
        %v5075 = vld [vmem:[%s4681 + $0x60] sm:$0xff]
        %v5076 = vld [vmem:[%s4681 + $0x68] sm:$0xff]
        %v5077 = vld [vmem:[%s4681 + $0x70] sm:$0xff]
        %v5078 = vld [vmem:[%s4681 + $0x78] sm:$0xff]
        %v5079 = vld [vmem:[%s4681 + $0x80] sm:$0xff]
        %v5080 = vld [vmem:[%s4681 + $0x88] sm:$0xff]
        %v5081 = vld [vmem:[%s4681 + $0x90] sm:$0xff]
        %v5082 = vld [vmem:[%s4681 + $0x98] sm:$0xff]
        %v5083 = vld [vmem:[%s4681 + $0xa0] sm:$0xff]
        %v5084 = vld [vmem:[%s4681 + $0xa8] sm:$0xff]
        %v5085 = vld [vmem:[%s4681 + $0xb0] sm:$0xff]
        %v5086 = vld [vmem:[%s4681 + $0xb8] sm:$0xff]
        %v5087 = vld [vmem:[%s4681 + $0xc0] sm:$0xff]
        %v5088 = vld [vmem:[%s4681 + $0xc8] sm:$0xff]
        %v5089 = vld [vmem:[%s4681 + $0xd0] sm:$0xff]
        %v5090 = vld [vmem:[%s4681 + $0xd8] sm:$0xff]
        %v5091 = vld [vmem:[%s4681 + $0xe0] sm:$0xff]
        %v5092 = vld [vmem:[%s4681 + $0xe8] sm:$0xff]
        %v5093 = vld [vmem:[%s4681 + $0xf0] sm:$0xff]
        %v5094 = vld [vmem:[%s4681 + $0xf8] sm:$0xff]
        %v5127 = vunpack.c.l.b16 %v5063
        %v5128 = vunpack.c.h.b16 %v5063
        %v5129 = vunpack.c.l.b16 %v5064
        %v5130 = vunpack.c.h.b16 %v5064
        %v5131 = vunpack.c.l.b16 %v5065
        %v5132 = vunpack.c.h.b16 %v5065
        %v5133 = vunpack.c.l.b16 %v5066
        %v5134 = vunpack.c.h.b16 %v5066
        %v5135 = vunpack.c.l.b16 %v5067
        %v5136 = vunpack.c.h.b16 %v5067
        %v5137 = vunpack.c.l.b16 %v5068
        %v5138 = vunpack.c.h.b16 %v5068
        %v5139 = vunpack.c.l.b16 %v5069
        %v5140 = vunpack.c.h.b16 %v5069
        %v5141 = vunpack.c.l.b16 %v5070
        %v5142 = vunpack.c.h.b16 %v5070
        %v5143 = vunpack.c.l.b16 %v5071
        %v5144 = vunpack.c.h.b16 %v5071
        %v5145 = vunpack.c.l.b16 %v5072
        %v5146 = vunpack.c.h.b16 %v5072
        %v5147 = vunpack.c.l.b16 %v5073
        %v5148 = vunpack.c.h.b16 %v5073
        %v5149 = vunpack.c.l.b16 %v5074
        %v5150 = vunpack.c.h.b16 %v5074
        %v5151 = vunpack.c.l.b16 %v5075
        %v5152 = vunpack.c.h.b16 %v5075
        %v5153 = vunpack.c.l.b16 %v5076
        %v5154 = vunpack.c.h.b16 %v5076
        %v5155 = vunpack.c.l.b16 %v5077
        %v5156 = vunpack.c.h.b16 %v5077
        %v5157 = vunpack.c.l.b16 %v5078
        %v5158 = vunpack.c.h.b16 %v5078
        %v5159 = vunpack.c.l.b16 %v5079
        %v5160 = vunpack.c.h.b16 %v5079
        %v5161 = vunpack.c.l.b16 %v5080
        %v5162 = vunpack.c.h.b16 %v5080
        %v5163 = vunpack.c.l.b16 %v5081
        %v5164 = vunpack.c.h.b16 %v5081
        %v5165 = vunpack.c.l.b16 %v5082
        %v5166 = vunpack.c.h.b16 %v5082
        %v5167 = vunpack.c.l.b16 %v5083
        %v5168 = vunpack.c.h.b16 %v5083
        %v5169 = vunpack.c.l.b16 %v5084
        %v5170 = vunpack.c.h.b16 %v5084
        %v5171 = vunpack.c.l.b16 %v5085
        %v5172 = vunpack.c.h.b16 %v5085
        %v5173 = vunpack.c.l.b16 %v5086
        %v5174 = vunpack.c.h.b16 %v5086
        %v5175 = vunpack.c.l.b16 %v5087
        %v5176 = vunpack.c.h.b16 %v5087
        %v5177 = vunpack.c.l.b16 %v5088
        %v5178 = vunpack.c.h.b16 %v5088
        %v5179 = vunpack.c.l.b16 %v5089
        %v5180 = vunpack.c.h.b16 %v5089
        %v5181 = vunpack.c.l.b16 %v5090
        %v5182 = vunpack.c.h.b16 %v5090
        %v5183 = vunpack.c.l.b16 %v5091
        %v5184 = vunpack.c.h.b16 %v5091
        %v5185 = vunpack.c.l.b16 %v5092
        %v5186 = vunpack.c.h.b16 %v5092
        %v5187 = vunpack.c.l.b16 %v5093
        %v5188 = vunpack.c.h.b16 %v5093
        %v5189 = vunpack.c.l.b16 %v5094
        %v5190 = vunpack.c.h.b16 %v5094
        %v5191 = vpack.c.b16 %v5131, %v5127
        %v5192 = vpack.c.b16 %v5132, %v5128
        %v5193 = vpack.c.b16 %v5133, %v5129
        %v5194 = vpack.c.b16 %v5134, %v5130
        %v5195 = vpack.c.b16 %v5139, %v5135
        %v5196 = vpack.c.b16 %v5140, %v5136
        %v5197 = vpack.c.b16 %v5141, %v5137
        %v5198 = vpack.c.b16 %v5142, %v5138
        %v5199 = vpack.c.b16 %v5147, %v5143
        %v5200 = vpack.c.b16 %v5148, %v5144
        %v5201 = vpack.c.b16 %v5149, %v5145
        %v5202 = vpack.c.b16 %v5150, %v5146
        %v5203 = vpack.c.b16 %v5155, %v5151
        %v5204 = vpack.c.b16 %v5156, %v5152
        %v5205 = vpack.c.b16 %v5157, %v5153
        %v5206 = vpack.c.b16 %v5158, %v5154
        %v5207 = vpack.c.b16 %v5163, %v5159
        %v5208 = vpack.c.b16 %v5164, %v5160
        %v5209 = vpack.c.b16 %v5165, %v5161
        %v5210 = vpack.c.b16 %v5166, %v5162
        %v5211 = vpack.c.b16 %v5171, %v5167
        %v5212 = vpack.c.b16 %v5172, %v5168
        %v5213 = vpack.c.b16 %v5173, %v5169
        %v5214 = vpack.c.b16 %v5174, %v5170
        %v5215 = vpack.c.b16 %v5179, %v5175
        %v5216 = vpack.c.b16 %v5180, %v5176
        %v5217 = vpack.c.b16 %v5181, %v5177
        %v5218 = vpack.c.b16 %v5182, %v5178
        %v5219 = vpack.c.b16 %v5187, %v5183
        %v5220 = vpack.c.b16 %v5188, %v5184
        %v5221 = vpack.c.b16 %v5189, %v5185
        %v5222 = vpack.c.b16 %v5190, %v5186
        %5255 = vmatprep.subr.bf16.mxu0 %v5192
        %5256 = vmatpush1.bf16.msra.mxu0 %v5191
        %5257 = vmatprep.subr.bf16.mxu0 %v5196
        %5258 = vmatpush1.bf16.msra.mxu0 %v5195
        %5259 = vmatprep.subr.bf16.mxu0 %v5200
        %5260 = vmatpush1.bf16.msra.mxu0 %v5199
        %5261 = vmatprep.subr.bf16.mxu0 %v5204
        %5262 = vmatpush1.bf16.msra.mxu0 %v5203
        %5263 = vmatprep.subr.bf16.mxu0 %v5208
        %5264 = vmatpush1.bf16.msra.mxu0 %v5207
        %5265 = vmatprep.subr.bf16.mxu0 %v5212
        %5266 = vmatpush1.bf16.msra.mxu0 %v5211
        %5267 = vmatprep.subr.bf16.mxu0 %v5216
        %5268 = vmatpush1.bf16.msra.mxu0 %v5215
        %5269 = vmatprep.subr.bf16.mxu0 %v5220
        %5270 = vmatpush1.bf16.msra.mxu0 %v5219
        %5271 = vmatprep.subr.bf16.mxu0 0
        %5272 = vmatpush1.bf16.msra.mxu0 0
        %5273 = vmatprep.subr.bf16.mxu0 0
        %5274 = vmatpush1.bf16.msra.mxu0 0
        %5275 = vmatprep.subr.bf16.mxu0 0
        %5276 = vmatpush1.bf16.msra.mxu0 0
        %5277 = vmatprep.subr.bf16.mxu0 0
        %5278 = vmatpush1.bf16.msra.mxu0 0
        %5279 = vmatprep.subr.bf16.mxu0 0
        %5280 = vmatpush1.bf16.msra.mxu0 0
        %5281 = vmatprep.subr.bf16.mxu0 0
        %5282 = vmatpush1.bf16.msra.mxu0 0
        %5283 = vmatprep.subr.bf16.mxu0 0
        %5284 = vmatpush1.bf16.msra.mxu0 0
        %5285 = vmatprep.subr.bf16.mxu0 0
        %5286 = vmatpush1.bf16.msra.mxu0 0
        %5287 = vmatprep.mubr.bf16.mxu0 0
        %5288 = vmatmul.mubr.bf16.gmra.mrb[0].mxu0 %v5062
        %v5289 = vpop.f32.mrb[0].mxu0
        %v5290 = vadd.f32 0.0, %v5289
        %v5291 = vpop.f32.mrb[0].mxu0
        %v5292 = vadd.f32 0.0, %v5291
        %v5293 = vpop.f32.mrb[0].mxu0
        %v5294 = vadd.f32 0.0, %v5293
        %v5295 = vpop.f32.mrb[0].mxu0
        %v5296 = vadd.f32 0.0, %v5295
        %5297 = vdwg.mxu0
        %5298 = vmatprep.subr.bf16.mxu0 %v5194
        %5299 = vmatpush1.bf16.msra.mxu0 %v5193
        %5300 = vmatprep.subr.bf16.mxu0 %v5198
        %5301 = vmatpush1.bf16.msra.mxu0 %v5197
        %5302 = vmatprep.subr.bf16.mxu0 %v5202
        %5303 = vmatpush1.bf16.msra.mxu0 %v5201
        %5304 = vmatprep.subr.bf16.mxu0 %v5206
        %5305 = vmatpush1.bf16.msra.mxu0 %v5205
        %5306 = vmatprep.subr.bf16.mxu0 %v5210
        %5307 = vmatpush1.bf16.msra.mxu0 %v5209
        %5308 = vmatprep.subr.bf16.mxu0 %v5214
        %5309 = vmatpush1.bf16.msra.mxu0 %v5213
        %5310 = vmatprep.subr.bf16.mxu0 %v5218
        %5311 = vmatpush1.bf16.msra.mxu0 %v5217
        %5312 = vmatprep.subr.bf16.mxu0 %v5222
        %5313 = vmatpush1.bf16.msra.mxu0 %v5221
        %5314 = vmatprep.subr.bf16.mxu0 0
        %5315 = vmatpush1.bf16.msra.mxu0 0
        %5316 = vmatprep.subr.bf16.mxu0 0
        %5317 = vmatpush1.bf16.msra.mxu0 0
        %5318 = vmatprep.subr.bf16.mxu0 0
        %5319 = vmatpush1.bf16.msra.mxu0 0
        %5320 = vmatprep.subr.bf16.mxu0 0
        %5321 = vmatpush1.bf16.msra.mxu0 0
        %5322 = vmatprep.subr.bf16.mxu0 0
        %5323 = vmatpush1.bf16.msra.mxu0 0
        %5324 = vmatprep.subr.bf16.mxu0 0
        %5325 = vmatpush1.bf16.msra.mxu0 0
        %5326 = vmatprep.subr.bf16.mxu0 0
        %5327 = vmatpush1.bf16.msra.mxu0 0
        %5328 = vmatprep.subr.bf16.mxu0 0
        %5329 = vmatpush1.bf16.msra.mxu0 0
        %5330 = vmatprep.mubr.bf16.mxu0 0
        %5331 = vmatmul.mubr.bf16.gmra.mrb[0].mxu0 %v5062
        %v5332 = vpop.f32.mrb[0].mxu0
        %v5333 = vadd.f32 0.0, %v5332
        %v5334 = vpop.f32.mrb[0].mxu0
        %v5335 = vadd.f32 0.0, %v5334
        %v5336 = vpop.f32.mrb[0].mxu0
        %v5337 = vadd.f32 0.0, %v5336
        %v5338 = vpop.f32.mrb[0].mxu0
        %v5339 = vadd.f32 0.0, %v5338
        %5340 = vdwg.mxu0
        %v5341 = vadd.f32 %v5054, %v5290
        %v5342 = vadd.f32 %v5055, %v5292
        %v5343 = vadd.f32 %v5056, %v5333
        %v5344 = vadd.f32 %v5057, %v5335
        %v5345 = vadd.f32 %v5058, %v5294
        %v5346 = vadd.f32 %v5059, %v5296
        %v5347 = vadd.f32 %v5060, %v5337
        %v5348 = vadd.f32 %v5061, %v5339
        %v5349 = vxor.u32 %v5341, 2147483648
        %v5350 = vxor.u32 %v5345, 2147483648
        %v5351 = vmul.f32 %v5349, 1.442695
        %v5352 = vpow.pop %v5351
        %v5353 = vmul.f32 %v5350, 1.442695
        %v5354 = vpow.pop %v5353
        %v5355 = vadd.f32 %v5352, 1.0
        %v5356 = vadd.f32 %v5354, 1.0
        %v5357 = vrcp.pop %v5355
        %v5358 = vmul.f32 1.0, %v5357
        %v5359 = vrcp.pop %v5356
        %v5360 = vmul.f32 1.0, %v5359
        %v5361 = vxor.u32 %v5342, 2147483648
        %v5362 = vxor.u32 %v5346, 2147483648
        %v5363 = vmul.f32 %v5361, 1.442695
        %v5364 = vpow.pop %v5363
        %v5365 = vmul.f32 %v5362, 1.442695
        %v5366 = vpow.pop %v5365
        %v5367 = vadd.f32 %v5364, 1.0
        %v5368 = vadd.f32 %v5366, 1.0
        %v5369 = vrcp.pop %v5367
        %v5370 = vmul.f32 1.0, %v5369
        %v5371 = vrcp.pop %v5368
        %v5372 = vmul.f32 1.0, %v5371
        %v5373 = vtanh.pop %v5343
        %v5374 = vtanh.pop %v5347
        %v5375 = vxor.u32 %v5344, 2147483648
        %v5376 = vxor.u32 %v5348, 2147483648
        %v5377 = vmul.f32 %v5375, 1.442695
        %v5378 = vpow.pop %v5377
        %v5379 = vmul.f32 %v5376, 1.442695
        %v5380 = vpow.pop %v5379
        %v5381 = vadd.f32 %v5378, 1.0
        %v5382 = vadd.f32 %v5380, 1.0
        %v5383 = vrcp.pop %v5381
        %v5384 = vmul.f32 1.0, %v5383
        %v5385 = vrcp.pop %v5382
        %v5386 = vmul.f32 1.0, %v5385
        %v5387 = vmul.f32 %v5370, %v5010
        %v5388 = vmul.f32 %v5372, %v5011
        %v5389 = vmul.f32 %v5358, %v5373
        %v5390 = vmul.f32 %v5360, %v5374
        %v5391 = vadd.f32 %v5387, %v5389
        %v5392 = vadd.f32 %v5388, %v5390
        %v5393 = vtanh.pop %v5391
        %v5394 = vtanh.pop %v5392
        %v5395 = vmul.f32 %v5384, %v5393
        %v5396 = vmul.f32 %v5386, %v5394
        %5397 = vadd.xlane.f32.xlu0 %v5395
        %v5398 = vpop.xlane.xlu0 %5397
        %5399 = vadd.xlane.f32.xlu0 %v5396
        %v5400 = vpop.xlane.xlu0 %5399
        %v5401 = vmul.f32 %v5398, %v1356
        %v5402 = vmul.f32 %v5400, %v1356
        %v5403 = vmul.f32 %v5395, %v5395
        %v5404 = vmul.f32 %v5396, %v5396
        %5405 = vadd.xlane.f32.xlu0 %v5403
        %v5406 = vpop.xlane.xlu0 %5405
        %5407 = vadd.xlane.f32.xlu0 %v5404
        %v5408 = vpop.xlane.xlu0 %5407
        %v5409 = vmul.f32 %v5406, %v1356
        %v5410 = vmul.f32 %v5408, %v1356
        %v5411 = vmul.f32 %v5401, %v5401
        %v5412 = vmul.f32 %v5402, %v5402
        %v5413 = vsub.f32 %v5409, %v5411
        %v5414 = vsub.f32 %v5410, %v5412
        %v5415 = vsub.f32 %v5395, %v5401
        %v5416 = vsub.f32 %v5396, %v5402
        %v5417 = vadd.f32 %v5413, 1e-05
        %v5418 = vadd.f32 %v5414, 1e-05
        %v5419 = vrsqrt.pop %v5417
        %v5420 = vrsqrt.pop %v5418
        %v5421 = vmul.f32 %v5415, %v5419
        %v5422 = vmul.f32 %v5416, %v5420
        %v5423 = vmul.f32 %v5421, %v4663
        %v5424 = vmul.f32 %v5422, %v4663
        %v5425 = vadd.f32 %v5423, %v4671
        %v5426 = vadd.f32 %v5424, %v4671
        %v5427 = vmax.f32 %v5425, 0.0
        %v5428 = vmax.f32 %v5426, 0.0
        %v5429 = vld [vmem:[%s1767] sm:$0xff]
        %v5430 = vld [vmem:[%s1767 + $0x8] sm:$0xff]
        %v5431 = vadd.f32 %v5427, %v5429
        %v5432 = vadd.f32 %v5428, %v5430
        %v5433 = vpack.c.bf16 %v5432, %v5431
        %5434 = vst [vmem:[%s1773] sm:$0xff] %v5433
        %v5435 = vld [vmem:[%s1775] sm:$0xff]
        %v5436 = vld [vmem:[%s1775 + $0x8] sm:$0xff]
        %v5437 = vld [vmem:[%s1775 + $0x10] sm:$0xff]
        %v5438 = vld [vmem:[%s1775 + $0x18] sm:$0xff]
        %v5439 = vld [vmem:[%s1775 + $0x20] sm:$0xff]
        %v5440 = vld [vmem:[%s1775 + $0x28] sm:$0xff]
        %v5441 = vld [vmem:[%s1775 + $0x30] sm:$0xff]
        %v5442 = vld [vmem:[%s1775 + $0x38] sm:$0xff]
        %v5443 = vpack.c.bf16 %v5396, %v5395
        %v5444 = vld [vmem:[%s4681] sm:$0xff]
        %v5445 = vld [vmem:[%s4681 + $0x8] sm:$0xff]
        %v5446 = vld [vmem:[%s4681 + $0x10] sm:$0xff]
        %v5447 = vld [vmem:[%s4681 + $0x18] sm:$0xff]
        %v5448 = vld [vmem:[%s4681 + $0x20] sm:$0xff]
        %v5449 = vld [vmem:[%s4681 + $0x28] sm:$0xff]
        %v5450 = vld [vmem:[%s4681 + $0x30] sm:$0xff]
        %v5451 = vld [vmem:[%s4681 + $0x38] sm:$0xff]
        %v5452 = vld [vmem:[%s4681 + $0x40] sm:$0xff]
        %v5453 = vld [vmem:[%s4681 + $0x48] sm:$0xff]
        %v5454 = vld [vmem:[%s4681 + $0x50] sm:$0xff]
        %v5455 = vld [vmem:[%s4681 + $0x58] sm:$0xff]
        %v5456 = vld [vmem:[%s4681 + $0x60] sm:$0xff]
        %v5457 = vld [vmem:[%s4681 + $0x68] sm:$0xff]
        %v5458 = vld [vmem:[%s4681 + $0x70] sm:$0xff]
        %v5459 = vld [vmem:[%s4681 + $0x78] sm:$0xff]
        %v5460 = vld [vmem:[%s4681 + $0x80] sm:$0xff]
        %v5461 = vld [vmem:[%s4681 + $0x88] sm:$0xff]
        %v5462 = vld [vmem:[%s4681 + $0x90] sm:$0xff]
        %v5463 = vld [vmem:[%s4681 + $0x98] sm:$0xff]
        %v5464 = vld [vmem:[%s4681 + $0xa0] sm:$0xff]
        %v5465 = vld [vmem:[%s4681 + $0xa8] sm:$0xff]
        %v5466 = vld [vmem:[%s4681 + $0xb0] sm:$0xff]
        %v5467 = vld [vmem:[%s4681 + $0xb8] sm:$0xff]
        %v5468 = vld [vmem:[%s4681 + $0xc0] sm:$0xff]
        %v5469 = vld [vmem:[%s4681 + $0xc8] sm:$0xff]
        %v5470 = vld [vmem:[%s4681 + $0xd0] sm:$0xff]
        %v5471 = vld [vmem:[%s4681 + $0xd8] sm:$0xff]
        %v5472 = vld [vmem:[%s4681 + $0xe0] sm:$0xff]
        %v5473 = vld [vmem:[%s4681 + $0xe8] sm:$0xff]
        %v5474 = vld [vmem:[%s4681 + $0xf0] sm:$0xff]
        %v5475 = vld [vmem:[%s4681 + $0xf8] sm:$0xff]
        %v5508 = vunpack.c.l.b16 %v5444
        %v5509 = vunpack.c.h.b16 %v5444
        %v5510 = vunpack.c.l.b16 %v5445
        %v5511 = vunpack.c.h.b16 %v5445
        %v5512 = vunpack.c.l.b16 %v5446
        %v5513 = vunpack.c.h.b16 %v5446
        %v5514 = vunpack.c.l.b16 %v5447
        %v5515 = vunpack.c.h.b16 %v5447
        %v5516 = vunpack.c.l.b16 %v5448
        %v5517 = vunpack.c.h.b16 %v5448
        %v5518 = vunpack.c.l.b16 %v5449
        %v5519 = vunpack.c.h.b16 %v5449
        %v5520 = vunpack.c.l.b16 %v5450
        %v5521 = vunpack.c.h.b16 %v5450
        %v5522 = vunpack.c.l.b16 %v5451
        %v5523 = vunpack.c.h.b16 %v5451
        %v5524 = vunpack.c.l.b16 %v5452
        %v5525 = vunpack.c.h.b16 %v5452
        %v5526 = vunpack.c.l.b16 %v5453
        %v5527 = vunpack.c.h.b16 %v5453
        %v5528 = vunpack.c.l.b16 %v5454
        %v5529 = vunpack.c.h.b16 %v5454
        %v5530 = vunpack.c.l.b16 %v5455
        %v5531 = vunpack.c.h.b16 %v5455
        %v5532 = vunpack.c.l.b16 %v5456
        %v5533 = vunpack.c.h.b16 %v5456
        %v5534 = vunpack.c.l.b16 %v5457
        %v5535 = vunpack.c.h.b16 %v5457
        %v5536 = vunpack.c.l.b16 %v5458
        %v5537 = vunpack.c.h.b16 %v5458
        %v5538 = vunpack.c.l.b16 %v5459
        %v5539 = vunpack.c.h.b16 %v5459
        %v5540 = vunpack.c.l.b16 %v5460
        %v5541 = vunpack.c.h.b16 %v5460
        %v5542 = vunpack.c.l.b16 %v5461
        %v5543 = vunpack.c.h.b16 %v5461
        %v5544 = vunpack.c.l.b16 %v5462
        %v5545 = vunpack.c.h.b16 %v5462
        %v5546 = vunpack.c.l.b16 %v5463
        %v5547 = vunpack.c.h.b16 %v5463
        %v5548 = vunpack.c.l.b16 %v5464
        %v5549 = vunpack.c.h.b16 %v5464
        %v5550 = vunpack.c.l.b16 %v5465
        %v5551 = vunpack.c.h.b16 %v5465
        %v5552 = vunpack.c.l.b16 %v5466
        %v5553 = vunpack.c.h.b16 %v5466
        %v5554 = vunpack.c.l.b16 %v5467
        %v5555 = vunpack.c.h.b16 %v5467
        %v5556 = vunpack.c.l.b16 %v5468
        %v5557 = vunpack.c.h.b16 %v5468
        %v5558 = vunpack.c.l.b16 %v5469
        %v5559 = vunpack.c.h.b16 %v5469
        %v5560 = vunpack.c.l.b16 %v5470
        %v5561 = vunpack.c.h.b16 %v5470
        %v5562 = vunpack.c.l.b16 %v5471
        %v5563 = vunpack.c.h.b16 %v5471
        %v5564 = vunpack.c.l.b16 %v5472
        %v5565 = vunpack.c.h.b16 %v5472
        %v5566 = vunpack.c.l.b16 %v5473
        %v5567 = vunpack.c.h.b16 %v5473
        %v5568 = vunpack.c.l.b16 %v5474
        %v5569 = vunpack.c.h.b16 %v5474
        %v5570 = vunpack.c.l.b16 %v5475
        %v5571 = vunpack.c.h.b16 %v5475
        %v5572 = vpack.c.b16 %v5512, %v5508
        %v5573 = vpack.c.b16 %v5513, %v5509
        %v5574 = vpack.c.b16 %v5514, %v5510
        %v5575 = vpack.c.b16 %v5515, %v5511
        %v5576 = vpack.c.b16 %v5520, %v5516
        %v5577 = vpack.c.b16 %v5521, %v5517
        %v5578 = vpack.c.b16 %v5522, %v5518
        %v5579 = vpack.c.b16 %v5523, %v5519
        %v5580 = vpack.c.b16 %v5528, %v5524
        %v5581 = vpack.c.b16 %v5529, %v5525
        %v5582 = vpack.c.b16 %v5530, %v5526
        %v5583 = vpack.c.b16 %v5531, %v5527
        %v5584 = vpack.c.b16 %v5536, %v5532
        %v5585 = vpack.c.b16 %v5537, %v5533
        %v5586 = vpack.c.b16 %v5538, %v5534
        %v5587 = vpack.c.b16 %v5539, %v5535
        %v5588 = vpack.c.b16 %v5544, %v5540
        %v5589 = vpack.c.b16 %v5545, %v5541
        %v5590 = vpack.c.b16 %v5546, %v5542
        %v5591 = vpack.c.b16 %v5547, %v5543
        %v5592 = vpack.c.b16 %v5552, %v5548
        %v5593 = vpack.c.b16 %v5553, %v5549
        %v5594 = vpack.c.b16 %v5554, %v5550
        %v5595 = vpack.c.b16 %v5555, %v5551
        %v5596 = vpack.c.b16 %v5560, %v5556
        %v5597 = vpack.c.b16 %v5561, %v5557
        %v5598 = vpack.c.b16 %v5562, %v5558
        %v5599 = vpack.c.b16 %v5563, %v5559
        %v5600 = vpack.c.b16 %v5568, %v5564
        %v5601 = vpack.c.b16 %v5569, %v5565
        %v5602 = vpack.c.b16 %v5570, %v5566
        %v5603 = vpack.c.b16 %v5571, %v5567
        %5636 = vmatprep.subr.bf16.mxu0 %v5573
        %5637 = vmatpush1.bf16.msra.mxu0 %v5572
        %5638 = vmatprep.subr.bf16.mxu0 %v5577
        %5639 = vmatpush1.bf16.msra.mxu0 %v5576
        %5640 = vmatprep.subr.bf16.mxu0 %v5581
        %5641 = vmatpush1.bf16.msra.mxu0 %v5580
        %5642 = vmatprep.subr.bf16.mxu0 %v5585
        %5643 = vmatpush1.bf16.msra.mxu0 %v5584
        %5644 = vmatprep.subr.bf16.mxu0 %v5589
        %5645 = vmatpush1.bf16.msra.mxu0 %v5588
        %5646 = vmatprep.subr.bf16.mxu0 %v5593
        %5647 = vmatpush1.bf16.msra.mxu0 %v5592
        %5648 = vmatprep.subr.bf16.mxu0 %v5597
        %5649 = vmatpush1.bf16.msra.mxu0 %v5596
        %5650 = vmatprep.subr.bf16.mxu0 %v5601
        %5651 = vmatpush1.bf16.msra.mxu0 %v5600
        %5652 = vmatprep.subr.bf16.mxu0 0
        %5653 = vmatpush1.bf16.msra.mxu0 0
        %5654 = vmatprep.subr.bf16.mxu0 0
        %5655 = vmatpush1.bf16.msra.mxu0 0
        %5656 = vmatprep.subr.bf16.mxu0 0
        %5657 = vmatpush1.bf16.msra.mxu0 0
        %5658 = vmatprep.subr.bf16.mxu0 0
        %5659 = vmatpush1.bf16.msra.mxu0 0
        %5660 = vmatprep.subr.bf16.mxu0 0
        %5661 = vmatpush1.bf16.msra.mxu0 0
        %5662 = vmatprep.subr.bf16.mxu0 0
        %5663 = vmatpush1.bf16.msra.mxu0 0
        %5664 = vmatprep.subr.bf16.mxu0 0
        %5665 = vmatpush1.bf16.msra.mxu0 0
        %5666 = vmatprep.subr.bf16.mxu0 0
        %5667 = vmatpush1.bf16.msra.mxu0 0
        %5668 = vmatprep.mubr.bf16.mxu0 0
        %5669 = vmatmul.mubr.bf16.gmra.mrb[0].mxu0 %v5443
        %v5670 = vpop.f32.mrb[0].mxu0
        %v5671 = vadd.f32 0.0, %v5670
        %v5672 = vpop.f32.mrb[0].mxu0
        %v5673 = vadd.f32 0.0, %v5672
        %v5674 = vpop.f32.mrb[0].mxu0
        %v5675 = vadd.f32 0.0, %v5674
        %v5676 = vpop.f32.mrb[0].mxu0
        %v5677 = vadd.f32 0.0, %v5676
        %5678 = vdwg.mxu0
        %5679 = vmatprep.subr.bf16.mxu0 %v5575
        %5680 = vmatpush1.bf16.msra.mxu0 %v5574
        %5681 = vmatprep.subr.bf16.mxu0 %v5579
        %5682 = vmatpush1.bf16.msra.mxu0 %v5578
        %5683 = vmatprep.subr.bf16.mxu0 %v5583
        %5684 = vmatpush1.bf16.msra.mxu0 %v5582
        %5685 = vmatprep.subr.bf16.mxu0 %v5587
        %5686 = vmatpush1.bf16.msra.mxu0 %v5586
        %5687 = vmatprep.subr.bf16.mxu0 %v5591
        %5688 = vmatpush1.bf16.msra.mxu0 %v5590
        %5689 = vmatprep.subr.bf16.mxu0 %v5595
        %5690 = vmatpush1.bf16.msra.mxu0 %v5594
        %5691 = vmatprep.subr.bf16.mxu0 %v5599
        %5692 = vmatpush1.bf16.msra.mxu0 %v5598
        %5693 = vmatprep.subr.bf16.mxu0 %v5603
        %5694 = vmatpush1.bf16.msra.mxu0 %v5602
        %5695 = vmatprep.subr.bf16.mxu0 0
        %5696 = vmatpush1.bf16.msra.mxu0 0
        %5697 = vmatprep.subr.bf16.mxu0 0
        %5698 = vmatpush1.bf16.msra.mxu0 0
        %5699 = vmatprep.subr.bf16.mxu0 0
        %5700 = vmatpush1.bf16.msra.mxu0 0
        %5701 = vmatprep.subr.bf16.mxu0 0
        %5702 = vmatpush1.bf16.msra.mxu0 0
        %5703 = vmatprep.subr.bf16.mxu0 0
        %5704 = vmatpush1.bf16.msra.mxu0 0
        %5705 = vmatprep.subr.bf16.mxu0 0
        %5706 = vmatpush1.bf16.msra.mxu0 0
        %5707 = vmatprep.subr.bf16.mxu0 0
        %5708 = vmatpush1.bf16.msra.mxu0 0
        %5709 = vmatprep.subr.bf16.mxu0 0
        %5710 = vmatpush1.bf16.msra.mxu0 0
        %5711 = vmatprep.mubr.bf16.mxu0 0
        %5712 = vmatmul.mubr.bf16.gmra.mrb[0].mxu0 %v5443
        %v5713 = vpop.f32.mrb[0].mxu0
        %v5714 = vadd.f32 0.0, %v5713
        %v5715 = vpop.f32.mrb[0].mxu0
        %v5716 = vadd.f32 0.0, %v5715
        %v5717 = vpop.f32.mrb[0].mxu0
        %v5718 = vadd.f32 0.0, %v5717
        %v5719 = vpop.f32.mrb[0].mxu0
        %v5720 = vadd.f32 0.0, %v5719
        %5721 = vdwg.mxu0
        %v5722 = vadd.f32 %v5435, %v5671
        %v5723 = vadd.f32 %v5436, %v5673
        %v5724 = vadd.f32 %v5437, %v5714
        %v5725 = vadd.f32 %v5438, %v5716
        %v5726 = vadd.f32 %v5439, %v5675
        %v5727 = vadd.f32 %v5440, %v5677
        %v5728 = vadd.f32 %v5441, %v5718
        %v5729 = vadd.f32 %v5442, %v5720
        %v5730 = vxor.u32 %v5722, 2147483648
        %v5731 = vxor.u32 %v5726, 2147483648
        %v5732 = vmul.f32 %v5730, 1.442695
        %v5733 = vpow.pop %v5732
        %v5734 = vmul.f32 %v5731, 1.442695
        %v5735 = vpow.pop %v5734
        %v5736 = vadd.f32 %v5733, 1.0
        %v5737 = vadd.f32 %v5735, 1.0
        %v5738 = vrcp.pop %v5736
        %v5739 = vmul.f32 1.0, %v5738
        %v5740 = vrcp.pop %v5737
        %v5741 = vmul.f32 1.0, %v5740
        %v5742 = vxor.u32 %v5723, 2147483648
        %v5743 = vxor.u32 %v5727, 2147483648
        %v5744 = vmul.f32 %v5742, 1.442695
        %v5745 = vpow.pop %v5744
        %v5746 = vmul.f32 %v5743, 1.442695
        %v5747 = vpow.pop %v5746
        %v5748 = vadd.f32 %v5745, 1.0
        %v5749 = vadd.f32 %v5747, 1.0
        %v5750 = vrcp.pop %v5748
        %v5751 = vmul.f32 1.0, %v5750
        %v5752 = vrcp.pop %v5749
        %v5753 = vmul.f32 1.0, %v5752
        %v5754 = vtanh.pop %v5724
        %v5755 = vtanh.pop %v5728
        %v5756 = vxor.u32 %v5725, 2147483648
        %v5757 = vxor.u32 %v5729, 2147483648
        %v5758 = vmul.f32 %v5756, 1.442695
        %v5759 = vpow.pop %v5758
        %v5760 = vmul.f32 %v5757, 1.442695
        %v5761 = vpow.pop %v5760
        %v5762 = vadd.f32 %v5759, 1.0
        %v5763 = vadd.f32 %v5761, 1.0
        %v5764 = vrcp.pop %v5762
        %v5765 = vmul.f32 1.0, %v5764
        %v5766 = vrcp.pop %v5763
        %v5767 = vmul.f32 1.0, %v5766
        %v5768 = vmul.f32 %v5751, %v5391
        %v5769 = vmul.f32 %v5753, %v5392
        %v5770 = vmul.f32 %v5739, %v5754
        %v5771 = vmul.f32 %v5741, %v5755
        %v5772 = vadd.f32 %v5768, %v5770
        %v5773 = vadd.f32 %v5769, %v5771
        %v5774 = vtanh.pop %v5772
        %v5775 = vtanh.pop %v5773
        %v5776 = vmul.f32 %v5765, %v5774
        %v5777 = vmul.f32 %v5767, %v5775
        %5778 = vadd.xlane.f32.xlu0 %v5776
        %v5779 = vpop.xlane.xlu0 %5778
        %5780 = vadd.xlane.f32.xlu0 %v5777
        %v5781 = vpop.xlane.xlu0 %5780
        %v5782 = vmul.f32 %v5779, %v1356
        %v5783 = vmul.f32 %v5781, %v1356
        %v5784 = vmul.f32 %v5776, %v5776
        %v5785 = vmul.f32 %v5777, %v5777
        %5786 = vadd.xlane.f32.xlu0 %v5784
        %v5787 = vpop.xlane.xlu0 %5786
        %5788 = vadd.xlane.f32.xlu0 %v5785
        %v5789 = vpop.xlane.xlu0 %5788
        %v5790 = vmul.f32 %v5787, %v1356
        %v5791 = vmul.f32 %v5789, %v1356
        %v5792 = vmul.f32 %v5782, %v5782
        %v5793 = vmul.f32 %v5783, %v5783
        %v5794 = vsub.f32 %v5790, %v5792
        %v5795 = vsub.f32 %v5791, %v5793
        %v5796 = vsub.f32 %v5776, %v5782
        %v5797 = vsub.f32 %v5777, %v5783
        %v5798 = vadd.f32 %v5794, 1e-05
        %v5799 = vadd.f32 %v5795, 1e-05
        %v5800 = vrsqrt.pop %v5798
        %v5801 = vrsqrt.pop %v5799
        %v5802 = vmul.f32 %v5796, %v5800
        %v5803 = vmul.f32 %v5797, %v5801
        %v5804 = vmul.f32 %v5802, %v4663
        %v5805 = vmul.f32 %v5803, %v4663
        %v5806 = vadd.f32 %v5804, %v4671
        %v5807 = vadd.f32 %v5805, %v4671
        %v5808 = vmax.f32 %v5806, 0.0
        %v5809 = vmax.f32 %v5807, 0.0
        %v5810 = vld [vmem:[%s2151] sm:$0xff]
        %v5811 = vld [vmem:[%s2151 + $0x8] sm:$0xff]
        %v5812 = vadd.f32 %v5808, %v5810
        %v5813 = vadd.f32 %v5809, %v5811
        %v5814 = vpack.c.bf16 %v5813, %v5812
        %5815 = vst [vmem:[%s2157] sm:$0xff] %v5814
        %v5816 = vld [vmem:[%s2159] sm:$0xff]
        %v5817 = vld [vmem:[%s2159 + $0x8] sm:$0xff]
        %v5818 = vld [vmem:[%s2159 + $0x10] sm:$0xff]
        %v5819 = vld [vmem:[%s2159 + $0x18] sm:$0xff]
        %v5820 = vld [vmem:[%s2159 + $0x20] sm:$0xff]
        %v5821 = vld [vmem:[%s2159 + $0x28] sm:$0xff]
        %v5822 = vld [vmem:[%s2159 + $0x30] sm:$0xff]
        %v5823 = vld [vmem:[%s2159 + $0x38] sm:$0xff]
        %v5824 = vpack.c.bf16 %v5777, %v5776
        %v5825 = vld [vmem:[%s4681] sm:$0xff]
        %v5826 = vld [vmem:[%s4681 + $0x8] sm:$0xff]
        %v5827 = vld [vmem:[%s4681 + $0x10] sm:$0xff]
        %v5828 = vld [vmem:[%s4681 + $0x18] sm:$0xff]
        %v5829 = vld [vmem:[%s4681 + $0x20] sm:$0xff]
        %v5830 = vld [vmem:[%s4681 + $0x28] sm:$0xff]
        %v5831 = vld [vmem:[%s4681 + $0x30] sm:$0xff]
        %v5832 = vld [vmem:[%s4681 + $0x38] sm:$0xff]
        %v5833 = vld [vmem:[%s4681 + $0x40] sm:$0xff]
        %v5834 = vld [vmem:[%s4681 + $0x48] sm:$0xff]
        %v5835 = vld [vmem:[%s4681 + $0x50] sm:$0xff]
        %v5836 = vld [vmem:[%s4681 + $0x58] sm:$0xff]
        %v5837 = vld [vmem:[%s4681 + $0x60] sm:$0xff]
        %v5838 = vld [vmem:[%s4681 + $0x68] sm:$0xff]
        %v5839 = vld [vmem:[%s4681 + $0x70] sm:$0xff]
        %v5840 = vld [vmem:[%s4681 + $0x78] sm:$0xff]
        %v5841 = vld [vmem:[%s4681 + $0x80] sm:$0xff]
        %v5842 = vld [vmem:[%s4681 + $0x88] sm:$0xff]
        %v5843 = vld [vmem:[%s4681 + $0x90] sm:$0xff]
        %v5844 = vld [vmem:[%s4681 + $0x98] sm:$0xff]
        %v5845 = vld [vmem:[%s4681 + $0xa0] sm:$0xff]
        %v5846 = vld [vmem:[%s4681 + $0xa8] sm:$0xff]
        %v5847 = vld [vmem:[%s4681 + $0xb0] sm:$0xff]
        %v5848 = vld [vmem:[%s4681 + $0xb8] sm:$0xff]
        %v5849 = vld [vmem:[%s4681 + $0xc0] sm:$0xff]
        %v5850 = vld [vmem:[%s4681 + $0xc8] sm:$0xff]
        %v5851 = vld [vmem:[%s4681 + $0xd0] sm:$0xff]
        %v5852 = vld [vmem:[%s4681 + $0xd8] sm:$0xff]
        %v5853 = vld [vmem:[%s4681 + $0xe0] sm:$0xff]
        %v5854 = vld [vmem:[%s4681 + $0xe8] sm:$0xff]
        %v5855 = vld [vmem:[%s4681 + $0xf0] sm:$0xff]
        %v5856 = vld [vmem:[%s4681 + $0xf8] sm:$0xff]
        %v5889 = vunpack.c.l.b16 %v5825
        %v5890 = vunpack.c.h.b16 %v5825
        %v5891 = vunpack.c.l.b16 %v5826
        %v5892 = vunpack.c.h.b16 %v5826
        %v5893 = vunpack.c.l.b16 %v5827
        %v5894 = vunpack.c.h.b16 %v5827
        %v5895 = vunpack.c.l.b16 %v5828
        %v5896 = vunpack.c.h.b16 %v5828
        %v5897 = vunpack.c.l.b16 %v5829
        %v5898 = vunpack.c.h.b16 %v5829
        %v5899 = vunpack.c.l.b16 %v5830
        %v5900 = vunpack.c.h.b16 %v5830
        %v5901 = vunpack.c.l.b16 %v5831
        %v5902 = vunpack.c.h.b16 %v5831
        %v5903 = vunpack.c.l.b16 %v5832
        %v5904 = vunpack.c.h.b16 %v5832
        %v5905 = vunpack.c.l.b16 %v5833
        %v5906 = vunpack.c.h.b16 %v5833
        %v5907 = vunpack.c.l.b16 %v5834
        %v5908 = vunpack.c.h.b16 %v5834
        %v5909 = vunpack.c.l.b16 %v5835
        %v5910 = vunpack.c.h.b16 %v5835
        %v5911 = vunpack.c.l.b16 %v5836
        %v5912 = vunpack.c.h.b16 %v5836
        %v5913 = vunpack.c.l.b16 %v5837
        %v5914 = vunpack.c.h.b16 %v5837
        %v5915 = vunpack.c.l.b16 %v5838
        %v5916 = vunpack.c.h.b16 %v5838
        %v5917 = vunpack.c.l.b16 %v5839
        %v5918 = vunpack.c.h.b16 %v5839
        %v5919 = vunpack.c.l.b16 %v5840
        %v5920 = vunpack.c.h.b16 %v5840
        %v5921 = vunpack.c.l.b16 %v5841
        %v5922 = vunpack.c.h.b16 %v5841
        %v5923 = vunpack.c.l.b16 %v5842
        %v5924 = vunpack.c.h.b16 %v5842
        %v5925 = vunpack.c.l.b16 %v5843
        %v5926 = vunpack.c.h.b16 %v5843
        %v5927 = vunpack.c.l.b16 %v5844
        %v5928 = vunpack.c.h.b16 %v5844
        %v5929 = vunpack.c.l.b16 %v5845
        %v5930 = vunpack.c.h.b16 %v5845
        %v5931 = vunpack.c.l.b16 %v5846
        %v5932 = vunpack.c.h.b16 %v5846
        %v5933 = vunpack.c.l.b16 %v5847
        %v5934 = vunpack.c.h.b16 %v5847
        %v5935 = vunpack.c.l.b16 %v5848
        %v5936 = vunpack.c.h.b16 %v5848
        %v5937 = vunpack.c.l.b16 %v5849
        %v5938 = vunpack.c.h.b16 %v5849
        %v5939 = vunpack.c.l.b16 %v5850
        %v5940 = vunpack.c.h.b16 %v5850
        %v5941 = vunpack.c.l.b16 %v5851
        %v5942 = vunpack.c.h.b16 %v5851
        %v5943 = vunpack.c.l.b16 %v5852
        %v5944 = vunpack.c.h.b16 %v5852
        %v5945 = vunpack.c.l.b16 %v5853
        %v5946 = vunpack.c.h.b16 %v5853
        %v5947 = vunpack.c.l.b16 %v5854
        %v5948 = vunpack.c.h.b16 %v5854
        %v5949 = vunpack.c.l.b16 %v5855
        %v5950 = vunpack.c.h.b16 %v5855
        %v5951 = vunpack.c.l.b16 %v5856
        %v5952 = vunpack.c.h.b16 %v5856
        %v5953 = vpack.c.b16 %v5893, %v5889
        %v5954 = vpack.c.b16 %v5894, %v5890
        %v5955 = vpack.c.b16 %v5895, %v5891
        %v5956 = vpack.c.b16 %v5896, %v5892
        %v5957 = vpack.c.b16 %v5901, %v5897
        %v5958 = vpack.c.b16 %v5902, %v5898
        %v5959 = vpack.c.b16 %v5903, %v5899
        %v5960 = vpack.c.b16 %v5904, %v5900
        %v5961 = vpack.c.b16 %v5909, %v5905
        %v5962 = vpack.c.b16 %v5910, %v5906
        %v5963 = vpack.c.b16 %v5911, %v5907
        %v5964 = vpack.c.b16 %v5912, %v5908
        %v5965 = vpack.c.b16 %v5917, %v5913
        %v5966 = vpack.c.b16 %v5918, %v5914
        %v5967 = vpack.c.b16 %v5919, %v5915
        %v5968 = vpack.c.b16 %v5920, %v5916
        %v5969 = vpack.c.b16 %v5925, %v5921
        %v5970 = vpack.c.b16 %v5926, %v5922
        %v5971 = vpack.c.b16 %v5927, %v5923
        %v5972 = vpack.c.b16 %v5928, %v5924
        %v5973 = vpack.c.b16 %v5933, %v5929
        %v5974 = vpack.c.b16 %v5934, %v5930
        %v5975 = vpack.c.b16 %v5935, %v5931
        %v5976 = vpack.c.b16 %v5936, %v5932
        %v5977 = vpack.c.b16 %v5941, %v5937
        %v5978 = vpack.c.b16 %v5942, %v5938
        %v5979 = vpack.c.b16 %v5943, %v5939
        %v5980 = vpack.c.b16 %v5944, %v5940
        %v5981 = vpack.c.b16 %v5949, %v5945
        %v5982 = vpack.c.b16 %v5950, %v5946
        %v5983 = vpack.c.b16 %v5951, %v5947
        %v5984 = vpack.c.b16 %v5952, %v5948
        %6017 = vmatprep.subr.bf16.mxu0 %v5954
        %6018 = vmatpush1.bf16.msra.mxu0 %v5953
        %6019 = vmatprep.subr.bf16.mxu0 %v5958
        %6020 = vmatpush1.bf16.msra.mxu0 %v5957
        %6021 = vmatprep.subr.bf16.mxu0 %v5962
        %6022 = vmatpush1.bf16.msra.mxu0 %v5961
        %6023 = vmatprep.subr.bf16.mxu0 %v5966
        %6024 = vmatpush1.bf16.msra.mxu0 %v5965
        %6025 = vmatprep.subr.bf16.mxu0 %v5970
        %6026 = vmatpush1.bf16.msra.mxu0 %v5969
        %6027 = vmatprep.subr.bf16.mxu0 %v5974
        %6028 = vmatpush1.bf16.msra.mxu0 %v5973
        %6029 = vmatprep.subr.bf16.mxu0 %v5978
        %6030 = vmatpush1.bf16.msra.mxu0 %v5977
        %6031 = vmatprep.subr.bf16.mxu0 %v5982
        %6032 = vmatpush1.bf16.msra.mxu0 %v5981
        %6033 = vmatprep.subr.bf16.mxu0 0
        %6034 = vmatpush1.bf16.msra.mxu0 0
        %6035 = vmatprep.subr.bf16.mxu0 0
        %6036 = vmatpush1.bf16.msra.mxu0 0
        %6037 = vmatprep.subr.bf16.mxu0 0
        %6038 = vmatpush1.bf16.msra.mxu0 0
        %6039 = vmatprep.subr.bf16.mxu0 0
        %6040 = vmatpush1.bf16.msra.mxu0 0
        %6041 = vmatprep.subr.bf16.mxu0 0
        %6042 = vmatpush1.bf16.msra.mxu0 0
        %6043 = vmatprep.subr.bf16.mxu0 0
        %6044 = vmatpush1.bf16.msra.mxu0 0
        %6045 = vmatprep.subr.bf16.mxu0 0
        %6046 = vmatpush1.bf16.msra.mxu0 0
        %6047 = vmatprep.subr.bf16.mxu0 0
        %6048 = vmatpush1.bf16.msra.mxu0 0
        %6049 = vmatprep.mubr.bf16.mxu0 0
        %6050 = vmatmul.mubr.bf16.gmra.mrb[0].mxu0 %v5824
        %v6051 = vpop.f32.mrb[0].mxu0
        %v6052 = vadd.f32 0.0, %v6051
        %v6053 = vpop.f32.mrb[0].mxu0
        %v6054 = vadd.f32 0.0, %v6053
        %v6055 = vpop.f32.mrb[0].mxu0
        %v6056 = vadd.f32 0.0, %v6055
        %v6057 = vpop.f32.mrb[0].mxu0
        %v6058 = vadd.f32 0.0, %v6057
        %6059 = vdwg.mxu0
        %6060 = vmatprep.subr.bf16.mxu0 %v5956
        %6061 = vmatpush1.bf16.msra.mxu0 %v5955
        %6062 = vmatprep.subr.bf16.mxu0 %v5960
        %6063 = vmatpush1.bf16.msra.mxu0 %v5959
        %6064 = vmatprep.subr.bf16.mxu0 %v5964
        %6065 = vmatpush1.bf16.msra.mxu0 %v5963
        %6066 = vmatprep.subr.bf16.mxu0 %v5968
        %6067 = vmatpush1.bf16.msra.mxu0 %v5967
        %6068 = vmatprep.subr.bf16.mxu0 %v5972
        %6069 = vmatpush1.bf16.msra.mxu0 %v5971
        %6070 = vmatprep.subr.bf16.mxu0 %v5976
        %6071 = vmatpush1.bf16.msra.mxu0 %v5975
        %6072 = vmatprep.subr.bf16.mxu0 %v5980
        %6073 = vmatpush1.bf16.msra.mxu0 %v5979
        %6074 = vmatprep.subr.bf16.mxu0 %v5984
        %6075 = vmatpush1.bf16.msra.mxu0 %v5983
        %6076 = vmatprep.subr.bf16.mxu0 0
        %6077 = vmatpush1.bf16.msra.mxu0 0
        %6078 = vmatprep.subr.bf16.mxu0 0
        %6079 = vmatpush1.bf16.msra.mxu0 0
        %6080 = vmatprep.subr.bf16.mxu0 0
        %6081 = vmatpush1.bf16.msra.mxu0 0
        %6082 = vmatprep.subr.bf16.mxu0 0
        %6083 = vmatpush1.bf16.msra.mxu0 0
        %6084 = vmatprep.subr.bf16.mxu0 0
        %6085 = vmatpush1.bf16.msra.mxu0 0
        %6086 = vmatprep.subr.bf16.mxu0 0
        %6087 = vmatpush1.bf16.msra.mxu0 0
        %6088 = vmatprep.subr.bf16.mxu0 0
        %6089 = vmatpush1.bf16.msra.mxu0 0
        %6090 = vmatprep.subr.bf16.mxu0 0
        %6091 = vmatpush1.bf16.msra.mxu0 0
        %6092 = vmatprep.mubr.bf16.mxu0 0
        %6093 = vmatmul.mubr.bf16.gmra.mrb[0].mxu0 %v5824
        %v6094 = vpop.f32.mrb[0].mxu0
        %v6095 = vadd.f32 0.0, %v6094
        %v6096 = vpop.f32.mrb[0].mxu0
        %v6097 = vadd.f32 0.0, %v6096
        %v6098 = vpop.f32.mrb[0].mxu0
        %v6099 = vadd.f32 0.0, %v6098
        %v6100 = vpop.f32.mrb[0].mxu0
        %v6101 = vadd.f32 0.0, %v6100
        %6102 = vdwg.mxu0
        %v6103 = vadd.f32 %v5816, %v6052
        %v6104 = vadd.f32 %v5817, %v6054
        %v6105 = vadd.f32 %v5818, %v6095
        %v6106 = vadd.f32 %v5819, %v6097
        %v6107 = vadd.f32 %v5820, %v6056
        %v6108 = vadd.f32 %v5821, %v6058
        %v6109 = vadd.f32 %v5822, %v6099
        %v6110 = vadd.f32 %v5823, %v6101
        %v6111 = vxor.u32 %v6103, 2147483648
        %v6112 = vxor.u32 %v6107, 2147483648
        %v6113 = vmul.f32 %v6111, 1.442695
        %v6114 = vpow.pop %v6113
        %v6115 = vmul.f32 %v6112, 1.442695
        %v6116 = vpow.pop %v6115
        %v6117 = vadd.f32 %v6114, 1.0
        %v6118 = vadd.f32 %v6116, 1.0
        %v6119 = vrcp.pop %v6117
        %v6120 = vmul.f32 1.0, %v6119
        %v6121 = vrcp.pop %v6118
        %v6122 = vmul.f32 1.0, %v6121
        %v6123 = vxor.u32 %v6104, 2147483648
        %v6124 = vxor.u32 %v6108, 2147483648
        %v6125 = vmul.f32 %v6123, 1.442695
        %v6126 = vpow.pop %v6125
        %v6127 = vmul.f32 %v6124, 1.442695
        %v6128 = vpow.pop %v6127
        %v6129 = vadd.f32 %v6126, 1.0
        %v6130 = vadd.f32 %v6128, 1.0
        %v6131 = vrcp.pop %v6129
        %v6132 = vmul.f32 1.0, %v6131
        %v6133 = vrcp.pop %v6130
        %v6134 = vmul.f32 1.0, %v6133
        %v6135 = vtanh.pop %v6105
        %v6136 = vtanh.pop %v6109
        %v6137 = vxor.u32 %v6106, 2147483648
        %v6138 = vxor.u32 %v6110, 2147483648
        %v6139 = vmul.f32 %v6137, 1.442695
        %v6140 = vpow.pop %v6139
        %v6141 = vmul.f32 %v6138, 1.442695
        %v6142 = vpow.pop %v6141
        %v6143 = vadd.f32 %v6140, 1.0
        %v6144 = vadd.f32 %v6142, 1.0
        %v6145 = vrcp.pop %v6143
        %v6146 = vmul.f32 1.0, %v6145
        %v6147 = vrcp.pop %v6144
        %v6148 = vmul.f32 1.0, %v6147
        %v6149 = vmul.f32 %v6132, %v5772
        %v6150 = vmul.f32 %v6134, %v5773
        %v6151 = vmul.f32 %v6120, %v6135
        %v6152 = vmul.f32 %v6122, %v6136
        %v6153 = vadd.f32 %v6149, %v6151
        %v6154 = vadd.f32 %v6150, %v6152
        %v6155 = vtanh.pop %v6153
        %v6156 = vtanh.pop %v6154
        %v6157 = vmul.f32 %v6146, %v6155
        %v6158 = vmul.f32 %v6148, %v6156
        %6159 = vadd.xlane.f32.xlu0 %v6157
        %v6160 = vpop.xlane.xlu0 %6159
        %6161 = vadd.xlane.f32.xlu0 %v6158
        %v6162 = vpop.xlane.xlu0 %6161
        %v6163 = vmul.f32 %v6160, %v1356
        %v6164 = vmul.f32 %v6162, %v1356
        %v6165 = vmul.f32 %v6157, %v6157
        %v6166 = vmul.f32 %v6158, %v6158
        %6167 = vadd.xlane.f32.xlu0 %v6165
        %v6168 = vpop.xlane.xlu0 %6167
        %6169 = vadd.xlane.f32.xlu0 %v6166
        %v6170 = vpop.xlane.xlu0 %6169
        %v6171 = vmul.f32 %v6168, %v1356
        %v6172 = vmul.f32 %v6170, %v1356
        %v6173 = vmul.f32 %v6163, %v6163
        %v6174 = vmul.f32 %v6164, %v6164
        %v6175 = vsub.f32 %v6171, %v6173
        %v6176 = vsub.f32 %v6172, %v6174
        %v6177 = vsub.f32 %v6157, %v6163
        %v6178 = vsub.f32 %v6158, %v6164
        %v6179 = vadd.f32 %v6175, 1e-05
        %v6180 = vadd.f32 %v6176, 1e-05
        %v6181 = vrsqrt.pop %v6179
        %v6182 = vrsqrt.pop %v6180
        %v6183 = vmul.f32 %v6177, %v6181
        %v6184 = vmul.f32 %v6178, %v6182
        %v6185 = vmul.f32 %v6183, %v4663
        %v6186 = vmul.f32 %v6184, %v4663
        %v6187 = vadd.f32 %v6185, %v4671
        %v6188 = vadd.f32 %v6186, %v4671
        %v6189 = vmax.f32 %v6187, 0.0
        %v6190 = vmax.f32 %v6188, 0.0
        %v6191 = vld [vmem:[%s2535] sm:$0xff]
        %v6192 = vld [vmem:[%s2535 + $0x8] sm:$0xff]
        %v6193 = vadd.f32 %v6189, %v6191
        %v6194 = vadd.f32 %v6190, %v6192
        %v6195 = vpack.c.bf16 %v6194, %v6193
        %6196 = vst [vmem:[%s2541] sm:$0xff] %v6195
        %v6197 = vld [vmem:[%s2543] sm:$0xff]
        %v6198 = vld [vmem:[%s2543 + $0x8] sm:$0xff]
        %v6199 = vld [vmem:[%s2543 + $0x10] sm:$0xff]
        %v6200 = vld [vmem:[%s2543 + $0x18] sm:$0xff]
        %v6201 = vld [vmem:[%s2543 + $0x20] sm:$0xff]
        %v6202 = vld [vmem:[%s2543 + $0x28] sm:$0xff]
        %v6203 = vld [vmem:[%s2543 + $0x30] sm:$0xff]
        %v6204 = vld [vmem:[%s2543 + $0x38] sm:$0xff]
        %v6205 = vpack.c.bf16 %v6158, %v6157
        %v6206 = vld [vmem:[%s4681] sm:$0xff]
        %v6207 = vld [vmem:[%s4681 + $0x8] sm:$0xff]
        %v6208 = vld [vmem:[%s4681 + $0x10] sm:$0xff]
        %v6209 = vld [vmem:[%s4681 + $0x18] sm:$0xff]
        %v6210 = vld [vmem:[%s4681 + $0x20] sm:$0xff]
        %v6211 = vld [vmem:[%s4681 + $0x28] sm:$0xff]
        %v6212 = vld [vmem:[%s4681 + $0x30] sm:$0xff]
        %v6213 = vld [vmem:[%s4681 + $0x38] sm:$0xff]
        %v6214 = vld [vmem:[%s4681 + $0x40] sm:$0xff]
        %v6215 = vld [vmem:[%s4681 + $0x48] sm:$0xff]
        %v6216 = vld [vmem:[%s4681 + $0x50] sm:$0xff]
        %v6217 = vld [vmem:[%s4681 + $0x58] sm:$0xff]
        %v6218 = vld [vmem:[%s4681 + $0x60] sm:$0xff]
        %v6219 = vld [vmem:[%s4681 + $0x68] sm:$0xff]
        %v6220 = vld [vmem:[%s4681 + $0x70] sm:$0xff]
        %v6221 = vld [vmem:[%s4681 + $0x78] sm:$0xff]
        %v6222 = vld [vmem:[%s4681 + $0x80] sm:$0xff]
        %v6223 = vld [vmem:[%s4681 + $0x88] sm:$0xff]
        %v6224 = vld [vmem:[%s4681 + $0x90] sm:$0xff]
        %v6225 = vld [vmem:[%s4681 + $0x98] sm:$0xff]
        %v6226 = vld [vmem:[%s4681 + $0xa0] sm:$0xff]
        %v6227 = vld [vmem:[%s4681 + $0xa8] sm:$0xff]
        %v6228 = vld [vmem:[%s4681 + $0xb0] sm:$0xff]
        %v6229 = vld [vmem:[%s4681 + $0xb8] sm:$0xff]
        %v6230 = vld [vmem:[%s4681 + $0xc0] sm:$0xff]
        %v6231 = vld [vmem:[%s4681 + $0xc8] sm:$0xff]
        %v6232 = vld [vmem:[%s4681 + $0xd0] sm:$0xff]
        %v6233 = vld [vmem:[%s4681 + $0xd8] sm:$0xff]
        %v6234 = vld [vmem:[%s4681 + $0xe0] sm:$0xff]
        %v6235 = vld [vmem:[%s4681 + $0xe8] sm:$0xff]
        %v6236 = vld [vmem:[%s4681 + $0xf0] sm:$0xff]
        %v6237 = vld [vmem:[%s4681 + $0xf8] sm:$0xff]
        %v6270 = vunpack.c.l.b16 %v6206
        %v6271 = vunpack.c.h.b16 %v6206
        %v6272 = vunpack.c.l.b16 %v6207
        %v6273 = vunpack.c.h.b16 %v6207
        %v6274 = vunpack.c.l.b16 %v6208
        %v6275 = vunpack.c.h.b16 %v6208
        %v6276 = vunpack.c.l.b16 %v6209
        %v6277 = vunpack.c.h.b16 %v6209
        %v6278 = vunpack.c.l.b16 %v6210
        %v6279 = vunpack.c.h.b16 %v6210
        %v6280 = vunpack.c.l.b16 %v6211
        %v6281 = vunpack.c.h.b16 %v6211
        %v6282 = vunpack.c.l.b16 %v6212
        %v6283 = vunpack.c.h.b16 %v6212
        %v6284 = vunpack.c.l.b16 %v6213
        %v6285 = vunpack.c.h.b16 %v6213
        %v6286 = vunpack.c.l.b16 %v6214
        %v6287 = vunpack.c.h.b16 %v6214
        %v6288 = vunpack.c.l.b16 %v6215
        %v6289 = vunpack.c.h.b16 %v6215
        %v6290 = vunpack.c.l.b16 %v6216
        %v6291 = vunpack.c.h.b16 %v6216
        %v6292 = vunpack.c.l.b16 %v6217
        %v6293 = vunpack.c.h.b16 %v6217
        %v6294 = vunpack.c.l.b16 %v6218
        %v6295 = vunpack.c.h.b16 %v6218
        %v6296 = vunpack.c.l.b16 %v6219
        %v6297 = vunpack.c.h.b16 %v6219
        %v6298 = vunpack.c.l.b16 %v6220
        %v6299 = vunpack.c.h.b16 %v6220
        %v6300 = vunpack.c.l.b16 %v6221
        %v6301 = vunpack.c.h.b16 %v6221
        %v6302 = vunpack.c.l.b16 %v6222
        %v6303 = vunpack.c.h.b16 %v6222
        %v6304 = vunpack.c.l.b16 %v6223
        %v6305 = vunpack.c.h.b16 %v6223
        %v6306 = vunpack.c.l.b16 %v6224
        %v6307 = vunpack.c.h.b16 %v6224
        %v6308 = vunpack.c.l.b16 %v6225
        %v6309 = vunpack.c.h.b16 %v6225
        %v6310 = vunpack.c.l.b16 %v6226
        %v6311 = vunpack.c.h.b16 %v6226
        %v6312 = vunpack.c.l.b16 %v6227
        %v6313 = vunpack.c.h.b16 %v6227
        %v6314 = vunpack.c.l.b16 %v6228
        %v6315 = vunpack.c.h.b16 %v6228
        %v6316 = vunpack.c.l.b16 %v6229
        %v6317 = vunpack.c.h.b16 %v6229
        %v6318 = vunpack.c.l.b16 %v6230
        %v6319 = vunpack.c.h.b16 %v6230
        %v6320 = vunpack.c.l.b16 %v6231
        %v6321 = vunpack.c.h.b16 %v6231
        %v6322 = vunpack.c.l.b16 %v6232
        %v6323 = vunpack.c.h.b16 %v6232
        %v6324 = vunpack.c.l.b16 %v6233
        %v6325 = vunpack.c.h.b16 %v6233
        %v6326 = vunpack.c.l.b16 %v6234
        %v6327 = vunpack.c.h.b16 %v6234
        %v6328 = vunpack.c.l.b16 %v6235
        %v6329 = vunpack.c.h.b16 %v6235
        %v6330 = vunpack.c.l.b16 %v6236
        %v6331 = vunpack.c.h.b16 %v6236
        %v6332 = vunpack.c.l.b16 %v6237
        %v6333 = vunpack.c.h.b16 %v6237
        %v6334 = vpack.c.b16 %v6274, %v6270
        %v6335 = vpack.c.b16 %v6275, %v6271
        %v6336 = vpack.c.b16 %v6276, %v6272
        %v6337 = vpack.c.b16 %v6277, %v6273
        %v6338 = vpack.c.b16 %v6282, %v6278
        %v6339 = vpack.c.b16 %v6283, %v6279
        %v6340 = vpack.c.b16 %v6284, %v6280
        %v6341 = vpack.c.b16 %v6285, %v6281
        %v6342 = vpack.c.b16 %v6290, %v6286
        %v6343 = vpack.c.b16 %v6291, %v6287
        %v6344 = vpack.c.b16 %v6292, %v6288
        %v6345 = vpack.c.b16 %v6293, %v6289
        %v6346 = vpack.c.b16 %v6298, %v6294
        %v6347 = vpack.c.b16 %v6299, %v6295
        %v6348 = vpack.c.b16 %v6300, %v6296
        %v6349 = vpack.c.b16 %v6301, %v6297
        %v6350 = vpack.c.b16 %v6306, %v6302
        %v6351 = vpack.c.b16 %v6307, %v6303
        %v6352 = vpack.c.b16 %v6308, %v6304
        %v6353 = vpack.c.b16 %v6309, %v6305
        %v6354 = vpack.c.b16 %v6314, %v6310
        %v6355 = vpack.c.b16 %v6315, %v6311
        %v6356 = vpack.c.b16 %v6316, %v6312
        %v6357 = vpack.c.b16 %v6317, %v6313
        %v6358 = vpack.c.b16 %v6322, %v6318
        %v6359 = vpack.c.b16 %v6323, %v6319
        %v6360 = vpack.c.b16 %v6324, %v6320
        %v6361 = vpack.c.b16 %v6325, %v6321
        %v6362 = vpack.c.b16 %v6330, %v6326
        %v6363 = vpack.c.b16 %v6331, %v6327
        %v6364 = vpack.c.b16 %v6332, %v6328
        %v6365 = vpack.c.b16 %v6333, %v6329
        %6398 = vmatprep.subr.bf16.mxu0 %v6335
        %6399 = vmatpush1.bf16.msra.mxu0 %v6334
        %6400 = vmatprep.subr.bf16.mxu0 %v6339
        %6401 = vmatpush1.bf16.msra.mxu0 %v6338
        %6402 = vmatprep.subr.bf16.mxu0 %v6343
        %6403 = vmatpush1.bf16.msra.mxu0 %v6342
        %6404 = vmatprep.subr.bf16.mxu0 %v6347
        %6405 = vmatpush1.bf16.msra.mxu0 %v6346
        %6406 = vmatprep.subr.bf16.mxu0 %v6351
        %6407 = vmatpush1.bf16.msra.mxu0 %v6350
        %6408 = vmatprep.subr.bf16.mxu0 %v6355
        %6409 = vmatpush1.bf16.msra.mxu0 %v6354
        %6410 = vmatprep.subr.bf16.mxu0 %v6359
        %6411 = vmatpush1.bf16.msra.mxu0 %v6358
        %6412 = vmatprep.subr.bf16.mxu0 %v6363
        %6413 = vmatpush1.bf16.msra.mxu0 %v6362
        %6414 = vmatprep.subr.bf16.mxu0 0
        %6415 = vmatpush1.bf16.msra.mxu0 0
        %6416 = vmatprep.subr.bf16.mxu0 0
        %6417 = vmatpush1.bf16.msra.mxu0 0
        %6418 = vmatprep.subr.bf16.mxu0 0
        %6419 = vmatpush1.bf16.msra.mxu0 0
        %6420 = vmatprep.subr.bf16.mxu0 0
        %6421 = vmatpush1.bf16.msra.mxu0 0
        %6422 = vmatprep.subr.bf16.mxu0 0
        %6423 = vmatpush1.bf16.msra.mxu0 0
        %6424 = vmatprep.subr.bf16.mxu0 0
        %6425 = vmatpush1.bf16.msra.mxu0 0
        %6426 = vmatprep.subr.bf16.mxu0 0
        %6427 = vmatpush1.bf16.msra.mxu0 0
        %6428 = vmatprep.subr.bf16.mxu0 0
        %6429 = vmatpush1.bf16.msra.mxu0 0
        %6430 = vmatprep.mubr.bf16.mxu0 0
        %6431 = vmatmul.mubr.bf16.gmra.mrb[0].mxu0 %v6205
        %v6432 = vpop.f32.mrb[0].mxu0
        %v6433 = vadd.f32 0.0, %v6432
        %v6434 = vpop.f32.mrb[0].mxu0
        %v6435 = vadd.f32 0.0, %v6434
        %v6436 = vpop.f32.mrb[0].mxu0
        %v6437 = vadd.f32 0.0, %v6436
        %v6438 = vpop.f32.mrb[0].mxu0
        %v6439 = vadd.f32 0.0, %v6438
        %6440 = vdwg.mxu0
        %6441 = vmatprep.subr.bf16.mxu0 %v6337
        %6442 = vmatpush1.bf16.msra.mxu0 %v6336
        %6443 = vmatprep.subr.bf16.mxu0 %v6341
        %6444 = vmatpush1.bf16.msra.mxu0 %v6340
        %6445 = vmatprep.subr.bf16.mxu0 %v6345
        %6446 = vmatpush1.bf16.msra.mxu0 %v6344
        %6447 = vmatprep.subr.bf16.mxu0 %v6349
        %6448 = vmatpush1.bf16.msra.mxu0 %v6348
        %6449 = vmatprep.subr.bf16.mxu0 %v6353
        %6450 = vmatpush1.bf16.msra.mxu0 %v6352
        %6451 = vmatprep.subr.bf16.mxu0 %v6357
        %6452 = vmatpush1.bf16.msra.mxu0 %v6356
        %6453 = vmatprep.subr.bf16.mxu0 %v6361
        %6454 = vmatpush1.bf16.msra.mxu0 %v6360
        %6455 = vmatprep.subr.bf16.mxu0 %v6365
        %6456 = vmatpush1.bf16.msra.mxu0 %v6364
        %6457 = vmatprep.subr.bf16.mxu0 0
        %6458 = vmatpush1.bf16.msra.mxu0 0
        %6459 = vmatprep.subr.bf16.mxu0 0
        %6460 = vmatpush1.bf16.msra.mxu0 0
        %6461 = vmatprep.subr.bf16.mxu0 0
        %6462 = vmatpush1.bf16.msra.mxu0 0
        %6463 = vmatprep.subr.bf16.mxu0 0
        %6464 = vmatpush1.bf16.msra.mxu0 0
        %6465 = vmatprep.subr.bf16.mxu0 0
        %6466 = vmatpush1.bf16.msra.mxu0 0
        %6467 = vmatprep.subr.bf16.mxu0 0
        %6468 = vmatpush1.bf16.msra.mxu0 0
        %6469 = vmatprep.subr.bf16.mxu0 0
        %6470 = vmatpush1.bf16.msra.mxu0 0
        %6471 = vmatprep.subr.bf16.mxu0 0
        %6472 = vmatpush1.bf16.msra.mxu0 0
        %6473 = vmatprep.mubr.bf16.mxu0 0
        %6474 = vmatmul.mubr.bf16.gmra.mrb[0].mxu0 %v6205
        %v6475 = vpop.f32.mrb[0].mxu0
        %v6476 = vadd.f32 0.0, %v6475
        %v6477 = vpop.f32.mrb[0].mxu0
        %v6478 = vadd.f32 0.0, %v6477
        %v6479 = vpop.f32.mrb[0].mxu0
        %v6480 = vadd.f32 0.0, %v6479
        %v6481 = vpop.f32.mrb[0].mxu0
        %v6482 = vadd.f32 0.0, %v6481
        %6483 = vdwg.mxu0
        %v6484 = vadd.f32 %v6197, %v6433
        %v6485 = vadd.f32 %v6198, %v6435
        %v6486 = vadd.f32 %v6199, %v6476
        %v6487 = vadd.f32 %v6200, %v6478
        %v6488 = vadd.f32 %v6201, %v6437
        %v6489 = vadd.f32 %v6202, %v6439
        %v6490 = vadd.f32 %v6203, %v6480
        %v6491 = vadd.f32 %v6204, %v6482
        %v6492 = vxor.u32 %v6484, 2147483648
        %v6493 = vxor.u32 %v6488, 2147483648
        %v6494 = vmul.f32 %v6492, 1.442695
        %v6495 = vpow.pop %v6494
        %v6496 = vmul.f32 %v6493, 1.442695
        %v6497 = vpow.pop %v6496
        %v6498 = vadd.f32 %v6495, 1.0
        %v6499 = vadd.f32 %v6497, 1.0
        %v6500 = vrcp.pop %v6498
        %v6501 = vmul.f32 1.0, %v6500
        %v6502 = vrcp.pop %v6499
        %v6503 = vmul.f32 1.0, %v6502
        %v6504 = vxor.u32 %v6485, 2147483648
        %v6505 = vxor.u32 %v6489, 2147483648
        %v6506 = vmul.f32 %v6504, 1.442695
        %v6507 = vpow.pop %v6506
        %v6508 = vmul.f32 %v6505, 1.442695
        %v6509 = vpow.pop %v6508
        %v6510 = vadd.f32 %v6507, 1.0
        %v6511 = vadd.f32 %v6509, 1.0
        %v6512 = vrcp.pop %v6510
        %v6513 = vmul.f32 1.0, %v6512
        %v6514 = vrcp.pop %v6511
        %v6515 = vmul.f32 1.0, %v6514
        %v6516 = vtanh.pop %v6486
        %v6517 = vtanh.pop %v6490
        %v6518 = vxor.u32 %v6487, 2147483648
        %v6519 = vxor.u32 %v6491, 2147483648
        %v6520 = vmul.f32 %v6518, 1.442695
        %v6521 = vpow.pop %v6520
        %v6522 = vmul.f32 %v6519, 1.442695
        %v6523 = vpow.pop %v6522
        %v6524 = vadd.f32 %v6521, 1.0
        %v6525 = vadd.f32 %v6523, 1.0
        %v6526 = vrcp.pop %v6524
        %v6527 = vmul.f32 1.0, %v6526
        %v6528 = vrcp.pop %v6525
        %v6529 = vmul.f32 1.0, %v6528
        %v6530 = vmul.f32 %v6513, %v6153
        %v6531 = vmul.f32 %v6515, %v6154
        %v6532 = vmul.f32 %v6501, %v6516
        %v6533 = vmul.f32 %v6503, %v6517
        %v6534 = vadd.f32 %v6530, %v6532
        %v6535 = vadd.f32 %v6531, %v6533
        %v6536 = vtanh.pop %v6534
        %v6537 = vtanh.pop %v6535
        %v6538 = vmul.f32 %v6527, %v6536
        %v6539 = vmul.f32 %v6529, %v6537
        %6540 = vadd.xlane.f32.xlu0 %v6538
        %v6541 = vpop.xlane.xlu0 %6540
        %6542 = vadd.xlane.f32.xlu0 %v6539
        %v6543 = vpop.xlane.xlu0 %6542
        %v6544 = vmul.f32 %v6541, %v1356
        %v6545 = vmul.f32 %v6543, %v1356
        %v6546 = vmul.f32 %v6538, %v6538
        %v6547 = vmul.f32 %v6539, %v6539
        %6548 = vadd.xlane.f32.xlu0 %v6546
        %v6549 = vpop.xlane.xlu0 %6548
        %6550 = vadd.xlane.f32.xlu0 %v6547
        %v6551 = vpop.xlane.xlu0 %6550
        %v6552 = vmul.f32 %v6549, %v1356
        %v6553 = vmul.f32 %v6551, %v1356
        %v6554 = vmul.f32 %v6544, %v6544
        %v6555 = vmul.f32 %v6545, %v6545
        %v6556 = vsub.f32 %v6552, %v6554
        %v6557 = vsub.f32 %v6553, %v6555
        %v6558 = vsub.f32 %v6538, %v6544
        %v6559 = vsub.f32 %v6539, %v6545
        %v6560 = vadd.f32 %v6556, 1e-05
        %v6561 = vadd.f32 %v6557, 1e-05
        %v6562 = vrsqrt.pop %v6560
        %v6563 = vrsqrt.pop %v6561
        %v6564 = vmul.f32 %v6558, %v6562
        %v6565 = vmul.f32 %v6559, %v6563
        %v6566 = vmul.f32 %v6564, %v4663
        %v6567 = vmul.f32 %v6565, %v4663
        %v6568 = vadd.f32 %v6566, %v4671
        %v6569 = vadd.f32 %v6567, %v4671
        %v6570 = vmax.f32 %v6568, 0.0
        %v6571 = vmax.f32 %v6569, 0.0
        %v6572 = vld [vmem:[%s2919] sm:$0xff]
        %v6573 = vld [vmem:[%s2919 + $0x8] sm:$0xff]
        %v6574 = vadd.f32 %v6570, %v6572
        %v6575 = vadd.f32 %v6571, %v6573
        %v6576 = vpack.c.bf16 %v6575, %v6574
        %6577 = vst [vmem:[%s2925] sm:$0xff] %v6576
        %v6578 = vld [vmem:[%s2927] sm:$0xff]
        %v6579 = vld [vmem:[%s2927 + $0x8] sm:$0xff]
        %v6580 = vld [vmem:[%s2927 + $0x10] sm:$0xff]
        %v6581 = vld [vmem:[%s2927 + $0x18] sm:$0xff]
        %v6582 = vld [vmem:[%s2927 + $0x20] sm:$0xff]
        %v6583 = vld [vmem:[%s2927 + $0x28] sm:$0xff]
        %v6584 = vld [vmem:[%s2927 + $0x30] sm:$0xff]
        %v6585 = vld [vmem:[%s2927 + $0x38] sm:$0xff]
        %v6586 = vpack.c.bf16 %v6539, %v6538
        %v6587 = vld [vmem:[%s4681] sm:$0xff]
        %v6588 = vld [vmem:[%s4681 + $0x8] sm:$0xff]
        %v6589 = vld [vmem:[%s4681 + $0x10] sm:$0xff]
        %v6590 = vld [vmem:[%s4681 + $0x18] sm:$0xff]
        %v6591 = vld [vmem:[%s4681 + $0x20] sm:$0xff]
        %v6592 = vld [vmem:[%s4681 + $0x28] sm:$0xff]
        %v6593 = vld [vmem:[%s4681 + $0x30] sm:$0xff]
        %v6594 = vld [vmem:[%s4681 + $0x38] sm:$0xff]
        %v6595 = vld [vmem:[%s4681 + $0x40] sm:$0xff]
        %v6596 = vld [vmem:[%s4681 + $0x48] sm:$0xff]
        %v6597 = vld [vmem:[%s4681 + $0x50] sm:$0xff]
        %v6598 = vld [vmem:[%s4681 + $0x58] sm:$0xff]
        %v6599 = vld [vmem:[%s4681 + $0x60] sm:$0xff]
        %v6600 = vld [vmem:[%s4681 + $0x68] sm:$0xff]
        %v6601 = vld [vmem:[%s4681 + $0x70] sm:$0xff]
        %v6602 = vld [vmem:[%s4681 + $0x78] sm:$0xff]
        %v6603 = vld [vmem:[%s4681 + $0x80] sm:$0xff]
        %v6604 = vld [vmem:[%s4681 + $0x88] sm:$0xff]
        %v6605 = vld [vmem:[%s4681 + $0x90] sm:$0xff]
        %v6606 = vld [vmem:[%s4681 + $0x98] sm:$0xff]
        %v6607 = vld [vmem:[%s4681 + $0xa0] sm:$0xff]
        %v6608 = vld [vmem:[%s4681 + $0xa8] sm:$0xff]
        %v6609 = vld [vmem:[%s4681 + $0xb0] sm:$0xff]
        %v6610 = vld [vmem:[%s4681 + $0xb8] sm:$0xff]
        %v6611 = vld [vmem:[%s4681 + $0xc0] sm:$0xff]
        %v6612 = vld [vmem:[%s4681 + $0xc8] sm:$0xff]
        %v6613 = vld [vmem:[%s4681 + $0xd0] sm:$0xff]
        %v6614 = vld [vmem:[%s4681 + $0xd8] sm:$0xff]
        %v6615 = vld [vmem:[%s4681 + $0xe0] sm:$0xff]
        %v6616 = vld [vmem:[%s4681 + $0xe8] sm:$0xff]
        %v6617 = vld [vmem:[%s4681 + $0xf0] sm:$0xff]
        %v6618 = vld [vmem:[%s4681 + $0xf8] sm:$0xff]
        %v6651 = vunpack.c.l.b16 %v6587
        %v6652 = vunpack.c.h.b16 %v6587
        %v6653 = vunpack.c.l.b16 %v6588
        %v6654 = vunpack.c.h.b16 %v6588
        %v6655 = vunpack.c.l.b16 %v6589
        %v6656 = vunpack.c.h.b16 %v6589
        %v6657 = vunpack.c.l.b16 %v6590
        %v6658 = vunpack.c.h.b16 %v6590
        %v6659 = vunpack.c.l.b16 %v6591
        %v6660 = vunpack.c.h.b16 %v6591
        %v6661 = vunpack.c.l.b16 %v6592
        %v6662 = vunpack.c.h.b16 %v6592
        %v6663 = vunpack.c.l.b16 %v6593
        %v6664 = vunpack.c.h.b16 %v6593
        %v6665 = vunpack.c.l.b16 %v6594
        %v6666 = vunpack.c.h.b16 %v6594
        %v6667 = vunpack.c.l.b16 %v6595
        %v6668 = vunpack.c.h.b16 %v6595
        %v6669 = vunpack.c.l.b16 %v6596
        %v6670 = vunpack.c.h.b16 %v6596
        %v6671 = vunpack.c.l.b16 %v6597
        %v6672 = vunpack.c.h.b16 %v6597
        %v6673 = vunpack.c.l.b16 %v6598
        %v6674 = vunpack.c.h.b16 %v6598
        %v6675 = vunpack.c.l.b16 %v6599
        %v6676 = vunpack.c.h.b16 %v6599
        %v6677 = vunpack.c.l.b16 %v6600
        %v6678 = vunpack.c.h.b16 %v6600
        %v6679 = vunpack.c.l.b16 %v6601
        %v6680 = vunpack.c.h.b16 %v6601
        %v6681 = vunpack.c.l.b16 %v6602
        %v6682 = vunpack.c.h.b16 %v6602
        %v6683 = vunpack.c.l.b16 %v6603
        %v6684 = vunpack.c.h.b16 %v6603
        %v6685 = vunpack.c.l.b16 %v6604
        %v6686 = vunpack.c.h.b16 %v6604
        %v6687 = vunpack.c.l.b16 %v6605
        %v6688 = vunpack.c.h.b16 %v6605
        %v6689 = vunpack.c.l.b16 %v6606
        %v6690 = vunpack.c.h.b16 %v6606
        %v6691 = vunpack.c.l.b16 %v6607
        %v6692 = vunpack.c.h.b16 %v6607
        %v6693 = vunpack.c.l.b16 %v6608
        %v6694 = vunpack.c.h.b16 %v6608
        %v6695 = vunpack.c.l.b16 %v6609
        %v6696 = vunpack.c.h.b16 %v6609
        %v6697 = vunpack.c.l.b16 %v6610
        %v6698 = vunpack.c.h.b16 %v6610
        %v6699 = vunpack.c.l.b16 %v6611
        %v6700 = vunpack.c.h.b16 %v6611
        %v6701 = vunpack.c.l.b16 %v6612
        %v6702 = vunpack.c.h.b16 %v6612
        %v6703 = vunpack.c.l.b16 %v6613
        %v6704 = vunpack.c.h.b16 %v6613
        %v6705 = vunpack.c.l.b16 %v6614
        %v6706 = vunpack.c.h.b16 %v6614
        %v6707 = vunpack.c.l.b16 %v6615
        %v6708 = vunpack.c.h.b16 %v6615
        %v6709 = vunpack.c.l.b16 %v6616
        %v6710 = vunpack.c.h.b16 %v6616
        %v6711 = vunpack.c.l.b16 %v6617
        %v6712 = vunpack.c.h.b16 %v6617
        %v6713 = vunpack.c.l.b16 %v6618
        %v6714 = vunpack.c.h.b16 %v6618
        %v6715 = vpack.c.b16 %v6655, %v6651
        %v6716 = vpack.c.b16 %v6656, %v6652
        %v6717 = vpack.c.b16 %v6657, %v6653
        %v6718 = vpack.c.b16 %v6658, %v6654
        %v6719 = vpack.c.b16 %v6663, %v6659
        %v6720 = vpack.c.b16 %v6664, %v6660
        %v6721 = vpack.c.b16 %v6665, %v6661
        %v6722 = vpack.c.b16 %v6666, %v6662
        %v6723 = vpack.c.b16 %v6671, %v6667
        %v6724 = vpack.c.b16 %v6672, %v6668
        %v6725 = vpack.c.b16 %v6673, %v6669
        %v6726 = vpack.c.b16 %v6674, %v6670
        %v6727 = vpack.c.b16 %v6679, %v6675
        %v6728 = vpack.c.b16 %v6680, %v6676
        %v6729 = vpack.c.b16 %v6681, %v6677
        %v6730 = vpack.c.b16 %v6682, %v6678
        %v6731 = vpack.c.b16 %v6687, %v6683
        %v6732 = vpack.c.b16 %v6688, %v6684
        %v6733 = vpack.c.b16 %v6689, %v6685
        %v6734 = vpack.c.b16 %v6690, %v6686
        %v6735 = vpack.c.b16 %v6695, %v6691
        %v6736 = vpack.c.b16 %v6696, %v6692
        %v6737 = vpack.c.b16 %v6697, %v6693
        %v6738 = vpack.c.b16 %v6698, %v6694
        %v6739 = vpack.c.b16 %v6703, %v6699
        %v6740 = vpack.c.b16 %v6704, %v6700
        %v6741 = vpack.c.b16 %v6705, %v6701
        %v6742 = vpack.c.b16 %v6706, %v6702
        %v6743 = vpack.c.b16 %v6711, %v6707
        %v6744 = vpack.c.b16 %v6712, %v6708
        %v6745 = vpack.c.b16 %v6713, %v6709
        %v6746 = vpack.c.b16 %v6714, %v6710
        %6779 = vmatprep.subr.bf16.mxu0 %v6716
        %6780 = vmatpush1.bf16.msra.mxu0 %v6715
        %6781 = vmatprep.subr.bf16.mxu0 %v6720
        %6782 = vmatpush1.bf16.msra.mxu0 %v6719
        %6783 = vmatprep.subr.bf16.mxu0 %v6724
        %6784 = vmatpush1.bf16.msra.mxu0 %v6723
        %6785 = vmatprep.subr.bf16.mxu0 %v6728
        %6786 = vmatpush1.bf16.msra.mxu0 %v6727
        %6787 = vmatprep.subr.bf16.mxu0 %v6732
        %6788 = vmatpush1.bf16.msra.mxu0 %v6731
        %6789 = vmatprep.subr.bf16.mxu0 %v6736
        %6790 = vmatpush1.bf16.msra.mxu0 %v6735
        %6791 = vmatprep.subr.bf16.mxu0 %v6740
        %6792 = vmatpush1.bf16.msra.mxu0 %v6739
        %6793 = vmatprep.subr.bf16.mxu0 %v6744
        %6794 = vmatpush1.bf16.msra.mxu0 %v6743
        %6795 = vmatprep.subr.bf16.mxu0 0
        %6796 = vmatpush1.bf16.msra.mxu0 0
        %6797 = vmatprep.subr.bf16.mxu0 0
        %6798 = vmatpush1.bf16.msra.mxu0 0
        %6799 = vmatprep.subr.bf16.mxu0 0
        %6800 = vmatpush1.bf16.msra.mxu0 0
        %6801 = vmatprep.subr.bf16.mxu0 0
        %6802 = vmatpush1.bf16.msra.mxu0 0
        %6803 = vmatprep.subr.bf16.mxu0 0
        %6804 = vmatpush1.bf16.msra.mxu0 0
        %6805 = vmatprep.subr.bf16.mxu0 0
        %6806 = vmatpush1.bf16.msra.mxu0 0
        %6807 = vmatprep.subr.bf16.mxu0 0
        %6808 = vmatpush1.bf16.msra.mxu0 0
        %6809 = vmatprep.subr.bf16.mxu0 0
        %6810 = vmatpush1.bf16.msra.mxu0 0
        %6811 = vmatprep.mubr.bf16.mxu0 0
        %6812 = vmatmul.mubr.bf16.gmra.mrb[0].mxu0 %v6586
        %v6813 = vpop.f32.mrb[0].mxu0
        %v6814 = vadd.f32 0.0, %v6813
        %v6815 = vpop.f32.mrb[0].mxu0
        %v6816 = vadd.f32 0.0, %v6815
        %v6817 = vpop.f32.mrb[0].mxu0
        %v6818 = vadd.f32 0.0, %v6817
        %v6819 = vpop.f32.mrb[0].mxu0
        %v6820 = vadd.f32 0.0, %v6819
        %6821 = vdwg.mxu0
        %6822 = vmatprep.subr.bf16.mxu0 %v6718
        %6823 = vmatpush1.bf16.msra.mxu0 %v6717
        %6824 = vmatprep.subr.bf16.mxu0 %v6722
        %6825 = vmatpush1.bf16.msra.mxu0 %v6721
        %6826 = vmatprep.subr.bf16.mxu0 %v6726
        %6827 = vmatpush1.bf16.msra.mxu0 %v6725
        %6828 = vmatprep.subr.bf16.mxu0 %v6730
        %6829 = vmatpush1.bf16.msra.mxu0 %v6729
        %6830 = vmatprep.subr.bf16.mxu0 %v6734
        %6831 = vmatpush1.bf16.msra.mxu0 %v6733
        %6832 = vmatprep.subr.bf16.mxu0 %v6738
        %6833 = vmatpush1.bf16.msra.mxu0 %v6737
        %6834 = vmatprep.subr.bf16.mxu0 %v6742
        %6835 = vmatpush1.bf16.msra.mxu0 %v6741
        %6836 = vmatprep.subr.bf16.mxu0 %v6746
        %6837 = vmatpush1.bf16.msra.mxu0 %v6745
        %6838 = vmatprep.subr.bf16.mxu0 0
        %6839 = vmatpush1.bf16.msra.mxu0 0
        %6840 = vmatprep.subr.bf16.mxu0 0
        %6841 = vmatpush1.bf16.msra.mxu0 0
        %6842 = vmatprep.subr.bf16.mxu0 0
        %6843 = vmatpush1.bf16.msra.mxu0 0
        %6844 = vmatprep.subr.bf16.mxu0 0
        %6845 = vmatpush1.bf16.msra.mxu0 0
        %6846 = vmatprep.subr.bf16.mxu0 0
        %6847 = vmatpush1.bf16.msra.mxu0 0
        %6848 = vmatprep.subr.bf16.mxu0 0
        %6849 = vmatpush1.bf16.msra.mxu0 0
        %6850 = vmatprep.subr.bf16.mxu0 0
        %6851 = vmatpush1.bf16.msra.mxu0 0
        %6852 = vmatprep.subr.bf16.mxu0 0
        %6853 = vmatpush1.bf16.msra.mxu0 0
        %6854 = vmatprep.mubr.bf16.mxu0 0
        %6855 = vmatmul.mubr.bf16.gmra.mrb[0].mxu0 %v6586
        %v6856 = vpop.f32.mrb[0].mxu0
        %v6857 = vadd.f32 0.0, %v6856
        %v6858 = vpop.f32.mrb[0].mxu0
        %v6859 = vadd.f32 0.0, %v6858
        %v6860 = vpop.f32.mrb[0].mxu0
        %v6861 = vadd.f32 0.0, %v6860
        %v6862 = vpop.f32.mrb[0].mxu0
        %v6863 = vadd.f32 0.0, %v6862
        %6864 = vdwg.mxu0
        %v6865 = vadd.f32 %v6578, %v6814
        %v6866 = vadd.f32 %v6579, %v6816
        %v6867 = vadd.f32 %v6580, %v6857
        %v6868 = vadd.f32 %v6581, %v6859
        %v6869 = vadd.f32 %v6582, %v6818
        %v6870 = vadd.f32 %v6583, %v6820
        %v6871 = vadd.f32 %v6584, %v6861
        %v6872 = vadd.f32 %v6585, %v6863
        %v6873 = vxor.u32 %v6865, 2147483648
        %v6874 = vxor.u32 %v6869, 2147483648
        %v6875 = vmul.f32 %v6873, 1.442695
        %v6876 = vpow.pop %v6875
        %v6877 = vmul.f32 %v6874, 1.442695
        %v6878 = vpow.pop %v6877
        %v6879 = vadd.f32 %v6876, 1.0
        %v6880 = vadd.f32 %v6878, 1.0
        %v6881 = vrcp.pop %v6879
        %v6882 = vmul.f32 1.0, %v6881
        %v6883 = vrcp.pop %v6880
        %v6884 = vmul.f32 1.0, %v6883
        %v6885 = vxor.u32 %v6866, 2147483648
        %v6886 = vxor.u32 %v6870, 2147483648
        %v6887 = vmul.f32 %v6885, 1.442695
        %v6888 = vpow.pop %v6887
        %v6889 = vmul.f32 %v6886, 1.442695
        %v6890 = vpow.pop %v6889
        %v6891 = vadd.f32 %v6888, 1.0
        %v6892 = vadd.f32 %v6890, 1.0
        %v6893 = vrcp.pop %v6891
        %v6894 = vmul.f32 1.0, %v6893
        %v6895 = vrcp.pop %v6892
        %v6896 = vmul.f32 1.0, %v6895
        %v6897 = vtanh.pop %v6867
        %v6898 = vtanh.pop %v6871
        %v6899 = vxor.u32 %v6868, 2147483648
        %v6900 = vxor.u32 %v6872, 2147483648
        %v6901 = vmul.f32 %v6899, 1.442695
        %v6902 = vpow.pop %v6901
        %v6903 = vmul.f32 %v6900, 1.442695
        %v6904 = vpow.pop %v6903
        %v6905 = vadd.f32 %v6902, 1.0
        %v6906 = vadd.f32 %v6904, 1.0
        %v6907 = vrcp.pop %v6905
        %v6908 = vmul.f32 1.0, %v6907
        %v6909 = vrcp.pop %v6906
        %v6910 = vmul.f32 1.0, %v6909
        %v6911 = vmul.f32 %v6894, %v6534
        %v6912 = vmul.f32 %v6896, %v6535
        %v6913 = vmul.f32 %v6882, %v6897
        %v6914 = vmul.f32 %v6884, %v6898
        %v6915 = vadd.f32 %v6911, %v6913
        %v6916 = vadd.f32 %v6912, %v6914
        %v6917 = vtanh.pop %v6915
        %v6918 = vtanh.pop %v6916
        %v6919 = vmul.f32 %v6908, %v6917
        %v6920 = vmul.f32 %v6910, %v6918
        %6921 = vadd.xlane.f32.xlu0 %v6919
        %v6922 = vpop.xlane.xlu0 %6921
        %6923 = vadd.xlane.f32.xlu0 %v6920
        %v6924 = vpop.xlane.xlu0 %6923
        %v6925 = vmul.f32 %v6922, %v1356
        %v6926 = vmul.f32 %v6924, %v1356
        %v6927 = vmul.f32 %v6919, %v6919
        %v6928 = vmul.f32 %v6920, %v6920
        %6929 = vadd.xlane.f32.xlu0 %v6927
        %v6930 = vpop.xlane.xlu0 %6929
        %6931 = vadd.xlane.f32.xlu0 %v6928
        %v6932 = vpop.xlane.xlu0 %6931
        %v6933 = vmul.f32 %v6930, %v1356
        %v6934 = vmul.f32 %v6932, %v1356
        %v6935 = vmul.f32 %v6925, %v6925
        %v6936 = vmul.f32 %v6926, %v6926
        %v6937 = vsub.f32 %v6933, %v6935
        %v6938 = vsub.f32 %v6934, %v6936
        %v6939 = vsub.f32 %v6919, %v6925
        %v6940 = vsub.f32 %v6920, %v6926
        %v6941 = vadd.f32 %v6937, 1e-05
        %v6942 = vadd.f32 %v6938, 1e-05
        %v6943 = vrsqrt.pop %v6941
        %v6944 = vrsqrt.pop %v6942
        %v6945 = vmul.f32 %v6939, %v6943
        %v6946 = vmul.f32 %v6940, %v6944
        %v6947 = vmul.f32 %v6945, %v4663
        %v6948 = vmul.f32 %v6946, %v4663
        %v6949 = vadd.f32 %v6947, %v4671
        %v6950 = vadd.f32 %v6948, %v4671
        %v6951 = vmax.f32 %v6949, 0.0
        %v6952 = vmax.f32 %v6950, 0.0
        %v6953 = vld [vmem:[%s3303] sm:$0xff]
        %v6954 = vld [vmem:[%s3303 + $0x8] sm:$0xff]
        %v6955 = vadd.f32 %v6951, %v6953
        %v6956 = vadd.f32 %v6952, %v6954
        %v6957 = vpack.c.bf16 %v6956, %v6955
        %6958 = vst [vmem:[%s3309] sm:$0xff] %v6957
        %v6959 = vld [vmem:[%s3311] sm:$0xff]
        %v6960 = vld [vmem:[%s3311 + $0x8] sm:$0xff]
        %v6961 = vld [vmem:[%s3311 + $0x10] sm:$0xff]
        %v6962 = vld [vmem:[%s3311 + $0x18] sm:$0xff]
        %v6963 = vld [vmem:[%s3311 + $0x20] sm:$0xff]
        %v6964 = vld [vmem:[%s3311 + $0x28] sm:$0xff]
        %v6965 = vld [vmem:[%s3311 + $0x30] sm:$0xff]
        %v6966 = vld [vmem:[%s3311 + $0x38] sm:$0xff]
        %v6967 = vpack.c.bf16 %v6920, %v6919
        %v6968 = vld [vmem:[%s4681] sm:$0xff]
        %v6969 = vld [vmem:[%s4681 + $0x8] sm:$0xff]
        %v6970 = vld [vmem:[%s4681 + $0x10] sm:$0xff]
        %v6971 = vld [vmem:[%s4681 + $0x18] sm:$0xff]
        %v6972 = vld [vmem:[%s4681 + $0x20] sm:$0xff]
        %v6973 = vld [vmem:[%s4681 + $0x28] sm:$0xff]
        %v6974 = vld [vmem:[%s4681 + $0x30] sm:$0xff]
        %v6975 = vld [vmem:[%s4681 + $0x38] sm:$0xff]
        %v6976 = vld [vmem:[%s4681 + $0x40] sm:$0xff]
        %v6977 = vld [vmem:[%s4681 + $0x48] sm:$0xff]
        %v6978 = vld [vmem:[%s4681 + $0x50] sm:$0xff]
        %v6979 = vld [vmem:[%s4681 + $0x58] sm:$0xff]
        %v6980 = vld [vmem:[%s4681 + $0x60] sm:$0xff]
        %v6981 = vld [vmem:[%s4681 + $0x68] sm:$0xff]
        %v6982 = vld [vmem:[%s4681 + $0x70] sm:$0xff]
        %v6983 = vld [vmem:[%s4681 + $0x78] sm:$0xff]
        %v6984 = vld [vmem:[%s4681 + $0x80] sm:$0xff]
        %v6985 = vld [vmem:[%s4681 + $0x88] sm:$0xff]
        %v6986 = vld [vmem:[%s4681 + $0x90] sm:$0xff]
        %v6987 = vld [vmem:[%s4681 + $0x98] sm:$0xff]
        %v6988 = vld [vmem:[%s4681 + $0xa0] sm:$0xff]
        %v6989 = vld [vmem:[%s4681 + $0xa8] sm:$0xff]
        %v6990 = vld [vmem:[%s4681 + $0xb0] sm:$0xff]
        %v6991 = vld [vmem:[%s4681 + $0xb8] sm:$0xff]
        %v6992 = vld [vmem:[%s4681 + $0xc0] sm:$0xff]
        %v6993 = vld [vmem:[%s4681 + $0xc8] sm:$0xff]
        %v6994 = vld [vmem:[%s4681 + $0xd0] sm:$0xff]
        %v6995 = vld [vmem:[%s4681 + $0xd8] sm:$0xff]
        %v6996 = vld [vmem:[%s4681 + $0xe0] sm:$0xff]
        %v6997 = vld [vmem:[%s4681 + $0xe8] sm:$0xff]
        %v6998 = vld [vmem:[%s4681 + $0xf0] sm:$0xff]
        %v6999 = vld [vmem:[%s4681 + $0xf8] sm:$0xff]
        %v7032 = vunpack.c.l.b16 %v6968
        %v7033 = vunpack.c.h.b16 %v6968
        %v7034 = vunpack.c.l.b16 %v6969
        %v7035 = vunpack.c.h.b16 %v6969
        %v7036 = vunpack.c.l.b16 %v6970
        %v7037 = vunpack.c.h.b16 %v6970
        %v7038 = vunpack.c.l.b16 %v6971
        %v7039 = vunpack.c.h.b16 %v6971
        %v7040 = vunpack.c.l.b16 %v6972
        %v7041 = vunpack.c.h.b16 %v6972
        %v7042 = vunpack.c.l.b16 %v6973
        %v7043 = vunpack.c.h.b16 %v6973
        %v7044 = vunpack.c.l.b16 %v6974
        %v7045 = vunpack.c.h.b16 %v6974
        %v7046 = vunpack.c.l.b16 %v6975
        %v7047 = vunpack.c.h.b16 %v6975
        %v7048 = vunpack.c.l.b16 %v6976
        %v7049 = vunpack.c.h.b16 %v6976
        %v7050 = vunpack.c.l.b16 %v6977
        %v7051 = vunpack.c.h.b16 %v6977
        %v7052 = vunpack.c.l.b16 %v6978
        %v7053 = vunpack.c.h.b16 %v6978
        %v7054 = vunpack.c.l.b16 %v6979
        %v7055 = vunpack.c.h.b16 %v6979
        %v7056 = vunpack.c.l.b16 %v6980
        %v7057 = vunpack.c.h.b16 %v6980
        %v7058 = vunpack.c.l.b16 %v6981
        %v7059 = vunpack.c.h.b16 %v6981
        %v7060 = vunpack.c.l.b16 %v6982
        %v7061 = vunpack.c.h.b16 %v6982
        %v7062 = vunpack.c.l.b16 %v6983
        %v7063 = vunpack.c.h.b16 %v6983
        %v7064 = vunpack.c.l.b16 %v6984
        %v7065 = vunpack.c.h.b16 %v6984
        %v7066 = vunpack.c.l.b16 %v6985
        %v7067 = vunpack.c.h.b16 %v6985
        %v7068 = vunpack.c.l.b16 %v6986
        %v7069 = vunpack.c.h.b16 %v6986
        %v7070 = vunpack.c.l.b16 %v6987
        %v7071 = vunpack.c.h.b16 %v6987
        %v7072 = vunpack.c.l.b16 %v6988
        %v7073 = vunpack.c.h.b16 %v6988
        %v7074 = vunpack.c.l.b16 %v6989
        %v7075 = vunpack.c.h.b16 %v6989
        %v7076 = vunpack.c.l.b16 %v6990
        %v7077 = vunpack.c.h.b16 %v6990
        %v7078 = vunpack.c.l.b16 %v6991
        %v7079 = vunpack.c.h.b16 %v6991
        %v7080 = vunpack.c.l.b16 %v6992
        %v7081 = vunpack.c.h.b16 %v6992
        %v7082 = vunpack.c.l.b16 %v6993
        %v7083 = vunpack.c.h.b16 %v6993
        %v7084 = vunpack.c.l.b16 %v6994
        %v7085 = vunpack.c.h.b16 %v6994
        %v7086 = vunpack.c.l.b16 %v6995
        %v7087 = vunpack.c.h.b16 %v6995
        %v7088 = vunpack.c.l.b16 %v6996
        %v7089 = vunpack.c.h.b16 %v6996
        %v7090 = vunpack.c.l.b16 %v6997
        %v7091 = vunpack.c.h.b16 %v6997
        %v7092 = vunpack.c.l.b16 %v6998
        %v7093 = vunpack.c.h.b16 %v6998
        %v7094 = vunpack.c.l.b16 %v6999
        %v7095 = vunpack.c.h.b16 %v6999
        %v7096 = vpack.c.b16 %v7036, %v7032
        %v7097 = vpack.c.b16 %v7037, %v7033
        %v7098 = vpack.c.b16 %v7038, %v7034
        %v7099 = vpack.c.b16 %v7039, %v7035
        %v7100 = vpack.c.b16 %v7044, %v7040
        %v7101 = vpack.c.b16 %v7045, %v7041
        %v7102 = vpack.c.b16 %v7046, %v7042
        %v7103 = vpack.c.b16 %v7047, %v7043
        %v7104 = vpack.c.b16 %v7052, %v7048
        %v7105 = vpack.c.b16 %v7053, %v7049
        %v7106 = vpack.c.b16 %v7054, %v7050
        %v7107 = vpack.c.b16 %v7055, %v7051
        %v7108 = vpack.c.b16 %v7060, %v7056
        %v7109 = vpack.c.b16 %v7061, %v7057
        %v7110 = vpack.c.b16 %v7062, %v7058
        %v7111 = vpack.c.b16 %v7063, %v7059
        %v7112 = vpack.c.b16 %v7068, %v7064
        %v7113 = vpack.c.b16 %v7069, %v7065
        %v7114 = vpack.c.b16 %v7070, %v7066
        %v7115 = vpack.c.b16 %v7071, %v7067
        %v7116 = vpack.c.b16 %v7076, %v7072
        %v7117 = vpack.c.b16 %v7077, %v7073
        %v7118 = vpack.c.b16 %v7078, %v7074
        %v7119 = vpack.c.b16 %v7079, %v7075
        %v7120 = vpack.c.b16 %v7084, %v7080
        %v7121 = vpack.c.b16 %v7085, %v7081
        %v7122 = vpack.c.b16 %v7086, %v7082
        %v7123 = vpack.c.b16 %v7087, %v7083
        %v7124 = vpack.c.b16 %v7092, %v7088
        %v7125 = vpack.c.b16 %v7093, %v7089
        %v7126 = vpack.c.b16 %v7094, %v7090
        %v7127 = vpack.c.b16 %v7095, %v7091
        %7160 = vmatprep.subr.bf16.mxu0 %v7097
        %7161 = vmatpush1.bf16.msra.mxu0 %v7096
        %7162 = vmatprep.subr.bf16.mxu0 %v7101
        %7163 = vmatpush1.bf16.msra.mxu0 %v7100
        %7164 = vmatprep.subr.bf16.mxu0 %v7105
        %7165 = vmatpush1.bf16.msra.mxu0 %v7104
        %7166 = vmatprep.subr.bf16.mxu0 %v7109
        %7167 = vmatpush1.bf16.msra.mxu0 %v7108
        %7168 = vmatprep.subr.bf16.mxu0 %v7113
        %7169 = vmatpush1.bf16.msra.mxu0 %v7112
        %7170 = vmatprep.subr.bf16.mxu0 %v7117
        %7171 = vmatpush1.bf16.msra.mxu0 %v7116
        %7172 = vmatprep.subr.bf16.mxu0 %v7121
        %7173 = vmatpush1.bf16.msra.mxu0 %v7120
        %7174 = vmatprep.subr.bf16.mxu0 %v7125
        %7175 = vmatpush1.bf16.msra.mxu0 %v7124
        %7176 = vmatprep.subr.bf16.mxu0 0
        %7177 = vmatpush1.bf16.msra.mxu0 0
        %7178 = vmatprep.subr.bf16.mxu0 0
        %7179 = vmatpush1.bf16.msra.mxu0 0
        %7180 = vmatprep.subr.bf16.mxu0 0
        %7181 = vmatpush1.bf16.msra.mxu0 0
        %7182 = vmatprep.subr.bf16.mxu0 0
        %7183 = vmatpush1.bf16.msra.mxu0 0
        %7184 = vmatprep.subr.bf16.mxu0 0
        %7185 = vmatpush1.bf16.msra.mxu0 0
        %7186 = vmatprep.subr.bf16.mxu0 0
        %7187 = vmatpush1.bf16.msra.mxu0 0
        %7188 = vmatprep.subr.bf16.mxu0 0
        %7189 = vmatpush1.bf16.msra.mxu0 0
        %7190 = vmatprep.subr.bf16.mxu0 0
        %7191 = vmatpush1.bf16.msra.mxu0 0
        %7192 = vmatprep.mubr.bf16.mxu0 0
        %7193 = vmatmul.mubr.bf16.gmra.mrb[0].mxu0 %v6967
        %v7194 = vpop.f32.mrb[0].mxu0
        %v7195 = vadd.f32 0.0, %v7194
        %v7196 = vpop.f32.mrb[0].mxu0
        %v7197 = vadd.f32 0.0, %v7196
        %v7198 = vpop.f32.mrb[0].mxu0
        %v7199 = vadd.f32 0.0, %v7198
        %v7200 = vpop.f32.mrb[0].mxu0
        %v7201 = vadd.f32 0.0, %v7200
        %7202 = vdwg.mxu0
        %7203 = vmatprep.subr.bf16.mxu0 %v7099
        %7204 = vmatpush1.bf16.msra.mxu0 %v7098
        %7205 = vmatprep.subr.bf16.mxu0 %v7103
        %7206 = vmatpush1.bf16.msra.mxu0 %v7102
        %7207 = vmatprep.subr.bf16.mxu0 %v7107
        %7208 = vmatpush1.bf16.msra.mxu0 %v7106
        %7209 = vmatprep.subr.bf16.mxu0 %v7111
        %7210 = vmatpush1.bf16.msra.mxu0 %v7110
        %7211 = vmatprep.subr.bf16.mxu0 %v7115
        %7212 = vmatpush1.bf16.msra.mxu0 %v7114
        %7213 = vmatprep.subr.bf16.mxu0 %v7119
        %7214 = vmatpush1.bf16.msra.mxu0 %v7118
        %7215 = vmatprep.subr.bf16.mxu0 %v7123
        %7216 = vmatpush1.bf16.msra.mxu0 %v7122
        %7217 = vmatprep.subr.bf16.mxu0 %v7127
        %7218 = vmatpush1.bf16.msra.mxu0 %v7126
        %7219 = vmatprep.subr.bf16.mxu0 0
        %7220 = vmatpush1.bf16.msra.mxu0 0
        %7221 = vmatprep.subr.bf16.mxu0 0
        %7222 = vmatpush1.bf16.msra.mxu0 0
        %7223 = vmatprep.subr.bf16.mxu0 0
        %7224 = vmatpush1.bf16.msra.mxu0 0
        %7225 = vmatprep.subr.bf16.mxu0 0
        %7226 = vmatpush1.bf16.msra.mxu0 0
        %7227 = vmatprep.subr.bf16.mxu0 0
        %7228 = vmatpush1.bf16.msra.mxu0 0
        %7229 = vmatprep.subr.bf16.mxu0 0
        %7230 = vmatpush1.bf16.msra.mxu0 0
        %7231 = vmatprep.subr.bf16.mxu0 0
        %7232 = vmatpush1.bf16.msra.mxu0 0
        %7233 = vmatprep.subr.bf16.mxu0 0
        %7234 = vmatpush1.bf16.msra.mxu0 0
        %7235 = vmatprep.mubr.bf16.mxu0 0
        %7236 = vmatmul.mubr.bf16.gmra.mrb[0].mxu0 %v6967
        %v7237 = vpop.f32.mrb[0].mxu0
        %v7238 = vadd.f32 0.0, %v7237
        %v7239 = vpop.f32.mrb[0].mxu0
        %v7240 = vadd.f32 0.0, %v7239
        %v7241 = vpop.f32.mrb[0].mxu0
        %v7242 = vadd.f32 0.0, %v7241
        %v7243 = vpop.f32.mrb[0].mxu0
        %v7244 = vadd.f32 0.0, %v7243
        %7245 = vdwg.mxu0
        %v7246 = vadd.f32 %v6959, %v7195
        %v7247 = vadd.f32 %v6960, %v7197
        %v7248 = vadd.f32 %v6961, %v7238
        %v7249 = vadd.f32 %v6962, %v7240
        %v7250 = vadd.f32 %v6963, %v7199
        %v7251 = vadd.f32 %v6964, %v7201
        %v7252 = vadd.f32 %v6965, %v7242
        %v7253 = vadd.f32 %v6966, %v7244
        %v7254 = vxor.u32 %v7246, 2147483648
        %v7255 = vxor.u32 %v7250, 2147483648
        %v7256 = vmul.f32 %v7254, 1.442695
        %v7257 = vpow.pop %v7256
        %v7258 = vmul.f32 %v7255, 1.442695
        %v7259 = vpow.pop %v7258
        %v7260 = vadd.f32 %v7257, 1.0
        %v7261 = vadd.f32 %v7259, 1.0
        %v7262 = vrcp.pop %v7260
        %v7263 = vmul.f32 1.0, %v7262
        %v7264 = vrcp.pop %v7261
        %v7265 = vmul.f32 1.0, %v7264
        %v7266 = vxor.u32 %v7247, 2147483648
        %v7267 = vxor.u32 %v7251, 2147483648
        %v7268 = vmul.f32 %v7266, 1.442695
        %v7269 = vpow.pop %v7268
        %v7270 = vmul.f32 %v7267, 1.442695
        %v7271 = vpow.pop %v7270
        %v7272 = vadd.f32 %v7269, 1.0
        %v7273 = vadd.f32 %v7271, 1.0
        %v7274 = vrcp.pop %v7272
        %v7275 = vmul.f32 1.0, %v7274
        %v7276 = vrcp.pop %v7273
        %v7277 = vmul.f32 1.0, %v7276
        %v7278 = vtanh.pop %v7248
        %v7279 = vtanh.pop %v7252
        %v7280 = vxor.u32 %v7249, 2147483648
        %v7281 = vxor.u32 %v7253, 2147483648
        %v7282 = vmul.f32 %v7280, 1.442695
        %v7283 = vpow.pop %v7282
        %v7284 = vmul.f32 %v7281, 1.442695
        %v7285 = vpow.pop %v7284
        %v7286 = vadd.f32 %v7283, 1.0
        %v7287 = vadd.f32 %v7285, 1.0
        %v7288 = vrcp.pop %v7286
        %v7289 = vmul.f32 1.0, %v7288
        %v7290 = vrcp.pop %v7287
        %v7291 = vmul.f32 1.0, %v7290
        %v7292 = vmul.f32 %v7275, %v6915
        %v7293 = vmul.f32 %v7277, %v6916
        %v7294 = vmul.f32 %v7263, %v7278
        %v7295 = vmul.f32 %v7265, %v7279
        %v7296 = vadd.f32 %v7292, %v7294
        %v7297 = vadd.f32 %v7293, %v7295
        %v7298 = vtanh.pop %v7296
        %v7299 = vtanh.pop %v7297
        %v7300 = vmul.f32 %v7289, %v7298
        %v7301 = vmul.f32 %v7291, %v7299
        %7302 = vadd.xlane.f32.xlu0 %v7300
        %v7303 = vpop.xlane.xlu0 %7302
        %7304 = vadd.xlane.f32.xlu0 %v7301
        %v7305 = vpop.xlane.xlu0 %7304
        %v7306 = vmul.f32 %v7303, %v1356
        %v7307 = vmul.f32 %v7305, %v1356
        %v7308 = vmul.f32 %v7300, %v7300
        %v7309 = vmul.f32 %v7301, %v7301
        %7310 = vadd.xlane.f32.xlu0 %v7308
        %v7311 = vpop.xlane.xlu0 %7310
        %7312 = vadd.xlane.f32.xlu0 %v7309
        %v7313 = vpop.xlane.xlu0 %7312
        %v7314 = vmul.f32 %v7311, %v1356
        %v7315 = vmul.f32 %v7313, %v1356
        %v7316 = vmul.f32 %v7306, %v7306
        %v7317 = vmul.f32 %v7307, %v7307
        %v7318 = vsub.f32 %v7314, %v7316
        %v7319 = vsub.f32 %v7315, %v7317
        %v7320 = vsub.f32 %v7300, %v7306
        %v7321 = vsub.f32 %v7301, %v7307
        %v7322 = vadd.f32 %v7318, 1e-05
        %v7323 = vadd.f32 %v7319, 1e-05
        %v7324 = vrsqrt.pop %v7322
        %v7325 = vrsqrt.pop %v7323
        %v7326 = vmul.f32 %v7320, %v7324
        %v7327 = vmul.f32 %v7321, %v7325
        %v7328 = vmul.f32 %v7326, %v4663
        %v7329 = vmul.f32 %v7327, %v4663
        %v7330 = vadd.f32 %v7328, %v4671
        %v7331 = vadd.f32 %v7329, %v4671
        %v7332 = vmax.f32 %v7330, 0.0
        %v7333 = vmax.f32 %v7331, 0.0
        %v7334 = vld [vmem:[%s3687] sm:$0xff]
        %v7335 = vld [vmem:[%s3687 + $0x8] sm:$0xff]
        %v7336 = vadd.f32 %v7332, %v7334
        %v7337 = vadd.f32 %v7333, %v7335
        %v7338 = vpack.c.bf16 %v7337, %v7336
        %7339 = vst [vmem:[%s3693] sm:$0xff] %v7338
        %v7340 = vld [vmem:[%s3695] sm:$0xff]
        %v7341 = vld [vmem:[%s3695 + $0x8] sm:$0xff]
        %v7342 = vld [vmem:[%s3695 + $0x10] sm:$0xff]
        %v7343 = vld [vmem:[%s3695 + $0x18] sm:$0xff]
        %v7344 = vld [vmem:[%s3695 + $0x20] sm:$0xff]
        %v7345 = vld [vmem:[%s3695 + $0x28] sm:$0xff]
        %v7346 = vld [vmem:[%s3695 + $0x30] sm:$0xff]
        %v7347 = vld [vmem:[%s3695 + $0x38] sm:$0xff]
        %v7348 = vpack.c.bf16 %v7301, %v7300
        %v7349 = vld [vmem:[%s4681] sm:$0xff]
        %v7350 = vld [vmem:[%s4681 + $0x8] sm:$0xff]
        %v7351 = vld [vmem:[%s4681 + $0x10] sm:$0xff]
        %v7352 = vld [vmem:[%s4681 + $0x18] sm:$0xff]
        %v7353 = vld [vmem:[%s4681 + $0x20] sm:$0xff]
        %v7354 = vld [vmem:[%s4681 + $0x28] sm:$0xff]
        %v7355 = vld [vmem:[%s4681 + $0x30] sm:$0xff]
        %v7356 = vld [vmem:[%s4681 + $0x38] sm:$0xff]
        %v7357 = vld [vmem:[%s4681 + $0x40] sm:$0xff]
        %v7358 = vld [vmem:[%s4681 + $0x48] sm:$0xff]
        %v7359 = vld [vmem:[%s4681 + $0x50] sm:$0xff]
        %v7360 = vld [vmem:[%s4681 + $0x58] sm:$0xff]
        %v7361 = vld [vmem:[%s4681 + $0x60] sm:$0xff]
        %v7362 = vld [vmem:[%s4681 + $0x68] sm:$0xff]
        %v7363 = vld [vmem:[%s4681 + $0x70] sm:$0xff]
        %v7364 = vld [vmem:[%s4681 + $0x78] sm:$0xff]
        %v7365 = vld [vmem:[%s4681 + $0x80] sm:$0xff]
        %v7366 = vld [vmem:[%s4681 + $0x88] sm:$0xff]
        %v7367 = vld [vmem:[%s4681 + $0x90] sm:$0xff]
        %v7368 = vld [vmem:[%s4681 + $0x98] sm:$0xff]
        %v7369 = vld [vmem:[%s4681 + $0xa0] sm:$0xff]
        %v7370 = vld [vmem:[%s4681 + $0xa8] sm:$0xff]
        %v7371 = vld [vmem:[%s4681 + $0xb0] sm:$0xff]
        %v7372 = vld [vmem:[%s4681 + $0xb8] sm:$0xff]
        %v7373 = vld [vmem:[%s4681 + $0xc0] sm:$0xff]
        %v7374 = vld [vmem:[%s4681 + $0xc8] sm:$0xff]
        %v7375 = vld [vmem:[%s4681 + $0xd0] sm:$0xff]
        %v7376 = vld [vmem:[%s4681 + $0xd8] sm:$0xff]
        %v7377 = vld [vmem:[%s4681 + $0xe0] sm:$0xff]
        %v7378 = vld [vmem:[%s4681 + $0xe8] sm:$0xff]
        %v7379 = vld [vmem:[%s4681 + $0xf0] sm:$0xff]
        %v7380 = vld [vmem:[%s4681 + $0xf8] sm:$0xff]
        %v7413 = vunpack.c.l.b16 %v7349
        %v7414 = vunpack.c.h.b16 %v7349
        %v7415 = vunpack.c.l.b16 %v7350
        %v7416 = vunpack.c.h.b16 %v7350
        %v7417 = vunpack.c.l.b16 %v7351
        %v7418 = vunpack.c.h.b16 %v7351
        %v7419 = vunpack.c.l.b16 %v7352
        %v7420 = vunpack.c.h.b16 %v7352
        %v7421 = vunpack.c.l.b16 %v7353
        %v7422 = vunpack.c.h.b16 %v7353
        %v7423 = vunpack.c.l.b16 %v7354
        %v7424 = vunpack.c.h.b16 %v7354
        %v7425 = vunpack.c.l.b16 %v7355
        %v7426 = vunpack.c.h.b16 %v7355
        %v7427 = vunpack.c.l.b16 %v7356
        %v7428 = vunpack.c.h.b16 %v7356
        %v7429 = vunpack.c.l.b16 %v7357
        %v7430 = vunpack.c.h.b16 %v7357
        %v7431 = vunpack.c.l.b16 %v7358
        %v7432 = vunpack.c.h.b16 %v7358
        %v7433 = vunpack.c.l.b16 %v7359
        %v7434 = vunpack.c.h.b16 %v7359
        %v7435 = vunpack.c.l.b16 %v7360
        %v7436 = vunpack.c.h.b16 %v7360
        %v7437 = vunpack.c.l.b16 %v7361
        %v7438 = vunpack.c.h.b16 %v7361
        %v7439 = vunpack.c.l.b16 %v7362
        %v7440 = vunpack.c.h.b16 %v7362
        %v7441 = vunpack.c.l.b16 %v7363
        %v7442 = vunpack.c.h.b16 %v7363
        %v7443 = vunpack.c.l.b16 %v7364
        %v7444 = vunpack.c.h.b16 %v7364
        %v7445 = vunpack.c.l.b16 %v7365
        %v7446 = vunpack.c.h.b16 %v7365
        %v7447 = vunpack.c.l.b16 %v7366
        %v7448 = vunpack.c.h.b16 %v7366
        %v7449 = vunpack.c.l.b16 %v7367
        %v7450 = vunpack.c.h.b16 %v7367
        %v7451 = vunpack.c.l.b16 %v7368
        %v7452 = vunpack.c.h.b16 %v7368
        %v7453 = vunpack.c.l.b16 %v7369
        %v7454 = vunpack.c.h.b16 %v7369
        %v7455 = vunpack.c.l.b16 %v7370
        %v7456 = vunpack.c.h.b16 %v7370
        %v7457 = vunpack.c.l.b16 %v7371
        %v7458 = vunpack.c.h.b16 %v7371
        %v7459 = vunpack.c.l.b16 %v7372
        %v7460 = vunpack.c.h.b16 %v7372
        %v7461 = vunpack.c.l.b16 %v7373
        %v7462 = vunpack.c.h.b16 %v7373
        %v7463 = vunpack.c.l.b16 %v7374
        %v7464 = vunpack.c.h.b16 %v7374
        %v7465 = vunpack.c.l.b16 %v7375
        %v7466 = vunpack.c.h.b16 %v7375
        %v7467 = vunpack.c.l.b16 %v7376
        %v7468 = vunpack.c.h.b16 %v7376
        %v7469 = vunpack.c.l.b16 %v7377
        %v7470 = vunpack.c.h.b16 %v7377
        %v7471 = vunpack.c.l.b16 %v7378
        %v7472 = vunpack.c.h.b16 %v7378
        %v7473 = vunpack.c.l.b16 %v7379
        %v7474 = vunpack.c.h.b16 %v7379
        %v7475 = vunpack.c.l.b16 %v7380
        %v7476 = vunpack.c.h.b16 %v7380
        %v7477 = vpack.c.b16 %v7417, %v7413
        %v7478 = vpack.c.b16 %v7418, %v7414
        %v7479 = vpack.c.b16 %v7419, %v7415
        %v7480 = vpack.c.b16 %v7420, %v7416
        %v7481 = vpack.c.b16 %v7425, %v7421
        %v7482 = vpack.c.b16 %v7426, %v7422
        %v7483 = vpack.c.b16 %v7427, %v7423
        %v7484 = vpack.c.b16 %v7428, %v7424
        %v7485 = vpack.c.b16 %v7433, %v7429
        %v7486 = vpack.c.b16 %v7434, %v7430
        %v7487 = vpack.c.b16 %v7435, %v7431
        %v7488 = vpack.c.b16 %v7436, %v7432
        %v7489 = vpack.c.b16 %v7441, %v7437
        %v7490 = vpack.c.b16 %v7442, %v7438
        %v7491 = vpack.c.b16 %v7443, %v7439
        %v7492 = vpack.c.b16 %v7444, %v7440
        %v7493 = vpack.c.b16 %v7449, %v7445
        %v7494 = vpack.c.b16 %v7450, %v7446
        %v7495 = vpack.c.b16 %v7451, %v7447
        %v7496 = vpack.c.b16 %v7452, %v7448
        %v7497 = vpack.c.b16 %v7457, %v7453
        %v7498 = vpack.c.b16 %v7458, %v7454
        %v7499 = vpack.c.b16 %v7459, %v7455
        %v7500 = vpack.c.b16 %v7460, %v7456
        %v7501 = vpack.c.b16 %v7465, %v7461
        %v7502 = vpack.c.b16 %v7466, %v7462
        %v7503 = vpack.c.b16 %v7467, %v7463
        %v7504 = vpack.c.b16 %v7468, %v7464
        %v7505 = vpack.c.b16 %v7473, %v7469
        %v7506 = vpack.c.b16 %v7474, %v7470
        %v7507 = vpack.c.b16 %v7475, %v7471
        %v7508 = vpack.c.b16 %v7476, %v7472
        %7541 = vmatprep.subr.bf16.mxu0 %v7478
        %7542 = vmatpush1.bf16.msra.mxu0 %v7477
        %7543 = vmatprep.subr.bf16.mxu0 %v7482
        %7544 = vmatpush1.bf16.msra.mxu0 %v7481
        %7545 = vmatprep.subr.bf16.mxu0 %v7486
        %7546 = vmatpush1.bf16.msra.mxu0 %v7485
        %7547 = vmatprep.subr.bf16.mxu0 %v7490
        %7548 = vmatpush1.bf16.msra.mxu0 %v7489
        %7549 = vmatprep.subr.bf16.mxu0 %v7494
        %7550 = vmatpush1.bf16.msra.mxu0 %v7493
        %7551 = vmatprep.subr.bf16.mxu0 %v7498
        %7552 = vmatpush1.bf16.msra.mxu0 %v7497
        %7553 = vmatprep.subr.bf16.mxu0 %v7502
        %7554 = vmatpush1.bf16.msra.mxu0 %v7501
        %7555 = vmatprep.subr.bf16.mxu0 %v7506
        %7556 = vmatpush1.bf16.msra.mxu0 %v7505
        %7557 = vmatprep.subr.bf16.mxu0 0
        %7558 = vmatpush1.bf16.msra.mxu0 0
        %7559 = vmatprep.subr.bf16.mxu0 0
        %7560 = vmatpush1.bf16.msra.mxu0 0
        %7561 = vmatprep.subr.bf16.mxu0 0
        %7562 = vmatpush1.bf16.msra.mxu0 0
        %7563 = vmatprep.subr.bf16.mxu0 0
        %7564 = vmatpush1.bf16.msra.mxu0 0
        %7565 = vmatprep.subr.bf16.mxu0 0
        %7566 = vmatpush1.bf16.msra.mxu0 0
        %7567 = vmatprep.subr.bf16.mxu0 0
        %7568 = vmatpush1.bf16.msra.mxu0 0
        %7569 = vmatprep.subr.bf16.mxu0 0
        %7570 = vmatpush1.bf16.msra.mxu0 0
        %7571 = vmatprep.subr.bf16.mxu0 0
        %7572 = vmatpush1.bf16.msra.mxu0 0
        %7573 = vmatprep.mubr.bf16.mxu0 0
        %7574 = vmatmul.mubr.bf16.gmra.mrb[0].mxu0 %v7348
        %v7575 = vpop.f32.mrb[0].mxu0
        %v7576 = vadd.f32 0.0, %v7575
        %v7577 = vpop.f32.mrb[0].mxu0
        %v7578 = vadd.f32 0.0, %v7577
        %v7579 = vpop.f32.mrb[0].mxu0
        %v7580 = vadd.f32 0.0, %v7579
        %v7581 = vpop.f32.mrb[0].mxu0
        %v7582 = vadd.f32 0.0, %v7581
        %7583 = vdwg.mxu0
        %7584 = vmatprep.subr.bf16.mxu0 %v7480
        %7585 = vmatpush1.bf16.msra.mxu0 %v7479
        %7586 = vmatprep.subr.bf16.mxu0 %v7484
        %7587 = vmatpush1.bf16.msra.mxu0 %v7483
        %7588 = vmatprep.subr.bf16.mxu0 %v7488
        %7589 = vmatpush1.bf16.msra.mxu0 %v7487
        %7590 = vmatprep.subr.bf16.mxu0 %v7492
        %7591 = vmatpush1.bf16.msra.mxu0 %v7491
        %7592 = vmatprep.subr.bf16.mxu0 %v7496
        %7593 = vmatpush1.bf16.msra.mxu0 %v7495
        %7594 = vmatprep.subr.bf16.mxu0 %v7500
        %7595 = vmatpush1.bf16.msra.mxu0 %v7499
        %7596 = vmatprep.subr.bf16.mxu0 %v7504
        %7597 = vmatpush1.bf16.msra.mxu0 %v7503
        %7598 = vmatprep.subr.bf16.mxu0 %v7508
        %7599 = vmatpush1.bf16.msra.mxu0 %v7507
        %7600 = vmatprep.subr.bf16.mxu0 0
        %7601 = vmatpush1.bf16.msra.mxu0 0
        %7602 = vmatprep.subr.bf16.mxu0 0
        %7603 = vmatpush1.bf16.msra.mxu0 0
        %7604 = vmatprep.subr.bf16.mxu0 0
        %7605 = vmatpush1.bf16.msra.mxu0 0
        %7606 = vmatprep.subr.bf16.mxu0 0
        %7607 = vmatpush1.bf16.msra.mxu0 0
        %7608 = vmatprep.subr.bf16.mxu0 0
        %7609 = vmatpush1.bf16.msra.mxu0 0
        %7610 = vmatprep.subr.bf16.mxu0 0
        %7611 = vmatpush1.bf16.msra.mxu0 0
        %7612 = vmatprep.subr.bf16.mxu0 0
        %7613 = vmatpush1.bf16.msra.mxu0 0
        %7614 = vmatprep.subr.bf16.mxu0 0
        %7615 = vmatpush1.bf16.msra.mxu0 0
        %7616 = vmatprep.mubr.bf16.mxu0 0
        %7617 = vmatmul.mubr.bf16.gmra.mrb[0].mxu0 %v7348
        %v7618 = vpop.f32.mrb[0].mxu0
        %v7619 = vadd.f32 0.0, %v7618
        %v7620 = vpop.f32.mrb[0].mxu0
        %v7621 = vadd.f32 0.0, %v7620
        %v7622 = vpop.f32.mrb[0].mxu0
        %v7623 = vadd.f32 0.0, %v7622
        %v7624 = vpop.f32.mrb[0].mxu0
        %v7625 = vadd.f32 0.0, %v7624
        %7626 = vdwg.mxu0
        %v7627 = vadd.f32 %v7340, %v7576
        %v7628 = vadd.f32 %v7341, %v7578
        %v7629 = vadd.f32 %v7342, %v7619
        %v7630 = vadd.f32 %v7343, %v7621
        %v7631 = vadd.f32 %v7344, %v7580
        %v7632 = vadd.f32 %v7345, %v7582
        %v7633 = vadd.f32 %v7346, %v7623
        %v7634 = vadd.f32 %v7347, %v7625
        %v7635 = vxor.u32 %v7627, 2147483648
        %v7636 = vxor.u32 %v7631, 2147483648
        %v7637 = vmul.f32 %v7635, 1.442695
        %v7638 = vpow.pop %v7637
        %v7639 = vmul.f32 %v7636, 1.442695
        %v7640 = vpow.pop %v7639
        %v7641 = vadd.f32 %v7638, 1.0
        %v7642 = vadd.f32 %v7640, 1.0
        %v7643 = vrcp.pop %v7641
        %v7644 = vmul.f32 1.0, %v7643
        %v7645 = vrcp.pop %v7642
        %v7646 = vmul.f32 1.0, %v7645
        %v7647 = vxor.u32 %v7628, 2147483648
        %v7648 = vxor.u32 %v7632, 2147483648
        %v7649 = vmul.f32 %v7647, 1.442695
        %v7650 = vpow.pop %v7649
        %v7651 = vmul.f32 %v7648, 1.442695
        %v7652 = vpow.pop %v7651
        %v7653 = vadd.f32 %v7650, 1.0
        %v7654 = vadd.f32 %v7652, 1.0
        %v7655 = vrcp.pop %v7653
        %v7656 = vmul.f32 1.0, %v7655
        %v7657 = vrcp.pop %v7654
        %v7658 = vmul.f32 1.0, %v7657
        %v7659 = vtanh.pop %v7629
        %v7660 = vtanh.pop %v7633
        %v7661 = vxor.u32 %v7630, 2147483648
        %v7662 = vxor.u32 %v7634, 2147483648
        %v7663 = vmul.f32 %v7661, 1.442695
        %v7664 = vpow.pop %v7663
        %v7665 = vmul.f32 %v7662, 1.442695
        %v7666 = vpow.pop %v7665
        %v7667 = vadd.f32 %v7664, 1.0
        %v7668 = vadd.f32 %v7666, 1.0
        %v7669 = vrcp.pop %v7667
        %v7670 = vmul.f32 1.0, %v7669
        %v7671 = vrcp.pop %v7668
        %v7672 = vmul.f32 1.0, %v7671
        %v7673 = vmul.f32 %v7656, %v7296
        %v7674 = vmul.f32 %v7658, %v7297
        %v7675 = vmul.f32 %v7644, %v7659
        %v7676 = vmul.f32 %v7646, %v7660
        %v7677 = vadd.f32 %v7673, %v7675
        %v7678 = vadd.f32 %v7674, %v7676
        %v7679 = vtanh.pop %v7677
        %v7680 = vtanh.pop %v7678
        %v7681 = vmul.f32 %v7670, %v7679
        %v7682 = vmul.f32 %v7672, %v7680
        %7683 = vadd.xlane.f32.xlu0 %v7681
        %v7684 = vpop.xlane.xlu0 %7683
        %7685 = vadd.xlane.f32.xlu0 %v7682
        %v7686 = vpop.xlane.xlu0 %7685
        %v7687 = vmul.f32 %v7684, %v1356
        %v7688 = vmul.f32 %v7686, %v1356
        %v7689 = vmul.f32 %v7681, %v7681
        %v7690 = vmul.f32 %v7682, %v7682
        %7691 = vadd.xlane.f32.xlu0 %v7689
        %v7692 = vpop.xlane.xlu0 %7691
        %7693 = vadd.xlane.f32.xlu0 %v7690
        %v7694 = vpop.xlane.xlu0 %7693
        %v7695 = vmul.f32 %v7692, %v1356
        %v7696 = vmul.f32 %v7694, %v1356
        %v7697 = vmul.f32 %v7687, %v7687
        %v7698 = vmul.f32 %v7688, %v7688
        %v7699 = vsub.f32 %v7695, %v7697
        %v7700 = vsub.f32 %v7696, %v7698
        %v7701 = vsub.f32 %v7681, %v7687
        %v7702 = vsub.f32 %v7682, %v7688
        %v7703 = vadd.f32 %v7699, 1e-05
        %v7704 = vadd.f32 %v7700, 1e-05
        %v7705 = vrsqrt.pop %v7703
        %v7706 = vrsqrt.pop %v7704
        %v7707 = vmul.f32 %v7701, %v7705
        %v7708 = vmul.f32 %v7702, %v7706
        %v7709 = vmul.f32 %v7707, %v4663
        %v7710 = vmul.f32 %v7708, %v4663
        %v7711 = vadd.f32 %v7709, %v4671
        %v7712 = vadd.f32 %v7710, %v4671
        %v7713 = vmax.f32 %v7711, 0.0
        %v7714 = vmax.f32 %v7712, 0.0
        %v7715 = vld [vmem:[%s4071] sm:$0xff]
        %v7716 = vld [vmem:[%s4071 + $0x8] sm:$0xff]
        %v7717 = vadd.f32 %v7713, %v7715
        %v7718 = vadd.f32 %v7714, %v7716
        %v7719 = vpack.c.bf16 %v7718, %v7717
        %7720 = vst [vmem:[%s4077] sm:$0xff] %v7719
        %v7721 = vld [vmem:[%s4077] sm:$0xff]
        %v7722 = vld [vmem:[%s6] sm:$0xf]
        %v7723 = vld [vmem:[%s6 + $0x4] sm:$0xf]
        %v7724 = vld [vmem:[%s6 + $0x8] sm:$0xf]
        %v7725 = vld [vmem:[%s6 + $0xc] sm:$0xf]
        %v7726 = vld [vmem:[%s6 + $0x10] sm:$0xf]
        %v7727 = vld [vmem:[%s6 + $0x14] sm:$0xf]
        %v7728 = vld [vmem:[%s6 + $0x18] sm:$0xf]
        %v7729 = vld [vmem:[%s6 + $0x1c] sm:$0xf]
        %v7730 = vld [vmem:[%s6 + $0x20] sm:$0xf]
        %v7731 = vld [vmem:[%s6 + $0x24] sm:$0xf]
        %v7732 = vld [vmem:[%s6 + $0x28] sm:$0xf]
        %v7733 = vld [vmem:[%s6 + $0x2c] sm:$0xf]
        %v7734 = vld [vmem:[%s6 + $0x30] sm:$0xf]
        %v7735 = vld [vmem:[%s6 + $0x34] sm:$0xf]
        %v7736 = vld [vmem:[%s6 + $0x38] sm:$0xf]
        %v7737 = vld [vmem:[%s6 + $0x3c] sm:$0xf]
        %v7738 = vld [vmem:[%s7] sm:$0x1]
        %v7740 = vlaneseq
        %v7741 = vshrl.u32 %v7740, 7
        %v7742 = vsub.s32 0, %v7741
        %v7743 = vrot.slane %v7738, %v7742
        %v7761 = vunpack.c.l.b16 %v7722
        %v7762 = vunpack.c.l.b16 %v7723
        %v7763 = vunpack.c.l.b16 %v7724
        %v7764 = vunpack.c.l.b16 %v7725
        %v7765 = vunpack.c.l.b16 %v7726
        %v7766 = vunpack.c.l.b16 %v7727
        %v7767 = vunpack.c.l.b16 %v7728
        %v7768 = vunpack.c.l.b16 %v7729
        %v7769 = vunpack.c.l.b16 %v7730
        %v7770 = vunpack.c.l.b16 %v7731
        %v7771 = vunpack.c.l.b16 %v7732
        %v7772 = vunpack.c.l.b16 %v7733
        %v7773 = vunpack.c.l.b16 %v7734
        %v7774 = vunpack.c.l.b16 %v7735
        %v7775 = vunpack.c.l.b16 %v7736
        %v7776 = vunpack.c.l.b16 %v7737
        %v7777 = vpack.c.b16 %v7762, %v7761
        %v7778 = vpack.c.b16 %v7764, %v7763
        %v7779 = vpack.c.b16 %v7766, %v7765
        %v7780 = vpack.c.b16 %v7768, %v7767
        %v7781 = vpack.c.b16 %v7770, %v7769
        %v7782 = vpack.c.b16 %v7772, %v7771
        %v7783 = vpack.c.b16 %v7774, %v7773
        %v7784 = vpack.c.b16 %v7776, %v7775
        %7793 = vmatprep.subr.bf16.mxu0 0
        %7794 = vmatpush1.bf16.msra.mxu0 %v7777
        %7795 = vmatprep.subr.bf16.mxu0 0
        %7796 = vmatpush1.bf16.msra.mxu0 %v7778
        %7797 = vmatprep.subr.bf16.mxu0 0
        %7798 = vmatpush1.bf16.msra.mxu0 %v7779
        %7799 = vmatprep.subr.bf16.mxu0 0
        %7800 = vmatpush1.bf16.msra.mxu0 %v7780
        %7801 = vmatprep.subr.bf16.mxu0 0
        %7802 = vmatpush1.bf16.msra.mxu0 %v7781
        %7803 = vmatprep.subr.bf16.mxu0 0
        %7804 = vmatpush1.bf16.msra.mxu0 %v7782
        %7805 = vmatprep.subr.bf16.mxu0 0
        %7806 = vmatpush1.bf16.msra.mxu0 %v7783
        %7807 = vmatprep.subr.bf16.mxu0 0
        %7808 = vmatpush1.bf16.msra.mxu0 %v7784
        %7809 = vmatprep.subr.bf16.mxu0 0
        %7810 = vmatpush1.bf16.msra.mxu0 0
        %7811 = vmatprep.subr.bf16.mxu0 0
        %7812 = vmatpush1.bf16.msra.mxu0 0
        %7813 = vmatprep.subr.bf16.mxu0 0
        %7814 = vmatpush1.bf16.msra.mxu0 0
        %7815 = vmatprep.subr.bf16.mxu0 0
        %7816 = vmatpush1.bf16.msra.mxu0 0
        %7817 = vmatprep.subr.bf16.mxu0 0
        %7818 = vmatpush1.bf16.msra.mxu0 0
        %7819 = vmatprep.subr.bf16.mxu0 0
        %7820 = vmatpush1.bf16.msra.mxu0 0
        %7821 = vmatprep.subr.bf16.mxu0 0
        %7822 = vmatpush1.bf16.msra.mxu0 0
        %7823 = vmatprep.subr.bf16.mxu0 0
        %7824 = vmatpush1.bf16.msra.mxu0 0
        %7825 = vmatprep.mubr.bf16.mxu0 0
        %7826 = vmatmul.mubr.bf16.gmra.mrb[0].mxu0 %v7721
        %v7827 = vpop.f32.mrb[0].mxu0
        %v7828 = vadd.f32 %v7743, %v7827
        %v7829 = vpop.f32.mrb[0].mxu0
        %v7830 = vpop.f32.mrb[0].mxu0
        %v7831 = vadd.f32 %v7743, %v7830
        %v7832 = vpop.f32.mrb[0].mxu0
        %7833 = vdwg.mxu0
        %vm7834 = vcmask 39936
        %7835 = vst.msk [vmem:[%s401] sm:$0xff] %vm7834, %v7828
        %7836 = vst.msk [vmem:[%s401 + $0x8] sm:$0xff] %vm7834, %v7831
        %s7837 = smul.u32 2, %s19
        %p7838 = scmp.lt.s32.totalorder %s7837, 3
        %s7839 = scalar_select %p7838, %s7837, 3
        %s7840 = smul.addr %s7839, 8
        %s7841 = scalar_lea.vmem %s8, %s7840
        // Predicated region
        $region91: #{rnn_forward_pallas.1} parent=85 // pred_check
          %p7842 = pneg %p210
        $region92: #{rnn_forward_pallas.1} parent=85 // pred_check_branch
          %7844 = sbr.rel (%p7842) target = $region94
        $region93: #{rnn_forward_pallas.1} parent=85 // pred_region
          %s7845 = smul.u32 2, %s19
        $region94: #{rnn_forward_pallas.1} parent=85 // pred_fallthru
          _
      $region86: #{rnn_forward_pallas.1} parent=5 // pred_fallthru
        _
      %p7846 = scmp.le.s32.totalorder 2, %s14
      // Predicated region
      $region95: #{rnn_forward_pallas.1} parent=5 // pred_check
        %p7847 = pneg %p7846
      $region96: #{rnn_forward_pallas.1} parent=5 // pred_check_branch
        %7849 = sbr.rel (%p7847) target = $region98
      $region97: #{rnn_forward_pallas.1} parent=5 // pred_region
        %s7850 = ssub.s32 %s14, 2
        // Predicated region
        $region99: #{rnn_forward_pallas.1} parent=97 // pred_check
          %p7851 = pneg %p216
        $region100: #{rnn_forward_pallas.1} parent=97 // pred_check_branch
          %7853 = sbr.rel (%p7851) target = $region102
        $region101: #{rnn_forward_pallas.1} parent=97 // pred_region
          %s7854 = smul.u32 2, %s20
          %p7855 = scmp.lt.s32.totalorder %s7854, 3
          %s7856 = scalar_select %p7855, %s7854, 3
          %s7857 = smul.addr %s7856, 8
          %s7858 = scalar_lea.vmem %s8, %s7857
        $region102: #{rnn_forward_pallas.1} parent=97 // pred_fallthru
          _
      $region98: #{rnn_forward_pallas.1} parent=5 // pred_fallthru
        _
    $region6: #{rnn_forward_pallas.1} parent=1 // loop_footer
      %s18 = sadd.s32 1, %s14
    $region7: #{rnn_forward_pallas.1} parent=1 // loop_footer_branch
      %13 = sbr.rel target = $region3
    $region8: #{rnn_forward_pallas.1} parent=1 // loop_exit
      _

</llo_original>
